<compile_context>
chip_gen: v5e
topology: v5e:2x2
jax: 0.10.0
libtpu: 0.0.40
codegen_flags: <defaults>
</compile_context>

<pallas_src>
import functools
import math
from collections import OrderedDict

import jax
import jax.numpy as jnp
from jax.experimental import pallas as pl
from jax.experimental.pallas import tpu as pltpu


def _round_up(x, m):
    return ((x + m - 1) // m) * m


# ----------------------------- in-kernel math helpers ------------------------
def _softplus_and_dsig(z):
    # One exp shared between softplus and its derivative (sigmoid):
    #   e = exp(min(z, 20)); softplus = log(1 + e) (guarded); d = e / (1 + e)
    e = jnp.exp(jnp.minimum(z, 20.0))
    inv = pl.reciprocal(1.0 + e, approx=True)
    sp = jnp.where(z > 20.0, z, jnp.log(1.0 + e))
    dsig = e * inv
    return sp, dsig


# ----------------------------- kernel A: fused surface + nablas + radiance ---
def _point_kernel(xv_ref,
                  w1_ref, b1_ref, w2_ref, b2_ref, w3_ref, b3_ref,
                  w1t_ref, w2t_ref, w3t_ref,
                  wxv_ref, wn_ref, wf_ref, br1_ref,
                  wr2_ref, br2_ref, wr3_ref, br3_ref,
                  out_ref):
    f32 = jnp.float32
    xv = xv_ref[...]                                       # [TN, 6] = [x | v]
    x = xv[:, 0:3]                                         # [TN, 3]

    # ---- implicit surface MLP ----
    z1 = jnp.dot(x, w1_ref[...], preferred_element_type=f32) + b1_ref[...]
    h1, d1 = _softplus_and_dsig(z1)
    z2 = jnp.dot(h1, w2_ref[...], preferred_element_type=f32) + b2_ref[...]
    h2, d2 = _softplus_and_dsig(z2)                        # h2 = geometry feature
    logit = jnp.dot(h2, w3_ref[...], preferred_element_type=f32) + b3_ref[...]

    # ---- reverse-mode analytic nablas (d logit / d x): 2 matmuls total ----
    g2 = d2 * w3t_ref[...]                                 # [TN, W]
    g1 = d1 * jnp.dot(g2, w2t_ref[...], preferred_element_type=f32)
    nabla = jnp.dot(g1, w1t_ref[...], preferred_element_type=f32)   # [TN, 3]

    # ---- radiance net (F.normalize(nablas) via rsqrt-multiply) ----
    sumsq = jnp.sum(nabla * nabla, axis=-1, keepdims=True)
    nrm = nabla * jax.lax.rsqrt(jnp.maximum(sumsq, 1e-24))
    h = (jnp.dot(xv, wxv_ref[...], preferred_element_type=f32)      # [x|v]@[wx;wv]
         + jnp.dot(nrm, wn_ref[...], preferred_element_type=f32)
         + jnp.dot(h2, wf_ref[...], preferred_element_type=f32)
         + br1_ref[...])
    h = jnp.maximum(h, 0.0)
    h = jnp.maximum(
        jnp.dot(h, wr2_ref[...], preferred_element_type=f32) + br2_ref[...], 0.0)
    zr = jnp.dot(h, wr3_ref[...], preferred_element_type=f32) + br3_ref[...]
    rgb = pl.reciprocal(1.0 + jnp.exp(-jnp.maximum(zr, -60.0)), approx=True)

    # single packed output slab: [logit | nabla(3) | rgb(3)]
    out_ref[:, 0:1] = logit
    out_ref[:, 1:4] = nabla
    out_ref[:, 4:7] = rgb


def unisurf_points_forward(xv_flat, sp, rp, tn_target=1024):
    """Fused surface+radiance query on packed [x|v] rows.

    xv_flat: [N, 6] = concat(points, view_dirs).
    Returns (logit [N,1], nablas [N,3], rgb [N,3]).
    """
    n = xv_flat.shape[0]
    w = sp["w2"].shape[0]
    wr = rp["w2"].shape[0]

    tn = min(tn_target, _round_up(n, 8))
    n_pad = _round_up(n, tn)
    if n_pad != n:
        xv_flat = jnp.pad(xv_flat, ((0, n_pad - n), (0, 0)))

    # host-side weight prep: transposes for the reverse-mode chain, fused [wx;wv]
    w1t = sp["w1"].T                                   # [W, 3]
    w2t = sp["w2"].T                                   # [W, W]
    w3t = sp["w3"].T                                   # [1, W]
    wxv = jnp.concatenate([rp["wx"], rp["wv"]], 0)     # [6, WR]

    row = lambda i: (i, 0)
    full = lambda i: (0, 0)

    packed = pl.pallas_call(
        _point_kernel,
        out_shape=jax.ShapeDtypeStruct((n_pad, 7), jnp.float32),
        grid=(n_pad // tn,),
        in_specs=[
            pl.BlockSpec((tn, 6), row),        # [pts | view dirs]
            pl.BlockSpec((3, w), full),        # w1
            pl.BlockSpec((1, w), full),        # b1
            pl.BlockSpec((w, w), full),        # w2
            pl.BlockSpec((1, w), full),        # b2
            pl.BlockSpec((w, 1), full),        # w3
            pl.BlockSpec((1, 1), full),        # b3
            pl.BlockSpec((w, 3), full),        # w1^T
            pl.BlockSpec((w, w), full),        # w2^T
            pl.BlockSpec((1, w), full),        # w3^T
            pl.BlockSpec((6, wr), full),       # [wx ; wv]
            pl.BlockSpec((3, wr), full),       # wn
            pl.BlockSpec((w, wr), full),       # wf
            pl.BlockSpec((1, wr), full),       # b1 (radiance)
            pl.BlockSpec((wr, wr), full),      # w2 (radiance)
            pl.BlockSpec((1, wr), full),       # b2 (radiance)
            pl.BlockSpec((wr, 3), full),       # w3 (radiance)
            pl.BlockSpec((1, 3), full),        # b3 (radiance)
        ],
        out_specs=pl.BlockSpec((tn, 7), row),
        compiler_params=pltpu.CompilerParams(dimension_semantics=("parallel",)),
    )(xv_flat,
      sp["w1"], sp["b1"], sp["w2"], sp["b2"], sp["w3"], sp["b3"],
      w1t, w2t, w3t,
      wxv, rp["wn"], rp["wf"], rp["b1"],
      rp["w2"], rp["b2"], rp["w3"], rp["b3"])

    packed = packed[:n]
    return packed[:, 0:1], packed[:, 1:4], packed[:, 4:7]


# ----------------------------- kernel B: volume compositing + per-ray L1 -----
def _render_kernel(tri_ref, logit_ref, rad_ref, d_ref, tgt_ref, out_ref):
    s = logit_ref[...]                                          # [TR, P]
    # get_opacity_from_surface: exp(-s) / (1 + exp(-s)) == 1 / (1 + exp(s))
    alpha = jnp.minimum(
        pl.reciprocal(1.0 + jnp.exp(jnp.minimum(s, 60.0)), approx=True), 1.0)

    # exclusive cumprod of (1 - alpha + 1e-10) in log space, via the hoisted
    # strictly-upper-triangular matmul: csum[:, i] = sum_{j<i} log_t[:, j]
    log_t = jnp.log(1.0 - alpha + 1e-10)
    csum = jnp.dot(log_t, tri_ref[...], preferred_element_type=jnp.float32)
    w = alpha * jnp.exp(csum)                                   # [TR, P]

    rad = rad_ref[...]                                          # [TR, 3, P]
    rgb = jnp.sum(w[:, None, :] * rad, axis=-1)                 # [TR, 3]
    acc = jnp.sum(w, axis=-1, keepdims=True)                    # [TR, 1]
    depth = (jnp.sum(w * d_ref[...], axis=-1, keepdims=True)
             * pl.reciprocal(acc + 1e-10, approx=True))         # [TR, 1]
    l1 = jnp.sum(jnp.abs(rgb - tgt_ref[...]), axis=-1, keepdims=True)

    # single packed output slab: [rgb(3) | depth | acc | l1]
    out_ref[:, 0:3] = rgb
    out_ref[:, 3:4] = depth
    out_ref[:, 4:5] = acc
    out_ref[:, 5:6] = l1


def volume_composite(logits, rad_cpl, d_all, target_rgb, tr_target=256):
    """logits [R,P], rad_cpl [R,3,P] (P on lanes), d_all [R,P], target_rgb [R,3]."""
    n_rays, p = logits.shape
    tr = min(tr_target, _round_up(n_rays, 8))
    n_pad = _round_up(n_rays, tr)
    pad = n_pad - n_rays
    if pad:
        logits = jnp.pad(logits, ((0, pad), (0, 0)))
        rad_cpl = jnp.pad(rad_cpl, ((0, pad), (0, 0), (0, 0)))
        d_all = jnp.pad(d_all, ((0, pad), (0, 0)))
        target_rgb = jnp.pad(target_rgb, ((0, pad), (0, 0)))

    # triangular matrix built once in JAX, resident in VMEM across grid steps
    idx = jnp.arange(p)
    tri = (idx[:, None] < idx[None, :]).astype(jnp.float32)

    row2 = lambda r: (r, 0)
    row3 = lambda r: (r, 0, 0)
    full = lambda r: (0, 0)

    packed = pl.pallas_call(
        _render_kernel,
        out_shape=jax.ShapeDtypeStruct((n_pad, 6), jnp.float32),
        grid=(n_pad // tr,),
        in_specs=[
            pl.BlockSpec((p, p), full),        # tri
            pl.BlockSpec((tr, p), row2),       # logits
            pl.BlockSpec((tr, 3, p), row3),    # radiance (channel, then P lanes)
            pl.BlockSpec((tr, p), row2),       # depths
            pl.BlockSpec((tr, 3), row2),       # target rgb
        ],
        out_specs=pl.BlockSpec((tr, 6), row2),
        compiler_params=pltpu.CompilerParams(dimension_semantics=("parallel",)),
    )(tri, logits, rad_cpl, d_all, target_rgb)

    packed = packed[:n_rays]
    rgb = packed[:, 0:3]
    depth = packed[:, 3]
    acc = packed[:, 4]
    l1_sum = jnp.sum(packed[:, 5])
    return rgb, depth, acc, l1_sum


# ----------------------------- glue: rays, sampling, trainer forward ---------
def get_rays(c2w, intrinsics, H, W, n_rays, key):
    b = c2w.shape[0]
    select_inds = jax.random.randint(key, (b, n_rays), 0, H * W)
    u = (select_inds % W).astype(jnp.float32)
    v = (select_inds // W).astype(jnp.float32)
    fx = intrinsics[:, 0, 0][:, None]
    fy = intrinsics[:, 1, 1][:, None]
    cx = intrinsics[:, 0, 2][:, None]
    cy = intrinsics[:, 1, 2][:, None]
    dirs_cam = jnp.stack([(u - cx) / fx, (v - cy) / fy, jnp.ones_like(u)], axis=-1)
    rot = c2w[:, :3, :3]
    trans = c2w[:, :3, 3]
    rays_d = jnp.einsum("bij,bnj->bni", rot, dirs_cam)
    rays_o = jnp.broadcast_to(trans[:, None, :], rays_d.shape)
    return rays_o, rays_d, select_inds


def near_far_from_sphere(rays_o, rays_d, r=4.0):
    mid = -jnp.sum(rays_o * rays_d, axis=-1)
    near = jnp.maximum(mid - r, 0.1)
    far = mid + r
    return near, far


@functools.partial(
    jax.jit,
    static_argnames=("H", "W", "n_rays", "n_query", "n_free", "radius"))
def _forward_core(surf_params, rad_params, intrinsics, c2w, gt_rgb, key,
                  interval, *, H, W, n_rays, n_query, n_free, radius):
    rays_o, rays_d, select_inds = get_rays(c2w, intrinsics, H, W, n_rays, key)
    target_rgb = jnp.take_along_axis(
        gt_rgb,
        jnp.broadcast_to(select_inds[..., None], (*select_inds.shape, 3)),
        axis=-2)

    rays_d = rays_d / jnp.linalg.norm(rays_d, axis=-1, keepdims=True)
    near, far = near_far_from_sphere(rays_o, rays_d, r=radius)

    # TODO(synk): replaces secant root finding; "no sign change" branch assumed.
    d_pred = jnp.clip(0.5 * (near + far), near, far)
    d_upper = jnp.minimum(d_pred + interval, far)
    d_lower_i = jnp.maximum(d_pred - interval, near)
    t_q = jnp.linspace(0.0, 1.0, n_query)
    d_int = d_lower_i[..., None] * (1.0 - t_q) + d_upper[..., None] * t_q
    d_lower_fs = far                                   # mask_sign_change == 0
    t_f = jnp.linspace(0.0, 1.0, n_free)
    d_free = near[..., None] * (1.0 - t_f) + d_lower_fs[..., None] * t_f
    d_all = jnp.sort(jnp.concatenate([d_free, d_int], axis=-1), axis=-1)

    pts = rays_o[..., None, :] + rays_d[..., None, :] * d_all[..., :, None]
    view_dirs = jnp.broadcast_to(rays_d[..., None, :], pts.shape)

    b, nr, p, _ = pts.shape
    xv_flat = jnp.concatenate(
        [pts.reshape(-1, 3), view_dirs.reshape(-1, 3)], axis=-1
    ).astype(jnp.float32)                               # [N, 6] packed operand

    # --- hot path: fused Pallas point kernel ---
    logit, nablas, radiances = unisurf_points_forward(
        xv_flat, surf_params, rad_params)

    logits_rp = logit.reshape(b * nr, p)
    rad_cpl = radiances.reshape(b * nr, p, 3).transpose(0, 2, 1)  # P on lanes
    d_rp = d_all.reshape(b * nr, p).astype(jnp.float32)
    tgt_rp = target_rgb.reshape(b * nr, 3).astype(jnp.float32)

    rgb_map, depth_map, acc_map, l1_sum = volume_composite(
        logits_rp, rad_cpl, d_rp, tgt_rp)

    losses = OrderedDict()
    losses["loss_img"] = (l1_sum / (b * nr * 3)).astype(jnp.float32)
    losses["loss_reg"] = jnp.array(0.0, jnp.float32)   # TODO(synk): w_reg path skipped
    losses["total"] = losses["loss_img"] + losses["loss_reg"]

    extras = OrderedDict()
    extras["rgb"] = rgb_map.reshape(b, nr, 3)
    extras["depth_volume"] = depth_map.reshape(b, nr)
    extras["mask_volume"] = acc_map.reshape(b, nr)
    extras["radiance"] = radiances.reshape(b, nr, p, 3)
    extras["implicit_surface"] = logit.reshape(b, nr, p, 1)
    extras["implicit_nablas"] = nablas.reshape(b, nr, p, 3)
    return losses, extras


def trainer_forward(surf_params, rad_params, model_input, ground_truth,
                    render_kwargs, it, args, key):
    # pure-Python interval -> whole forward stays inside one jit
    interval = max(args["delta_max"] * math.exp(-it * args["delta_beta"]),
                   args["delta_min"])
    losses, extras = _forward_core(
        surf_params, rad_params,
        model_input["intrinsics"], model_input["c2w"], ground_truth["rgb"],
        key, jnp.float32(interval),
        H=render_kwargs["H"], W=render_kwargs["W"],
        n_rays=args["N_rays"], n_query=render_kwargs["N_query"],
        n_free=render_kwargs["N_freespace"],
        radius=render_kwargs["radius_of_interest"])
    extras["scalars"] = {"interval": jnp.array([interval], jnp.float32)}
    return OrderedDict([("losses", losses), ("extras", extras)])


# ----------------------------- deterministic parameter init ------------------
def init_params(key, w_surf=32, w_rad=32):
    ks = jax.random.split(key, 16)
    s = 0.2
    surf = {
        "w1": s * jax.random.normal(ks[0], (3, w_surf), jnp.float32),
        "b1": s * jax.random.normal(ks[1], (1, w_surf), jnp.float32),
        "w2": s * jax.random.normal(ks[2], (w_surf, w_surf), jnp.float32),
        "b2": s * jax.random.normal(ks[3], (1, w_surf), jnp.float32),
        "w3": s * jax.random.normal(ks[4], (w_surf, 1), jnp.float32),
        "b3": s * jax.random.normal(ks[5], (1, 1), jnp.float32),
    }
    rad = {
        "wx": s * jax.random.normal(ks[6], (3, w_rad), jnp.float32),
        "wv": s * jax.random.normal(ks[7], (3, w_rad), jnp.float32),
        "wn": s * jax.random.normal(ks[8], (3, w_rad), jnp.float32),
        "wf": s * jax.random.normal(ks[9], (w_surf, w_rad), jnp.float32),
        "b1": s * jax.random.normal(ks[10], (1, w_rad), jnp.float32),
        "w2": s * jax.random.normal(ks[11], (w_rad, w_rad), jnp.float32),
        "b2": s * jax.random.normal(ks[12], (1, w_rad), jnp.float32),
        "w3": s * jax.random.normal(ks[13], (w_rad, 3), jnp.float32),
        "b3": s * jax.random.normal(ks[14], (1, 3), jnp.float32),
    }
    return surf, rad


# ----------------------------- main ------------------------------------------
if __name__ == "__main__":
    key = jax.random.PRNGKey(0)
    k_param, k_rays, k_gt = jax.random.split(key, 3)

    surf_params, rad_params = init_params(k_param)

    B, H, W = 1, 16, 16
    intrinsics = jnp.broadcast_to(
        jnp.array([[20.0, 0.0, 8.0],
                   [0.0, 20.0, 8.0],
                   [0.0, 0.0, 1.0]], jnp.float32), (B, 3, 3))
    c2w = jnp.broadcast_to(
        jnp.array([[1.0, 0.0, 0.0, 0.0],
                   [0.0, 1.0, 0.0, 0.0],
                   [0.0, 0.0, 1.0, -3.0],
                   [0.0, 0.0, 0.0, 1.0]], jnp.float32), (B, 4, 4))
    model_input = {"intrinsics": intrinsics, "c2w": c2w}
    ground_truth = {"rgb": jax.random.uniform(k_gt, (B, H * W, 3), jnp.float32)}

    render_kwargs = {"H": H, "W": W, "N_query": 16, "N_freespace": 8,
                     "radius_of_interest": 4.0}
    args = {"N_rays": 32, "delta_max": 1.0, "delta_beta": 1.5e-3,
            "delta_min": 0.05}

    out = trainer_forward(surf_params, rad_params, model_input, ground_truth,
                          render_kwargs, it=100, args=args, key=k_rays)
    jax.block_until_ready(out["losses"]["total"])
    jax.block_until_ready(out["extras"]["rgb"])
    print("KERNEL_OK")
</pallas_src>

<mosaic_0001>
module attributes {stable_mosaic.version = 11 : i64} {
  func.func @_point_kernel(%arg0: i32, %arg1: memref<768x6xf32, #tpu.memory_space<vmem>>, %arg2: memref<3x32xf32, #tpu.memory_space<vmem>>, %arg3: memref<1x32xf32, #tpu.memory_space<vmem>>, %arg4: memref<32x32xf32, #tpu.memory_space<vmem>>, %arg5: memref<1x32xf32, #tpu.memory_space<vmem>>, %arg6: memref<32x1xf32, #tpu.memory_space<vmem>>, %arg7: memref<1x1xf32, #tpu.memory_space<vmem>>, %arg8: memref<32x3xf32, #tpu.memory_space<vmem>>, %arg9: memref<32x32xf32, #tpu.memory_space<vmem>>, %arg10: memref<1x32xf32, #tpu.memory_space<vmem>>, %arg11: memref<6x32xf32, #tpu.memory_space<vmem>>, %arg12: memref<3x32xf32, #tpu.memory_space<vmem>>, %arg13: memref<32x32xf32, #tpu.memory_space<vmem>>, %arg14: memref<1x32xf32, #tpu.memory_space<vmem>>, %arg15: memref<32x32xf32, #tpu.memory_space<vmem>>, %arg16: memref<1x32xf32, #tpu.memory_space<vmem>>, %arg17: memref<32x3xf32, #tpu.memory_space<vmem>>, %arg18: memref<1x3xf32, #tpu.memory_space<vmem>>, %arg19: memref<768x7xf32, #tpu.memory_space<vmem>>) attributes {dimension_semantics = [#tpu.dimension_semantics<parallel>], iteration_bounds = array<i64: 1>, scalar_prefetch = 0 : i64, scratch_operands = 0 : i64, tpu.core_type = #tpu.core_type<tc>, window_params = [{transform_indices = @transform_0, window_bounds = array<i64: 768, 6>}, {pipeline_mode = #tpu.pipeline_mode<synchronous>, transform_indices = @transform_1, window_bounds = array<i64: 3, 32>}, {pipeline_mode = #tpu.pipeline_mode<synchronous>, transform_indices = @transform_2, window_bounds = array<i64: 1, 32>}, {pipeline_mode = #tpu.pipeline_mode<synchronous>, transform_indices = @transform_3, window_bounds = array<i64: 32, 32>}, {pipeline_mode = #tpu.pipeline_mode<synchronous>, transform_indices = @transform_4, window_bounds = array<i64: 1, 32>}, {pipeline_mode = #tpu.pipeline_mode<synchronous>, transform_indices = @transform_5, window_bounds = array<i64: 32, 1>}, {pipeline_mode = #tpu.pipeline_mode<synchronous>, transform_indices = @transform_6, window_bounds = array<i64: 1, 1>}, {pipeline_mode = #tpu.pipeline_mode<synchronous>, transform_indices = @transform_7, window_bounds = array<i64: 32, 3>}, {pipeline_mode = #tpu.pipeline_mode<synchronous>, transform_indices = @transform_8, window_bounds = array<i64: 32, 32>}, {pipeline_mode = #tpu.pipeline_mode<synchronous>, transform_indices = @transform_9, window_bounds = array<i64: 1, 32>}, {pipeline_mode = #tpu.pipeline_mode<synchronous>, transform_indices = @transform_10, window_bounds = array<i64: 6, 32>}, {pipeline_mode = #tpu.pipeline_mode<synchronous>, transform_indices = @transform_11, window_bounds = array<i64: 3, 32>}, {pipeline_mode = #tpu.pipeline_mode<synchronous>, transform_indices = @transform_12, window_bounds = array<i64: 32, 32>}, {pipeline_mode = #tpu.pipeline_mode<synchronous>, transform_indices = @transform_13, window_bounds = array<i64: 1, 32>}, {pipeline_mode = #tpu.pipeline_mode<synchronous>, transform_indices = @transform_14, window_bounds = array<i64: 32, 32>}, {pipeline_mode = #tpu.pipeline_mode<synchronous>, transform_indices = @transform_15, window_bounds = array<i64: 1, 32>}, {pipeline_mode = #tpu.pipeline_mode<synchronous>, transform_indices = @transform_16, window_bounds = array<i64: 32, 3>}, {pipeline_mode = #tpu.pipeline_mode<synchronous>, transform_indices = @transform_17, window_bounds = array<i64: 1, 3>}, {transform_indices = @transform_18, window_bounds = array<i64: 768, 7>}]} {
    %c0 = arith.constant 0 : index
    %c0_0 = arith.constant 0 : index
    %0 = vector.load %arg1[%c0, %c0_0] : memref<768x6xf32, #tpu.memory_space<vmem>>, vector<768x6xf32>
    %1 = vector.extract_strided_slice %0 {offsets = [0, 0], sizes = [768, 3], strides = [1, 1]} : vector<768x6xf32> to vector<768x3xf32>
    %c0_1 = arith.constant 0 : index
    %c0_2 = arith.constant 0 : index
    %2 = vector.load %arg2[%c0_1, %c0_2] : memref<3x32xf32, #tpu.memory_space<vmem>>, vector<3x32xf32>
    %cst = arith.constant dense<0.000000e+00> : vector<768x32xf32>
    %3 = tpu.matmul %1, %2, %cst {dimension_numbers = #tpu.dot_dimension_numbers<[1], [0], [0], [1], [0, 0, 1, 1], [], []>} : vector<768x3xf32>, vector<3x32xf32>, vector<768x32xf32> -> vector<768x32xf32>
    %c0_3 = arith.constant 0 : index
    %c0_4 = arith.constant 0 : index
    %4 = vector.load %arg3[%c0_3, %c0_4] : memref<1x32xf32, #tpu.memory_space<vmem>>, vector<1x32xf32>
    %5 = vector.broadcast %4 : vector<1x32xf32> to vector<768x32xf32>
    %6 = arith.addf %3, %5 : vector<768x32xf32>
    %cst_5 = arith.constant 2.000000e+01 : f32
    %7 = vector.broadcast %cst_5 : f32 to vector<768x32xf32>
    %8 = arith.minimumf %6, %7 : vector<768x32xf32>
    %9 = math.exp %8 : vector<768x32xf32>
    %cst_6 = arith.constant 1.000000e+00 : f32
    %10 = vector.broadcast %cst_6 : f32 to vector<768x32xf32>
    %11 = arith.addf %10, %9 : vector<768x32xf32>
    %12 = tpu.reciprocal %11 {approx = true} : vector<768x32xf32> -> vector<768x32xf32>
    %cst_7 = arith.constant 2.000000e+01 : f32
    %13 = vector.broadcast %cst_7 : f32 to vector<768x32xf32>
    %14 = arith.cmpf ogt, %6, %13 : vector<768x32xf32>
    %cst_8 = arith.constant 1.000000e+00 : f32
    %15 = vector.broadcast %cst_8 : f32 to vector<768x32xf32>
    %16 = arith.addf %15, %9 : vector<768x32xf32>
    %17 = math.log %16 : vector<768x32xf32>
    %18 = arith.select %14, %6, %17 : vector<768x32xi1>, vector<768x32xf32>
    %19 = arith.mulf %9, %12 : vector<768x32xf32>
    %c0_9 = arith.constant 0 : index
    %c0_10 = arith.constant 0 : index
    %20 = vector.load %arg4[%c0_9, %c0_10] : memref<32x32xf32, #tpu.memory_space<vmem>>, vector<32x32xf32>
    %cst_11 = arith.constant dense<0.000000e+00> : vector<768x32xf32>
    %21 = tpu.matmul %18, %20, %cst_11 {dimension_numbers = #tpu.dot_dimension_numbers<[1], [0], [0], [1], [0, 0, 1, 1], [], []>} : vector<768x32xf32>, vector<32x32xf32>, vector<768x32xf32> -> vector<768x32xf32>
    %c0_12 = arith.constant 0 : index
    %c0_13 = arith.constant 0 : index
    %22 = vector.load %arg5[%c0_12, %c0_13] : memref<1x32xf32, #tpu.memory_space<vmem>>, vector<1x32xf32>
    %23 = vector.broadcast %22 : vector<1x32xf32> to vector<768x32xf32>
    %24 = arith.addf %21, %23 : vector<768x32xf32>
    %cst_14 = arith.constant 2.000000e+01 : f32
    %25 = vector.broadcast %cst_14 : f32 to vector<768x32xf32>
    %26 = arith.minimumf %24, %25 : vector<768x32xf32>
    %27 = math.exp %26 : vector<768x32xf32>
    %cst_15 = arith.constant 1.000000e+00 : f32
    %28 = vector.broadcast %cst_15 : f32 to vector<768x32xf32>
    %29 = arith.addf %28, %27 : vector<768x32xf32>
    %30 = tpu.reciprocal %29 {approx = true} : vector<768x32xf32> -> vector<768x32xf32>
    %cst_16 = arith.constant 2.000000e+01 : f32
    %31 = vector.broadcast %cst_16 : f32 to vector<768x32xf32>
    %32 = arith.cmpf ogt, %24, %31 : vector<768x32xf32>
    %cst_17 = arith.constant 1.000000e+00 : f32
    %33 = vector.broadcast %cst_17 : f32 to vector<768x32xf32>
    %34 = arith.addf %33, %27 : vector<768x32xf32>
    %35 = math.log %34 : vector<768x32xf32>
    %36 = arith.select %32, %24, %35 : vector<768x32xi1>, vector<768x32xf32>
    %37 = arith.mulf %27, %30 : vector<768x32xf32>
    %c0_18 = arith.constant 0 : index
    %c0_19 = arith.constant 0 : index
    %38 = vector.load %arg6[%c0_18, %c0_19] : memref<32x1xf32, #tpu.memory_space<vmem>>, vector<32x1xf32>
    %cst_20 = arith.constant dense<0.000000e+00> : vector<768x1xf32>
    %39 = tpu.matmul %36, %38, %cst_20 {dimension_numbers = #tpu.dot_dimension_numbers<[1], [0], [0], [1], [0, 0, 1, 1], [], []>} : vector<768x32xf32>, vector<32x1xf32>, vector<768x1xf32> -> vector<768x1xf32>
    %c0_21 = arith.constant 0 : index
    %c0_22 = arith.constant 0 : index
    %40 = vector.load %arg7[%c0_21, %c0_22] : memref<1x1xf32, #tpu.memory_space<vmem>>, vector<1x1xf32>
    %41 = vector.broadcast %40 : vector<1x1xf32> to vector<768x1xf32>
    %42 = arith.addf %39, %41 : vector<768x1xf32>
    %c0_23 = arith.constant 0 : index
    %c0_24 = arith.constant 0 : index
    %43 = vector.load %arg10[%c0_23, %c0_24] : memref<1x32xf32, #tpu.memory_space<vmem>>, vector<1x32xf32>
    %44 = vector.broadcast %43 : vector<1x32xf32> to vector<768x32xf32>
    %45 = arith.mulf %37, %44 : vector<768x32xf32>
    %c0_25 = arith.constant 0 : index
    %c0_26 = arith.constant 0 : index
    %46 = vector.load %arg9[%c0_25, %c0_26] : memref<32x32xf32, #tpu.memory_space<vmem>>, vector<32x32xf32>
    %cst_27 = arith.constant dense<0.000000e+00> : vector<768x32xf32>
    %47 = tpu.matmul %45, %46, %cst_27 {dimension_numbers = #tpu.dot_dimension_numbers<[1], [0], [0], [1], [0, 0, 1, 1], [], []>} : vector<768x32xf32>, vector<32x32xf32>, vector<768x32xf32> -> vector<768x32xf32>
    %48 = arith.mulf %19, %47 : vector<768x32xf32>
    %c0_28 = arith.constant 0 : index
    %c0_29 = arith.constant 0 : index
    %49 = vector.load %arg8[%c0_28, %c0_29] : memref<32x3xf32, #tpu.memory_space<vmem>>, vector<32x3xf32>
    %cst_30 = arith.constant dense<0.000000e+00> : vector<768x3xf32>
    %50 = tpu.matmul %48, %49, %cst_30 {dimension_numbers = #tpu.dot_dimension_numbers<[1], [0], [0], [1], [0, 0, 1, 1], [], []>} : vector<768x32xf32>, vector<32x3xf32>, vector<768x3xf32> -> vector<768x3xf32>
    %51 = arith.mulf %50, %50 : vector<768x3xf32>
    %cst_31 = arith.constant dense<0.000000e+00> : vector<768xf32>
    %52 = vector.multi_reduction <add>, %51, %cst_31 [1] : vector<768x3xf32> to vector<768xf32>
    %53 = vector.shape_cast %52 : vector<768xf32> to vector<768x1xf32>
    %cst_32 = arith.constant 1.000000e-24 : f32
    %54 = vector.broadcast %cst_32 : f32 to vector<768x1xf32>
    %55 = arith.maximumf %53, %54 : vector<768x1xf32>
    %56 = math.rsqrt %55 : vector<768x1xf32>
    %57 = vector.broadcast %56 : vector<768x1xf32> to vector<768x3xf32>
    %58 = arith.mulf %50, %57 : vector<768x3xf32>
    %c0_33 = arith.constant 0 : index
    %c0_34 = arith.constant 0 : index
    %59 = vector.load %arg11[%c0_33, %c0_34] : memref<6x32xf32, #tpu.memory_space<vmem>>, vector<6x32xf32>
    %cst_35 = arith.constant dense<0.000000e+00> : vector<768x32xf32>
    %60 = tpu.matmul %0, %59, %cst_35 {dimension_numbers = #tpu.dot_dimension_numbers<[1], [0], [0], [1], [0, 0, 1, 1], [], []>} : vector<768x6xf32>, vector<6x32xf32>, vector<768x32xf32> -> vector<768x32xf32>
    %c0_36 = arith.constant 0 : index
    %c0_37 = arith.constant 0 : index
    %61 = vector.load %arg12[%c0_36, %c0_37] : memref<3x32xf32, #tpu.memory_space<vmem>>, vector<3x32xf32>
    %cst_38 = arith.constant dense<0.000000e+00> : vector<768x32xf32>
    %62 = tpu.matmul %58, %61, %cst_38 {dimension_numbers = #tpu.dot_dimension_numbers<[1], [0], [0], [1], [0, 0, 1, 1], [], []>} : vector<768x3xf32>, vector<3x32xf32>, vector<768x32xf32> -> vector<768x32xf32>
    %63 = arith.addf %60, %62 : vector<768x32xf32>
    %c0_39 = arith.constant 0 : index
    %c0_40 = arith.constant 0 : index
    %64 = vector.load %arg13[%c0_39, %c0_40] : memref<32x32xf32, #tpu.memory_space<vmem>>, vector<32x32xf32>
    %cst_41 = arith.constant dense<0.000000e+00> : vector<768x32xf32>
    %65 = tpu.matmul %36, %64, %cst_41 {dimension_numbers = #tpu.dot_dimension_numbers<[1], [0], [0], [1], [0, 0, 1, 1], [], []>} : vector<768x32xf32>, vector<32x32xf32>, vector<768x32xf32> -> vector<768x32xf32>
    %66 = arith.addf %63, %65 : vector<768x32xf32>
    %c0_42 = arith.constant 0 : index
    %c0_43 = arith.constant 0 : index
    %67 = vector.load %arg14[%c0_42, %c0_43] : memref<1x32xf32, #tpu.memory_space<vmem>>, vector<1x32xf32>
    %68 = vector.broadcast %67 : vector<1x32xf32> to vector<768x32xf32>
    %69 = arith.addf %66, %68 : vector<768x32xf32>
    %cst_44 = arith.constant 0.000000e+00 : f32
    %70 = vector.broadcast %cst_44 : f32 to vector<768x32xf32>
    %71 = arith.maximumf %69, %70 : vector<768x32xf32>
    %c0_45 = arith.constant 0 : index
    %c0_46 = arith.constant 0 : index
    %72 = vector.load %arg15[%c0_45, %c0_46] : memref<32x32xf32, #tpu.memory_space<vmem>>, vector<32x32xf32>
    %cst_47 = arith.constant dense<0.000000e+00> : vector<768x32xf32>
    %73 = tpu.matmul %71, %72, %cst_47 {dimension_numbers = #tpu.dot_dimension_numbers<[1], [0], [0], [1], [0, 0, 1, 1], [], []>} : vector<768x32xf32>, vector<32x32xf32>, vector<768x32xf32> -> vector<768x32xf32>
    %c0_48 = arith.constant 0 : index
    %c0_49 = arith.constant 0 : index
    %74 = vector.load %arg16[%c0_48, %c0_49] : memref<1x32xf32, #tpu.memory_space<vmem>>, vector<1x32xf32>
    %75 = vector.broadcast %74 : vector<1x32xf32> to vector<768x32xf32>
    %76 = arith.addf %73, %75 : vector<768x32xf32>
    %cst_50 = arith.constant 0.000000e+00 : f32
    %77 = vector.broadcast %cst_50 : f32 to vector<768x32xf32>
    %78 = arith.maximumf %76, %77 : vector<768x32xf32>
    %c0_51 = arith.constant 0 : index
    %c0_52 = arith.constant 0 : index
    %79 = vector.load %arg17[%c0_51, %c0_52] : memref<32x3xf32, #tpu.memory_space<vmem>>, vector<32x3xf32>
    %cst_53 = arith.constant dense<0.000000e+00> : vector<768x3xf32>
    %80 = tpu.matmul %78, %79, %cst_53 {dimension_numbers = #tpu.dot_dimension_numbers<[1], [0], [0], [1], [0, 0, 1, 1], [], []>} : vector<768x32xf32>, vector<32x3xf32>, vector<768x3xf32> -> vector<768x3xf32>
    %c0_54 = arith.constant 0 : index
    %c0_55 = arith.constant 0 : index
    %81 = vector.load %arg18[%c0_54, %c0_55] : memref<1x3xf32, #tpu.memory_space<vmem>>, vector<1x3xf32>
    %82 = vector.broadcast %81 : vector<1x3xf32> to vector<768x3xf32>
    %83 = arith.addf %80, %82 : vector<768x3xf32>
    %cst_56 = arith.constant -6.000000e+01 : f32
    %84 = vector.broadcast %cst_56 : f32 to vector<768x3xf32>
    %85 = arith.maximumf %83, %84 : vector<768x3xf32>
    %cst_57 = arith.constant 0.000000e+00 : f32
    %86 = vector.broadcast %cst_57 : f32 to vector<768x3xf32>
    %87 = arith.subf %86, %85 : vector<768x3xf32>
    %88 = math.exp %87 : vector<768x3xf32>
    %cst_58 = arith.constant 1.000000e+00 : f32
    %89 = vector.broadcast %cst_58 : f32 to vector<768x3xf32>
    %90 = arith.addf %89, %88 : vector<768x3xf32>
    %91 = tpu.reciprocal %90 {approx = true} : vector<768x3xf32> -> vector<768x3xf32>
    %c0_59 = arith.constant 0 : index
    %c0_60 = arith.constant 0 : index
    %92 = vector.load %arg19[%c0_59, %c0_60] : memref<768x7xf32, #tpu.memory_space<vmem>>, vector<768x1xf32>
    tpu.vector_store %arg19[%c0_59, %c0_60], %42 {strides = array<i32>} : memref<768x7xf32, #tpu.memory_space<vmem>>, vector<768x1xf32>,
    %c0_61 = arith.constant 0 : index
    %c1 = arith.constant 1 : index
    %93 = vector.load %arg19[%c0_61, %c1] : memref<768x7xf32, #tpu.memory_space<vmem>>, vector<768x3xf32>
    tpu.vector_store %arg19[%c0_61, %c1], %50 {strides = array<i32>} : memref<768x7xf32, #tpu.memory_space<vmem>>, vector<768x3xf32>,
    %c0_62 = arith.constant 0 : index
    %c4 = arith.constant 4 : index
    %94 = vector.load %arg19[%c0_62, %c4] : memref<768x7xf32, #tpu.memory_space<vmem>>, vector<768x3xf32>
    tpu.vector_store %arg19[%c0_62, %c4], %91 {strides = array<i32>} : memref<768x7xf32, #tpu.memory_space<vmem>>, vector<768x3xf32>,
    return
  }
  func.func @transform_0(%arg0: i32) -> (i32, i32) {
    %c0_i32 = arith.constant 0 : i32
    %c0_i32_0 = arith.constant 0 : i32
    return %arg0, %c0_i32 : i32, i32
  }
  func.func @transform_1(%arg0: i32) -> (i32, i32) {
    %c0_i32 = arith.constant 0 : i32
    %c0_i32_0 = arith.constant 0 : i32
    %c0_i32_1 = arith.constant 0 : i32
    return %c0_i32, %c0_i32_0 : i32, i32
  }
  func.func @transform_2(%arg0: i32) -> (i32, i32) {
    %c0_i32 = arith.constant 0 : i32
    %c0_i32_0 = arith.constant 0 : i32
    %c0_i32_1 = arith.constant 0 : i32
    return %c0_i32, %c0_i32_0 : i32, i32
  }
  func.func @transform_3(%arg0: i32) -> (i32, i32) {
    %c0_i32 = arith.constant 0 : i32
    %c0_i32_0 = arith.constant 0 : i32
    %c0_i32_1 = arith.constant 0 : i32
    return %c0_i32, %c0_i32_0 : i32, i32
  }
  func.func @transform_4(%arg0: i32) -> (i32, i32) {
    %c0_i32 = arith.constant 0 : i32
    %c0_i32_0 = arith.constant 0 : i32
    %c0_i32_1 = arith.constant 0 : i32
    return %c0_i32, %c0_i32_0 : i32, i32
  }
  func.func @transform_5(%arg0: i32) -> (i32, i32) {
    %c0_i32 = arith.constant 0 : i32
    %c0_i32_0 = arith.constant 0 : i32
    %c0_i32_1 = arith.constant 0 : i32
    return %c0_i32, %c0_i32_0 : i32, i32
  }
  func.func @transform_6(%arg0: i32) -> (i32, i32) {
    %c0_i32 = arith.constant 0 : i32
    %c0_i32_0 = arith.constant 0 : i32
    %c0_i32_1 = arith.constant 0 : i32
    return %c0_i32, %c0_i32_0 : i32, i32
  }
  func.func @transform_7(%arg0: i32) -> (i32, i32) {
    %c0_i32 = arith.constant 0 : i32
    %c0_i32_0 = arith.constant 0 : i32
    %c0_i32_1 = arith.constant 0 : i32
    return %c0_i32, %c0_i32_0 : i32, i32
  }
  func.func @transform_8(%arg0: i32) -> (i32, i32) {
    %c0_i32 = arith.constant 0 : i32
    %c0_i32_0 = arith.constant 0 : i32
    %c0_i32_1 = arith.constant 0 : i32
    return %c0_i32, %c0_i32_0 : i32, i32
  }
  func.func @transform_9(%arg0: i32) -> (i32, i32) {
    %c0_i32 = arith.constant 0 : i32
    %c0_i32_0 = arith.constant 0 : i32
    %c0_i32_1 = arith.constant 0 : i32
    return %c0_i32, %c0_i32_0 : i32, i32
  }
  func.func @transform_10(%arg0: i32) -> (i32, i32) {
    %c0_i32 = arith.constant 0 : i32
    %c0_i32_0 = arith.constant 0 : i32
    %c0_i32_1 = arith.constant 0 : i32
    return %c0_i32, %c0_i32_0 : i32, i32
  }
  func.func @transform_11(%arg0: i32) -> (i32, i32) {
    %c0_i32 = arith.constant 0 : i32
    %c0_i32_0 = arith.constant 0 : i32
    %c0_i32_1 = arith.constant 0 : i32
    return %c0_i32, %c0_i32_0 : i32, i32
  }
  func.func @transform_12(%arg0: i32) -> (i32, i32) {
    %c0_i32 = arith.constant 0 : i32
    %c0_i32_0 = arith.constant 0 : i32
    %c0_i32_1 = arith.constant 0 : i32
    return %c0_i32, %c0_i32_0 : i32, i32
  }
  func.func @transform_13(%arg0: i32) -> (i32, i32) {
    %c0_i32 = arith.constant 0 : i32
    %c0_i32_0 = arith.constant 0 : i32
    %c0_i32_1 = arith.constant 0 : i32
    return %c0_i32, %c0_i32_0 : i32, i32
  }
  func.func @transform_14(%arg0: i32) -> (i32, i32) {
    %c0_i32 = arith.constant 0 : i32
    %c0_i32_0 = arith.constant 0 : i32
    %c0_i32_1 = arith.constant 0 : i32
    return %c0_i32, %c0_i32_0 : i32, i32
  }
  func.func @transform_15(%arg0: i32) -> (i32, i32) {
    %c0_i32 = arith.constant 0 : i32
    %c0_i32_0 = arith.constant 0 : i32
    %c0_i32_1 = arith.constant 0 : i32
    return %c0_i32, %c0_i32_0 : i32, i32
  }
  func.func @transform_16(%arg0: i32) -> (i32, i32) {
    %c0_i32 = arith.constant 0 : i32
    %c0_i32_0 = arith.constant 0 : i32
    %c0_i32_1 = arith.constant 0 : i32
    return %c0_i32, %c0_i32_0 : i32, i32
  }
  func.func @transform_17(%arg0: i32) -> (i32, i32) {
    %c0_i32 = arith.constant 0 : i32
    %c0_i32_0 = arith.constant 0 : i32
    %c0_i32_1 = arith.constant 0 : i32
    return %c0_i32, %c0_i32_0 : i32, i32
  }
  func.func @transform_18(%arg0: i32) -> (i32, i32) {
    %c0_i32 = arith.constant 0 : i32
    %c0_i32_0 = arith.constant 0 : i32
    return %arg0, %c0_i32 : i32, i32
  }
}

module attributes {stable_mosaic.version = 11 : i64} {
  func.func @_render_kernel(%arg0: i32, %arg1: memref<24x24xf32, #tpu.memory_space<vmem>>, %arg2: memref<32x24xf32, #tpu.memory_space<vmem>>, %arg3: memref<32x3x24xf32, #tpu.memory_space<vmem>>, %arg4: memref<32x24xf32, #tpu.memory_space<vmem>>, %arg5: memref<32x3xf32, #tpu.memory_space<vmem>>, %arg6: memref<32x6xf32, #tpu.memory_space<vmem>>) attributes {dimension_semantics = [#tpu.dimension_semantics<parallel>], iteration_bounds = array<i64: 1>, scalar_prefetch = 0 : i64, scratch_operands = 0 : i64, tpu.core_type = #tpu.core_type<tc>, window_params = [{pipeline_mode = #tpu.pipeline_mode<synchronous>, transform_indices = @transform_0, window_bounds = array<i64: 24, 24>}, {transform_indices = @transform_1, window_bounds = array<i64: 32, 24>}, {transform_indices = @transform_2, window_bounds = array<i64: 32, 3, 24>}, {transform_indices = @transform_3, window_bounds = array<i64: 32, 24>}, {transform_indices = @transform_4, window_bounds = array<i64: 32, 3>}, {transform_indices = @transform_5, window_bounds = array<i64: 32, 6>}]} {
    %c0 = arith.constant 0 : index
    %c0_0 = arith.constant 0 : index
    %0 = vector.load %arg2[%c0, %c0_0] : memref<32x24xf32, #tpu.memory_space<vmem>>, vector<32x24xf32>
    %cst = arith.constant 6.000000e+01 : f32
    %1 = vector.broadcast %cst : f32 to vector<32x24xf32>
    %2 = arith.minimumf %0, %1 : vector<32x24xf32>
    %3 = math.exp %2 : vector<32x24xf32>
    %cst_1 = arith.constant 1.000000e+00 : f32
    %4 = vector.broadcast %cst_1 : f32 to vector<32x24xf32>
    %5 = arith.addf %4, %3 : vector<32x24xf32>
    %6 = tpu.reciprocal %5 {approx = true} : vector<32x24xf32> -> vector<32x24xf32>
    %cst_2 = arith.constant 1.000000e+00 : f32
    %7 = vector.broadcast %cst_2 : f32 to vector<32x24xf32>
    %8 = arith.minimumf %6, %7 : vector<32x24xf32>
    %cst_3 = arith.constant 1.000000e+00 : f32
    %9 = vector.broadcast %cst_3 : f32 to vector<32x24xf32>
    %10 = arith.subf %9, %8 : vector<32x24xf32>
    %cst_4 = arith.constant 1.000000e-10 : f32
    %11 = vector.broadcast %cst_4 : f32 to vector<32x24xf32>
    %12 = arith.addf %10, %11 : vector<32x24xf32>
    %13 = math.log %12 : vector<32x24xf32>
    %c0_5 = arith.constant 0 : index
    %c0_6 = arith.constant 0 : index
    %14 = vector.load %arg1[%c0_5, %c0_6] : memref<24x24xf32, #tpu.memory_space<vmem>>, vector<24x24xf32>
    %cst_7 = arith.constant dense<0.000000e+00> : vector<32x24xf32>
    %15 = tpu.matmul %13, %14, %cst_7 {dimension_numbers = #tpu.dot_dimension_numbers<[1], [0], [0], [1], [0, 0, 1, 1], [], []>} : vector<32x24xf32>, vector<24x24xf32>, vector<32x24xf32> -> vector<32x24xf32>
    %16 = math.exp %15 : vector<32x24xf32>
    %17 = arith.mulf %8, %16 : vector<32x24xf32>
    %c0_8 = arith.constant 0 : index
    %c0_9 = arith.constant 0 : index
    %c0_10 = arith.constant 0 : index
    %18 = vector.load %arg3[%c0_8, %c0_9, %c0_10] : memref<32x3x24xf32, #tpu.memory_space<vmem>>, vector<32x3x24xf32>
    %19 = vector.shape_cast %17 : vector<32x24xf32> to vector<32x1x24xf32>
    %20 = vector.broadcast %19 : vector<32x1x24xf32> to vector<32x3x24xf32>
    %21 = arith.mulf %20, %18 : vector<32x3x24xf32>
    %cst_11 = arith.constant dense<0.000000e+00> : vector<32x3xf32>
    %22 = vector.multi_reduction <add>, %21, %cst_11 [2] : vector<32x3x24xf32> to vector<32x3xf32>
    %cst_12 = arith.constant dense<0.000000e+00> : vector<32xf32>
    %23 = vector.multi_reduction <add>, %17, %cst_12 [1] : vector<32x24xf32> to vector<32xf32>
    %24 = vector.shape_cast %23 : vector<32xf32> to vector<32x1xf32>
    %c0_13 = arith.constant 0 : index
    %c0_14 = arith.constant 0 : index
    %25 = vector.load %arg4[%c0_13, %c0_14] : memref<32x24xf32, #tpu.memory_space<vmem>>, vector<32x24xf32>
    %26 = arith.mulf %17, %25 : vector<32x24xf32>
    %cst_15 = arith.constant dense<0.000000e+00> : vector<32xf32>
    %27 = vector.multi_reduction <add>, %26, %cst_15 [1] : vector<32x24xf32> to vector<32xf32>
    %28 = vector.shape_cast %27 : vector<32xf32> to vector<32x1xf32>
    %cst_16 = arith.constant 1.000000e-10 : f32
    %29 = vector.broadcast %cst_16 : f32 to vector<32x1xf32>
    %30 = arith.addf %24, %29 : vector<32x1xf32>
    %31 = tpu.reciprocal %30 {approx = true} : vector<32x1xf32> -> vector<32x1xf32>
    %32 = arith.mulf %28, %31 : vector<32x1xf32>
    %c0_17 = arith.constant 0 : index
    %c0_18 = arith.constant 0 : index
    %33 = vector.load %arg5[%c0_17, %c0_18] : memref<32x3xf32, #tpu.memory_space<vmem>>, vector<32x3xf32>
    %34 = arith.subf %22, %33 : vector<32x3xf32>
    %35 = math.absf %34 : vector<32x3xf32>
    %cst_19 = arith.constant dense<0.000000e+00> : vector<32xf32>
    %36 = vector.multi_reduction <add>, %35, %cst_19 [1] : vector<32x3xf32> to vector<32xf32>
    %37 = vector.shape_cast %36 : vector<32xf32> to vector<32x1xf32>
    %c0_20 = arith.constant 0 : index
    %c0_21 = arith.constant 0 : index
    %38 = vector.load %arg6[%c0_20, %c0_21] : memref<32x6xf32, #tpu.memory_space<vmem>>, vector<32x3xf32>
    tpu.vector_store %arg6[%c0_20, %c0_21], %22 {strides = array<i32>} : memref<32x6xf32, #tpu.memory_space<vmem>>, vector<32x3xf32>,
    %c0_22 = arith.constant 0 : index
    %c3 = arith.constant 3 : index
    %39 = vector.load %arg6[%c0_22, %c3] : memref<32x6xf32, #tpu.memory_space<vmem>>, vector<32x1xf32>
    tpu.vector_store %arg6[%c0_22, %c3], %32 {strides = array<i32>} : memref<32x6xf32, #tpu.memory_space<vmem>>, vector<32x1xf32>,
    %c0_23 = arith.constant 0 : index
    %c4 = arith.constant 4 : index
    %40 = vector.load %arg6[%c0_23, %c4] : memref<32x6xf32, #tpu.memory_space<vmem>>, vector<32x1xf32>
    tpu.vector_store %arg6[%c0_23, %c4], %24 {strides = array<i32>} : memref<32x6xf32, #tpu.memory_space<vmem>>, vector<32x1xf32>,
    %c0_24 = arith.constant 0 : index
    %c5 = arith.constant 5 : index
    %41 = vector.load %arg6[%c0_24, %c5] : memref<32x6xf32, #tpu.memory_space<vmem>>, vector<32x1xf32>
    tpu.vector_store %arg6[%c0_24, %c5], %37 {strides = array<i32>} : memref<32x6xf32, #tpu.memory_space<vmem>>, vector<32x1xf32>,
    return
  }
  func.func @transform_0(%arg0: i32) -> (i32, i32) {
    %c0_i32 = arith.constant 0 : i32
    %c0_i32_0 = arith.constant 0 : i32
    %c0_i32_1 = arith.constant 0 : i32
    return %c0_i32, %c0_i32_0 : i32, i32
  }
  func.func @transform_1(%arg0: i32) -> (i32, i32) {
    %c0_i32 = arith.constant 0 : i32
    %c0_i32_0 = arith.constant 0 : i32
    return %arg0, %c0_i32 : i32, i32
  }
  func.func @transform_2(%arg0: i32) -> (i32, i32, i32) {
    %c0_i32 = arith.constant 0 : i32
    %c0_i32_0 = arith.constant 0 : i32
    %c0_i32_1 = arith.constant 0 : i32
    return %arg0, %c0_i32, %c0_i32_0 : i32, i32, i32
  }
  func.func @transform_3(%arg0: i32) -> (i32, i32) {
    %c0_i32 = arith.constant 0 : i32
    %c0_i32_0 = arith.constant 0 : i32
    return %arg0, %c0_i32 : i32, i32
  }
  func.func @transform_4(%arg0: i32) -> (i32, i32) {
    %c0_i32 = arith.constant 0 : i32
    %c0_i32_0 = arith.constant 0 : i32
    return %arg0, %c0_i32 : i32, i32
  }
  func.func @transform_5(%arg0: i32) -> (i32, i32) {
    %c0_i32 = arith.constant 0 : i32
    %c0_i32_0 = arith.constant 0 : i32
    return %arg0, %c0_i32 : i32, i32
  }
}

</mosaic_0001>

<llo_original>
// kernel: _forward_core.3
$region0: #{_forward_core.3}
  #allocation0 [shape = 'u32[]', space=smem, size = 0x4, offset = 0x4, fixed_abs, tag = 'smem constant byte address 0x4 - core index']
  #allocation1 [shape = 'u32[72,128]{1,0:T(1,128)}', space=vmem, size = 0x9000, scoped, tag = 'internal scratch']
  %s0 = inlined_call_operand.vmem [shape: f32[24,24], index: 0, kind: input, shape index: {}]
  %s1 = inlined_call_operand.vmem [shape: f32[32,24], index: 1, kind: input, shape index: {}]
  %s2 = inlined_call_operand.vmem [shape: f32[32,3,24], index: 2, kind: input, shape index: {}]
  %s3 = inlined_call_operand.vmem [shape: f32[32,24], index: 3, kind: input, shape index: {}]
  %s4 = inlined_call_operand.vmem [shape: f32[32,3], index: 4, kind: input, shape index: {}]
  %s5 = inlined_call_operand.vmem [shape: f32[32,6], index: 5, kind: output, shape index: {}]
  %s6 = sld [smem:[#allocation0]]
  $region30: #{_forward_core.3} parent=0
    _
  %s8 = ssub.s32 1, %s6
  %s9 = scalar_select 0, %s8, %s6
  // Predicated region
  $region2: #{_forward_core.3} parent=0 // pred_check
    _
  $region3: #{_forward_core.3} parent=0 // pred_check_branch
    %11 = sbr.rel (0) target = $region5
  $region4: #{_forward_core.3} parent=0 // pred_region
    _
  $region5: #{_forward_core.3} parent=0 // pred_fallthru
    _
  // Predicated region
  $region6: #{_forward_core.3} parent=0 // pred_check
    _
  $region7: #{_forward_core.3} parent=0 // pred_check_branch
    %13 = sbr.rel (0) target = $region9
  $region8: #{_forward_core.3} parent=0 // pred_region
    _
  $region9: #{_forward_core.3} parent=0 // pred_fallthru
    _
  // Predicated region
  $region10: #{_forward_core.3} parent=0 // pred_check
    _
  $region11: #{_forward_core.3} parent=0 // pred_check_branch
    %15 = sbr.rel (0) target = $region13
  $region12: #{_forward_core.3} parent=0 // pred_region
    _
  $region13: #{_forward_core.3} parent=0 // pred_fallthru
    _
  // Predicated region
  $region14: #{_forward_core.3} parent=0 // pred_check
    _
  $region15: #{_forward_core.3} parent=0 // pred_check_branch
    %17 = sbr.rel (0) target = $region17
  $region16: #{_forward_core.3} parent=0 // pred_region
    _
  $region17: #{_forward_core.3} parent=0 // pred_fallthru
    _
  // Predicated region
  $region18: #{_forward_core.3} parent=0 // pred_check
    _
  $region19: #{_forward_core.3} parent=0 // pred_check_branch
    %19 = sbr.rel (0) target = $region21
  $region20: #{_forward_core.3} parent=0 // pred_region
    _
  $region21: #{_forward_core.3} parent=0 // pred_fallthru
    _
  %v20 = vld [vmem:[%s1] sm:$0xff]
  %v21 = vld [vmem:[%s1 + $0x8] sm:$0xff]
  %v22 = vld [vmem:[%s1 + $0x10] sm:$0xff]
  %v23 = vld [vmem:[%s1 + $0x18] sm:$0xff]
  %v24 = vmin.f32 %v20, 60.0
  %v25 = vmin.f32 %v21, 60.0
  %v26 = vmin.f32 %v22, 60.0
  %v27 = vmin.f32 %v23, 60.0
  %v28 = vmul.f32 %v24, 1.442695
  %v29 = vpow.pop %v28
  %v30 = vmul.f32 %v25, 1.442695
  %v31 = vpow.pop %v30
  %v32 = vmul.f32 %v26, 1.442695
  %v33 = vpow.pop %v32
  %v34 = vmul.f32 %v27, 1.442695
  %v35 = vpow.pop %v34
  %v36 = vadd.f32 %v29, 1.0
  %v37 = vadd.f32 %v31, 1.0
  %v38 = vadd.f32 %v33, 1.0
  %v39 = vadd.f32 %v35, 1.0
  %v40 = vrcp.pop %v36
  %v41 = vrcp.pop %v37
  %v42 = vrcp.pop %v38
  %v43 = vrcp.pop %v39
  %v44 = vmin.f32 %v40, 1.0
  %v45 = vmin.f32 %v41, 1.0
  %v46 = vmin.f32 %v42, 1.0
  %v47 = vmin.f32 %v43, 1.0
  %v48 = vsub.f32 1.0, %v44
  %v49 = vsub.f32 1.0, %v45
  %v50 = vsub.f32 1.0, %v46
  %v51 = vsub.f32 1.0, %v47
  %v52 = vadd.f32 %v48, 1e-10
  %v53 = vadd.f32 %v49, 1e-10
  %v54 = vadd.f32 %v50, 1e-10
  %v55 = vadd.f32 %v51, 1e-10
  %v56 = vlog2.pop %v52
  %v57 = vmul.f32 %v56, 0.6931472
  %v58 = vlog2.pop %v53
  %v59 = vmul.f32 %v58, 0.6931472
  %v60 = vlog2.pop %v54
  %v61 = vmul.f32 %v60, 0.6931472
  %v62 = vlog2.pop %v55
  %v63 = vmul.f32 %v62, 0.6931472
  %v64 = vld [vmem:[%s0] sm:$0xff]
  %v65 = vld [vmem:[%s0 + $0x8] sm:$0xff]
  %v66 = vld [vmem:[%s0 + $0x10] sm:$0xff]
  %vm67 = vcmask 195584
  %v69 = vsel %vm67, %v57, 0
  %v72 = vsel %vm67, %v59, 0
  %v75 = vsel %vm67, %v61, 0
  %v78 = vsel %vm67, %v63, 0
  %80 = vmatpush.msra.mxu0 0.0
  %81 = vmatpush.msra.mxu0 0.0
  %82 = vmatpush.msra.mxu0 0.0
  %83 = vmatpush.msra.mxu0 0.0
  %84 = vmatpush.msra.mxu0 0.0
  %85 = vmatpush.msra.mxu0 0.0
  %86 = vmatpush.msra.mxu0 0.0
  %87 = vmatpush.msra.mxu0 0.0
  %88 = vmatpush.msra.mxu0 0.0
  %89 = vmatpush.msra.mxu0 0.0
  %90 = vmatpush.msra.mxu0 0.0
  %91 = vmatpush.msra.mxu0 0.0
  %92 = vmatpush.msra.mxu0 0.0
  %93 = vmatpush.msra.mxu0 %v66
  %94 = vmatpush.msra.mxu0 %v65
  %95 = vmatpush.msra.mxu0 %v64
  %96 = vmatmul.f32.gmra.mxu0 %v69
  %v97 = vpop.f32.mrf.mxu0
  %v98 = vadd.f32 0.0, %v97
  %99 = vmatmul.f32.gmra.mxu0 %v72
  %v100 = vpop.f32.mrf.mxu0
  %v101 = vadd.f32 0.0, %v100
  %102 = vmatmul.f32.gmra.mxu0 %v75
  %v103 = vpop.f32.mrf.mxu0
  %v104 = vadd.f32 0.0, %v103
  %105 = vmatmul.f32.gmra.mxu0 %v78
  %v106 = vpop.f32.mrf.mxu0
  %v107 = vadd.f32 0.0, %v106
  %108 = vdwg.mxu0
  %v109 = vmul.f32 %v98, 1.442695
  %v110 = vpow.pop %v109
  %v111 = vmul.f32 %v101, 1.442695
  %v112 = vpow.pop %v111
  %v113 = vmul.f32 %v104, 1.442695
  %v114 = vpow.pop %v113
  %v115 = vmul.f32 %v107, 1.442695
  %v116 = vpow.pop %v115
  %v117 = vmul.f32 %v44, %v110
  %v118 = vmul.f32 %v45, %v112
  %v119 = vmul.f32 %v46, %v114
  %v120 = vmul.f32 %v47, %v116
  %v121 = vld [vmem:[%s2] sm:$0x7]
  %v122 = vld [vmem:[%s2 + $0x4] sm:$0x7]
  %v123 = vld [vmem:[%s2 + $0x8] sm:$0x7]
  %v124 = vld [vmem:[%s2 + $0xc] sm:$0x7]
  %v125 = vld [vmem:[%s2 + $0x10] sm:$0x7]
  %v126 = vld [vmem:[%s2 + $0x14] sm:$0x7]
  %v127 = vld [vmem:[%s2 + $0x18] sm:$0x7]
  %v128 = vld [vmem:[%s2 + $0x1c] sm:$0x7]
  %v129 = vld [vmem:[%s2 + $0x20] sm:$0x7]
  %v130 = vld [vmem:[%s2 + $0x24] sm:$0x7]
  %v131 = vld [vmem:[%s2 + $0x28] sm:$0x7]
  %v132 = vld [vmem:[%s2 + $0x2c] sm:$0x7]
  %v133 = vld [vmem:[%s2 + $0x30] sm:$0x7]
  %v134 = vld [vmem:[%s2 + $0x34] sm:$0x7]
  %v135 = vld [vmem:[%s2 + $0x38] sm:$0x7]
  %v136 = vld [vmem:[%s2 + $0x3c] sm:$0x7]
  %v137 = vld [vmem:[%s2 + $0x40] sm:$0x7]
  %v138 = vld [vmem:[%s2 + $0x44] sm:$0x7]
  %v139 = vld [vmem:[%s2 + $0x48] sm:$0x7]
  %v140 = vld [vmem:[%s2 + $0x4c] sm:$0x7]
  %v141 = vld [vmem:[%s2 + $0x50] sm:$0x7]
  %v142 = vld [vmem:[%s2 + $0x54] sm:$0x7]
  %v143 = vld [vmem:[%s2 + $0x58] sm:$0x7]
  %v144 = vld [vmem:[%s2 + $0x5c] sm:$0x7]
  %v145 = vld [vmem:[%s2 + $0x60] sm:$0x7]
  %v146 = vld [vmem:[%s2 + $0x64] sm:$0x7]
  %v147 = vld [vmem:[%s2 + $0x68] sm:$0x7]
  %v148 = vld [vmem:[%s2 + $0x6c] sm:$0x7]
  %v149 = vld [vmem:[%s2 + $0x70] sm:$0x7]
  %v150 = vld [vmem:[%s2 + $0x74] sm:$0x7]
  %v151 = vld [vmem:[%s2 + $0x78] sm:$0x7]
  %v152 = vld [vmem:[%s2 + $0x7c] sm:$0x7]
  %v157 = vrot.slane %v117, 1
  %v158 = vrot.slane %v117, 2
  %v159 = vrot.slane %v117, 3
  %v160 = vrot.slane %v117, 4
  %v161 = vrot.slane %v117, 5
  %v162 = vrot.slane %v117, 6
  %v163 = vrot.slane %v117, 7
  %v164 = vrot.slane %v118, 1
  %v165 = vrot.slane %v118, 2
  %v166 = vrot.slane %v118, 3
  %v167 = vrot.slane %v118, 4
  %v168 = vrot.slane %v118, 5
  %v169 = vrot.slane %v118, 6
  %v170 = vrot.slane %v118, 7
  %v171 = vrot.slane %v119, 1
  %v172 = vrot.slane %v119, 2
  %v173 = vrot.slane %v119, 3
  %v174 = vrot.slane %v119, 4
  %v175 = vrot.slane %v119, 5
  %v176 = vrot.slane %v119, 6
  %v177 = vrot.slane %v119, 7
  %v178 = vrot.slane %v120, 1
  %v179 = vrot.slane %v120, 2
  %v180 = vrot.slane %v120, 3
  %v181 = vrot.slane %v120, 4
  %v182 = vrot.slane %v120, 5
  %v183 = vrot.slane %v120, 6
  %v184 = vrot.slane %v120, 7
  %v185 = vperm.slane %v117, 0
  %v186 = vperm.slane %v157, 0
  %v187 = vperm.slane %v158, 0
  %v188 = vperm.slane %v159, 0
  %v189 = vperm.slane %v160, 0
  %v190 = vperm.slane %v161, 0
  %v191 = vperm.slane %v162, 0
  %v192 = vperm.slane %v163, 0
  %v193 = vperm.slane %v118, 0
  %v194 = vperm.slane %v164, 0
  %v195 = vperm.slane %v165, 0
  %v196 = vperm.slane %v166, 0
  %v197 = vperm.slane %v167, 0
  %v198 = vperm.slane %v168, 0
  %v199 = vperm.slane %v169, 0
  %v200 = vperm.slane %v170, 0
  %v201 = vperm.slane %v119, 0
  %v202 = vperm.slane %v171, 0
  %v203 = vperm.slane %v172, 0
  %v204 = vperm.slane %v173, 0
  %v205 = vperm.slane %v174, 0
  %v206 = vperm.slane %v175, 0
  %v207 = vperm.slane %v176, 0
  %v208 = vperm.slane %v177, 0
  %v209 = vperm.slane %v120, 0
  %v210 = vperm.slane %v178, 0
  %v211 = vperm.slane %v179, 0
  %v212 = vperm.slane %v180, 0
  %v213 = vperm.slane %v181, 0
  %v214 = vperm.slane %v182, 0
  %v215 = vperm.slane %v183, 0
  %v216 = vperm.slane %v184, 0
  %v249 = vmul.f32 %v185, %v121
  %v250 = vmul.f32 %v186, %v122
  %v251 = vmul.f32 %v187, %v123
  %v252 = vmul.f32 %v188, %v124
  %v253 = vmul.f32 %v189, %v125
  %v254 = vmul.f32 %v190, %v126
  %v255 = vmul.f32 %v191, %v127
  %v256 = vmul.f32 %v192, %v128
  %v257 = vmul.f32 %v193, %v129
  %v258 = vmul.f32 %v194, %v130
  %v259 = vmul.f32 %v195, %v131
  %v260 = vmul.f32 %v196, %v132
  %v261 = vmul.f32 %v197, %v133
  %v262 = vmul.f32 %v198, %v134
  %v263 = vmul.f32 %v199, %v135
  %v264 = vmul.f32 %v200, %v136
  %v265 = vmul.f32 %v201, %v137
  %v266 = vmul.f32 %v202, %v138
  %v267 = vmul.f32 %v203, %v139
  %v268 = vmul.f32 %v204, %v140
  %v269 = vmul.f32 %v205, %v141
  %v270 = vmul.f32 %v206, %v142
  %v271 = vmul.f32 %v207, %v143
  %v272 = vmul.f32 %v208, %v144
  %v273 = vmul.f32 %v209, %v145
  %v274 = vmul.f32 %v210, %v146
  %v275 = vmul.f32 %v211, %v147
  %v276 = vmul.f32 %v212, %v148
  %v277 = vmul.f32 %v213, %v149
  %v278 = vmul.f32 %v214, %v150
  %v279 = vmul.f32 %v215, %v151
  %v280 = vmul.f32 %v216, %v152
  %vm281 = vcmask 190464
  %v282 = vsel %vm281, %v249, 0.0
  %283 = vadd.xlane.f32.xlu0 %v282
  %v284 = vpop.xlane.xlu0 %283
  %v285 = vsel %vm281, %v250, 0.0
  %286 = vadd.xlane.f32.xlu0 %v285
  %v287 = vpop.xlane.xlu0 %286
  %v288 = vsel %vm281, %v251, 0.0
  %289 = vadd.xlane.f32.xlu0 %v288
  %v290 = vpop.xlane.xlu0 %289
  %v291 = vsel %vm281, %v252, 0.0
  %292 = vadd.xlane.f32.xlu0 %v291
  %v293 = vpop.xlane.xlu0 %292
  %v294 = vsel %vm281, %v253, 0.0
  %295 = vadd.xlane.f32.xlu0 %v294
  %v296 = vpop.xlane.xlu0 %295
  %v297 = vsel %vm281, %v254, 0.0
  %298 = vadd.xlane.f32.xlu0 %v297
  %v299 = vpop.xlane.xlu0 %298
  %v300 = vsel %vm281, %v255, 0.0
  %301 = vadd.xlane.f32.xlu0 %v300
  %v302 = vpop.xlane.xlu0 %301
  %v303 = vsel %vm281, %v256, 0.0
  %304 = vadd.xlane.f32.xlu0 %v303
  %v305 = vpop.xlane.xlu0 %304
  %v306 = vsel %vm281, %v257, 0.0
  %307 = vadd.xlane.f32.xlu0 %v306
  %v308 = vpop.xlane.xlu0 %307
  %v309 = vsel %vm281, %v258, 0.0
  %310 = vadd.xlane.f32.xlu0 %v309
  %v311 = vpop.xlane.xlu0 %310
  %v312 = vsel %vm281, %v259, 0.0
  %313 = vadd.xlane.f32.xlu0 %v312
  %v314 = vpop.xlane.xlu0 %313
  %v315 = vsel %vm281, %v260, 0.0
  %316 = vadd.xlane.f32.xlu0 %v315
  %v317 = vpop.xlane.xlu0 %316
  %v318 = vsel %vm281, %v261, 0.0
  %319 = vadd.xlane.f32.xlu0 %v318
  %v320 = vpop.xlane.xlu0 %319
  %v321 = vsel %vm281, %v262, 0.0
  %322 = vadd.xlane.f32.xlu0 %v321
  %v323 = vpop.xlane.xlu0 %322
  %v324 = vsel %vm281, %v263, 0.0
  %325 = vadd.xlane.f32.xlu0 %v324
  %v326 = vpop.xlane.xlu0 %325
  %v327 = vsel %vm281, %v264, 0.0
  %328 = vadd.xlane.f32.xlu0 %v327
  %v329 = vpop.xlane.xlu0 %328
  %v330 = vsel %vm281, %v265, 0.0
  %331 = vadd.xlane.f32.xlu0 %v330
  %v332 = vpop.xlane.xlu0 %331
  %v333 = vsel %vm281, %v266, 0.0
  %334 = vadd.xlane.f32.xlu0 %v333
  %v335 = vpop.xlane.xlu0 %334
  %v336 = vsel %vm281, %v267, 0.0
  %337 = vadd.xlane.f32.xlu0 %v336
  %v338 = vpop.xlane.xlu0 %337
  %v339 = vsel %vm281, %v268, 0.0
  %340 = vadd.xlane.f32.xlu0 %v339
  %v341 = vpop.xlane.xlu0 %340
  %v342 = vsel %vm281, %v269, 0.0
  %343 = vadd.xlane.f32.xlu0 %v342
  %v344 = vpop.xlane.xlu0 %343
  %v345 = vsel %vm281, %v270, 0.0
  %346 = vadd.xlane.f32.xlu0 %v345
  %v347 = vpop.xlane.xlu0 %346
  %v348 = vsel %vm281, %v271, 0.0
  %349 = vadd.xlane.f32.xlu0 %v348
  %v350 = vpop.xlane.xlu0 %349
  %v351 = vsel %vm281, %v272, 0.0
  %352 = vadd.xlane.f32.xlu0 %v351
  %v353 = vpop.xlane.xlu0 %352
  %v354 = vsel %vm281, %v273, 0.0
  %355 = vadd.xlane.f32.xlu0 %v354
  %v356 = vpop.xlane.xlu0 %355
  %v357 = vsel %vm281, %v274, 0.0
  %358 = vadd.xlane.f32.xlu0 %v357
  %v359 = vpop.xlane.xlu0 %358
  %v360 = vsel %vm281, %v275, 0.0
  %361 = vadd.xlane.f32.xlu0 %v360
  %v362 = vpop.xlane.xlu0 %361
  %v363 = vsel %vm281, %v276, 0.0
  %364 = vadd.xlane.f32.xlu0 %v363
  %v365 = vpop.xlane.xlu0 %364
  %v366 = vsel %vm281, %v277, 0.0
  %367 = vadd.xlane.f32.xlu0 %v366
  %v368 = vpop.xlane.xlu0 %367
  %v369 = vsel %vm281, %v278, 0.0
  %370 = vadd.xlane.f32.xlu0 %v369
  %v371 = vpop.xlane.xlu0 %370
  %v372 = vsel %vm281, %v279, 0.0
  %373 = vadd.xlane.f32.xlu0 %v372
  %v374 = vpop.xlane.xlu0 %373
  %v375 = vsel %vm281, %v280, 0.0
  %376 = vadd.xlane.f32.xlu0 %v375
  %v377 = vpop.xlane.xlu0 %376
  %v378 = vsel %vm67, %v117, 0.0
  %379 = vadd.xlane.f32.xlu0 %v378
  %v380 = vpop.xlane.xlu0 %379
  %v381 = vsel %vm67, %v118, 0.0
  %382 = vadd.xlane.f32.xlu0 %v381
  %v383 = vpop.xlane.xlu0 %382
  %v384 = vsel %vm67, %v119, 0.0
  %385 = vadd.xlane.f32.xlu0 %v384
  %v386 = vpop.xlane.xlu0 %385
  %v387 = vsel %vm67, %v120, 0.0
  %388 = vadd.xlane.f32.xlu0 %v387
  %v389 = vpop.xlane.xlu0 %388
  %v390 = vld [vmem:[%s3] sm:$0xff]
  %v391 = vld [vmem:[%s3 + $0x8] sm:$0xff]
  %v392 = vld [vmem:[%s3 + $0x10] sm:$0xff]
  %v393 = vld [vmem:[%s3 + $0x18] sm:$0xff]
  %v394 = vmul.f32 %v117, %v390
  %v395 = vmul.f32 %v118, %v391
  %v396 = vmul.f32 %v119, %v392
  %v397 = vmul.f32 %v120, %v393
  %v398 = vsel %vm67, %v394, 0.0
  %399 = vadd.xlane.f32.xlu0 %v398
  %v400 = vpop.xlane.xlu0 %399
  %v401 = vsel %vm67, %v395, 0.0
  %402 = vadd.xlane.f32.xlu0 %v401
  %v403 = vpop.xlane.xlu0 %402
  %v404 = vsel %vm67, %v396, 0.0
  %405 = vadd.xlane.f32.xlu0 %v404
  %v406 = vpop.xlane.xlu0 %405
  %v407 = vsel %vm67, %v397, 0.0
  %408 = vadd.xlane.f32.xlu0 %v407
  %v409 = vpop.xlane.xlu0 %408
  %v410 = vadd.f32 %v380, 1e-10
  %v411 = vadd.f32 %v383, 1e-10
  %v412 = vadd.f32 %v386, 1e-10
  %v413 = vadd.f32 %v389, 1e-10
  %v414 = vrcp.pop %v410
  %v415 = vrcp.pop %v411
  %v416 = vrcp.pop %v412
  %v417 = vrcp.pop %v413
  %v418 = vmul.f32 %v400, %v414
  %v419 = vmul.f32 %v403, %v415
  %v420 = vmul.f32 %v406, %v416
  %v421 = vmul.f32 %v409, %v417
  %v422 = vld [vmem:[%s4] sm:$0xff]
  %v423 = vld [vmem:[%s4 + $0x8] sm:$0xff]
  %v424 = vld [vmem:[%s4 + $0x10] sm:$0xff]
  %v425 = vld [vmem:[%s4 + $0x18] sm:$0xff]
  %v430 = vperm.slane %v422, 0
  %v431 = vlaneseq
  %v432 = vshrl.u32 %v431, 7
  %434 = vset.pattern.permute.xlu0 %v432
  %435 = vperm.xlu0 %434, %v430
  %v436 = vpop.permute.xlu0 %435
  %v437 = vperm.slane %v422, 1
  %v438 = vlaneseq
  %v439 = vshrl.u32 %v438, 7
  %441 = vset.pattern.permute.xlu0 %v439
  %442 = vperm.xlu0 %441, %v437
  %v443 = vpop.permute.xlu0 %442
  %v444 = vperm.slane %v422, 2
  %v445 = vlaneseq
  %v446 = vshrl.u32 %v445, 7
  %448 = vset.pattern.permute.xlu0 %v446
  %449 = vperm.xlu0 %448, %v444
  %v450 = vpop.permute.xlu0 %449
  %v451 = vperm.slane %v422, 3
  %v452 = vlaneseq
  %v453 = vshrl.u32 %v452, 7
  %455 = vset.pattern.permute.xlu0 %v453
  %456 = vperm.xlu0 %455, %v451
  %v457 = vpop.permute.xlu0 %456
  %v458 = vperm.slane %v422, 4
  %v459 = vlaneseq
  %v460 = vshrl.u32 %v459, 7
  %462 = vset.pattern.permute.xlu0 %v460
  %463 = vperm.xlu0 %462, %v458
  %v464 = vpop.permute.xlu0 %463
  %v465 = vperm.slane %v422, 5
  %v466 = vlaneseq
  %v467 = vshrl.u32 %v466, 7
  %469 = vset.pattern.permute.xlu0 %v467
  %470 = vperm.xlu0 %469, %v465
  %v471 = vpop.permute.xlu0 %470
  %v472 = vperm.slane %v422, 6
  %v473 = vlaneseq
  %v474 = vshrl.u32 %v473, 7
  %476 = vset.pattern.permute.xlu0 %v474
  %477 = vperm.xlu0 %476, %v472
  %v478 = vpop.permute.xlu0 %477
  %v479 = vperm.slane %v422, 7
  %v480 = vlaneseq
  %v481 = vshrl.u32 %v480, 7
  %483 = vset.pattern.permute.xlu0 %v481
  %484 = vperm.xlu0 %483, %v479
  %v485 = vpop.permute.xlu0 %484
  %v486 = vperm.slane %v423, 0
  %v487 = vlaneseq
  %v488 = vshrl.u32 %v487, 7
  %490 = vset.pattern.permute.xlu0 %v488
  %491 = vperm.xlu0 %490, %v486
  %v492 = vpop.permute.xlu0 %491
  %v493 = vperm.slane %v423, 1
  %v494 = vlaneseq
  %v495 = vshrl.u32 %v494, 7
  %497 = vset.pattern.permute.xlu0 %v495
  %498 = vperm.xlu0 %497, %v493
  %v499 = vpop.permute.xlu0 %498
  %v500 = vperm.slane %v423, 2
  %v501 = vlaneseq
  %v502 = vshrl.u32 %v501, 7
  %504 = vset.pattern.permute.xlu0 %v502
  %505 = vperm.xlu0 %504, %v500
  %v506 = vpop.permute.xlu0 %505
  %v507 = vperm.slane %v423, 3
  %v508 = vlaneseq
  %v509 = vshrl.u32 %v508, 7
  %511 = vset.pattern.permute.xlu0 %v509
  %512 = vperm.xlu0 %511, %v507
  %v513 = vpop.permute.xlu0 %512
  %v514 = vperm.slane %v423, 4
  %v515 = vlaneseq
  %v516 = vshrl.u32 %v515, 7
  %518 = vset.pattern.permute.xlu0 %v516
  %519 = vperm.xlu0 %518, %v514
  %v520 = vpop.permute.xlu0 %519
  %v521 = vperm.slane %v423, 5
  %v522 = vlaneseq
  %v523 = vshrl.u32 %v522, 7
  %525 = vset.pattern.permute.xlu0 %v523
  %526 = vperm.xlu0 %525, %v521
  %v527 = vpop.permute.xlu0 %526
  %v528 = vperm.slane %v423, 6
  %v529 = vlaneseq
  %v530 = vshrl.u32 %v529, 7
  %532 = vset.pattern.permute.xlu0 %v530
  %533 = vperm.xlu0 %532, %v528
  %v534 = vpop.permute.xlu0 %533
  %v535 = vperm.slane %v423, 7
  %v536 = vlaneseq
  %v537 = vshrl.u32 %v536, 7
  %539 = vset.pattern.permute.xlu0 %v537
  %540 = vperm.xlu0 %539, %v535
  %v541 = vpop.permute.xlu0 %540
  %v542 = vperm.slane %v424, 0
  %v543 = vlaneseq
  %v544 = vshrl.u32 %v543, 7
  %546 = vset.pattern.permute.xlu0 %v544
  %547 = vperm.xlu0 %546, %v542
  %v548 = vpop.permute.xlu0 %547
  %v549 = vperm.slane %v424, 1
  %v550 = vlaneseq
  %v551 = vshrl.u32 %v550, 7
  %553 = vset.pattern.permute.xlu0 %v551
  %554 = vperm.xlu0 %553, %v549
  %v555 = vpop.permute.xlu0 %554
  %v556 = vperm.slane %v424, 2
  %v557 = vlaneseq
  %v558 = vshrl.u32 %v557, 7
  %560 = vset.pattern.permute.xlu0 %v558
  %561 = vperm.xlu0 %560, %v556
  %v562 = vpop.permute.xlu0 %561
  %v563 = vperm.slane %v424, 3
  %v564 = vlaneseq
  %v565 = vshrl.u32 %v564, 7
  %567 = vset.pattern.permute.xlu0 %v565
  %568 = vperm.xlu0 %567, %v563
  %v569 = vpop.permute.xlu0 %568
  %v570 = vperm.slane %v424, 4
  %v571 = vlaneseq
  %v572 = vshrl.u32 %v571, 7
  %574 = vset.pattern.permute.xlu0 %v572
  %575 = vperm.xlu0 %574, %v570
  %v576 = vpop.permute.xlu0 %575
  %v577 = vperm.slane %v424, 5
  %v578 = vlaneseq
  %v579 = vshrl.u32 %v578, 7
  %581 = vset.pattern.permute.xlu0 %v579
  %582 = vperm.xlu0 %581, %v577
  %v583 = vpop.permute.xlu0 %582
  %v584 = vperm.slane %v424, 6
  %v585 = vlaneseq
  %v586 = vshrl.u32 %v585, 7
  %588 = vset.pattern.permute.xlu0 %v586
  %589 = vperm.xlu0 %588, %v584
  %v590 = vpop.permute.xlu0 %589
  %v591 = vperm.slane %v424, 7
  %v592 = vlaneseq
  %v593 = vshrl.u32 %v592, 7
  %595 = vset.pattern.permute.xlu0 %v593
  %596 = vperm.xlu0 %595, %v591
  %v597 = vpop.permute.xlu0 %596
  %v598 = vperm.slane %v425, 0
  %v599 = vlaneseq
  %v600 = vshrl.u32 %v599, 7
  %602 = vset.pattern.permute.xlu0 %v600
  %603 = vperm.xlu0 %602, %v598
  %v604 = vpop.permute.xlu0 %603
  %v605 = vperm.slane %v425, 1
  %v606 = vlaneseq
  %v607 = vshrl.u32 %v606, 7
  %609 = vset.pattern.permute.xlu0 %v607
  %610 = vperm.xlu0 %609, %v605
  %v611 = vpop.permute.xlu0 %610
  %v612 = vperm.slane %v425, 2
  %v613 = vlaneseq
  %v614 = vshrl.u32 %v613, 7
  %616 = vset.pattern.permute.xlu0 %v614
  %617 = vperm.xlu0 %616, %v612
  %v618 = vpop.permute.xlu0 %617
  %v619 = vperm.slane %v425, 3
  %v620 = vlaneseq
  %v621 = vshrl.u32 %v620, 7
  %623 = vset.pattern.permute.xlu0 %v621
  %624 = vperm.xlu0 %623, %v619
  %v625 = vpop.permute.xlu0 %624
  %v626 = vperm.slane %v425, 4
  %v627 = vlaneseq
  %v628 = vshrl.u32 %v627, 7
  %630 = vset.pattern.permute.xlu0 %v628
  %631 = vperm.xlu0 %630, %v626
  %v632 = vpop.permute.xlu0 %631
  %v633 = vperm.slane %v425, 5
  %v634 = vlaneseq
  %v635 = vshrl.u32 %v634, 7
  %637 = vset.pattern.permute.xlu0 %v635
  %638 = vperm.xlu0 %637, %v633
  %v639 = vpop.permute.xlu0 %638
  %v640 = vperm.slane %v425, 6
  %v641 = vlaneseq
  %v642 = vshrl.u32 %v641, 7
  %644 = vset.pattern.permute.xlu0 %v642
  %645 = vperm.xlu0 %644, %v640
  %v646 = vpop.permute.xlu0 %645
  %v647 = vperm.slane %v425, 7
  %v648 = vlaneseq
  %v649 = vshrl.u32 %v648, 7
  %651 = vset.pattern.permute.xlu0 %v649
  %652 = vperm.xlu0 %651, %v647
  %v653 = vpop.permute.xlu0 %652
  %v686 = vsub.f32 %v284, %v436
  %v687 = vsub.f32 %v287, %v443
  %v688 = vsub.f32 %v290, %v450
  %v689 = vsub.f32 %v293, %v457
  %v690 = vsub.f32 %v296, %v464
  %v691 = vsub.f32 %v299, %v471
  %v692 = vsub.f32 %v302, %v478
  %v693 = vsub.f32 %v305, %v485
  %v694 = vsub.f32 %v308, %v492
  %v695 = vsub.f32 %v311, %v499
  %v696 = vsub.f32 %v314, %v506
  %v697 = vsub.f32 %v317, %v513
  %v698 = vsub.f32 %v320, %v520
  %v699 = vsub.f32 %v323, %v527
  %v700 = vsub.f32 %v326, %v534
  %v701 = vsub.f32 %v329, %v541
  %v702 = vsub.f32 %v332, %v548
  %v703 = vsub.f32 %v335, %v555
  %v704 = vsub.f32 %v338, %v562
  %v705 = vsub.f32 %v341, %v569
  %v706 = vsub.f32 %v344, %v576
  %v707 = vsub.f32 %v347, %v583
  %v708 = vsub.f32 %v350, %v590
  %v709 = vsub.f32 %v353, %v597
  %v710 = vsub.f32 %v356, %v604
  %v711 = vsub.f32 %v359, %v611
  %v712 = vsub.f32 %v362, %v618
  %v713 = vsub.f32 %v365, %v625
  %v714 = vsub.f32 %v368, %v632
  %v715 = vsub.f32 %v371, %v639
  %v716 = vsub.f32 %v374, %v646
  %v717 = vsub.f32 %v377, %v653
  %v718 = vand.u32 2147483647, %v686
  %v719 = vand.u32 2147483647, %v687
  %v720 = vand.u32 2147483647, %v688
  %v721 = vand.u32 2147483647, %v689
  %v722 = vand.u32 2147483647, %v690
  %v723 = vand.u32 2147483647, %v691
  %v724 = vand.u32 2147483647, %v692
  %v725 = vand.u32 2147483647, %v693
  %v726 = vand.u32 2147483647, %v694
  %v727 = vand.u32 2147483647, %v695
  %v728 = vand.u32 2147483647, %v696
  %v729 = vand.u32 2147483647, %v697
  %v730 = vand.u32 2147483647, %v698
  %v731 = vand.u32 2147483647, %v699
  %v732 = vand.u32 2147483647, %v700
  %v733 = vand.u32 2147483647, %v701
  %v734 = vand.u32 2147483647, %v702
  %v735 = vand.u32 2147483647, %v703
  %v736 = vand.u32 2147483647, %v704
  %v737 = vand.u32 2147483647, %v705
  %v738 = vand.u32 2147483647, %v706
  %v739 = vand.u32 2147483647, %v707
  %v740 = vand.u32 2147483647, %v708
  %v741 = vand.u32 2147483647, %v709
  %v742 = vand.u32 2147483647, %v710
  %v743 = vand.u32 2147483647, %v711
  %v744 = vand.u32 2147483647, %v712
  %v745 = vand.u32 2147483647, %v713
  %v746 = vand.u32 2147483647, %v714
  %v747 = vand.u32 2147483647, %v715
  %v748 = vand.u32 2147483647, %v716
  %v749 = vand.u32 2147483647, %v717
  %782 = vset.pattern.permute.xlu0 0
  %783 = vperm.xlu0 %782, %v718
  %v784 = vpop.permute.xlu0 %783
  %785 = vset.pattern.permute.xlu0 0
  %786 = vperm.xlu0 %785, %v719
  %v787 = vpop.permute.xlu0 %786
  %788 = vset.pattern.permute.xlu0 0
  %789 = vperm.xlu0 %788, %v720
  %v790 = vpop.permute.xlu0 %789
  %791 = vset.pattern.permute.xlu0 0
  %792 = vperm.xlu0 %791, %v721
  %v793 = vpop.permute.xlu0 %792
  %794 = vset.pattern.permute.xlu0 0
  %795 = vperm.xlu0 %794, %v722
  %v796 = vpop.permute.xlu0 %795
  %797 = vset.pattern.permute.xlu0 0
  %798 = vperm.xlu0 %797, %v723
  %v799 = vpop.permute.xlu0 %798
  %800 = vset.pattern.permute.xlu0 0
  %801 = vperm.xlu0 %800, %v724
  %v802 = vpop.permute.xlu0 %801
  %803 = vset.pattern.permute.xlu0 0
  %804 = vperm.xlu0 %803, %v725
  %v805 = vpop.permute.xlu0 %804
  %806 = vset.pattern.permute.xlu0 0
  %807 = vperm.xlu0 %806, %v726
  %v808 = vpop.permute.xlu0 %807
  %809 = vset.pattern.permute.xlu0 0
  %810 = vperm.xlu0 %809, %v727
  %v811 = vpop.permute.xlu0 %810
  %812 = vset.pattern.permute.xlu0 0
  %813 = vperm.xlu0 %812, %v728
  %v814 = vpop.permute.xlu0 %813
  %815 = vset.pattern.permute.xlu0 0
  %816 = vperm.xlu0 %815, %v729
  %v817 = vpop.permute.xlu0 %816
  %818 = vset.pattern.permute.xlu0 0
  %819 = vperm.xlu0 %818, %v730
  %v820 = vpop.permute.xlu0 %819
  %821 = vset.pattern.permute.xlu0 0
  %822 = vperm.xlu0 %821, %v731
  %v823 = vpop.permute.xlu0 %822
  %824 = vset.pattern.permute.xlu0 0
  %825 = vperm.xlu0 %824, %v732
  %v826 = vpop.permute.xlu0 %825
  %827 = vset.pattern.permute.xlu0 0
  %828 = vperm.xlu0 %827, %v733
  %v829 = vpop.permute.xlu0 %828
  %830 = vset.pattern.permute.xlu0 0
  %831 = vperm.xlu0 %830, %v734
  %v832 = vpop.permute.xlu0 %831
  %833 = vset.pattern.permute.xlu0 0
  %834 = vperm.xlu0 %833, %v735
  %v835 = vpop.permute.xlu0 %834
  %836 = vset.pattern.permute.xlu0 0
  %837 = vperm.xlu0 %836, %v736
  %v838 = vpop.permute.xlu0 %837
  %839 = vset.pattern.permute.xlu0 0
  %840 = vperm.xlu0 %839, %v737
  %v841 = vpop.permute.xlu0 %840
  %842 = vset.pattern.permute.xlu0 0
  %843 = vperm.xlu0 %842, %v738
  %v844 = vpop.permute.xlu0 %843
  %845 = vset.pattern.permute.xlu0 0
  %846 = vperm.xlu0 %845, %v739
  %v847 = vpop.permute.xlu0 %846
  %848 = vset.pattern.permute.xlu0 0
  %849 = vperm.xlu0 %848, %v740
  %v850 = vpop.permute.xlu0 %849
  %851 = vset.pattern.permute.xlu0 0
  %852 = vperm.xlu0 %851, %v741
  %v853 = vpop.permute.xlu0 %852
  %854 = vset.pattern.permute.xlu0 0
  %855 = vperm.xlu0 %854, %v742
  %v856 = vpop.permute.xlu0 %855
  %857 = vset.pattern.permute.xlu0 0
  %858 = vperm.xlu0 %857, %v743
  %v859 = vpop.permute.xlu0 %858
  %860 = vset.pattern.permute.xlu0 0
  %861 = vperm.xlu0 %860, %v744
  %v862 = vpop.permute.xlu0 %861
  %863 = vset.pattern.permute.xlu0 0
  %864 = vperm.xlu0 %863, %v745
  %v865 = vpop.permute.xlu0 %864
  %866 = vset.pattern.permute.xlu0 0
  %867 = vperm.xlu0 %866, %v746
  %v868 = vpop.permute.xlu0 %867
  %869 = vset.pattern.permute.xlu0 0
  %870 = vperm.xlu0 %869, %v747
  %v871 = vpop.permute.xlu0 %870
  %872 = vset.pattern.permute.xlu0 0
  %873 = vperm.xlu0 %872, %v748
  %v874 = vpop.permute.xlu0 %873
  %875 = vset.pattern.permute.xlu0 0
  %876 = vperm.xlu0 %875, %v749
  %v877 = vpop.permute.xlu0 %876
  %v878 = vlaneseq
  %v879 = vand.u32 %v878, 127
  %v880 = vperm.slane %v784, %v879
  %v881 = vperm.slane %v787, %v879
  %v882 = vperm.slane %v790, %v879
  %v883 = vperm.slane %v793, %v879
  %v884 = vperm.slane %v796, %v879
  %v885 = vperm.slane %v799, %v879
  %v886 = vperm.slane %v802, %v879
  %v887 = vperm.slane %v805, %v879
  %v888 = vperm.slane %v808, %v879
  %v889 = vperm.slane %v811, %v879
  %v890 = vperm.slane %v814, %v879
  %v891 = vperm.slane %v817, %v879
  %v892 = vperm.slane %v820, %v879
  %v893 = vperm.slane %v823, %v879
  %v894 = vperm.slane %v826, %v879
  %v895 = vperm.slane %v829, %v879
  %v896 = vperm.slane %v832, %v879
  %v897 = vperm.slane %v835, %v879
  %v898 = vperm.slane %v838, %v879
  %v899 = vperm.slane %v841, %v879
  %v900 = vperm.slane %v844, %v879
  %v901 = vperm.slane %v847, %v879
  %v902 = vperm.slane %v850, %v879
  %v903 = vperm.slane %v853, %v879
  %v904 = vperm.slane %v856, %v879
  %v905 = vperm.slane %v859, %v879
  %v906 = vperm.slane %v862, %v879
  %v907 = vperm.slane %v865, %v879
  %v908 = vperm.slane %v868, %v879
  %v909 = vperm.slane %v871, %v879
  %v910 = vperm.slane %v874, %v879
  %v911 = vperm.slane %v877, %v879
  %vm912 = vcmask 1041409
  %v913 = vsel %vm912, %v881, %v880
  %vm914 = vcmask 1042434
  %v915 = vsel %vm914, %v882, %v913
  %vm916 = vcmask 1043459
  %v917 = vsel %vm916, %v883, %v915
  %vm918 = vcmask 1044484
  %v919 = vsel %vm918, %v884, %v917
  %vm920 = vcmask 1045509
  %v921 = vsel %vm920, %v885, %v919
  %vm922 = vcmask 1046534
  %v923 = vsel %vm922, %v886, %v921
  %vm924 = vcmask 1047559
  %v925 = vsel %vm924, %v887, %v923
  %v926 = vsel %vm912, %v889, %v888
  %v927 = vsel %vm914, %v890, %v926
  %v928 = vsel %vm916, %v891, %v927
  %v929 = vsel %vm918, %v892, %v928
  %v930 = vsel %vm920, %v893, %v929
  %v931 = vsel %vm922, %v894, %v930
  %v932 = vsel %vm924, %v895, %v931
  %v933 = vsel %vm912, %v897, %v896
  %v934 = vsel %vm914, %v898, %v933
  %v935 = vsel %vm916, %v899, %v934
  %v936 = vsel %vm918, %v900, %v935
  %v937 = vsel %vm920, %v901, %v936
  %v938 = vsel %vm922, %v902, %v937
  %v939 = vsel %vm924, %v903, %v938
  %v940 = vsel %vm912, %v905, %v904
  %v941 = vsel %vm914, %v906, %v940
  %v942 = vsel %vm916, %v907, %v941
  %v943 = vsel %vm918, %v908, %v942
  %v944 = vsel %vm920, %v909, %v943
  %v945 = vsel %vm922, %v910, %v944
  %v946 = vsel %vm924, %v911, %v945
  %vm951 = vcmask 23552
  %v952 = vsel %vm951, %v925, 0.0
  %953 = vadd.xlane.f32.xlu0 %v952
  %v954 = vpop.xlane.xlu0 %953
  %v955 = vsel %vm951, %v932, 0.0
  %956 = vadd.xlane.f32.xlu0 %v955
  %v957 = vpop.xlane.xlu0 %956
  %v958 = vsel %vm951, %v939, 0.0
  %959 = vadd.xlane.f32.xlu0 %v958
  %v960 = vpop.xlane.xlu0 %959
  %v961 = vsel %vm951, %v946, 0.0
  %962 = vadd.xlane.f32.xlu0 %v961
  %v963 = vpop.xlane.xlu0 %962
  %v996 = vperm.slane %v284, %v879
  %v997 = vperm.slane %v287, %v879
  %v998 = vperm.slane %v290, %v879
  %v999 = vperm.slane %v293, %v879
  %v1000 = vperm.slane %v296, %v879
  %v1001 = vperm.slane %v299, %v879
  %v1002 = vperm.slane %v302, %v879
  %v1003 = vperm.slane %v305, %v879
  %v1004 = vperm.slane %v308, %v879
  %v1005 = vperm.slane %v311, %v879
  %v1006 = vperm.slane %v314, %v879
  %v1007 = vperm.slane %v317, %v879
  %v1008 = vperm.slane %v320, %v879
  %v1009 = vperm.slane %v323, %v879
  %v1010 = vperm.slane %v326, %v879
  %v1011 = vperm.slane %v329, %v879
  %v1012 = vperm.slane %v332, %v879
  %v1013 = vperm.slane %v335, %v879
  %v1014 = vperm.slane %v338, %v879
  %v1015 = vperm.slane %v341, %v879
  %v1016 = vperm.slane %v344, %v879
  %v1017 = vperm.slane %v347, %v879
  %v1018 = vperm.slane %v350, %v879
  %v1019 = vperm.slane %v353, %v879
  %v1020 = vperm.slane %v356, %v879
  %v1021 = vperm.slane %v359, %v879
  %v1022 = vperm.slane %v362, %v879
  %v1023 = vperm.slane %v365, %v879
  %v1024 = vperm.slane %v368, %v879
  %v1025 = vperm.slane %v371, %v879
  %v1026 = vperm.slane %v374, %v879
  %v1027 = vperm.slane %v377, %v879
  %v1028 = vsel %vm912, %v997, %v996
  %v1029 = vsel %vm914, %v998, %v1028
  %v1030 = vsel %vm916, %v999, %v1029
  %v1031 = vsel %vm918, %v1000, %v1030
  %v1032 = vsel %vm920, %v1001, %v1031
  %v1033 = vsel %vm922, %v1002, %v1032
  %v1034 = vsel %vm924, %v1003, %v1033
  %v1035 = vsel %vm912, %v1005, %v1004
  %v1036 = vsel %vm914, %v1006, %v1035
  %v1037 = vsel %vm916, %v1007, %v1036
  %v1038 = vsel %vm918, %v1008, %v1037
  %v1039 = vsel %vm920, %v1009, %v1038
  %v1040 = vsel %vm922, %v1010, %v1039
  %v1041 = vsel %vm924, %v1011, %v1040
  %v1042 = vsel %vm912, %v1013, %v1012
  %v1043 = vsel %vm914, %v1014, %v1042
  %v1044 = vsel %vm916, %v1015, %v1043
  %v1045 = vsel %vm918, %v1016, %v1044
  %v1046 = vsel %vm920, %v1017, %v1045
  %v1047 = vsel %vm922, %v1018, %v1046
  %v1048 = vsel %vm924, %v1019, %v1047
  %v1049 = vsel %vm912, %v1021, %v1020
  %v1050 = vsel %vm914, %v1022, %v1049
  %v1051 = vsel %vm916, %v1023, %v1050
  %v1052 = vsel %vm918, %v1024, %v1051
  %v1053 = vsel %vm920, %v1025, %v1052
  %v1054 = vsel %vm922, %v1026, %v1053
  %v1055 = vsel %vm924, %v1027, %v1054
  %1060 = vst.msk [vmem:[%s5] sm:$0xff] %vm951, %v1034
  %1061 = vst.msk [vmem:[%s5 + $0x8] sm:$0xff] %vm951, %v1041
  %1062 = vst.msk [vmem:[%s5 + $0x10] sm:$0xff] %vm951, %v1048
  %1063 = vst.msk [vmem:[%s5 + $0x18] sm:$0xff] %vm951, %v1055
  %vm1064 = vcmask 31768
  %1065 = vst.msk [vmem:[%s5] sm:$0xff] %vm1064, %v418
  %1066 = vst.msk [vmem:[%s5 + $0x8] sm:$0xff] %vm1064, %v419
  %1067 = vst.msk [vmem:[%s5 + $0x10] sm:$0xff] %vm1064, %v420
  %1068 = vst.msk [vmem:[%s5 + $0x18] sm:$0xff] %vm1064, %v421
  %vm1069 = vcmask 39968
  %1070 = vst.msk [vmem:[%s5] sm:$0xff] %vm1069, %v380
  %1071 = vst.msk [vmem:[%s5 + $0x8] sm:$0xff] %vm1069, %v383
  %1072 = vst.msk [vmem:[%s5 + $0x10] sm:$0xff] %vm1069, %v386
  %1073 = vst.msk [vmem:[%s5 + $0x18] sm:$0xff] %vm1069, %v389
  %vm1074 = vcmask 48168
  %1075 = vst.msk [vmem:[%s5] sm:$0xff] %vm1074, %v954
  %1076 = vst.msk [vmem:[%s5 + $0x8] sm:$0xff] %vm1074, %v957
  %1077 = vst.msk [vmem:[%s5 + $0x10] sm:$0xff] %vm1074, %v960
  %1078 = vst.msk [vmem:[%s5 + $0x18] sm:$0xff] %vm1074, %v963
  // Predicated region
  $region22: #{_forward_core.3} parent=0 // pred_check
    _
  $region23: #{_forward_core.3} parent=0 // pred_check_branch
    %1080 = sbr.rel (0) target = $region25
  $region24: #{_forward_core.3} parent=0 // pred_region
    _
  $region25: #{_forward_core.3} parent=0 // pred_fallthru
    _
  // Predicated region
  $region26: #{_forward_core.3} parent=0 // pred_check
    _
  $region27: #{_forward_core.3} parent=0 // pred_check_branch
    %1082 = sbr.rel (0) target = $region29
  $region28: #{_forward_core.3} parent=0 // pred_region
    _
  $region29: #{_forward_core.3} parent=0 // pred_fallthru
    _

// kernel: _forward_core.2
$region0: #{_forward_core.2}
  #allocation0 [shape = 'u32[]', space=smem, size = 0x4, offset = 0x4, fixed_abs, tag = 'smem constant byte address 0x4 - core index']
  #allocation1 [shape = 'u32[72,128]{1,0:T(1,128)}', space=vmem, size = 0x9000, scoped, tag = 'internal scratch']
  #allocation2 [shape = 'f32[1,1]{1,0:T(1,128)S(1)}', space=vmem, size = 0x200, scoped, tag = 'scoped memory for _forward_core.2']
  %s0 = inlined_call_operand.vmem [shape: f32[768,6], index: 0, kind: input, shape index: {}]
  %s1 = inlined_call_operand.vmem [shape: f32[3,32], index: 1, kind: input, shape index: {}]
  %s2 = inlined_call_operand.vmem [shape: f32[1,32], index: 2, kind: input, shape index: {}]
  %s3 = inlined_call_operand.vmem [shape: f32[32,32], index: 3, kind: input, shape index: {}]
  %s4 = inlined_call_operand.vmem [shape: f32[1,32], index: 4, kind: input, shape index: {}]
  %s5 = inlined_call_operand.vmem [shape: f32[32,1], index: 5, kind: input, shape index: {}]
  %s6 = inlined_call_operand.<no memory space> [shape: f32[1,1], index: 6, kind: input, shape index: {}]
  %s7 = inlined_call_operand.vmem [shape: f32[32,3], index: 7, kind: input, shape index: {}]
  %s8 = inlined_call_operand.vmem [shape: f32[32,32], index: 8, kind: input, shape index: {}]
  %s9 = inlined_call_operand.vmem [shape: f32[1,32], index: 9, kind: input, shape index: {}]
  %s10 = inlined_call_operand.vmem [shape: f32[6,32], index: 10, kind: input, shape index: {}]
  %s11 = inlined_call_operand.vmem [shape: f32[3,32], index: 11, kind: input, shape index: {}]
  %s12 = inlined_call_operand.vmem [shape: f32[32,32], index: 12, kind: input, shape index: {}]
  %s13 = inlined_call_operand.vmem [shape: f32[1,32], index: 13, kind: input, shape index: {}]
  %s14 = inlined_call_operand.vmem [shape: f32[32,32], index: 14, kind: input, shape index: {}]
  %s15 = inlined_call_operand.vmem [shape: f32[1,32], index: 15, kind: input, shape index: {}]
  %s16 = inlined_call_operand.vmem [shape: f32[32,3], index: 16, kind: input, shape index: {}]
  %s17 = inlined_call_operand.vmem [shape: f32[1,3], index: 17, kind: input, shape index: {}]
  %s18 = inlined_call_operand.vmem [shape: f32[768,7], index: 18, kind: output, shape index: {}]
  %s19 = sld [smem:[#allocation0]]
  $region82: #{_forward_core.2} parent=0
    _
  %s21 = ssub.s32 1, %s19
  %s22 = scalar_select 0, %s21, %s19
  %v23 = vstv %s6
  %24 = vst [vmem:[#allocation2] sm:$0x1] %v23
  // Predicated region
  $region2: #{_forward_core.2} parent=0 // pred_check
    _
  $region3: #{_forward_core.2} parent=0 // pred_check_branch
    %26 = sbr.rel (0) target = $region5
  $region4: #{_forward_core.2} parent=0 // pred_region
    _
  $region5: #{_forward_core.2} parent=0 // pred_fallthru
    _
  // Predicated region
  $region6: #{_forward_core.2} parent=0 // pred_check
    _
  $region7: #{_forward_core.2} parent=0 // pred_check_branch
    %28 = sbr.rel (0) target = $region9
  $region8: #{_forward_core.2} parent=0 // pred_region
    _
  $region9: #{_forward_core.2} parent=0 // pred_fallthru
    _
  // Predicated region
  $region10: #{_forward_core.2} parent=0 // pred_check
    _
  $region11: #{_forward_core.2} parent=0 // pred_check_branch
    %30 = sbr.rel (0) target = $region13
  $region12: #{_forward_core.2} parent=0 // pred_region
    _
  $region13: #{_forward_core.2} parent=0 // pred_fallthru
    _
  // Predicated region
  $region14: #{_forward_core.2} parent=0 // pred_check
    _
  $region15: #{_forward_core.2} parent=0 // pred_check_branch
    %32 = sbr.rel (0) target = $region17
  $region16: #{_forward_core.2} parent=0 // pred_region
    _
  $region17: #{_forward_core.2} parent=0 // pred_fallthru
    _
  // Predicated region
  $region18: #{_forward_core.2} parent=0 // pred_check
    _
  $region19: #{_forward_core.2} parent=0 // pred_check_branch
    %34 = sbr.rel (0) target = $region21
  $region20: #{_forward_core.2} parent=0 // pred_region
    _
  $region21: #{_forward_core.2} parent=0 // pred_fallthru
    _
  // Predicated region
  $region22: #{_forward_core.2} parent=0 // pred_check
    _
  $region23: #{_forward_core.2} parent=0 // pred_check_branch
    %36 = sbr.rel (0) target = $region25
  $region24: #{_forward_core.2} parent=0 // pred_region
    _
  $region25: #{_forward_core.2} parent=0 // pred_fallthru
    _
  // Predicated region
  $region26: #{_forward_core.2} parent=0 // pred_check
    _
  $region27: #{_forward_core.2} parent=0 // pred_check_branch
    %38 = sbr.rel (0) target = $region29
  $region28: #{_forward_core.2} parent=0 // pred_region
    _
  $region29: #{_forward_core.2} parent=0 // pred_fallthru
    _
  // Predicated region
  $region30: #{_forward_core.2} parent=0 // pred_check
    _
  $region31: #{_forward_core.2} parent=0 // pred_check_branch
    %40 = sbr.rel (0) target = $region33
  $region32: #{_forward_core.2} parent=0 // pred_region
    _
  $region33: #{_forward_core.2} parent=0 // pred_fallthru
    _
  // Predicated region
  $region34: #{_forward_core.2} parent=0 // pred_check
    _
  $region35: #{_forward_core.2} parent=0 // pred_check_branch
    %42 = sbr.rel (0) target = $region37
  $region36: #{_forward_core.2} parent=0 // pred_region
    _
  $region37: #{_forward_core.2} parent=0 // pred_fallthru
    _
  // Predicated region
  $region38: #{_forward_core.2} parent=0 // pred_check
    _
  $region39: #{_forward_core.2} parent=0 // pred_check_branch
    %44 = sbr.rel (0) target = $region41
  $region40: #{_forward_core.2} parent=0 // pred_region
    _
  $region41: #{_forward_core.2} parent=0 // pred_fallthru
    _
  // Predicated region
  $region42: #{_forward_core.2} parent=0 // pred_check
    _
  $region43: #{_forward_core.2} parent=0 // pred_check_branch
    %46 = sbr.rel (0) target = $region45
  $region44: #{_forward_core.2} parent=0 // pred_region
    _
  $region45: #{_forward_core.2} parent=0 // pred_fallthru
    _
  // Predicated region
  $region46: #{_forward_core.2} parent=0 // pred_check
    _
  $region47: #{_forward_core.2} parent=0 // pred_check_branch
    %48 = sbr.rel (0) target = $region49
  $region48: #{_forward_core.2} parent=0 // pred_region
    _
  $region49: #{_forward_core.2} parent=0 // pred_fallthru
    _
  // Predicated region
  $region50: #{_forward_core.2} parent=0 // pred_check
    _
  $region51: #{_forward_core.2} parent=0 // pred_check_branch
    %50 = sbr.rel (0) target = $region53
  $region52: #{_forward_core.2} parent=0 // pred_region
    _
  $region53: #{_forward_core.2} parent=0 // pred_fallthru
    _
  // Predicated region
  $region54: #{_forward_core.2} parent=0 // pred_check
    _
  $region55: #{_forward_core.2} parent=0 // pred_check_branch
    %52 = sbr.rel (0) target = $region57
  $region56: #{_forward_core.2} parent=0 // pred_region
    _
  $region57: #{_forward_core.2} parent=0 // pred_fallthru
    _
  // Predicated region
  $region58: #{_forward_core.2} parent=0 // pred_check
    _
  $region59: #{_forward_core.2} parent=0 // pred_check_branch
    %54 = sbr.rel (0) target = $region61
  $region60: #{_forward_core.2} parent=0 // pred_region
    _
  $region61: #{_forward_core.2} parent=0 // pred_fallthru
    _
  // Predicated region
  $region62: #{_forward_core.2} parent=0 // pred_check
    _
  $region63: #{_forward_core.2} parent=0 // pred_check_branch
    %56 = sbr.rel (0) target = $region65
  $region64: #{_forward_core.2} parent=0 // pred_region
    _
  $region65: #{_forward_core.2} parent=0 // pred_fallthru
    _
  // Predicated region
  $region66: #{_forward_core.2} parent=0 // pred_check
    _
  $region67: #{_forward_core.2} parent=0 // pred_check_branch
    %58 = sbr.rel (0) target = $region69
  $region68: #{_forward_core.2} parent=0 // pred_region
    _
  $region69: #{_forward_core.2} parent=0 // pred_fallthru
    _
  // Predicated region
  $region70: #{_forward_core.2} parent=0 // pred_check
    _
  $region71: #{_forward_core.2} parent=0 // pred_check_branch
    %60 = sbr.rel (0) target = $region73
  $region72: #{_forward_core.2} parent=0 // pred_region
    _
  $region73: #{_forward_core.2} parent=0 // pred_fallthru
    _
  %v61 = vld [vmem:[%s0] sm:$0xff]
  %v62 = vld [vmem:[%s0 + $0x8] sm:$0xff]
  %v63 = vld [vmem:[%s0 + $0x10] sm:$0xff]
  %v64 = vld [vmem:[%s0 + $0x18] sm:$0xff]
  %v65 = vld [vmem:[%s0 + $0x20] sm:$0xff]
  %v66 = vld [vmem:[%s0 + $0x28] sm:$0xff]
  %v67 = vld [vmem:[%s0 + $0x30] sm:$0xff]
  %v68 = vld [vmem:[%s0 + $0x38] sm:$0xff]
  %v69 = vld [vmem:[%s0 + $0x40] sm:$0xff]
  %v70 = vld [vmem:[%s0 + $0x48] sm:$0xff]
  %v71 = vld [vmem:[%s0 + $0x50] sm:$0xff]
  %v72 = vld [vmem:[%s0 + $0x58] sm:$0xff]
  %v73 = vld [vmem:[%s0 + $0x60] sm:$0xff]
  %v74 = vld [vmem:[%s0 + $0x68] sm:$0xff]
  %v75 = vld [vmem:[%s0 + $0x70] sm:$0xff]
  %v76 = vld [vmem:[%s0 + $0x78] sm:$0xff]
  %v77 = vld [vmem:[%s0 + $0x80] sm:$0xff]
  %v78 = vld [vmem:[%s0 + $0x88] sm:$0xff]
  %v79 = vld [vmem:[%s0 + $0x90] sm:$0xff]
  %v80 = vld [vmem:[%s0 + $0x98] sm:$0xff]
  %v81 = vld [vmem:[%s0 + $0xa0] sm:$0xff]
  %v82 = vld [vmem:[%s0 + $0xa8] sm:$0xff]
  %v83 = vld [vmem:[%s0 + $0xb0] sm:$0xff]
  %v84 = vld [vmem:[%s0 + $0xb8] sm:$0xff]
  %v85 = vld [vmem:[%s0 + $0xc0] sm:$0xff]
  %v86 = vld [vmem:[%s0 + $0xc8] sm:$0xff]
  %v87 = vld [vmem:[%s0 + $0xd0] sm:$0xff]
  %v88 = vld [vmem:[%s0 + $0xd8] sm:$0xff]
  %v89 = vld [vmem:[%s0 + $0xe0] sm:$0xff]
  %v90 = vld [vmem:[%s0 + $0xe8] sm:$0xff]
  %v91 = vld [vmem:[%s0 + $0xf0] sm:$0xff]
  %v92 = vld [vmem:[%s0 + $0xf8] sm:$0xff]
  %v93 = vld [vmem:[%s0 + $0x100] sm:$0xff]
  %v94 = vld [vmem:[%s0 + $0x108] sm:$0xff]
  %v95 = vld [vmem:[%s0 + $0x110] sm:$0xff]
  %v96 = vld [vmem:[%s0 + $0x118] sm:$0xff]
  %v97 = vld [vmem:[%s0 + $0x120] sm:$0xff]
  %v98 = vld [vmem:[%s0 + $0x128] sm:$0xff]
  %v99 = vld [vmem:[%s0 + $0x130] sm:$0xff]
  %v100 = vld [vmem:[%s0 + $0x138] sm:$0xff]
  %v101 = vld [vmem:[%s0 + $0x140] sm:$0xff]
  %v102 = vld [vmem:[%s0 + $0x148] sm:$0xff]
  %v103 = vld [vmem:[%s0 + $0x150] sm:$0xff]
  %v104 = vld [vmem:[%s0 + $0x158] sm:$0xff]
  %v105 = vld [vmem:[%s0 + $0x160] sm:$0xff]
  %v106 = vld [vmem:[%s0 + $0x168] sm:$0xff]
  %v107 = vld [vmem:[%s0 + $0x170] sm:$0xff]
  %v108 = vld [vmem:[%s0 + $0x178] sm:$0xff]
  %v109 = vld [vmem:[%s0 + $0x180] sm:$0xff]
  %v110 = vld [vmem:[%s0 + $0x188] sm:$0xff]
  %v111 = vld [vmem:[%s0 + $0x190] sm:$0xff]
  %v112 = vld [vmem:[%s0 + $0x198] sm:$0xff]
  %v113 = vld [vmem:[%s0 + $0x1a0] sm:$0xff]
  %v114 = vld [vmem:[%s0 + $0x1a8] sm:$0xff]
  %v115 = vld [vmem:[%s0 + $0x1b0] sm:$0xff]
  %v116 = vld [vmem:[%s0 + $0x1b8] sm:$0xff]
  %v117 = vld [vmem:[%s0 + $0x1c0] sm:$0xff]
  %v118 = vld [vmem:[%s0 + $0x1c8] sm:$0xff]
  %v119 = vld [vmem:[%s0 + $0x1d0] sm:$0xff]
  %v120 = vld [vmem:[%s0 + $0x1d8] sm:$0xff]
  %v121 = vld [vmem:[%s0 + $0x1e0] sm:$0xff]
  %v122 = vld [vmem:[%s0 + $0x1e8] sm:$0xff]
  %v123 = vld [vmem:[%s0 + $0x1f0] sm:$0xff]
  %v124 = vld [vmem:[%s0 + $0x1f8] sm:$0xff]
  %v125 = vld [vmem:[%s0 + $0x200] sm:$0xff]
  %v126 = vld [vmem:[%s0 + $0x208] sm:$0xff]
  %v127 = vld [vmem:[%s0 + $0x210] sm:$0xff]
  %v128 = vld [vmem:[%s0 + $0x218] sm:$0xff]
  %v129 = vld [vmem:[%s0 + $0x220] sm:$0xff]
  %v130 = vld [vmem:[%s0 + $0x228] sm:$0xff]
  %v131 = vld [vmem:[%s0 + $0x230] sm:$0xff]
  %v132 = vld [vmem:[%s0 + $0x238] sm:$0xff]
  %v133 = vld [vmem:[%s0 + $0x240] sm:$0xff]
  %v134 = vld [vmem:[%s0 + $0x248] sm:$0xff]
  %v135 = vld [vmem:[%s0 + $0x250] sm:$0xff]
  %v136 = vld [vmem:[%s0 + $0x258] sm:$0xff]
  %v137 = vld [vmem:[%s0 + $0x260] sm:$0xff]
  %v138 = vld [vmem:[%s0 + $0x268] sm:$0xff]
  %v139 = vld [vmem:[%s0 + $0x270] sm:$0xff]
  %v140 = vld [vmem:[%s0 + $0x278] sm:$0xff]
  %v141 = vld [vmem:[%s0 + $0x280] sm:$0xff]
  %v142 = vld [vmem:[%s0 + $0x288] sm:$0xff]
  %v143 = vld [vmem:[%s0 + $0x290] sm:$0xff]
  %v144 = vld [vmem:[%s0 + $0x298] sm:$0xff]
  %v145 = vld [vmem:[%s0 + $0x2a0] sm:$0xff]
  %v146 = vld [vmem:[%s0 + $0x2a8] sm:$0xff]
  %v147 = vld [vmem:[%s0 + $0x2b0] sm:$0xff]
  %v148 = vld [vmem:[%s0 + $0x2b8] sm:$0xff]
  %v149 = vld [vmem:[%s0 + $0x2c0] sm:$0xff]
  %v150 = vld [vmem:[%s0 + $0x2c8] sm:$0xff]
  %v151 = vld [vmem:[%s0 + $0x2d0] sm:$0xff]
  %v152 = vld [vmem:[%s0 + $0x2d8] sm:$0xff]
  %v153 = vld [vmem:[%s0 + $0x2e0] sm:$0xff]
  %v154 = vld [vmem:[%s0 + $0x2e8] sm:$0xff]
  %v155 = vld [vmem:[%s0 + $0x2f0] sm:$0xff]
  %v156 = vld [vmem:[%s0 + $0x2f8] sm:$0xff]
  %v157 = vld [vmem:[%s1] sm:$0x7]
  %v158 = vld [vmem:[%s2] sm:$0x1]
  %v160 = vperm.slane %v158, 0
  %vm162 = vcmask 23552
  %v164 = vsel %vm162, %v61, 0
  %v167 = vsel %vm162, %v62, 0
  %v170 = vsel %vm162, %v63, 0
  %v173 = vsel %vm162, %v64, 0
  %v176 = vsel %vm162, %v65, 0
  %v179 = vsel %vm162, %v66, 0
  %v182 = vsel %vm162, %v67, 0
  %v185 = vsel %vm162, %v68, 0
  %v188 = vsel %vm162, %v69, 0
  %v191 = vsel %vm162, %v70, 0
  %v194 = vsel %vm162, %v71, 0
  %v197 = vsel %vm162, %v72, 0
  %v200 = vsel %vm162, %v73, 0
  %v203 = vsel %vm162, %v74, 0
  %v206 = vsel %vm162, %v75, 0
  %v209 = vsel %vm162, %v76, 0
  %v212 = vsel %vm162, %v77, 0
  %v215 = vsel %vm162, %v78, 0
  %v218 = vsel %vm162, %v79, 0
  %v221 = vsel %vm162, %v80, 0
  %v224 = vsel %vm162, %v81, 0
  %v227 = vsel %vm162, %v82, 0
  %v230 = vsel %vm162, %v83, 0
  %v233 = vsel %vm162, %v84, 0
  %v236 = vsel %vm162, %v85, 0
  %v239 = vsel %vm162, %v86, 0
  %v242 = vsel %vm162, %v87, 0
  %v245 = vsel %vm162, %v88, 0
  %v248 = vsel %vm162, %v89, 0
  %v251 = vsel %vm162, %v90, 0
  %v254 = vsel %vm162, %v91, 0
  %v257 = vsel %vm162, %v92, 0
  %v260 = vsel %vm162, %v93, 0
  %v263 = vsel %vm162, %v94, 0
  %v266 = vsel %vm162, %v95, 0
  %v269 = vsel %vm162, %v96, 0
  %v272 = vsel %vm162, %v97, 0
  %v275 = vsel %vm162, %v98, 0
  %v278 = vsel %vm162, %v99, 0
  %v281 = vsel %vm162, %v100, 0
  %v284 = vsel %vm162, %v101, 0
  %v287 = vsel %vm162, %v102, 0
  %v290 = vsel %vm162, %v103, 0
  %v293 = vsel %vm162, %v104, 0
  %v296 = vsel %vm162, %v105, 0
  %v299 = vsel %vm162, %v106, 0
  %v302 = vsel %vm162, %v107, 0
  %v305 = vsel %vm162, %v108, 0
  %v308 = vsel %vm162, %v109, 0
  %v311 = vsel %vm162, %v110, 0
  %v314 = vsel %vm162, %v111, 0
  %v317 = vsel %vm162, %v112, 0
  %v320 = vsel %vm162, %v113, 0
  %v323 = vsel %vm162, %v114, 0
  %v326 = vsel %vm162, %v115, 0
  %v329 = vsel %vm162, %v116, 0
  %v332 = vsel %vm162, %v117, 0
  %v335 = vsel %vm162, %v118, 0
  %v338 = vsel %vm162, %v119, 0
  %v341 = vsel %vm162, %v120, 0
  %v344 = vsel %vm162, %v121, 0
  %v347 = vsel %vm162, %v122, 0
  %v350 = vsel %vm162, %v123, 0
  %v353 = vsel %vm162, %v124, 0
  %v356 = vsel %vm162, %v125, 0
  %v359 = vsel %vm162, %v126, 0
  %v362 = vsel %vm162, %v127, 0
  %v365 = vsel %vm162, %v128, 0
  %v368 = vsel %vm162, %v129, 0
  %v371 = vsel %vm162, %v130, 0
  %v374 = vsel %vm162, %v131, 0
  %v377 = vsel %vm162, %v132, 0
  %v380 = vsel %vm162, %v133, 0
  %v383 = vsel %vm162, %v134, 0
  %v386 = vsel %vm162, %v135, 0
  %v389 = vsel %vm162, %v136, 0
  %v392 = vsel %vm162, %v137, 0
  %v395 = vsel %vm162, %v138, 0
  %v398 = vsel %vm162, %v139, 0
  %v401 = vsel %vm162, %v140, 0
  %v404 = vsel %vm162, %v141, 0
  %v407 = vsel %vm162, %v142, 0
  %v410 = vsel %vm162, %v143, 0
  %v413 = vsel %vm162, %v144, 0
  %v416 = vsel %vm162, %v145, 0
  %v419 = vsel %vm162, %v146, 0
  %v422 = vsel %vm162, %v147, 0
  %v425 = vsel %vm162, %v148, 0
  %v428 = vsel %vm162, %v149, 0
  %v431 = vsel %vm162, %v150, 0
  %v434 = vsel %vm162, %v151, 0
  %v437 = vsel %vm162, %v152, 0
  %v440 = vsel %vm162, %v153, 0
  %v443 = vsel %vm162, %v154, 0
  %v446 = vsel %vm162, %v155, 0
  %v449 = vsel %vm162, %v156, 0
  %vm451 = vcmask 1042432
  %v453 = vsel %vm451, %v157, 0
  %455 = vmatpush.msra.mxu0 0.0
  %456 = vmatpush.msra.mxu0 0.0
  %457 = vmatpush.msra.mxu0 0.0
  %458 = vmatpush.msra.mxu0 0.0
  %459 = vmatpush.msra.mxu0 0.0
  %460 = vmatpush.msra.mxu0 0.0
  %461 = vmatpush.msra.mxu0 0.0
  %462 = vmatpush.msra.mxu0 0.0
  %463 = vmatpush.msra.mxu0 0.0
  %464 = vmatpush.msra.mxu0 0.0
  %465 = vmatpush.msra.mxu0 0.0
  %466 = vmatpush.msra.mxu0 0.0
  %467 = vmatpush.msra.mxu0 0.0
  %468 = vmatpush.msra.mxu0 0.0
  %469 = vmatpush.msra.mxu0 0.0
  %470 = vmatpush.msra.mxu0 %v453
  %471 = vmatmul.f32.gmra.mxu0 %v164
  %v472 = vpop.f32.mrf.mxu0
  %v473 = vadd.f32 %v160, %v472
  %474 = vmatmul.f32.gmra.mxu0 %v167
  %v475 = vpop.f32.mrf.mxu0
  %v476 = vadd.f32 %v160, %v475
  %477 = vmatmul.f32.gmra.mxu0 %v170
  %v478 = vpop.f32.mrf.mxu0
  %v479 = vadd.f32 %v160, %v478
  %480 = vmatmul.f32.gmra.mxu0 %v173
  %v481 = vpop.f32.mrf.mxu0
  %v482 = vadd.f32 %v160, %v481
  %483 = vmatmul.f32.gmra.mxu0 %v176
  %v484 = vpop.f32.mrf.mxu0
  %v485 = vadd.f32 %v160, %v484
  %486 = vmatmul.f32.gmra.mxu0 %v179
  %v487 = vpop.f32.mrf.mxu0
  %v488 = vadd.f32 %v160, %v487
  %489 = vmatmul.f32.gmra.mxu0 %v182
  %v490 = vpop.f32.mrf.mxu0
  %v491 = vadd.f32 %v160, %v490
  %492 = vmatmul.f32.gmra.mxu0 %v185
  %v493 = vpop.f32.mrf.mxu0
  %v494 = vadd.f32 %v160, %v493
  %495 = vmatmul.f32.gmra.mxu0 %v188
  %v496 = vpop.f32.mrf.mxu0
  %v497 = vadd.f32 %v160, %v496
  %498 = vmatmul.f32.gmra.mxu0 %v191
  %v499 = vpop.f32.mrf.mxu0
  %v500 = vadd.f32 %v160, %v499
  %501 = vmatmul.f32.gmra.mxu0 %v194
  %v502 = vpop.f32.mrf.mxu0
  %v503 = vadd.f32 %v160, %v502
  %504 = vmatmul.f32.gmra.mxu0 %v197
  %v505 = vpop.f32.mrf.mxu0
  %v506 = vadd.f32 %v160, %v505
  %507 = vmatmul.f32.gmra.mxu0 %v200
  %v508 = vpop.f32.mrf.mxu0
  %v509 = vadd.f32 %v160, %v508
  %510 = vmatmul.f32.gmra.mxu0 %v203
  %v511 = vpop.f32.mrf.mxu0
  %v512 = vadd.f32 %v160, %v511
  %513 = vmatmul.f32.gmra.mxu0 %v206
  %v514 = vpop.f32.mrf.mxu0
  %v515 = vadd.f32 %v160, %v514
  %516 = vmatmul.f32.gmra.mxu0 %v209
  %v517 = vpop.f32.mrf.mxu0
  %v518 = vadd.f32 %v160, %v517
  %519 = vmatmul.f32.gmra.mxu0 %v212
  %v520 = vpop.f32.mrf.mxu0
  %v521 = vadd.f32 %v160, %v520
  %522 = vmatmul.f32.gmra.mxu0 %v215
  %v523 = vpop.f32.mrf.mxu0
  %v524 = vadd.f32 %v160, %v523
  %525 = vmatmul.f32.gmra.mxu0 %v218
  %v526 = vpop.f32.mrf.mxu0
  %v527 = vadd.f32 %v160, %v526
  %528 = vmatmul.f32.gmra.mxu0 %v221
  %v529 = vpop.f32.mrf.mxu0
  %v530 = vadd.f32 %v160, %v529
  %531 = vmatmul.f32.gmra.mxu0 %v224
  %v532 = vpop.f32.mrf.mxu0
  %v533 = vadd.f32 %v160, %v532
  %534 = vmatmul.f32.gmra.mxu0 %v227
  %v535 = vpop.f32.mrf.mxu0
  %v536 = vadd.f32 %v160, %v535
  %537 = vmatmul.f32.gmra.mxu0 %v230
  %v538 = vpop.f32.mrf.mxu0
  %v539 = vadd.f32 %v160, %v538
  %540 = vmatmul.f32.gmra.mxu0 %v233
  %v541 = vpop.f32.mrf.mxu0
  %v542 = vadd.f32 %v160, %v541
  %543 = vmatmul.f32.gmra.mxu0 %v236
  %v544 = vpop.f32.mrf.mxu0
  %v545 = vadd.f32 %v160, %v544
  %546 = vmatmul.f32.gmra.mxu0 %v239
  %v547 = vpop.f32.mrf.mxu0
  %v548 = vadd.f32 %v160, %v547
  %549 = vmatmul.f32.gmra.mxu0 %v242
  %v550 = vpop.f32.mrf.mxu0
  %v551 = vadd.f32 %v160, %v550
  %552 = vmatmul.f32.gmra.mxu0 %v245
  %v553 = vpop.f32.mrf.mxu0
  %v554 = vadd.f32 %v160, %v553
  %555 = vmatmul.f32.gmra.mxu0 %v248
  %v556 = vpop.f32.mrf.mxu0
  %v557 = vadd.f32 %v160, %v556
  %558 = vmatmul.f32.gmra.mxu0 %v251
  %v559 = vpop.f32.mrf.mxu0
  %v560 = vadd.f32 %v160, %v559
  %561 = vmatmul.f32.gmra.mxu0 %v254
  %v562 = vpop.f32.mrf.mxu0
  %v563 = vadd.f32 %v160, %v562
  %564 = vmatmul.f32.gmra.mxu0 %v257
  %v565 = vpop.f32.mrf.mxu0
  %v566 = vadd.f32 %v160, %v565
  %567 = vmatmul.f32.gmra.mxu0 %v260
  %v568 = vpop.f32.mrf.mxu0
  %v569 = vadd.f32 %v160, %v568
  %570 = vmatmul.f32.gmra.mxu0 %v263
  %v571 = vpop.f32.mrf.mxu0
  %v572 = vadd.f32 %v160, %v571
  %573 = vmatmul.f32.gmra.mxu0 %v266
  %v574 = vpop.f32.mrf.mxu0
  %v575 = vadd.f32 %v160, %v574
  %576 = vmatmul.f32.gmra.mxu0 %v269
  %v577 = vpop.f32.mrf.mxu0
  %v578 = vadd.f32 %v160, %v577
  %579 = vmatmul.f32.gmra.mxu0 %v272
  %v580 = vpop.f32.mrf.mxu0
  %v581 = vadd.f32 %v160, %v580
  %582 = vmatmul.f32.gmra.mxu0 %v275
  %v583 = vpop.f32.mrf.mxu0
  %v584 = vadd.f32 %v160, %v583
  %585 = vmatmul.f32.gmra.mxu0 %v278
  %v586 = vpop.f32.mrf.mxu0
  %v587 = vadd.f32 %v160, %v586
  %588 = vmatmul.f32.gmra.mxu0 %v281
  %v589 = vpop.f32.mrf.mxu0
  %v590 = vadd.f32 %v160, %v589
  %591 = vmatmul.f32.gmra.mxu0 %v284
  %v592 = vpop.f32.mrf.mxu0
  %v593 = vadd.f32 %v160, %v592
  %594 = vmatmul.f32.gmra.mxu0 %v287
  %v595 = vpop.f32.mrf.mxu0
  %v596 = vadd.f32 %v160, %v595
  %597 = vmatmul.f32.gmra.mxu0 %v290
  %v598 = vpop.f32.mrf.mxu0
  %v599 = vadd.f32 %v160, %v598
  %600 = vmatmul.f32.gmra.mxu0 %v293
  %v601 = vpop.f32.mrf.mxu0
  %v602 = vadd.f32 %v160, %v601
  %603 = vmatmul.f32.gmra.mxu0 %v296
  %v604 = vpop.f32.mrf.mxu0
  %v605 = vadd.f32 %v160, %v604
  %606 = vmatmul.f32.gmra.mxu0 %v299
  %v607 = vpop.f32.mrf.mxu0
  %v608 = vadd.f32 %v160, %v607
  %609 = vmatmul.f32.gmra.mxu0 %v302
  %v610 = vpop.f32.mrf.mxu0
  %v611 = vadd.f32 %v160, %v610
  %612 = vmatmul.f32.gmra.mxu0 %v305
  %v613 = vpop.f32.mrf.mxu0
  %v614 = vadd.f32 %v160, %v613
  %615 = vmatmul.f32.gmra.mxu0 %v308
  %v616 = vpop.f32.mrf.mxu0
  %v617 = vadd.f32 %v160, %v616
  %618 = vmatmul.f32.gmra.mxu0 %v311
  %v619 = vpop.f32.mrf.mxu0
  %v620 = vadd.f32 %v160, %v619
  %621 = vmatmul.f32.gmra.mxu0 %v314
  %v622 = vpop.f32.mrf.mxu0
  %v623 = vadd.f32 %v160, %v622
  %624 = vmatmul.f32.gmra.mxu0 %v317
  %v625 = vpop.f32.mrf.mxu0
  %v626 = vadd.f32 %v160, %v625
  %627 = vmatmul.f32.gmra.mxu0 %v320
  %v628 = vpop.f32.mrf.mxu0
  %v629 = vadd.f32 %v160, %v628
  %630 = vmatmul.f32.gmra.mxu0 %v323
  %v631 = vpop.f32.mrf.mxu0
  %v632 = vadd.f32 %v160, %v631
  %633 = vmatmul.f32.gmra.mxu0 %v326
  %v634 = vpop.f32.mrf.mxu0
  %v635 = vadd.f32 %v160, %v634
  %636 = vmatmul.f32.gmra.mxu0 %v329
  %v637 = vpop.f32.mrf.mxu0
  %v638 = vadd.f32 %v160, %v637
  %639 = vmatmul.f32.gmra.mxu0 %v332
  %v640 = vpop.f32.mrf.mxu0
  %v641 = vadd.f32 %v160, %v640
  %642 = vmatmul.f32.gmra.mxu0 %v335
  %v643 = vpop.f32.mrf.mxu0
  %v644 = vadd.f32 %v160, %v643
  %645 = vmatmul.f32.gmra.mxu0 %v338
  %v646 = vpop.f32.mrf.mxu0
  %v647 = vadd.f32 %v160, %v646
  %648 = vmatmul.f32.gmra.mxu0 %v341
  %v649 = vpop.f32.mrf.mxu0
  %v650 = vadd.f32 %v160, %v649
  %651 = vmatmul.f32.gmra.mxu0 %v344
  %v652 = vpop.f32.mrf.mxu0
  %v653 = vadd.f32 %v160, %v652
  %654 = vmatmul.f32.gmra.mxu0 %v347
  %v655 = vpop.f32.mrf.mxu0
  %v656 = vadd.f32 %v160, %v655
  %657 = vmatmul.f32.gmra.mxu0 %v350
  %v658 = vpop.f32.mrf.mxu0
  %v659 = vadd.f32 %v160, %v658
  %660 = vmatmul.f32.gmra.mxu0 %v353
  %v661 = vpop.f32.mrf.mxu0
  %v662 = vadd.f32 %v160, %v661
  %663 = vmatmul.f32.gmra.mxu0 %v356
  %v664 = vpop.f32.mrf.mxu0
  %v665 = vadd.f32 %v160, %v664
  %666 = vmatmul.f32.gmra.mxu0 %v359
  %v667 = vpop.f32.mrf.mxu0
  %v668 = vadd.f32 %v160, %v667
  %669 = vmatmul.f32.gmra.mxu0 %v362
  %v670 = vpop.f32.mrf.mxu0
  %v671 = vadd.f32 %v160, %v670
  %672 = vmatmul.f32.gmra.mxu0 %v365
  %v673 = vpop.f32.mrf.mxu0
  %v674 = vadd.f32 %v160, %v673
  %675 = vmatmul.f32.gmra.mxu0 %v368
  %v676 = vpop.f32.mrf.mxu0
  %v677 = vadd.f32 %v160, %v676
  %678 = vmatmul.f32.gmra.mxu0 %v371
  %v679 = vpop.f32.mrf.mxu0
  %v680 = vadd.f32 %v160, %v679
  %681 = vmatmul.f32.gmra.mxu0 %v374
  %v682 = vpop.f32.mrf.mxu0
  %v683 = vadd.f32 %v160, %v682
  %684 = vmatmul.f32.gmra.mxu0 %v377
  %v685 = vpop.f32.mrf.mxu0
  %v686 = vadd.f32 %v160, %v685
  %687 = vmatmul.f32.gmra.mxu0 %v380
  %v688 = vpop.f32.mrf.mxu0
  %v689 = vadd.f32 %v160, %v688
  %690 = vmatmul.f32.gmra.mxu0 %v383
  %v691 = vpop.f32.mrf.mxu0
  %v692 = vadd.f32 %v160, %v691
  %693 = vmatmul.f32.gmra.mxu0 %v386
  %v694 = vpop.f32.mrf.mxu0
  %v695 = vadd.f32 %v160, %v694
  %696 = vmatmul.f32.gmra.mxu0 %v389
  %v697 = vpop.f32.mrf.mxu0
  %v698 = vadd.f32 %v160, %v697
  %699 = vmatmul.f32.gmra.mxu0 %v392
  %v700 = vpop.f32.mrf.mxu0
  %v701 = vadd.f32 %v160, %v700
  %702 = vmatmul.f32.gmra.mxu0 %v395
  %v703 = vpop.f32.mrf.mxu0
  %v704 = vadd.f32 %v160, %v703
  %705 = vmatmul.f32.gmra.mxu0 %v398
  %v706 = vpop.f32.mrf.mxu0
  %v707 = vadd.f32 %v160, %v706
  %708 = vmatmul.f32.gmra.mxu0 %v401
  %v709 = vpop.f32.mrf.mxu0
  %v710 = vadd.f32 %v160, %v709
  %711 = vmatmul.f32.gmra.mxu0 %v404
  %v712 = vpop.f32.mrf.mxu0
  %v713 = vadd.f32 %v160, %v712
  %714 = vmatmul.f32.gmra.mxu0 %v407
  %v715 = vpop.f32.mrf.mxu0
  %v716 = vadd.f32 %v160, %v715
  %717 = vmatmul.f32.gmra.mxu0 %v410
  %v718 = vpop.f32.mrf.mxu0
  %v719 = vadd.f32 %v160, %v718
  %720 = vmatmul.f32.gmra.mxu0 %v413
  %v721 = vpop.f32.mrf.mxu0
  %v722 = vadd.f32 %v160, %v721
  %723 = vmatmul.f32.gmra.mxu0 %v416
  %v724 = vpop.f32.mrf.mxu0
  %v725 = vadd.f32 %v160, %v724
  %726 = vmatmul.f32.gmra.mxu0 %v419
  %v727 = vpop.f32.mrf.mxu0
  %v728 = vadd.f32 %v160, %v727
  %729 = vmatmul.f32.gmra.mxu0 %v422
  %v730 = vpop.f32.mrf.mxu0
  %v731 = vadd.f32 %v160, %v730
  %732 = vmatmul.f32.gmra.mxu0 %v425
  %v733 = vpop.f32.mrf.mxu0
  %v734 = vadd.f32 %v160, %v733
  %735 = vmatmul.f32.gmra.mxu0 %v428
  %v736 = vpop.f32.mrf.mxu0
  %v737 = vadd.f32 %v160, %v736
  %738 = vmatmul.f32.gmra.mxu0 %v431
  %v739 = vpop.f32.mrf.mxu0
  %v740 = vadd.f32 %v160, %v739
  %741 = vmatmul.f32.gmra.mxu0 %v434
  %v742 = vpop.f32.mrf.mxu0
  %v743 = vadd.f32 %v160, %v742
  %744 = vmatmul.f32.gmra.mxu0 %v437
  %v745 = vpop.f32.mrf.mxu0
  %v746 = vadd.f32 %v160, %v745
  %747 = vmatmul.f32.gmra.mxu0 %v440
  %v748 = vpop.f32.mrf.mxu0
  %v749 = vadd.f32 %v160, %v748
  %750 = vmatmul.f32.gmra.mxu0 %v443
  %v751 = vpop.f32.mrf.mxu0
  %v752 = vadd.f32 %v160, %v751
  %753 = vmatmul.f32.gmra.mxu0 %v446
  %v754 = vpop.f32.mrf.mxu0
  %v755 = vadd.f32 %v160, %v754
  %756 = vmatmul.f32.gmra.mxu0 %v449
  %v757 = vpop.f32.mrf.mxu0
  %v758 = vadd.f32 %v160, %v757
  %759 = vdwg.mxu0
  %v760 = vmin.f32 %v473, 20.0
  %v761 = vmin.f32 %v476, 20.0
  %v762 = vmin.f32 %v479, 20.0
  %v763 = vmin.f32 %v482, 20.0
  %v764 = vmin.f32 %v485, 20.0
  %v765 = vmin.f32 %v488, 20.0
  %v766 = vmin.f32 %v491, 20.0
  %v767 = vmin.f32 %v494, 20.0
  %v768 = vmin.f32 %v497, 20.0
  %v769 = vmin.f32 %v500, 20.0
  %v770 = vmin.f32 %v503, 20.0
  %v771 = vmin.f32 %v506, 20.0
  %v772 = vmin.f32 %v509, 20.0
  %v773 = vmin.f32 %v512, 20.0
  %v774 = vmin.f32 %v515, 20.0
  %v775 = vmin.f32 %v518, 20.0
  %v776 = vmin.f32 %v521, 20.0
  %v777 = vmin.f32 %v524, 20.0
  %v778 = vmin.f32 %v527, 20.0
  %v779 = vmin.f32 %v530, 20.0
  %v780 = vmin.f32 %v533, 20.0
  %v781 = vmin.f32 %v536, 20.0
  %v782 = vmin.f32 %v539, 20.0
  %v783 = vmin.f32 %v542, 20.0
  %v784 = vmin.f32 %v545, 20.0
  %v785 = vmin.f32 %v548, 20.0
  %v786 = vmin.f32 %v551, 20.0
  %v787 = vmin.f32 %v554, 20.0
  %v788 = vmin.f32 %v557, 20.0
  %v789 = vmin.f32 %v560, 20.0
  %v790 = vmin.f32 %v563, 20.0
  %v791 = vmin.f32 %v566, 20.0
  %v792 = vmin.f32 %v569, 20.0
  %v793 = vmin.f32 %v572, 20.0
  %v794 = vmin.f32 %v575, 20.0
  %v795 = vmin.f32 %v578, 20.0
  %v796 = vmin.f32 %v581, 20.0
  %v797 = vmin.f32 %v584, 20.0
  %v798 = vmin.f32 %v587, 20.0
  %v799 = vmin.f32 %v590, 20.0
  %v800 = vmin.f32 %v593, 20.0
  %v801 = vmin.f32 %v596, 20.0
  %v802 = vmin.f32 %v599, 20.0
  %v803 = vmin.f32 %v602, 20.0
  %v804 = vmin.f32 %v605, 20.0
  %v805 = vmin.f32 %v608, 20.0
  %v806 = vmin.f32 %v611, 20.0
  %v807 = vmin.f32 %v614, 20.0
  %v808 = vmin.f32 %v617, 20.0
  %v809 = vmin.f32 %v620, 20.0
  %v810 = vmin.f32 %v623, 20.0
  %v811 = vmin.f32 %v626, 20.0
  %v812 = vmin.f32 %v629, 20.0
  %v813 = vmin.f32 %v632, 20.0
  %v814 = vmin.f32 %v635, 20.0
  %v815 = vmin.f32 %v638, 20.0
  %v816 = vmin.f32 %v641, 20.0
  %v817 = vmin.f32 %v644, 20.0
  %v818 = vmin.f32 %v647, 20.0
  %v819 = vmin.f32 %v650, 20.0
  %v820 = vmin.f32 %v653, 20.0
  %v821 = vmin.f32 %v656, 20.0
  %v822 = vmin.f32 %v659, 20.0
  %v823 = vmin.f32 %v662, 20.0
  %v824 = vmin.f32 %v665, 20.0
  %v825 = vmin.f32 %v668, 20.0
  %v826 = vmin.f32 %v671, 20.0
  %v827 = vmin.f32 %v674, 20.0
  %v828 = vmin.f32 %v677, 20.0
  %v829 = vmin.f32 %v680, 20.0
  %v830 = vmin.f32 %v683, 20.0
  %v831 = vmin.f32 %v686, 20.0
  %v832 = vmin.f32 %v689, 20.0
  %v833 = vmin.f32 %v692, 20.0
  %v834 = vmin.f32 %v695, 20.0
  %v835 = vmin.f32 %v698, 20.0
  %v836 = vmin.f32 %v701, 20.0
  %v837 = vmin.f32 %v704, 20.0
  %v838 = vmin.f32 %v707, 20.0
  %v839 = vmin.f32 %v710, 20.0
  %v840 = vmin.f32 %v713, 20.0
  %v841 = vmin.f32 %v716, 20.0
  %v842 = vmin.f32 %v719, 20.0
  %v843 = vmin.f32 %v722, 20.0
  %v844 = vmin.f32 %v725, 20.0
  %v845 = vmin.f32 %v728, 20.0
  %v846 = vmin.f32 %v731, 20.0
  %v847 = vmin.f32 %v734, 20.0
  %v848 = vmin.f32 %v737, 20.0
  %v849 = vmin.f32 %v740, 20.0
  %v850 = vmin.f32 %v743, 20.0
  %v851 = vmin.f32 %v746, 20.0
  %v852 = vmin.f32 %v749, 20.0
  %v853 = vmin.f32 %v752, 20.0
  %v854 = vmin.f32 %v755, 20.0
  %v855 = vmin.f32 %v758, 20.0
  %v856 = vmul.f32 %v760, 1.442695
  %v857 = vpow.pop %v856
  %v858 = vmul.f32 %v761, 1.442695
  %v859 = vpow.pop %v858
  %v860 = vmul.f32 %v762, 1.442695
  %v861 = vpow.pop %v860
  %v862 = vmul.f32 %v763, 1.442695
  %v863 = vpow.pop %v862
  %v864 = vmul.f32 %v764, 1.442695
  %v865 = vpow.pop %v864
  %v866 = vmul.f32 %v765, 1.442695
  %v867 = vpow.pop %v866
  %v868 = vmul.f32 %v766, 1.442695
  %v869 = vpow.pop %v868
  %v870 = vmul.f32 %v767, 1.442695
  %v871 = vpow.pop %v870
  %v872 = vmul.f32 %v768, 1.442695
  %v873 = vpow.pop %v872
  %v874 = vmul.f32 %v769, 1.442695
  %v875 = vpow.pop %v874
  %v876 = vmul.f32 %v770, 1.442695
  %v877 = vpow.pop %v876
  %v878 = vmul.f32 %v771, 1.442695
  %v879 = vpow.pop %v878
  %v880 = vmul.f32 %v772, 1.442695
  %v881 = vpow.pop %v880
  %v882 = vmul.f32 %v773, 1.442695
  %v883 = vpow.pop %v882
  %v884 = vmul.f32 %v774, 1.442695
  %v885 = vpow.pop %v884
  %v886 = vmul.f32 %v775, 1.442695
  %v887 = vpow.pop %v886
  %v888 = vmul.f32 %v776, 1.442695
  %v889 = vpow.pop %v888
  %v890 = vmul.f32 %v777, 1.442695
  %v891 = vpow.pop %v890
  %v892 = vmul.f32 %v778, 1.442695
  %v893 = vpow.pop %v892
  %v894 = vmul.f32 %v779, 1.442695
  %v895 = vpow.pop %v894
  %v896 = vmul.f32 %v780, 1.442695
  %v897 = vpow.pop %v896
  %v898 = vmul.f32 %v781, 1.442695
  %v899 = vpow.pop %v898
  %v900 = vmul.f32 %v782, 1.442695
  %v901 = vpow.pop %v900
  %v902 = vmul.f32 %v783, 1.442695
  %v903 = vpow.pop %v902
  %v904 = vmul.f32 %v784, 1.442695
  %v905 = vpow.pop %v904
  %v906 = vmul.f32 %v785, 1.442695
  %v907 = vpow.pop %v906
  %v908 = vmul.f32 %v786, 1.442695
  %v909 = vpow.pop %v908
  %v910 = vmul.f32 %v787, 1.442695
  %v911 = vpow.pop %v910
  %v912 = vmul.f32 %v788, 1.442695
  %v913 = vpow.pop %v912
  %v914 = vmul.f32 %v789, 1.442695
  %v915 = vpow.pop %v914
  %v916 = vmul.f32 %v790, 1.442695
  %v917 = vpow.pop %v916
  %v918 = vmul.f32 %v791, 1.442695
  %v919 = vpow.pop %v918
  %v920 = vmul.f32 %v792, 1.442695
  %v921 = vpow.pop %v920
  %v922 = vmul.f32 %v793, 1.442695
  %v923 = vpow.pop %v922
  %v924 = vmul.f32 %v794, 1.442695
  %v925 = vpow.pop %v924
  %v926 = vmul.f32 %v795, 1.442695
  %v927 = vpow.pop %v926
  %v928 = vmul.f32 %v796, 1.442695
  %v929 = vpow.pop %v928
  %v930 = vmul.f32 %v797, 1.442695
  %v931 = vpow.pop %v930
  %v932 = vmul.f32 %v798, 1.442695
  %v933 = vpow.pop %v932
  %v934 = vmul.f32 %v799, 1.442695
  %v935 = vpow.pop %v934
  %v936 = vmul.f32 %v800, 1.442695
  %v937 = vpow.pop %v936
  %v938 = vmul.f32 %v801, 1.442695
  %v939 = vpow.pop %v938
  %v940 = vmul.f32 %v802, 1.442695
  %v941 = vpow.pop %v940
  %v942 = vmul.f32 %v803, 1.442695
  %v943 = vpow.pop %v942
  %v944 = vmul.f32 %v804, 1.442695
  %v945 = vpow.pop %v944
  %v946 = vmul.f32 %v805, 1.442695
  %v947 = vpow.pop %v946
  %v948 = vmul.f32 %v806, 1.442695
  %v949 = vpow.pop %v948
  %v950 = vmul.f32 %v807, 1.442695
  %v951 = vpow.pop %v950
  %v952 = vmul.f32 %v808, 1.442695
  %v953 = vpow.pop %v952
  %v954 = vmul.f32 %v809, 1.442695
  %v955 = vpow.pop %v954
  %v956 = vmul.f32 %v810, 1.442695
  %v957 = vpow.pop %v956
  %v958 = vmul.f32 %v811, 1.442695
  %v959 = vpow.pop %v958
  %v960 = vmul.f32 %v812, 1.442695
  %v961 = vpow.pop %v960
  %v962 = vmul.f32 %v813, 1.442695
  %v963 = vpow.pop %v962
  %v964 = vmul.f32 %v814, 1.442695
  %v965 = vpow.pop %v964
  %v966 = vmul.f32 %v815, 1.442695
  %v967 = vpow.pop %v966
  %v968 = vmul.f32 %v816, 1.442695
  %v969 = vpow.pop %v968
  %v970 = vmul.f32 %v817, 1.442695
  %v971 = vpow.pop %v970
  %v972 = vmul.f32 %v818, 1.442695
  %v973 = vpow.pop %v972
  %v974 = vmul.f32 %v819, 1.442695
  %v975 = vpow.pop %v974
  %v976 = vmul.f32 %v820, 1.442695
  %v977 = vpow.pop %v976
  %v978 = vmul.f32 %v821, 1.442695
  %v979 = vpow.pop %v978
  %v980 = vmul.f32 %v822, 1.442695
  %v981 = vpow.pop %v980
  %v982 = vmul.f32 %v823, 1.442695
  %v983 = vpow.pop %v982
  %v984 = vmul.f32 %v824, 1.442695
  %v985 = vpow.pop %v984
  %v986 = vmul.f32 %v825, 1.442695
  %v987 = vpow.pop %v986
  %v988 = vmul.f32 %v826, 1.442695
  %v989 = vpow.pop %v988
  %v990 = vmul.f32 %v827, 1.442695
  %v991 = vpow.pop %v990
  %v992 = vmul.f32 %v828, 1.442695
  %v993 = vpow.pop %v992
  %v994 = vmul.f32 %v829, 1.442695
  %v995 = vpow.pop %v994
  %v996 = vmul.f32 %v830, 1.442695
  %v997 = vpow.pop %v996
  %v998 = vmul.f32 %v831, 1.442695
  %v999 = vpow.pop %v998
  %v1000 = vmul.f32 %v832, 1.442695
  %v1001 = vpow.pop %v1000
  %v1002 = vmul.f32 %v833, 1.442695
  %v1003 = vpow.pop %v1002
  %v1004 = vmul.f32 %v834, 1.442695
  %v1005 = vpow.pop %v1004
  %v1006 = vmul.f32 %v835, 1.442695
  %v1007 = vpow.pop %v1006
  %v1008 = vmul.f32 %v836, 1.442695
  %v1009 = vpow.pop %v1008
  %v1010 = vmul.f32 %v837, 1.442695
  %v1011 = vpow.pop %v1010
  %v1012 = vmul.f32 %v838, 1.442695
  %v1013 = vpow.pop %v1012
  %v1014 = vmul.f32 %v839, 1.442695
  %v1015 = vpow.pop %v1014
  %v1016 = vmul.f32 %v840, 1.442695
  %v1017 = vpow.pop %v1016
  %v1018 = vmul.f32 %v841, 1.442695
  %v1019 = vpow.pop %v1018
  %v1020 = vmul.f32 %v842, 1.442695
  %v1021 = vpow.pop %v1020
  %v1022 = vmul.f32 %v843, 1.442695
  %v1023 = vpow.pop %v1022
  %v1024 = vmul.f32 %v844, 1.442695
  %v1025 = vpow.pop %v1024
  %v1026 = vmul.f32 %v845, 1.442695
  %v1027 = vpow.pop %v1026
  %v1028 = vmul.f32 %v846, 1.442695
  %v1029 = vpow.pop %v1028
  %v1030 = vmul.f32 %v847, 1.442695
  %v1031 = vpow.pop %v1030
  %v1032 = vmul.f32 %v848, 1.442695
  %v1033 = vpow.pop %v1032
  %v1034 = vmul.f32 %v849, 1.442695
  %v1035 = vpow.pop %v1034
  %v1036 = vmul.f32 %v850, 1.442695
  %v1037 = vpow.pop %v1036
  %v1038 = vmul.f32 %v851, 1.442695
  %v1039 = vpow.pop %v1038
  %v1040 = vmul.f32 %v852, 1.442695
  %v1041 = vpow.pop %v1040
  %v1042 = vmul.f32 %v853, 1.442695
  %v1043 = vpow.pop %v1042
  %v1044 = vmul.f32 %v854, 1.442695
  %v1045 = vpow.pop %v1044
  %v1046 = vmul.f32 %v855, 1.442695
  %v1047 = vpow.pop %v1046
  %v1048 = vadd.f32 %v857, 1.0
  %v1049 = vadd.f32 %v859, 1.0
  %v1050 = vadd.f32 %v861, 1.0
  %v1051 = vadd.f32 %v863, 1.0
  %v1052 = vadd.f32 %v865, 1.0
  %v1053 = vadd.f32 %v867, 1.0
  %v1054 = vadd.f32 %v869, 1.0
  %v1055 = vadd.f32 %v871, 1.0
  %v1056 = vadd.f32 %v873, 1.0
  %v1057 = vadd.f32 %v875, 1.0
  %v1058 = vadd.f32 %v877, 1.0
  %v1059 = vadd.f32 %v879, 1.0
  %v1060 = vadd.f32 %v881, 1.0
  %v1061 = vadd.f32 %v883, 1.0
  %v1062 = vadd.f32 %v885, 1.0
  %v1063 = vadd.f32 %v887, 1.0
  %v1064 = vadd.f32 %v889, 1.0
  %v1065 = vadd.f32 %v891, 1.0
  %v1066 = vadd.f32 %v893, 1.0
  %v1067 = vadd.f32 %v895, 1.0
  %v1068 = vadd.f32 %v897, 1.0
  %v1069 = vadd.f32 %v899, 1.0
  %v1070 = vadd.f32 %v901, 1.0
  %v1071 = vadd.f32 %v903, 1.0
  %v1072 = vadd.f32 %v905, 1.0
  %v1073 = vadd.f32 %v907, 1.0
  %v1074 = vadd.f32 %v909, 1.0
  %v1075 = vadd.f32 %v911, 1.0
  %v1076 = vadd.f32 %v913, 1.0
  %v1077 = vadd.f32 %v915, 1.0
  %v1078 = vadd.f32 %v917, 1.0
  %v1079 = vadd.f32 %v919, 1.0
  %v1080 = vadd.f32 %v921, 1.0
  %v1081 = vadd.f32 %v923, 1.0
  %v1082 = vadd.f32 %v925, 1.0
  %v1083 = vadd.f32 %v927, 1.0
  %v1084 = vadd.f32 %v929, 1.0
  %v1085 = vadd.f32 %v931, 1.0
  %v1086 = vadd.f32 %v933, 1.0
  %v1087 = vadd.f32 %v935, 1.0
  %v1088 = vadd.f32 %v937, 1.0
  %v1089 = vadd.f32 %v939, 1.0
  %v1090 = vadd.f32 %v941, 1.0
  %v1091 = vadd.f32 %v943, 1.0
  %v1092 = vadd.f32 %v945, 1.0
  %v1093 = vadd.f32 %v947, 1.0
  %v1094 = vadd.f32 %v949, 1.0
  %v1095 = vadd.f32 %v951, 1.0
  %v1096 = vadd.f32 %v953, 1.0
  %v1097 = vadd.f32 %v955, 1.0
  %v1098 = vadd.f32 %v957, 1.0
  %v1099 = vadd.f32 %v959, 1.0
  %v1100 = vadd.f32 %v961, 1.0
  %v1101 = vadd.f32 %v963, 1.0
  %v1102 = vadd.f32 %v965, 1.0
  %v1103 = vadd.f32 %v967, 1.0
  %v1104 = vadd.f32 %v969, 1.0
  %v1105 = vadd.f32 %v971, 1.0
  %v1106 = vadd.f32 %v973, 1.0
  %v1107 = vadd.f32 %v975, 1.0
  %v1108 = vadd.f32 %v977, 1.0
  %v1109 = vadd.f32 %v979, 1.0
  %v1110 = vadd.f32 %v981, 1.0
  %v1111 = vadd.f32 %v983, 1.0
  %v1112 = vadd.f32 %v985, 1.0
  %v1113 = vadd.f32 %v987, 1.0
  %v1114 = vadd.f32 %v989, 1.0
  %v1115 = vadd.f32 %v991, 1.0
  %v1116 = vadd.f32 %v993, 1.0
  %v1117 = vadd.f32 %v995, 1.0
  %v1118 = vadd.f32 %v997, 1.0
  %v1119 = vadd.f32 %v999, 1.0
  %v1120 = vadd.f32 %v1001, 1.0
  %v1121 = vadd.f32 %v1003, 1.0
  %v1122 = vadd.f32 %v1005, 1.0
  %v1123 = vadd.f32 %v1007, 1.0
  %v1124 = vadd.f32 %v1009, 1.0
  %v1125 = vadd.f32 %v1011, 1.0
  %v1126 = vadd.f32 %v1013, 1.0
  %v1127 = vadd.f32 %v1015, 1.0
  %v1128 = vadd.f32 %v1017, 1.0
  %v1129 = vadd.f32 %v1019, 1.0
  %v1130 = vadd.f32 %v1021, 1.0
  %v1131 = vadd.f32 %v1023, 1.0
  %v1132 = vadd.f32 %v1025, 1.0
  %v1133 = vadd.f32 %v1027, 1.0
  %v1134 = vadd.f32 %v1029, 1.0
  %v1135 = vadd.f32 %v1031, 1.0
  %v1136 = vadd.f32 %v1033, 1.0
  %v1137 = vadd.f32 %v1035, 1.0
  %v1138 = vadd.f32 %v1037, 1.0
  %v1139 = vadd.f32 %v1039, 1.0
  %v1140 = vadd.f32 %v1041, 1.0
  %v1141 = vadd.f32 %v1043, 1.0
  %v1142 = vadd.f32 %v1045, 1.0
  %v1143 = vadd.f32 %v1047, 1.0
  %v1144 = vrcp.pop %v1048
  %v1145 = vrcp.pop %v1049
  %v1146 = vrcp.pop %v1050
  %v1147 = vrcp.pop %v1051
  %v1148 = vrcp.pop %v1052
  %v1149 = vrcp.pop %v1053
  %v1150 = vrcp.pop %v1054
  %v1151 = vrcp.pop %v1055
  %v1152 = vrcp.pop %v1056
  %v1153 = vrcp.pop %v1057
  %v1154 = vrcp.pop %v1058
  %v1155 = vrcp.pop %v1059
  %v1156 = vrcp.pop %v1060
  %v1157 = vrcp.pop %v1061
  %v1158 = vrcp.pop %v1062
  %v1159 = vrcp.pop %v1063
  %v1160 = vrcp.pop %v1064
  %v1161 = vrcp.pop %v1065
  %v1162 = vrcp.pop %v1066
  %v1163 = vrcp.pop %v1067
  %v1164 = vrcp.pop %v1068
  %v1165 = vrcp.pop %v1069
  %v1166 = vrcp.pop %v1070
  %v1167 = vrcp.pop %v1071
  %v1168 = vrcp.pop %v1072
  %v1169 = vrcp.pop %v1073
  %v1170 = vrcp.pop %v1074
  %v1171 = vrcp.pop %v1075
  %v1172 = vrcp.pop %v1076
  %v1173 = vrcp.pop %v1077
  %v1174 = vrcp.pop %v1078
  %v1175 = vrcp.pop %v1079
  %v1176 = vrcp.pop %v1080
  %v1177 = vrcp.pop %v1081
  %v1178 = vrcp.pop %v1082
  %v1179 = vrcp.pop %v1083
  %v1180 = vrcp.pop %v1084
  %v1181 = vrcp.pop %v1085
  %v1182 = vrcp.pop %v1086
  %v1183 = vrcp.pop %v1087
  %v1184 = vrcp.pop %v1088
  %v1185 = vrcp.pop %v1089
  %v1186 = vrcp.pop %v1090
  %v1187 = vrcp.pop %v1091
  %v1188 = vrcp.pop %v1092
  %v1189 = vrcp.pop %v1093
  %v1190 = vrcp.pop %v1094
  %v1191 = vrcp.pop %v1095
  %v1192 = vrcp.pop %v1096
  %v1193 = vrcp.pop %v1097
  %v1194 = vrcp.pop %v1098
  %v1195 = vrcp.pop %v1099
  %v1196 = vrcp.pop %v1100
  %v1197 = vrcp.pop %v1101
  %v1198 = vrcp.pop %v1102
  %v1199 = vrcp.pop %v1103
  %v1200 = vrcp.pop %v1104
  %v1201 = vrcp.pop %v1105
  %v1202 = vrcp.pop %v1106
  %v1203 = vrcp.pop %v1107
  %v1204 = vrcp.pop %v1108
  %v1205 = vrcp.pop %v1109
  %v1206 = vrcp.pop %v1110
  %v1207 = vrcp.pop %v1111
  %v1208 = vrcp.pop %v1112
  %v1209 = vrcp.pop %v1113
  %v1210 = vrcp.pop %v1114
  %v1211 = vrcp.pop %v1115
  %v1212 = vrcp.pop %v1116
  %v1213 = vrcp.pop %v1117
  %v1214 = vrcp.pop %v1118
  %v1215 = vrcp.pop %v1119
  %v1216 = vrcp.pop %v1120
  %v1217 = vrcp.pop %v1121
  %v1218 = vrcp.pop %v1122
  %v1219 = vrcp.pop %v1123
  %v1220 = vrcp.pop %v1124
  %v1221 = vrcp.pop %v1125
  %v1222 = vrcp.pop %v1126
  %v1223 = vrcp.pop %v1127
  %v1224 = vrcp.pop %v1128
  %v1225 = vrcp.pop %v1129
  %v1226 = vrcp.pop %v1130
  %v1227 = vrcp.pop %v1131
  %v1228 = vrcp.pop %v1132
  %v1229 = vrcp.pop %v1133
  %v1230 = vrcp.pop %v1134
  %v1231 = vrcp.pop %v1135
  %v1232 = vrcp.pop %v1136
  %v1233 = vrcp.pop %v1137
  %v1234 = vrcp.pop %v1138
  %v1235 = vrcp.pop %v1139
  %v1236 = vrcp.pop %v1140
  %v1237 = vrcp.pop %v1141
  %v1238 = vrcp.pop %v1142
  %v1239 = vrcp.pop %v1143
  %vm1240 = vcmp.gt.f32.partialorder %v473, 20.0
  %vm1241 = vcmp.gt.f32.partialorder %v476, 20.0
  %vm1242 = vcmp.gt.f32.partialorder %v479, 20.0
  %vm1243 = vcmp.gt.f32.partialorder %v482, 20.0
  %vm1244 = vcmp.gt.f32.partialorder %v485, 20.0
  %vm1245 = vcmp.gt.f32.partialorder %v488, 20.0
  %vm1246 = vcmp.gt.f32.partialorder %v491, 20.0
  %vm1247 = vcmp.gt.f32.partialorder %v494, 20.0
  %vm1248 = vcmp.gt.f32.partialorder %v497, 20.0
  %vm1249 = vcmp.gt.f32.partialorder %v500, 20.0
  %vm1250 = vcmp.gt.f32.partialorder %v503, 20.0
  %vm1251 = vcmp.gt.f32.partialorder %v506, 20.0
  %vm1252 = vcmp.gt.f32.partialorder %v509, 20.0
  %vm1253 = vcmp.gt.f32.partialorder %v512, 20.0
  %vm1254 = vcmp.gt.f32.partialorder %v515, 20.0
  %vm1255 = vcmp.gt.f32.partialorder %v518, 20.0
  %vm1256 = vcmp.gt.f32.partialorder %v521, 20.0
  %vm1257 = vcmp.gt.f32.partialorder %v524, 20.0
  %vm1258 = vcmp.gt.f32.partialorder %v527, 20.0
  %vm1259 = vcmp.gt.f32.partialorder %v530, 20.0
  %vm1260 = vcmp.gt.f32.partialorder %v533, 20.0
  %vm1261 = vcmp.gt.f32.partialorder %v536, 20.0
  %vm1262 = vcmp.gt.f32.partialorder %v539, 20.0
  %vm1263 = vcmp.gt.f32.partialorder %v542, 20.0
  %vm1264 = vcmp.gt.f32.partialorder %v545, 20.0
  %vm1265 = vcmp.gt.f32.partialorder %v548, 20.0
  %vm1266 = vcmp.gt.f32.partialorder %v551, 20.0
  %vm1267 = vcmp.gt.f32.partialorder %v554, 20.0
  %vm1268 = vcmp.gt.f32.partialorder %v557, 20.0
  %vm1269 = vcmp.gt.f32.partialorder %v560, 20.0
  %vm1270 = vcmp.gt.f32.partialorder %v563, 20.0
  %vm1271 = vcmp.gt.f32.partialorder %v566, 20.0
  %vm1272 = vcmp.gt.f32.partialorder %v569, 20.0
  %vm1273 = vcmp.gt.f32.partialorder %v572, 20.0
  %vm1274 = vcmp.gt.f32.partialorder %v575, 20.0
  %vm1275 = vcmp.gt.f32.partialorder %v578, 20.0
  %vm1276 = vcmp.gt.f32.partialorder %v581, 20.0
  %vm1277 = vcmp.gt.f32.partialorder %v584, 20.0
  %vm1278 = vcmp.gt.f32.partialorder %v587, 20.0
  %vm1279 = vcmp.gt.f32.partialorder %v590, 20.0
  %vm1280 = vcmp.gt.f32.partialorder %v593, 20.0
  %vm1281 = vcmp.gt.f32.partialorder %v596, 20.0
  %vm1282 = vcmp.gt.f32.partialorder %v599, 20.0
  %vm1283 = vcmp.gt.f32.partialorder %v602, 20.0
  %vm1284 = vcmp.gt.f32.partialorder %v605, 20.0
  %vm1285 = vcmp.gt.f32.partialorder %v608, 20.0
  %vm1286 = vcmp.gt.f32.partialorder %v611, 20.0
  %vm1287 = vcmp.gt.f32.partialorder %v614, 20.0
  %vm1288 = vcmp.gt.f32.partialorder %v617, 20.0
  %vm1289 = vcmp.gt.f32.partialorder %v620, 20.0
  %vm1290 = vcmp.gt.f32.partialorder %v623, 20.0
  %vm1291 = vcmp.gt.f32.partialorder %v626, 20.0
  %vm1292 = vcmp.gt.f32.partialorder %v629, 20.0
  %vm1293 = vcmp.gt.f32.partialorder %v632, 20.0
  %vm1294 = vcmp.gt.f32.partialorder %v635, 20.0
  %vm1295 = vcmp.gt.f32.partialorder %v638, 20.0
  %vm1296 = vcmp.gt.f32.partialorder %v641, 20.0
  %vm1297 = vcmp.gt.f32.partialorder %v644, 20.0
  %vm1298 = vcmp.gt.f32.partialorder %v647, 20.0
  %vm1299 = vcmp.gt.f32.partialorder %v650, 20.0
  %vm1300 = vcmp.gt.f32.partialorder %v653, 20.0
  %vm1301 = vcmp.gt.f32.partialorder %v656, 20.0
  %vm1302 = vcmp.gt.f32.partialorder %v659, 20.0
  %vm1303 = vcmp.gt.f32.partialorder %v662, 20.0
  %vm1304 = vcmp.gt.f32.partialorder %v665, 20.0
  %vm1305 = vcmp.gt.f32.partialorder %v668, 20.0
  %vm1306 = vcmp.gt.f32.partialorder %v671, 20.0
  %vm1307 = vcmp.gt.f32.partialorder %v674, 20.0
  %vm1308 = vcmp.gt.f32.partialorder %v677, 20.0
  %vm1309 = vcmp.gt.f32.partialorder %v680, 20.0
  %vm1310 = vcmp.gt.f32.partialorder %v683, 20.0
  %vm1311 = vcmp.gt.f32.partialorder %v686, 20.0
  %vm1312 = vcmp.gt.f32.partialorder %v689, 20.0
  %vm1313 = vcmp.gt.f32.partialorder %v692, 20.0
  %vm1314 = vcmp.gt.f32.partialorder %v695, 20.0
  %vm1315 = vcmp.gt.f32.partialorder %v698, 20.0
  %vm1316 = vcmp.gt.f32.partialorder %v701, 20.0
  %vm1317 = vcmp.gt.f32.partialorder %v704, 20.0
  %vm1318 = vcmp.gt.f32.partialorder %v707, 20.0
  %vm1319 = vcmp.gt.f32.partialorder %v710, 20.0
  %vm1320 = vcmp.gt.f32.partialorder %v713, 20.0
  %vm1321 = vcmp.gt.f32.partialorder %v716, 20.0
  %vm1322 = vcmp.gt.f32.partialorder %v719, 20.0
  %vm1323 = vcmp.gt.f32.partialorder %v722, 20.0
  %vm1324 = vcmp.gt.f32.partialorder %v725, 20.0
  %vm1325 = vcmp.gt.f32.partialorder %v728, 20.0
  %vm1326 = vcmp.gt.f32.partialorder %v731, 20.0
  %vm1327 = vcmp.gt.f32.partialorder %v734, 20.0
  %vm1328 = vcmp.gt.f32.partialorder %v737, 20.0
  %vm1329 = vcmp.gt.f32.partialorder %v740, 20.0
  %vm1330 = vcmp.gt.f32.partialorder %v743, 20.0
  %vm1331 = vcmp.gt.f32.partialorder %v746, 20.0
  %vm1332 = vcmp.gt.f32.partialorder %v749, 20.0
  %vm1333 = vcmp.gt.f32.partialorder %v752, 20.0
  %vm1334 = vcmp.gt.f32.partialorder %v755, 20.0
  %vm1335 = vcmp.gt.f32.partialorder %v758, 20.0
  %v1336 = vlog2.pop %v1048
  %v1337 = vmul.f32 %v1336, 0.6931472
  %v1338 = vlog2.pop %v1049
  %v1339 = vmul.f32 %v1338, 0.6931472
  %v1340 = vlog2.pop %v1050
  %v1341 = vmul.f32 %v1340, 0.6931472
  %v1342 = vlog2.pop %v1051
  %v1343 = vmul.f32 %v1342, 0.6931472
  %v1344 = vlog2.pop %v1052
  %v1345 = vmul.f32 %v1344, 0.6931472
  %v1346 = vlog2.pop %v1053
  %v1347 = vmul.f32 %v1346, 0.6931472
  %v1348 = vlog2.pop %v1054
  %v1349 = vmul.f32 %v1348, 0.6931472
  %v1350 = vlog2.pop %v1055
  %v1351 = vmul.f32 %v1350, 0.6931472
  %v1352 = vlog2.pop %v1056
  %v1353 = vmul.f32 %v1352, 0.6931472
  %v1354 = vlog2.pop %v1057
  %v1355 = vmul.f32 %v1354, 0.6931472
  %v1356 = vlog2.pop %v1058
  %v1357 = vmul.f32 %v1356, 0.6931472
  %v1358 = vlog2.pop %v1059
  %v1359 = vmul.f32 %v1358, 0.6931472
  %v1360 = vlog2.pop %v1060
  %v1361 = vmul.f32 %v1360, 0.6931472
  %v1362 = vlog2.pop %v1061
  %v1363 = vmul.f32 %v1362, 0.6931472
  %v1364 = vlog2.pop %v1062
  %v1365 = vmul.f32 %v1364, 0.6931472
  %v1366 = vlog2.pop %v1063
  %v1367 = vmul.f32 %v1366, 0.6931472
  %v1368 = vlog2.pop %v1064
  %v1369 = vmul.f32 %v1368, 0.6931472
  %v1370 = vlog2.pop %v1065
  %v1371 = vmul.f32 %v1370, 0.6931472
  %v1372 = vlog2.pop %v1066
  %v1373 = vmul.f32 %v1372, 0.6931472
  %v1374 = vlog2.pop %v1067
  %v1375 = vmul.f32 %v1374, 0.6931472
  %v1376 = vlog2.pop %v1068
  %v1377 = vmul.f32 %v1376, 0.6931472
  %v1378 = vlog2.pop %v1069
  %v1379 = vmul.f32 %v1378, 0.6931472
  %v1380 = vlog2.pop %v1070
  %v1381 = vmul.f32 %v1380, 0.6931472
  %v1382 = vlog2.pop %v1071
  %v1383 = vmul.f32 %v1382, 0.6931472
  %v1384 = vlog2.pop %v1072
  %v1385 = vmul.f32 %v1384, 0.6931472
  %v1386 = vlog2.pop %v1073
  %v1387 = vmul.f32 %v1386, 0.6931472
  %v1388 = vlog2.pop %v1074
  %v1389 = vmul.f32 %v1388, 0.6931472
  %v1390 = vlog2.pop %v1075
  %v1391 = vmul.f32 %v1390, 0.6931472
  %v1392 = vlog2.pop %v1076
  %v1393 = vmul.f32 %v1392, 0.6931472
  %v1394 = vlog2.pop %v1077
  %v1395 = vmul.f32 %v1394, 0.6931472
  %v1396 = vlog2.pop %v1078
  %v1397 = vmul.f32 %v1396, 0.6931472
  %v1398 = vlog2.pop %v1079
  %v1399 = vmul.f32 %v1398, 0.6931472
  %v1400 = vlog2.pop %v1080
  %v1401 = vmul.f32 %v1400, 0.6931472
  %v1402 = vlog2.pop %v1081
  %v1403 = vmul.f32 %v1402, 0.6931472
  %v1404 = vlog2.pop %v1082
  %v1405 = vmul.f32 %v1404, 0.6931472
  %v1406 = vlog2.pop %v1083
  %v1407 = vmul.f32 %v1406, 0.6931472
  %v1408 = vlog2.pop %v1084
  %v1409 = vmul.f32 %v1408, 0.6931472
  %v1410 = vlog2.pop %v1085
  %v1411 = vmul.f32 %v1410, 0.6931472
  %v1412 = vlog2.pop %v1086
  %v1413 = vmul.f32 %v1412, 0.6931472
  %v1414 = vlog2.pop %v1087
  %v1415 = vmul.f32 %v1414, 0.6931472
  %v1416 = vlog2.pop %v1088
  %v1417 = vmul.f32 %v1416, 0.6931472
  %v1418 = vlog2.pop %v1089
  %v1419 = vmul.f32 %v1418, 0.6931472
  %v1420 = vlog2.pop %v1090
  %v1421 = vmul.f32 %v1420, 0.6931472
  %v1422 = vlog2.pop %v1091
  %v1423 = vmul.f32 %v1422, 0.6931472
  %v1424 = vlog2.pop %v1092
  %v1425 = vmul.f32 %v1424, 0.6931472
  %v1426 = vlog2.pop %v1093
  %v1427 = vmul.f32 %v1426, 0.6931472
  %v1428 = vlog2.pop %v1094
  %v1429 = vmul.f32 %v1428, 0.6931472
  %v1430 = vlog2.pop %v1095
  %v1431 = vmul.f32 %v1430, 0.6931472
  %v1432 = vlog2.pop %v1096
  %v1433 = vmul.f32 %v1432, 0.6931472
  %v1434 = vlog2.pop %v1097
  %v1435 = vmul.f32 %v1434, 0.6931472
  %v1436 = vlog2.pop %v1098
  %v1437 = vmul.f32 %v1436, 0.6931472
  %v1438 = vlog2.pop %v1099
  %v1439 = vmul.f32 %v1438, 0.6931472
  %v1440 = vlog2.pop %v1100
  %v1441 = vmul.f32 %v1440, 0.6931472
  %v1442 = vlog2.pop %v1101
  %v1443 = vmul.f32 %v1442, 0.6931472
  %v1444 = vlog2.pop %v1102
  %v1445 = vmul.f32 %v1444, 0.6931472
  %v1446 = vlog2.pop %v1103
  %v1447 = vmul.f32 %v1446, 0.6931472
  %v1448 = vlog2.pop %v1104
  %v1449 = vmul.f32 %v1448, 0.6931472
  %v1450 = vlog2.pop %v1105
  %v1451 = vmul.f32 %v1450, 0.6931472
  %v1452 = vlog2.pop %v1106
  %v1453 = vmul.f32 %v1452, 0.6931472
  %v1454 = vlog2.pop %v1107
  %v1455 = vmul.f32 %v1454, 0.6931472
  %v1456 = vlog2.pop %v1108
  %v1457 = vmul.f32 %v1456, 0.6931472
  %v1458 = vlog2.pop %v1109
  %v1459 = vmul.f32 %v1458, 0.6931472
  %v1460 = vlog2.pop %v1110
  %v1461 = vmul.f32 %v1460, 0.6931472
  %v1462 = vlog2.pop %v1111
  %v1463 = vmul.f32 %v1462, 0.6931472
  %v1464 = vlog2.pop %v1112
  %v1465 = vmul.f32 %v1464, 0.6931472
  %v1466 = vlog2.pop %v1113
  %v1467 = vmul.f32 %v1466, 0.6931472
  %v1468 = vlog2.pop %v1114
  %v1469 = vmul.f32 %v1468, 0.6931472
  %v1470 = vlog2.pop %v1115
  %v1471 = vmul.f32 %v1470, 0.6931472
  %v1472 = vlog2.pop %v1116
  %v1473 = vmul.f32 %v1472, 0.6931472
  %v1474 = vlog2.pop %v1117
  %v1475 = vmul.f32 %v1474, 0.6931472
  %v1476 = vlog2.pop %v1118
  %v1477 = vmul.f32 %v1476, 0.6931472
  %v1478 = vlog2.pop %v1119
  %v1479 = vmul.f32 %v1478, 0.6931472
  %v1480 = vlog2.pop %v1120
  %v1481 = vmul.f32 %v1480, 0.6931472
  %v1482 = vlog2.pop %v1121
  %v1483 = vmul.f32 %v1482, 0.6931472
  %v1484 = vlog2.pop %v1122
  %v1485 = vmul.f32 %v1484, 0.6931472
  %v1486 = vlog2.pop %v1123
  %v1487 = vmul.f32 %v1486, 0.6931472
  %v1488 = vlog2.pop %v1124
  %v1489 = vmul.f32 %v1488, 0.6931472
  %v1490 = vlog2.pop %v1125
  %v1491 = vmul.f32 %v1490, 0.6931472
  %v1492 = vlog2.pop %v1126
  %v1493 = vmul.f32 %v1492, 0.6931472
  %v1494 = vlog2.pop %v1127
  %v1495 = vmul.f32 %v1494, 0.6931472
  %v1496 = vlog2.pop %v1128
  %v1497 = vmul.f32 %v1496, 0.6931472
  %v1498 = vlog2.pop %v1129
  %v1499 = vmul.f32 %v1498, 0.6931472
  %v1500 = vlog2.pop %v1130
  %v1501 = vmul.f32 %v1500, 0.6931472
  %v1502 = vlog2.pop %v1131
  %v1503 = vmul.f32 %v1502, 0.6931472
  %v1504 = vlog2.pop %v1132
  %v1505 = vmul.f32 %v1504, 0.6931472
  %v1506 = vlog2.pop %v1133
  %v1507 = vmul.f32 %v1506, 0.6931472
  %v1508 = vlog2.pop %v1134
  %v1509 = vmul.f32 %v1508, 0.6931472
  %v1510 = vlog2.pop %v1135
  %v1511 = vmul.f32 %v1510, 0.6931472
  %v1512 = vlog2.pop %v1136
  %v1513 = vmul.f32 %v1512, 0.6931472
  %v1514 = vlog2.pop %v1137
  %v1515 = vmul.f32 %v1514, 0.6931472
  %v1516 = vlog2.pop %v1138
  %v1517 = vmul.f32 %v1516, 0.6931472
  %v1518 = vlog2.pop %v1139
  %v1519 = vmul.f32 %v1518, 0.6931472
  %v1520 = vlog2.pop %v1140
  %v1521 = vmul.f32 %v1520, 0.6931472
  %v1522 = vlog2.pop %v1141
  %v1523 = vmul.f32 %v1522, 0.6931472
  %v1524 = vlog2.pop %v1142
  %v1525 = vmul.f32 %v1524, 0.6931472
  %v1526 = vlog2.pop %v1143
  %v1527 = vmul.f32 %v1526, 0.6931472
  %v1528 = vsel %vm1240, %v473, %v1337
  %v1529 = vsel %vm1241, %v476, %v1339
  %v1530 = vsel %vm1242, %v479, %v1341
  %v1531 = vsel %vm1243, %v482, %v1343
  %v1532 = vsel %vm1244, %v485, %v1345
  %v1533 = vsel %vm1245, %v488, %v1347
  %v1534 = vsel %vm1246, %v491, %v1349
  %v1535 = vsel %vm1247, %v494, %v1351
  %v1536 = vsel %vm1248, %v497, %v1353
  %v1537 = vsel %vm1249, %v500, %v1355
  %v1538 = vsel %vm1250, %v503, %v1357
  %v1539 = vsel %vm1251, %v506, %v1359
  %v1540 = vsel %vm1252, %v509, %v1361
  %v1541 = vsel %vm1253, %v512, %v1363
  %v1542 = vsel %vm1254, %v515, %v1365
  %v1543 = vsel %vm1255, %v518, %v1367
  %v1544 = vsel %vm1256, %v521, %v1369
  %v1545 = vsel %vm1257, %v524, %v1371
  %v1546 = vsel %vm1258, %v527, %v1373
  %v1547 = vsel %vm1259, %v530, %v1375
  %v1548 = vsel %vm1260, %v533, %v1377
  %v1549 = vsel %vm1261, %v536, %v1379
  %v1550 = vsel %vm1262, %v539, %v1381
  %v1551 = vsel %vm1263, %v542, %v1383
  %v1552 = vsel %vm1264, %v545, %v1385
  %v1553 = vsel %vm1265, %v548, %v1387
  %v1554 = vsel %vm1266, %v551, %v1389
  %v1555 = vsel %vm1267, %v554, %v1391
  %v1556 = vsel %vm1268, %v557, %v1393
  %v1557 = vsel %vm1269, %v560, %v1395
  %v1558 = vsel %vm1270, %v563, %v1397
  %v1559 = vsel %vm1271, %v566, %v1399
  %v1560 = vsel %vm1272, %v569, %v1401
  %v1561 = vsel %vm1273, %v572, %v1403
  %v1562 = vsel %vm1274, %v575, %v1405
  %v1563 = vsel %vm1275, %v578, %v1407
  %v1564 = vsel %vm1276, %v581, %v1409
  %v1565 = vsel %vm1277, %v584, %v1411
  %v1566 = vsel %vm1278, %v587, %v1413
  %v1567 = vsel %vm1279, %v590, %v1415
  %v1568 = vsel %vm1280, %v593, %v1417
  %v1569 = vsel %vm1281, %v596, %v1419
  %v1570 = vsel %vm1282, %v599, %v1421
  %v1571 = vsel %vm1283, %v602, %v1423
  %v1572 = vsel %vm1284, %v605, %v1425
  %v1573 = vsel %vm1285, %v608, %v1427
  %v1574 = vsel %vm1286, %v611, %v1429
  %v1575 = vsel %vm1287, %v614, %v1431
  %v1576 = vsel %vm1288, %v617, %v1433
  %v1577 = vsel %vm1289, %v620, %v1435
  %v1578 = vsel %vm1290, %v623, %v1437
  %v1579 = vsel %vm1291, %v626, %v1439
  %v1580 = vsel %vm1292, %v629, %v1441
  %v1581 = vsel %vm1293, %v632, %v1443
  %v1582 = vsel %vm1294, %v635, %v1445
  %v1583 = vsel %vm1295, %v638, %v1447
  %v1584 = vsel %vm1296, %v641, %v1449
  %v1585 = vsel %vm1297, %v644, %v1451
  %v1586 = vsel %vm1298, %v647, %v1453
  %v1587 = vsel %vm1299, %v650, %v1455
  %v1588 = vsel %vm1300, %v653, %v1457
  %v1589 = vsel %vm1301, %v656, %v1459
  %v1590 = vsel %vm1302, %v659, %v1461
  %v1591 = vsel %vm1303, %v662, %v1463
  %v1592 = vsel %vm1304, %v665, %v1465
  %v1593 = vsel %vm1305, %v668, %v1467
  %v1594 = vsel %vm1306, %v671, %v1469
  %v1595 = vsel %vm1307, %v674, %v1471
  %v1596 = vsel %vm1308, %v677, %v1473
  %v1597 = vsel %vm1309, %v680, %v1475
  %v1598 = vsel %vm1310, %v683, %v1477
  %v1599 = vsel %vm1311, %v686, %v1479
  %v1600 = vsel %vm1312, %v689, %v1481
  %v1601 = vsel %vm1313, %v692, %v1483
  %v1602 = vsel %vm1314, %v695, %v1485
  %v1603 = vsel %vm1315, %v698, %v1487
  %v1604 = vsel %vm1316, %v701, %v1489
  %v1605 = vsel %vm1317, %v704, %v1491
  %v1606 = vsel %vm1318, %v707, %v1493
  %v1607 = vsel %vm1319, %v710, %v1495
  %v1608 = vsel %vm1320, %v713, %v1497
  %v1609 = vsel %vm1321, %v716, %v1499
  %v1610 = vsel %vm1322, %v719, %v1501
  %v1611 = vsel %vm1323, %v722, %v1503
  %v1612 = vsel %vm1324, %v725, %v1505
  %v1613 = vsel %vm1325, %v728, %v1507
  %v1614 = vsel %vm1326, %v731, %v1509
  %v1615 = vsel %vm1327, %v734, %v1511
  %v1616 = vsel %vm1328, %v737, %v1513
  %v1617 = vsel %vm1329, %v740, %v1515
  %v1618 = vsel %vm1330, %v743, %v1517
  %v1619 = vsel %vm1331, %v746, %v1519
  %v1620 = vsel %vm1332, %v749, %v1521
  %v1621 = vsel %vm1333, %v752, %v1523
  %v1622 = vsel %vm1334, %v755, %v1525
  %v1623 = vsel %vm1335, %v758, %v1527
  %v1624 = vmul.f32 %v857, %v1144
  %v1625 = vmul.f32 %v859, %v1145
  %v1626 = vmul.f32 %v861, %v1146
  %v1627 = vmul.f32 %v863, %v1147
  %v1628 = vmul.f32 %v865, %v1148
  %v1629 = vmul.f32 %v867, %v1149
  %v1630 = vmul.f32 %v869, %v1150
  %v1631 = vmul.f32 %v871, %v1151
  %v1632 = vmul.f32 %v873, %v1152
  %v1633 = vmul.f32 %v875, %v1153
  %v1634 = vmul.f32 %v877, %v1154
  %v1635 = vmul.f32 %v879, %v1155
  %v1636 = vmul.f32 %v881, %v1156
  %v1637 = vmul.f32 %v883, %v1157
  %v1638 = vmul.f32 %v885, %v1158
  %v1639 = vmul.f32 %v887, %v1159
  %v1640 = vmul.f32 %v889, %v1160
  %v1641 = vmul.f32 %v891, %v1161
  %v1642 = vmul.f32 %v893, %v1162
  %v1643 = vmul.f32 %v895, %v1163
  %v1644 = vmul.f32 %v897, %v1164
  %v1645 = vmul.f32 %v899, %v1165
  %v1646 = vmul.f32 %v901, %v1166
  %v1647 = vmul.f32 %v903, %v1167
  %v1648 = vmul.f32 %v905, %v1168
  %v1649 = vmul.f32 %v907, %v1169
  %v1650 = vmul.f32 %v909, %v1170
  %v1651 = vmul.f32 %v911, %v1171
  %v1652 = vmul.f32 %v913, %v1172
  %v1653 = vmul.f32 %v915, %v1173
  %v1654 = vmul.f32 %v917, %v1174
  %v1655 = vmul.f32 %v919, %v1175
  %v1656 = vmul.f32 %v921, %v1176
  %v1657 = vmul.f32 %v923, %v1177
  %v1658 = vmul.f32 %v925, %v1178
  %v1659 = vmul.f32 %v927, %v1179
  %v1660 = vmul.f32 %v929, %v1180
  %v1661 = vmul.f32 %v931, %v1181
  %v1662 = vmul.f32 %v933, %v1182
  %v1663 = vmul.f32 %v935, %v1183
  %v1664 = vmul.f32 %v937, %v1184
  %v1665 = vmul.f32 %v939, %v1185
  %v1666 = vmul.f32 %v941, %v1186
  %v1667 = vmul.f32 %v943, %v1187
  %v1668 = vmul.f32 %v945, %v1188
  %v1669 = vmul.f32 %v947, %v1189
  %v1670 = vmul.f32 %v949, %v1190
  %v1671 = vmul.f32 %v951, %v1191
  %v1672 = vmul.f32 %v953, %v1192
  %v1673 = vmul.f32 %v955, %v1193
  %v1674 = vmul.f32 %v957, %v1194
  %v1675 = vmul.f32 %v959, %v1195
  %v1676 = vmul.f32 %v961, %v1196
  %v1677 = vmul.f32 %v963, %v1197
  %v1678 = vmul.f32 %v965, %v1198
  %v1679 = vmul.f32 %v967, %v1199
  %v1680 = vmul.f32 %v969, %v1200
  %v1681 = vmul.f32 %v971, %v1201
  %v1682 = vmul.f32 %v973, %v1202
  %v1683 = vmul.f32 %v975, %v1203
  %v1684 = vmul.f32 %v977, %v1204
  %v1685 = vmul.f32 %v979, %v1205
  %v1686 = vmul.f32 %v981, %v1206
  %v1687 = vmul.f32 %v983, %v1207
  %v1688 = vmul.f32 %v985, %v1208
  %v1689 = vmul.f32 %v987, %v1209
  %v1690 = vmul.f32 %v989, %v1210
  %v1691 = vmul.f32 %v991, %v1211
  %v1692 = vmul.f32 %v993, %v1212
  %v1693 = vmul.f32 %v995, %v1213
  %v1694 = vmul.f32 %v997, %v1214
  %v1695 = vmul.f32 %v999, %v1215
  %v1696 = vmul.f32 %v1001, %v1216
  %v1697 = vmul.f32 %v1003, %v1217
  %v1698 = vmul.f32 %v1005, %v1218
  %v1699 = vmul.f32 %v1007, %v1219
  %v1700 = vmul.f32 %v1009, %v1220
  %v1701 = vmul.f32 %v1011, %v1221
  %v1702 = vmul.f32 %v1013, %v1222
  %v1703 = vmul.f32 %v1015, %v1223
  %v1704 = vmul.f32 %v1017, %v1224
  %v1705 = vmul.f32 %v1019, %v1225
  %v1706 = vmul.f32 %v1021, %v1226
  %v1707 = vmul.f32 %v1023, %v1227
  %v1708 = vmul.f32 %v1025, %v1228
  %v1709 = vmul.f32 %v1027, %v1229
  %v1710 = vmul.f32 %v1029, %v1230
  %v1711 = vmul.f32 %v1031, %v1231
  %v1712 = vmul.f32 %v1033, %v1232
  %v1713 = vmul.f32 %v1035, %v1233
  %v1714 = vmul.f32 %v1037, %v1234
  %v1715 = vmul.f32 %v1039, %v1235
  %v1716 = vmul.f32 %v1041, %v1236
  %v1717 = vmul.f32 %v1043, %v1237
  %v1718 = vmul.f32 %v1045, %v1238
  %v1719 = vmul.f32 %v1047, %v1239
  %v1720 = vld [vmem:[%s3] sm:$0xff]
  %v1721 = vld [vmem:[%s3 + $0x8] sm:$0xff]
  %v1722 = vld [vmem:[%s3 + $0x10] sm:$0xff]
  %v1723 = vld [vmem:[%s3 + $0x18] sm:$0xff]
  %v1724 = vld [vmem:[%s4] sm:$0x1]
  %v1726 = vperm.slane %v1724, 0
  %vm1728 = vcmask 261120
  %v1730 = vsel %vm1728, %v1528, 0
  %v1733 = vsel %vm1728, %v1529, 0
  %v1736 = vsel %vm1728, %v1530, 0
  %v1739 = vsel %vm1728, %v1531, 0
  %v1742 = vsel %vm1728, %v1532, 0
  %v1745 = vsel %vm1728, %v1533, 0
  %v1748 = vsel %vm1728, %v1534, 0
  %v1751 = vsel %vm1728, %v1535, 0
  %v1754 = vsel %vm1728, %v1536, 0
  %v1757 = vsel %vm1728, %v1537, 0
  %v1760 = vsel %vm1728, %v1538, 0
  %v1763 = vsel %vm1728, %v1539, 0
  %v1766 = vsel %vm1728, %v1540, 0
  %v1769 = vsel %vm1728, %v1541, 0
  %v1772 = vsel %vm1728, %v1542, 0
  %v1775 = vsel %vm1728, %v1543, 0
  %v1778 = vsel %vm1728, %v1544, 0
  %v1781 = vsel %vm1728, %v1545, 0
  %v1784 = vsel %vm1728, %v1546, 0
  %v1787 = vsel %vm1728, %v1547, 0
  %v1790 = vsel %vm1728, %v1548, 0
  %v1793 = vsel %vm1728, %v1549, 0
  %v1796 = vsel %vm1728, %v1550, 0
  %v1799 = vsel %vm1728, %v1551, 0
  %v1802 = vsel %vm1728, %v1552, 0
  %v1805 = vsel %vm1728, %v1553, 0
  %v1808 = vsel %vm1728, %v1554, 0
  %v1811 = vsel %vm1728, %v1555, 0
  %v1814 = vsel %vm1728, %v1556, 0
  %v1817 = vsel %vm1728, %v1557, 0
  %v1820 = vsel %vm1728, %v1558, 0
  %v1823 = vsel %vm1728, %v1559, 0
  %v1826 = vsel %vm1728, %v1560, 0
  %v1829 = vsel %vm1728, %v1561, 0
  %v1832 = vsel %vm1728, %v1562, 0
  %v1835 = vsel %vm1728, %v1563, 0
  %v1838 = vsel %vm1728, %v1564, 0
  %v1841 = vsel %vm1728, %v1565, 0
  %v1844 = vsel %vm1728, %v1566, 0
  %v1847 = vsel %vm1728, %v1567, 0
  %v1850 = vsel %vm1728, %v1568, 0
  %v1853 = vsel %vm1728, %v1569, 0
  %v1856 = vsel %vm1728, %v1570, 0
  %v1859 = vsel %vm1728, %v1571, 0
  %v1862 = vsel %vm1728, %v1572, 0
  %v1865 = vsel %vm1728, %v1573, 0
  %v1868 = vsel %vm1728, %v1574, 0
  %v1871 = vsel %vm1728, %v1575, 0
  %v1874 = vsel %vm1728, %v1576, 0
  %v1877 = vsel %vm1728, %v1577, 0
  %v1880 = vsel %vm1728, %v1578, 0
  %v1883 = vsel %vm1728, %v1579, 0
  %v1886 = vsel %vm1728, %v1580, 0
  %v1889 = vsel %vm1728, %v1581, 0
  %v1892 = vsel %vm1728, %v1582, 0
  %v1895 = vsel %vm1728, %v1583, 0
  %v1898 = vsel %vm1728, %v1584, 0
  %v1901 = vsel %vm1728, %v1585, 0
  %v1904 = vsel %vm1728, %v1586, 0
  %v1907 = vsel %vm1728, %v1587, 0
  %v1910 = vsel %vm1728, %v1588, 0
  %v1913 = vsel %vm1728, %v1589, 0
  %v1916 = vsel %vm1728, %v1590, 0
  %v1919 = vsel %vm1728, %v1591, 0
  %v1922 = vsel %vm1728, %v1592, 0
  %v1925 = vsel %vm1728, %v1593, 0
  %v1928 = vsel %vm1728, %v1594, 0
  %v1931 = vsel %vm1728, %v1595, 0
  %v1934 = vsel %vm1728, %v1596, 0
  %v1937 = vsel %vm1728, %v1597, 0
  %v1940 = vsel %vm1728, %v1598, 0
  %v1943 = vsel %vm1728, %v1599, 0
  %v1946 = vsel %vm1728, %v1600, 0
  %v1949 = vsel %vm1728, %v1601, 0
  %v1952 = vsel %vm1728, %v1602, 0
  %v1955 = vsel %vm1728, %v1603, 0
  %v1958 = vsel %vm1728, %v1604, 0
  %v1961 = vsel %vm1728, %v1605, 0
  %v1964 = vsel %vm1728, %v1606, 0
  %v1967 = vsel %vm1728, %v1607, 0
  %v1970 = vsel %vm1728, %v1608, 0
  %v1973 = vsel %vm1728, %v1609, 0
  %v1976 = vsel %vm1728, %v1610, 0
  %v1979 = vsel %vm1728, %v1611, 0
  %v1982 = vsel %vm1728, %v1612, 0
  %v1985 = vsel %vm1728, %v1613, 0
  %v1988 = vsel %vm1728, %v1614, 0
  %v1991 = vsel %vm1728, %v1615, 0
  %v1994 = vsel %vm1728, %v1616, 0
  %v1997 = vsel %vm1728, %v1617, 0
  %v2000 = vsel %vm1728, %v1618, 0
  %v2003 = vsel %vm1728, %v1619, 0
  %v2006 = vsel %vm1728, %v1620, 0
  %v2009 = vsel %vm1728, %v1621, 0
  %v2012 = vsel %vm1728, %v1622, 0
  %v2015 = vsel %vm1728, %v1623, 0
  %2017 = vmatpush.msra.mxu0 0.0
  %2018 = vmatpush.msra.mxu0 0.0
  %2019 = vmatpush.msra.mxu0 0.0
  %2020 = vmatpush.msra.mxu0 0.0
  %2021 = vmatpush.msra.mxu0 0.0
  %2022 = vmatpush.msra.mxu0 0.0
  %2023 = vmatpush.msra.mxu0 0.0
  %2024 = vmatpush.msra.mxu0 0.0
  %2025 = vmatpush.msra.mxu0 0.0
  %2026 = vmatpush.msra.mxu0 0.0
  %2027 = vmatpush.msra.mxu0 0.0
  %2028 = vmatpush.msra.mxu0 0.0
  %2029 = vmatpush.msra.mxu0 %v1723
  %2030 = vmatpush.msra.mxu0 %v1722
  %2031 = vmatpush.msra.mxu0 %v1721
  %2032 = vmatpush.msra.mxu0 %v1720
  %2033 = vmatmul.f32.gmra.mxu0 %v1730
  %v2034 = vpop.f32.mrf.mxu0
  %v2035 = vadd.f32 %v1726, %v2034
  %2036 = vmatmul.f32.gmra.mxu0 %v1733
  %v2037 = vpop.f32.mrf.mxu0
  %v2038 = vadd.f32 %v1726, %v2037
  %2039 = vmatmul.f32.gmra.mxu0 %v1736
  %v2040 = vpop.f32.mrf.mxu0
  %v2041 = vadd.f32 %v1726, %v2040
  %2042 = vmatmul.f32.gmra.mxu0 %v1739
  %v2043 = vpop.f32.mrf.mxu0
  %v2044 = vadd.f32 %v1726, %v2043
  %2045 = vmatmul.f32.gmra.mxu0 %v1742
  %v2046 = vpop.f32.mrf.mxu0
  %v2047 = vadd.f32 %v1726, %v2046
  %2048 = vmatmul.f32.gmra.mxu0 %v1745
  %v2049 = vpop.f32.mrf.mxu0
  %v2050 = vadd.f32 %v1726, %v2049
  %2051 = vmatmul.f32.gmra.mxu0 %v1748
  %v2052 = vpop.f32.mrf.mxu0
  %v2053 = vadd.f32 %v1726, %v2052
  %2054 = vmatmul.f32.gmra.mxu0 %v1751
  %v2055 = vpop.f32.mrf.mxu0
  %v2056 = vadd.f32 %v1726, %v2055
  %2057 = vmatmul.f32.gmra.mxu0 %v1754
  %v2058 = vpop.f32.mrf.mxu0
  %v2059 = vadd.f32 %v1726, %v2058
  %2060 = vmatmul.f32.gmra.mxu0 %v1757
  %v2061 = vpop.f32.mrf.mxu0
  %v2062 = vadd.f32 %v1726, %v2061
  %2063 = vmatmul.f32.gmra.mxu0 %v1760
  %v2064 = vpop.f32.mrf.mxu0
  %v2065 = vadd.f32 %v1726, %v2064
  %2066 = vmatmul.f32.gmra.mxu0 %v1763
  %v2067 = vpop.f32.mrf.mxu0
  %v2068 = vadd.f32 %v1726, %v2067
  %2069 = vmatmul.f32.gmra.mxu0 %v1766
  %v2070 = vpop.f32.mrf.mxu0
  %v2071 = vadd.f32 %v1726, %v2070
  %2072 = vmatmul.f32.gmra.mxu0 %v1769
  %v2073 = vpop.f32.mrf.mxu0
  %v2074 = vadd.f32 %v1726, %v2073
  %2075 = vmatmul.f32.gmra.mxu0 %v1772
  %v2076 = vpop.f32.mrf.mxu0
  %v2077 = vadd.f32 %v1726, %v2076
  %2078 = vmatmul.f32.gmra.mxu0 %v1775
  %v2079 = vpop.f32.mrf.mxu0
  %v2080 = vadd.f32 %v1726, %v2079
  %2081 = vmatmul.f32.gmra.mxu0 %v1778
  %v2082 = vpop.f32.mrf.mxu0
  %v2083 = vadd.f32 %v1726, %v2082
  %2084 = vmatmul.f32.gmra.mxu0 %v1781
  %v2085 = vpop.f32.mrf.mxu0
  %v2086 = vadd.f32 %v1726, %v2085
  %2087 = vmatmul.f32.gmra.mxu0 %v1784
  %v2088 = vpop.f32.mrf.mxu0
  %v2089 = vadd.f32 %v1726, %v2088
  %2090 = vmatmul.f32.gmra.mxu0 %v1787
  %v2091 = vpop.f32.mrf.mxu0
  %v2092 = vadd.f32 %v1726, %v2091
  %2093 = vmatmul.f32.gmra.mxu0 %v1790
  %v2094 = vpop.f32.mrf.mxu0
  %v2095 = vadd.f32 %v1726, %v2094
  %2096 = vmatmul.f32.gmra.mxu0 %v1793
  %v2097 = vpop.f32.mrf.mxu0
  %v2098 = vadd.f32 %v1726, %v2097
  %2099 = vmatmul.f32.gmra.mxu0 %v1796
  %v2100 = vpop.f32.mrf.mxu0
  %v2101 = vadd.f32 %v1726, %v2100
  %2102 = vmatmul.f32.gmra.mxu0 %v1799
  %v2103 = vpop.f32.mrf.mxu0
  %v2104 = vadd.f32 %v1726, %v2103
  %2105 = vmatmul.f32.gmra.mxu0 %v1802
  %v2106 = vpop.f32.mrf.mxu0
  %v2107 = vadd.f32 %v1726, %v2106
  %2108 = vmatmul.f32.gmra.mxu0 %v1805
  %v2109 = vpop.f32.mrf.mxu0
  %v2110 = vadd.f32 %v1726, %v2109
  %2111 = vmatmul.f32.gmra.mxu0 %v1808
  %v2112 = vpop.f32.mrf.mxu0
  %v2113 = vadd.f32 %v1726, %v2112
  %2114 = vmatmul.f32.gmra.mxu0 %v1811
  %v2115 = vpop.f32.mrf.mxu0
  %v2116 = vadd.f32 %v1726, %v2115
  %2117 = vmatmul.f32.gmra.mxu0 %v1814
  %v2118 = vpop.f32.mrf.mxu0
  %v2119 = vadd.f32 %v1726, %v2118
  %2120 = vmatmul.f32.gmra.mxu0 %v1817
  %v2121 = vpop.f32.mrf.mxu0
  %v2122 = vadd.f32 %v1726, %v2121
  %2123 = vmatmul.f32.gmra.mxu0 %v1820
  %v2124 = vpop.f32.mrf.mxu0
  %v2125 = vadd.f32 %v1726, %v2124
  %2126 = vmatmul.f32.gmra.mxu0 %v1823
  %v2127 = vpop.f32.mrf.mxu0
  %v2128 = vadd.f32 %v1726, %v2127
  %2129 = vmatmul.f32.gmra.mxu0 %v1826
  %v2130 = vpop.f32.mrf.mxu0
  %v2131 = vadd.f32 %v1726, %v2130
  %2132 = vmatmul.f32.gmra.mxu0 %v1829
  %v2133 = vpop.f32.mrf.mxu0
  %v2134 = vadd.f32 %v1726, %v2133
  %2135 = vmatmul.f32.gmra.mxu0 %v1832
  %v2136 = vpop.f32.mrf.mxu0
  %v2137 = vadd.f32 %v1726, %v2136
  %2138 = vmatmul.f32.gmra.mxu0 %v1835
  %v2139 = vpop.f32.mrf.mxu0
  %v2140 = vadd.f32 %v1726, %v2139
  %2141 = vmatmul.f32.gmra.mxu0 %v1838
  %v2142 = vpop.f32.mrf.mxu0
  %v2143 = vadd.f32 %v1726, %v2142
  %2144 = vmatmul.f32.gmra.mxu0 %v1841
  %v2145 = vpop.f32.mrf.mxu0
  %v2146 = vadd.f32 %v1726, %v2145
  %2147 = vmatmul.f32.gmra.mxu0 %v1844
  %v2148 = vpop.f32.mrf.mxu0
  %v2149 = vadd.f32 %v1726, %v2148
  %2150 = vmatmul.f32.gmra.mxu0 %v1847
  %v2151 = vpop.f32.mrf.mxu0
  %v2152 = vadd.f32 %v1726, %v2151
  %2153 = vmatmul.f32.gmra.mxu0 %v1850
  %v2154 = vpop.f32.mrf.mxu0
  %v2155 = vadd.f32 %v1726, %v2154
  %2156 = vmatmul.f32.gmra.mxu0 %v1853
  %v2157 = vpop.f32.mrf.mxu0
  %v2158 = vadd.f32 %v1726, %v2157
  %2159 = vmatmul.f32.gmra.mxu0 %v1856
  %v2160 = vpop.f32.mrf.mxu0
  %v2161 = vadd.f32 %v1726, %v2160
  %2162 = vmatmul.f32.gmra.mxu0 %v1859
  %v2163 = vpop.f32.mrf.mxu0
  %v2164 = vadd.f32 %v1726, %v2163
  %2165 = vmatmul.f32.gmra.mxu0 %v1862
  %v2166 = vpop.f32.mrf.mxu0
  %v2167 = vadd.f32 %v1726, %v2166
  %2168 = vmatmul.f32.gmra.mxu0 %v1865
  %v2169 = vpop.f32.mrf.mxu0
  %v2170 = vadd.f32 %v1726, %v2169
  %2171 = vmatmul.f32.gmra.mxu0 %v1868
  %v2172 = vpop.f32.mrf.mxu0
  %v2173 = vadd.f32 %v1726, %v2172
  %2174 = vmatmul.f32.gmra.mxu0 %v1871
  %v2175 = vpop.f32.mrf.mxu0
  %v2176 = vadd.f32 %v1726, %v2175
  %2177 = vmatmul.f32.gmra.mxu0 %v1874
  %v2178 = vpop.f32.mrf.mxu0
  %v2179 = vadd.f32 %v1726, %v2178
  %2180 = vmatmul.f32.gmra.mxu0 %v1877
  %v2181 = vpop.f32.mrf.mxu0
  %v2182 = vadd.f32 %v1726, %v2181
  %2183 = vmatmul.f32.gmra.mxu0 %v1880
  %v2184 = vpop.f32.mrf.mxu0
  %v2185 = vadd.f32 %v1726, %v2184
  %2186 = vmatmul.f32.gmra.mxu0 %v1883
  %v2187 = vpop.f32.mrf.mxu0
  %v2188 = vadd.f32 %v1726, %v2187
  %2189 = vmatmul.f32.gmra.mxu0 %v1886
  %v2190 = vpop.f32.mrf.mxu0
  %v2191 = vadd.f32 %v1726, %v2190
  %2192 = vmatmul.f32.gmra.mxu0 %v1889
  %v2193 = vpop.f32.mrf.mxu0
  %v2194 = vadd.f32 %v1726, %v2193
  %2195 = vmatmul.f32.gmra.mxu0 %v1892
  %v2196 = vpop.f32.mrf.mxu0
  %v2197 = vadd.f32 %v1726, %v2196
  %2198 = vmatmul.f32.gmra.mxu0 %v1895
  %v2199 = vpop.f32.mrf.mxu0
  %v2200 = vadd.f32 %v1726, %v2199
  %2201 = vmatmul.f32.gmra.mxu0 %v1898
  %v2202 = vpop.f32.mrf.mxu0
  %v2203 = vadd.f32 %v1726, %v2202
  %2204 = vmatmul.f32.gmra.mxu0 %v1901
  %v2205 = vpop.f32.mrf.mxu0
  %v2206 = vadd.f32 %v1726, %v2205
  %2207 = vmatmul.f32.gmra.mxu0 %v1904
  %v2208 = vpop.f32.mrf.mxu0
  %v2209 = vadd.f32 %v1726, %v2208
  %2210 = vmatmul.f32.gmra.mxu0 %v1907
  %v2211 = vpop.f32.mrf.mxu0
  %v2212 = vadd.f32 %v1726, %v2211
  %2213 = vmatmul.f32.gmra.mxu0 %v1910
  %v2214 = vpop.f32.mrf.mxu0
  %v2215 = vadd.f32 %v1726, %v2214
  %2216 = vmatmul.f32.gmra.mxu0 %v1913
  %v2217 = vpop.f32.mrf.mxu0
  %v2218 = vadd.f32 %v1726, %v2217
  %2219 = vmatmul.f32.gmra.mxu0 %v1916
  %v2220 = vpop.f32.mrf.mxu0
  %v2221 = vadd.f32 %v1726, %v2220
  %2222 = vmatmul.f32.gmra.mxu0 %v1919
  %v2223 = vpop.f32.mrf.mxu0
  %v2224 = vadd.f32 %v1726, %v2223
  %2225 = vmatmul.f32.gmra.mxu0 %v1922
  %v2226 = vpop.f32.mrf.mxu0
  %v2227 = vadd.f32 %v1726, %v2226
  %2228 = vmatmul.f32.gmra.mxu0 %v1925
  %v2229 = vpop.f32.mrf.mxu0
  %v2230 = vadd.f32 %v1726, %v2229
  %2231 = vmatmul.f32.gmra.mxu0 %v1928
  %v2232 = vpop.f32.mrf.mxu0
  %v2233 = vadd.f32 %v1726, %v2232
  %2234 = vmatmul.f32.gmra.mxu0 %v1931
  %v2235 = vpop.f32.mrf.mxu0
  %v2236 = vadd.f32 %v1726, %v2235
  %2237 = vmatmul.f32.gmra.mxu0 %v1934
  %v2238 = vpop.f32.mrf.mxu0
  %v2239 = vadd.f32 %v1726, %v2238
  %2240 = vmatmul.f32.gmra.mxu0 %v1937
  %v2241 = vpop.f32.mrf.mxu0
  %v2242 = vadd.f32 %v1726, %v2241
  %2243 = vmatmul.f32.gmra.mxu0 %v1940
  %v2244 = vpop.f32.mrf.mxu0
  %v2245 = vadd.f32 %v1726, %v2244
  %2246 = vmatmul.f32.gmra.mxu0 %v1943
  %v2247 = vpop.f32.mrf.mxu0
  %v2248 = vadd.f32 %v1726, %v2247
  %2249 = vmatmul.f32.gmra.mxu0 %v1946
  %v2250 = vpop.f32.mrf.mxu0
  %v2251 = vadd.f32 %v1726, %v2250
  %2252 = vmatmul.f32.gmra.mxu0 %v1949
  %v2253 = vpop.f32.mrf.mxu0
  %v2254 = vadd.f32 %v1726, %v2253
  %2255 = vmatmul.f32.gmra.mxu0 %v1952
  %v2256 = vpop.f32.mrf.mxu0
  %v2257 = vadd.f32 %v1726, %v2256
  %2258 = vmatmul.f32.gmra.mxu0 %v1955
  %v2259 = vpop.f32.mrf.mxu0
  %v2260 = vadd.f32 %v1726, %v2259
  %2261 = vmatmul.f32.gmra.mxu0 %v1958
  %v2262 = vpop.f32.mrf.mxu0
  %v2263 = vadd.f32 %v1726, %v2262
  %2264 = vmatmul.f32.gmra.mxu0 %v1961
  %v2265 = vpop.f32.mrf.mxu0
  %v2266 = vadd.f32 %v1726, %v2265
  %2267 = vmatmul.f32.gmra.mxu0 %v1964
  %v2268 = vpop.f32.mrf.mxu0
  %v2269 = vadd.f32 %v1726, %v2268
  %2270 = vmatmul.f32.gmra.mxu0 %v1967
  %v2271 = vpop.f32.mrf.mxu0
  %v2272 = vadd.f32 %v1726, %v2271
  %2273 = vmatmul.f32.gmra.mxu0 %v1970
  %v2274 = vpop.f32.mrf.mxu0
  %v2275 = vadd.f32 %v1726, %v2274
  %2276 = vmatmul.f32.gmra.mxu0 %v1973
  %v2277 = vpop.f32.mrf.mxu0
  %v2278 = vadd.f32 %v1726, %v2277
  %2279 = vmatmul.f32.gmra.mxu0 %v1976
  %v2280 = vpop.f32.mrf.mxu0
  %v2281 = vadd.f32 %v1726, %v2280
  %2282 = vmatmul.f32.gmra.mxu0 %v1979
  %v2283 = vpop.f32.mrf.mxu0
  %v2284 = vadd.f32 %v1726, %v2283
  %2285 = vmatmul.f32.gmra.mxu0 %v1982
  %v2286 = vpop.f32.mrf.mxu0
  %v2287 = vadd.f32 %v1726, %v2286
  %2288 = vmatmul.f32.gmra.mxu0 %v1985
  %v2289 = vpop.f32.mrf.mxu0
  %v2290 = vadd.f32 %v1726, %v2289
  %2291 = vmatmul.f32.gmra.mxu0 %v1988
  %v2292 = vpop.f32.mrf.mxu0
  %v2293 = vadd.f32 %v1726, %v2292
  %2294 = vmatmul.f32.gmra.mxu0 %v1991
  %v2295 = vpop.f32.mrf.mxu0
  %v2296 = vadd.f32 %v1726, %v2295
  %2297 = vmatmul.f32.gmra.mxu0 %v1994
  %v2298 = vpop.f32.mrf.mxu0
  %v2299 = vadd.f32 %v1726, %v2298
  %2300 = vmatmul.f32.gmra.mxu0 %v1997
  %v2301 = vpop.f32.mrf.mxu0
  %v2302 = vadd.f32 %v1726, %v2301
  %2303 = vmatmul.f32.gmra.mxu0 %v2000
  %v2304 = vpop.f32.mrf.mxu0
  %v2305 = vadd.f32 %v1726, %v2304
  %2306 = vmatmul.f32.gmra.mxu0 %v2003
  %v2307 = vpop.f32.mrf.mxu0
  %v2308 = vadd.f32 %v1726, %v2307
  %2309 = vmatmul.f32.gmra.mxu0 %v2006
  %v2310 = vpop.f32.mrf.mxu0
  %v2311 = vadd.f32 %v1726, %v2310
  %2312 = vmatmul.f32.gmra.mxu0 %v2009
  %v2313 = vpop.f32.mrf.mxu0
  %v2314 = vadd.f32 %v1726, %v2313
  %2315 = vmatmul.f32.gmra.mxu0 %v2012
  %v2316 = vpop.f32.mrf.mxu0
  %v2317 = vadd.f32 %v1726, %v2316
  %2318 = vmatmul.f32.gmra.mxu0 %v2015
  %v2319 = vpop.f32.mrf.mxu0
  %v2320 = vadd.f32 %v1726, %v2319
  %2321 = vdwg.mxu0
  %v2322 = vmin.f32 %v2035, 20.0
  %v2323 = vmin.f32 %v2038, 20.0
  %v2324 = vmin.f32 %v2041, 20.0
  %v2325 = vmin.f32 %v2044, 20.0
  %v2326 = vmin.f32 %v2047, 20.0
  %v2327 = vmin.f32 %v2050, 20.0
  %v2328 = vmin.f32 %v2053, 20.0
  %v2329 = vmin.f32 %v2056, 20.0
  %v2330 = vmin.f32 %v2059, 20.0
  %v2331 = vmin.f32 %v2062, 20.0
  %v2332 = vmin.f32 %v2065, 20.0
  %v2333 = vmin.f32 %v2068, 20.0
  %v2334 = vmin.f32 %v2071, 20.0
  %v2335 = vmin.f32 %v2074, 20.0
  %v2336 = vmin.f32 %v2077, 20.0
  %v2337 = vmin.f32 %v2080, 20.0
  %v2338 = vmin.f32 %v2083, 20.0
  %v2339 = vmin.f32 %v2086, 20.0
  %v2340 = vmin.f32 %v2089, 20.0
  %v2341 = vmin.f32 %v2092, 20.0
  %v2342 = vmin.f32 %v2095, 20.0
  %v2343 = vmin.f32 %v2098, 20.0
  %v2344 = vmin.f32 %v2101, 20.0
  %v2345 = vmin.f32 %v2104, 20.0
  %v2346 = vmin.f32 %v2107, 20.0
  %v2347 = vmin.f32 %v2110, 20.0
  %v2348 = vmin.f32 %v2113, 20.0
  %v2349 = vmin.f32 %v2116, 20.0
  %v2350 = vmin.f32 %v2119, 20.0
  %v2351 = vmin.f32 %v2122, 20.0
  %v2352 = vmin.f32 %v2125, 20.0
  %v2353 = vmin.f32 %v2128, 20.0
  %v2354 = vmin.f32 %v2131, 20.0
  %v2355 = vmin.f32 %v2134, 20.0
  %v2356 = vmin.f32 %v2137, 20.0
  %v2357 = vmin.f32 %v2140, 20.0
  %v2358 = vmin.f32 %v2143, 20.0
  %v2359 = vmin.f32 %v2146, 20.0
  %v2360 = vmin.f32 %v2149, 20.0
  %v2361 = vmin.f32 %v2152, 20.0
  %v2362 = vmin.f32 %v2155, 20.0
  %v2363 = vmin.f32 %v2158, 20.0
  %v2364 = vmin.f32 %v2161, 20.0
  %v2365 = vmin.f32 %v2164, 20.0
  %v2366 = vmin.f32 %v2167, 20.0
  %v2367 = vmin.f32 %v2170, 20.0
  %v2368 = vmin.f32 %v2173, 20.0
  %v2369 = vmin.f32 %v2176, 20.0
  %v2370 = vmin.f32 %v2179, 20.0
  %v2371 = vmin.f32 %v2182, 20.0
  %v2372 = vmin.f32 %v2185, 20.0
  %v2373 = vmin.f32 %v2188, 20.0
  %v2374 = vmin.f32 %v2191, 20.0
  %v2375 = vmin.f32 %v2194, 20.0
  %v2376 = vmin.f32 %v2197, 20.0
  %v2377 = vmin.f32 %v2200, 20.0
  %v2378 = vmin.f32 %v2203, 20.0
  %v2379 = vmin.f32 %v2206, 20.0
  %v2380 = vmin.f32 %v2209, 20.0
  %v2381 = vmin.f32 %v2212, 20.0
  %v2382 = vmin.f32 %v2215, 20.0
  %v2383 = vmin.f32 %v2218, 20.0
  %v2384 = vmin.f32 %v2221, 20.0
  %v2385 = vmin.f32 %v2224, 20.0
  %v2386 = vmin.f32 %v2227, 20.0
  %v2387 = vmin.f32 %v2230, 20.0
  %v2388 = vmin.f32 %v2233, 20.0
  %v2389 = vmin.f32 %v2236, 20.0
  %v2390 = vmin.f32 %v2239, 20.0
  %v2391 = vmin.f32 %v2242, 20.0
  %v2392 = vmin.f32 %v2245, 20.0
  %v2393 = vmin.f32 %v2248, 20.0
  %v2394 = vmin.f32 %v2251, 20.0
  %v2395 = vmin.f32 %v2254, 20.0
  %v2396 = vmin.f32 %v2257, 20.0
  %v2397 = vmin.f32 %v2260, 20.0
  %v2398 = vmin.f32 %v2263, 20.0
  %v2399 = vmin.f32 %v2266, 20.0
  %v2400 = vmin.f32 %v2269, 20.0
  %v2401 = vmin.f32 %v2272, 20.0
  %v2402 = vmin.f32 %v2275, 20.0
  %v2403 = vmin.f32 %v2278, 20.0
  %v2404 = vmin.f32 %v2281, 20.0
  %v2405 = vmin.f32 %v2284, 20.0
  %v2406 = vmin.f32 %v2287, 20.0
  %v2407 = vmin.f32 %v2290, 20.0
  %v2408 = vmin.f32 %v2293, 20.0
  %v2409 = vmin.f32 %v2296, 20.0
  %v2410 = vmin.f32 %v2299, 20.0
  %v2411 = vmin.f32 %v2302, 20.0
  %v2412 = vmin.f32 %v2305, 20.0
  %v2413 = vmin.f32 %v2308, 20.0
  %v2414 = vmin.f32 %v2311, 20.0
  %v2415 = vmin.f32 %v2314, 20.0
  %v2416 = vmin.f32 %v2317, 20.0
  %v2417 = vmin.f32 %v2320, 20.0
  %v2418 = vmul.f32 %v2322, 1.442695
  %v2419 = vpow.pop %v2418
  %v2420 = vmul.f32 %v2323, 1.442695
  %v2421 = vpow.pop %v2420
  %v2422 = vmul.f32 %v2324, 1.442695
  %v2423 = vpow.pop %v2422
  %v2424 = vmul.f32 %v2325, 1.442695
  %v2425 = vpow.pop %v2424
  %v2426 = vmul.f32 %v2326, 1.442695
  %v2427 = vpow.pop %v2426
  %v2428 = vmul.f32 %v2327, 1.442695
  %v2429 = vpow.pop %v2428
  %v2430 = vmul.f32 %v2328, 1.442695
  %v2431 = vpow.pop %v2430
  %v2432 = vmul.f32 %v2329, 1.442695
  %v2433 = vpow.pop %v2432
  %v2434 = vmul.f32 %v2330, 1.442695
  %v2435 = vpow.pop %v2434
  %v2436 = vmul.f32 %v2331, 1.442695
  %v2437 = vpow.pop %v2436
  %v2438 = vmul.f32 %v2332, 1.442695
  %v2439 = vpow.pop %v2438
  %v2440 = vmul.f32 %v2333, 1.442695
  %v2441 = vpow.pop %v2440
  %v2442 = vmul.f32 %v2334, 1.442695
  %v2443 = vpow.pop %v2442
  %v2444 = vmul.f32 %v2335, 1.442695
  %v2445 = vpow.pop %v2444
  %v2446 = vmul.f32 %v2336, 1.442695
  %v2447 = vpow.pop %v2446
  %v2448 = vmul.f32 %v2337, 1.442695
  %v2449 = vpow.pop %v2448
  %v2450 = vmul.f32 %v2338, 1.442695
  %v2451 = vpow.pop %v2450
  %v2452 = vmul.f32 %v2339, 1.442695
  %v2453 = vpow.pop %v2452
  %v2454 = vmul.f32 %v2340, 1.442695
  %v2455 = vpow.pop %v2454
  %v2456 = vmul.f32 %v2341, 1.442695
  %v2457 = vpow.pop %v2456
  %v2458 = vmul.f32 %v2342, 1.442695
  %v2459 = vpow.pop %v2458
  %v2460 = vmul.f32 %v2343, 1.442695
  %v2461 = vpow.pop %v2460
  %v2462 = vmul.f32 %v2344, 1.442695
  %v2463 = vpow.pop %v2462
  %v2464 = vmul.f32 %v2345, 1.442695
  %v2465 = vpow.pop %v2464
  %v2466 = vmul.f32 %v2346, 1.442695
  %v2467 = vpow.pop %v2466
  %v2468 = vmul.f32 %v2347, 1.442695
  %v2469 = vpow.pop %v2468
  %v2470 = vmul.f32 %v2348, 1.442695
  %v2471 = vpow.pop %v2470
  %v2472 = vmul.f32 %v2349, 1.442695
  %v2473 = vpow.pop %v2472
  %v2474 = vmul.f32 %v2350, 1.442695
  %v2475 = vpow.pop %v2474
  %v2476 = vmul.f32 %v2351, 1.442695
  %v2477 = vpow.pop %v2476
  %v2478 = vmul.f32 %v2352, 1.442695
  %v2479 = vpow.pop %v2478
  %v2480 = vmul.f32 %v2353, 1.442695
  %v2481 = vpow.pop %v2480
  %v2482 = vmul.f32 %v2354, 1.442695
  %v2483 = vpow.pop %v2482
  %v2484 = vmul.f32 %v2355, 1.442695
  %v2485 = vpow.pop %v2484
  %v2486 = vmul.f32 %v2356, 1.442695
  %v2487 = vpow.pop %v2486
  %v2488 = vmul.f32 %v2357, 1.442695
  %v2489 = vpow.pop %v2488
  %v2490 = vmul.f32 %v2358, 1.442695
  %v2491 = vpow.pop %v2490
  %v2492 = vmul.f32 %v2359, 1.442695
  %v2493 = vpow.pop %v2492
  %v2494 = vmul.f32 %v2360, 1.442695
  %v2495 = vpow.pop %v2494
  %v2496 = vmul.f32 %v2361, 1.442695
  %v2497 = vpow.pop %v2496
  %v2498 = vmul.f32 %v2362, 1.442695
  %v2499 = vpow.pop %v2498
  %v2500 = vmul.f32 %v2363, 1.442695
  %v2501 = vpow.pop %v2500
  %v2502 = vmul.f32 %v2364, 1.442695
  %v2503 = vpow.pop %v2502
  %v2504 = vmul.f32 %v2365, 1.442695
  %v2505 = vpow.pop %v2504
  %v2506 = vmul.f32 %v2366, 1.442695
  %v2507 = vpow.pop %v2506
  %v2508 = vmul.f32 %v2367, 1.442695
  %v2509 = vpow.pop %v2508
  %v2510 = vmul.f32 %v2368, 1.442695
  %v2511 = vpow.pop %v2510
  %v2512 = vmul.f32 %v2369, 1.442695
  %v2513 = vpow.pop %v2512
  %v2514 = vmul.f32 %v2370, 1.442695
  %v2515 = vpow.pop %v2514
  %v2516 = vmul.f32 %v2371, 1.442695
  %v2517 = vpow.pop %v2516
  %v2518 = vmul.f32 %v2372, 1.442695
  %v2519 = vpow.pop %v2518
  %v2520 = vmul.f32 %v2373, 1.442695
  %v2521 = vpow.pop %v2520
  %v2522 = vmul.f32 %v2374, 1.442695
  %v2523 = vpow.pop %v2522
  %v2524 = vmul.f32 %v2375, 1.442695
  %v2525 = vpow.pop %v2524
  %v2526 = vmul.f32 %v2376, 1.442695
  %v2527 = vpow.pop %v2526
  %v2528 = vmul.f32 %v2377, 1.442695
  %v2529 = vpow.pop %v2528
  %v2530 = vmul.f32 %v2378, 1.442695
  %v2531 = vpow.pop %v2530
  %v2532 = vmul.f32 %v2379, 1.442695
  %v2533 = vpow.pop %v2532
  %v2534 = vmul.f32 %v2380, 1.442695
  %v2535 = vpow.pop %v2534
  %v2536 = vmul.f32 %v2381, 1.442695
  %v2537 = vpow.pop %v2536
  %v2538 = vmul.f32 %v2382, 1.442695
  %v2539 = vpow.pop %v2538
  %v2540 = vmul.f32 %v2383, 1.442695
  %v2541 = vpow.pop %v2540
  %v2542 = vmul.f32 %v2384, 1.442695
  %v2543 = vpow.pop %v2542
  %v2544 = vmul.f32 %v2385, 1.442695
  %v2545 = vpow.pop %v2544
  %v2546 = vmul.f32 %v2386, 1.442695
  %v2547 = vpow.pop %v2546
  %v2548 = vmul.f32 %v2387, 1.442695
  %v2549 = vpow.pop %v2548
  %v2550 = vmul.f32 %v2388, 1.442695
  %v2551 = vpow.pop %v2550
  %v2552 = vmul.f32 %v2389, 1.442695
  %v2553 = vpow.pop %v2552
  %v2554 = vmul.f32 %v2390, 1.442695
  %v2555 = vpow.pop %v2554
  %v2556 = vmul.f32 %v2391, 1.442695
  %v2557 = vpow.pop %v2556
  %v2558 = vmul.f32 %v2392, 1.442695
  %v2559 = vpow.pop %v2558
  %v2560 = vmul.f32 %v2393, 1.442695
  %v2561 = vpow.pop %v2560
  %v2562 = vmul.f32 %v2394, 1.442695
  %v2563 = vpow.pop %v2562
  %v2564 = vmul.f32 %v2395, 1.442695
  %v2565 = vpow.pop %v2564
  %v2566 = vmul.f32 %v2396, 1.442695
  %v2567 = vpow.pop %v2566
  %v2568 = vmul.f32 %v2397, 1.442695
  %v2569 = vpow.pop %v2568
  %v2570 = vmul.f32 %v2398, 1.442695
  %v2571 = vpow.pop %v2570
  %v2572 = vmul.f32 %v2399, 1.442695
  %v2573 = vpow.pop %v2572
  %v2574 = vmul.f32 %v2400, 1.442695
  %v2575 = vpow.pop %v2574
  %v2576 = vmul.f32 %v2401, 1.442695
  %v2577 = vpow.pop %v2576
  %v2578 = vmul.f32 %v2402, 1.442695
  %v2579 = vpow.pop %v2578
  %v2580 = vmul.f32 %v2403, 1.442695
  %v2581 = vpow.pop %v2580
  %v2582 = vmul.f32 %v2404, 1.442695
  %v2583 = vpow.pop %v2582
  %v2584 = vmul.f32 %v2405, 1.442695
  %v2585 = vpow.pop %v2584
  %v2586 = vmul.f32 %v2406, 1.442695
  %v2587 = vpow.pop %v2586
  %v2588 = vmul.f32 %v2407, 1.442695
  %v2589 = vpow.pop %v2588
  %v2590 = vmul.f32 %v2408, 1.442695
  %v2591 = vpow.pop %v2590
  %v2592 = vmul.f32 %v2409, 1.442695
  %v2593 = vpow.pop %v2592
  %v2594 = vmul.f32 %v2410, 1.442695
  %v2595 = vpow.pop %v2594
  %v2596 = vmul.f32 %v2411, 1.442695
  %v2597 = vpow.pop %v2596
  %v2598 = vmul.f32 %v2412, 1.442695
  %v2599 = vpow.pop %v2598
  %v2600 = vmul.f32 %v2413, 1.442695
  %v2601 = vpow.pop %v2600
  %v2602 = vmul.f32 %v2414, 1.442695
  %v2603 = vpow.pop %v2602
  %v2604 = vmul.f32 %v2415, 1.442695
  %v2605 = vpow.pop %v2604
  %v2606 = vmul.f32 %v2416, 1.442695
  %v2607 = vpow.pop %v2606
  %v2608 = vmul.f32 %v2417, 1.442695
  %v2609 = vpow.pop %v2608
  %v2610 = vadd.f32 %v2419, 1.0
  %v2611 = vadd.f32 %v2421, 1.0
  %v2612 = vadd.f32 %v2423, 1.0
  %v2613 = vadd.f32 %v2425, 1.0
  %v2614 = vadd.f32 %v2427, 1.0
  %v2615 = vadd.f32 %v2429, 1.0
  %v2616 = vadd.f32 %v2431, 1.0
  %v2617 = vadd.f32 %v2433, 1.0
  %v2618 = vadd.f32 %v2435, 1.0
  %v2619 = vadd.f32 %v2437, 1.0
  %v2620 = vadd.f32 %v2439, 1.0
  %v2621 = vadd.f32 %v2441, 1.0
  %v2622 = vadd.f32 %v2443, 1.0
  %v2623 = vadd.f32 %v2445, 1.0
  %v2624 = vadd.f32 %v2447, 1.0
  %v2625 = vadd.f32 %v2449, 1.0
  %v2626 = vadd.f32 %v2451, 1.0
  %v2627 = vadd.f32 %v2453, 1.0
  %v2628 = vadd.f32 %v2455, 1.0
  %v2629 = vadd.f32 %v2457, 1.0
  %v2630 = vadd.f32 %v2459, 1.0
  %v2631 = vadd.f32 %v2461, 1.0
  %v2632 = vadd.f32 %v2463, 1.0
  %v2633 = vadd.f32 %v2465, 1.0
  %v2634 = vadd.f32 %v2467, 1.0
  %v2635 = vadd.f32 %v2469, 1.0
  %v2636 = vadd.f32 %v2471, 1.0
  %v2637 = vadd.f32 %v2473, 1.0
  %v2638 = vadd.f32 %v2475, 1.0
  %v2639 = vadd.f32 %v2477, 1.0
  %v2640 = vadd.f32 %v2479, 1.0
  %v2641 = vadd.f32 %v2481, 1.0
  %v2642 = vadd.f32 %v2483, 1.0
  %v2643 = vadd.f32 %v2485, 1.0
  %v2644 = vadd.f32 %v2487, 1.0
  %v2645 = vadd.f32 %v2489, 1.0
  %v2646 = vadd.f32 %v2491, 1.0
  %v2647 = vadd.f32 %v2493, 1.0
  %v2648 = vadd.f32 %v2495, 1.0
  %v2649 = vadd.f32 %v2497, 1.0
  %v2650 = vadd.f32 %v2499, 1.0
  %v2651 = vadd.f32 %v2501, 1.0
  %v2652 = vadd.f32 %v2503, 1.0
  %v2653 = vadd.f32 %v2505, 1.0
  %v2654 = vadd.f32 %v2507, 1.0
  %v2655 = vadd.f32 %v2509, 1.0
  %v2656 = vadd.f32 %v2511, 1.0
  %v2657 = vadd.f32 %v2513, 1.0
  %v2658 = vadd.f32 %v2515, 1.0
  %v2659 = vadd.f32 %v2517, 1.0
  %v2660 = vadd.f32 %v2519, 1.0
  %v2661 = vadd.f32 %v2521, 1.0
  %v2662 = vadd.f32 %v2523, 1.0
  %v2663 = vadd.f32 %v2525, 1.0
  %v2664 = vadd.f32 %v2527, 1.0
  %v2665 = vadd.f32 %v2529, 1.0
  %v2666 = vadd.f32 %v2531, 1.0
  %v2667 = vadd.f32 %v2533, 1.0
  %v2668 = vadd.f32 %v2535, 1.0
  %v2669 = vadd.f32 %v2537, 1.0
  %v2670 = vadd.f32 %v2539, 1.0
  %v2671 = vadd.f32 %v2541, 1.0
  %v2672 = vadd.f32 %v2543, 1.0
  %v2673 = vadd.f32 %v2545, 1.0
  %v2674 = vadd.f32 %v2547, 1.0
  %v2675 = vadd.f32 %v2549, 1.0
  %v2676 = vadd.f32 %v2551, 1.0
  %v2677 = vadd.f32 %v2553, 1.0
  %v2678 = vadd.f32 %v2555, 1.0
  %v2679 = vadd.f32 %v2557, 1.0
  %v2680 = vadd.f32 %v2559, 1.0
  %v2681 = vadd.f32 %v2561, 1.0
  %v2682 = vadd.f32 %v2563, 1.0
  %v2683 = vadd.f32 %v2565, 1.0
  %v2684 = vadd.f32 %v2567, 1.0
  %v2685 = vadd.f32 %v2569, 1.0
  %v2686 = vadd.f32 %v2571, 1.0
  %v2687 = vadd.f32 %v2573, 1.0
  %v2688 = vadd.f32 %v2575, 1.0
  %v2689 = vadd.f32 %v2577, 1.0
  %v2690 = vadd.f32 %v2579, 1.0
  %v2691 = vadd.f32 %v2581, 1.0
  %v2692 = vadd.f32 %v2583, 1.0
  %v2693 = vadd.f32 %v2585, 1.0
  %v2694 = vadd.f32 %v2587, 1.0
  %v2695 = vadd.f32 %v2589, 1.0
  %v2696 = vadd.f32 %v2591, 1.0
  %v2697 = vadd.f32 %v2593, 1.0
  %v2698 = vadd.f32 %v2595, 1.0
  %v2699 = vadd.f32 %v2597, 1.0
  %v2700 = vadd.f32 %v2599, 1.0
  %v2701 = vadd.f32 %v2601, 1.0
  %v2702 = vadd.f32 %v2603, 1.0
  %v2703 = vadd.f32 %v2605, 1.0
  %v2704 = vadd.f32 %v2607, 1.0
  %v2705 = vadd.f32 %v2609, 1.0
  %v2706 = vrcp.pop %v2610
  %v2707 = vrcp.pop %v2611
  %v2708 = vrcp.pop %v2612
  %v2709 = vrcp.pop %v2613
  %v2710 = vrcp.pop %v2614
  %v2711 = vrcp.pop %v2615
  %v2712 = vrcp.pop %v2616
  %v2713 = vrcp.pop %v2617
  %v2714 = vrcp.pop %v2618
  %v2715 = vrcp.pop %v2619
  %v2716 = vrcp.pop %v2620
  %v2717 = vrcp.pop %v2621
  %v2718 = vrcp.pop %v2622
  %v2719 = vrcp.pop %v2623
  %v2720 = vrcp.pop %v2624
  %v2721 = vrcp.pop %v2625
  %v2722 = vrcp.pop %v2626
  %v2723 = vrcp.pop %v2627
  %v2724 = vrcp.pop %v2628
  %v2725 = vrcp.pop %v2629
  %v2726 = vrcp.pop %v2630
  %v2727 = vrcp.pop %v2631
  %v2728 = vrcp.pop %v2632
  %v2729 = vrcp.pop %v2633
  %v2730 = vrcp.pop %v2634
  %v2731 = vrcp.pop %v2635
  %v2732 = vrcp.pop %v2636
  %v2733 = vrcp.pop %v2637
  %v2734 = vrcp.pop %v2638
  %v2735 = vrcp.pop %v2639
  %v2736 = vrcp.pop %v2640
  %v2737 = vrcp.pop %v2641
  %v2738 = vrcp.pop %v2642
  %v2739 = vrcp.pop %v2643
  %v2740 = vrcp.pop %v2644
  %v2741 = vrcp.pop %v2645
  %v2742 = vrcp.pop %v2646
  %v2743 = vrcp.pop %v2647
  %v2744 = vrcp.pop %v2648
  %v2745 = vrcp.pop %v2649
  %v2746 = vrcp.pop %v2650
  %v2747 = vrcp.pop %v2651
  %v2748 = vrcp.pop %v2652
  %v2749 = vrcp.pop %v2653
  %v2750 = vrcp.pop %v2654
  %v2751 = vrcp.pop %v2655
  %v2752 = vrcp.pop %v2656
  %v2753 = vrcp.pop %v2657
  %v2754 = vrcp.pop %v2658
  %v2755 = vrcp.pop %v2659
  %v2756 = vrcp.pop %v2660
  %v2757 = vrcp.pop %v2661
  %v2758 = vrcp.pop %v2662
  %v2759 = vrcp.pop %v2663
  %v2760 = vrcp.pop %v2664
  %v2761 = vrcp.pop %v2665
  %v2762 = vrcp.pop %v2666
  %v2763 = vrcp.pop %v2667
  %v2764 = vrcp.pop %v2668
  %v2765 = vrcp.pop %v2669
  %v2766 = vrcp.pop %v2670
  %v2767 = vrcp.pop %v2671
  %v2768 = vrcp.pop %v2672
  %v2769 = vrcp.pop %v2673
  %v2770 = vrcp.pop %v2674
  %v2771 = vrcp.pop %v2675
  %v2772 = vrcp.pop %v2676
  %v2773 = vrcp.pop %v2677
  %v2774 = vrcp.pop %v2678
  %v2775 = vrcp.pop %v2679
  %v2776 = vrcp.pop %v2680
  %v2777 = vrcp.pop %v2681
  %v2778 = vrcp.pop %v2682
  %v2779 = vrcp.pop %v2683
  %v2780 = vrcp.pop %v2684
  %v2781 = vrcp.pop %v2685
  %v2782 = vrcp.pop %v2686
  %v2783 = vrcp.pop %v2687
  %v2784 = vrcp.pop %v2688
  %v2785 = vrcp.pop %v2689
  %v2786 = vrcp.pop %v2690
  %v2787 = vrcp.pop %v2691
  %v2788 = vrcp.pop %v2692
  %v2789 = vrcp.pop %v2693
  %v2790 = vrcp.pop %v2694
  %v2791 = vrcp.pop %v2695
  %v2792 = vrcp.pop %v2696
  %v2793 = vrcp.pop %v2697
  %v2794 = vrcp.pop %v2698
  %v2795 = vrcp.pop %v2699
  %v2796 = vrcp.pop %v2700
  %v2797 = vrcp.pop %v2701
  %v2798 = vrcp.pop %v2702
  %v2799 = vrcp.pop %v2703
  %v2800 = vrcp.pop %v2704
  %v2801 = vrcp.pop %v2705
  %vm2802 = vcmp.gt.f32.partialorder %v2035, 20.0
  %vm2803 = vcmp.gt.f32.partialorder %v2038, 20.0
  %vm2804 = vcmp.gt.f32.partialorder %v2041, 20.0
  %vm2805 = vcmp.gt.f32.partialorder %v2044, 20.0
  %vm2806 = vcmp.gt.f32.partialorder %v2047, 20.0
  %vm2807 = vcmp.gt.f32.partialorder %v2050, 20.0
  %vm2808 = vcmp.gt.f32.partialorder %v2053, 20.0
  %vm2809 = vcmp.gt.f32.partialorder %v2056, 20.0
  %vm2810 = vcmp.gt.f32.partialorder %v2059, 20.0
  %vm2811 = vcmp.gt.f32.partialorder %v2062, 20.0
  %vm2812 = vcmp.gt.f32.partialorder %v2065, 20.0
  %vm2813 = vcmp.gt.f32.partialorder %v2068, 20.0
  %vm2814 = vcmp.gt.f32.partialorder %v2071, 20.0
  %vm2815 = vcmp.gt.f32.partialorder %v2074, 20.0
  %vm2816 = vcmp.gt.f32.partialorder %v2077, 20.0
  %vm2817 = vcmp.gt.f32.partialorder %v2080, 20.0
  %vm2818 = vcmp.gt.f32.partialorder %v2083, 20.0
  %vm2819 = vcmp.gt.f32.partialorder %v2086, 20.0
  %vm2820 = vcmp.gt.f32.partialorder %v2089, 20.0
  %vm2821 = vcmp.gt.f32.partialorder %v2092, 20.0
  %vm2822 = vcmp.gt.f32.partialorder %v2095, 20.0
  %vm2823 = vcmp.gt.f32.partialorder %v2098, 20.0
  %vm2824 = vcmp.gt.f32.partialorder %v2101, 20.0
  %vm2825 = vcmp.gt.f32.partialorder %v2104, 20.0
  %vm2826 = vcmp.gt.f32.partialorder %v2107, 20.0
  %vm2827 = vcmp.gt.f32.partialorder %v2110, 20.0
  %vm2828 = vcmp.gt.f32.partialorder %v2113, 20.0
  %vm2829 = vcmp.gt.f32.partialorder %v2116, 20.0
  %vm2830 = vcmp.gt.f32.partialorder %v2119, 20.0
  %vm2831 = vcmp.gt.f32.partialorder %v2122, 20.0
  %vm2832 = vcmp.gt.f32.partialorder %v2125, 20.0
  %vm2833 = vcmp.gt.f32.partialorder %v2128, 20.0
  %vm2834 = vcmp.gt.f32.partialorder %v2131, 20.0
  %vm2835 = vcmp.gt.f32.partialorder %v2134, 20.0
  %vm2836 = vcmp.gt.f32.partialorder %v2137, 20.0
  %vm2837 = vcmp.gt.f32.partialorder %v2140, 20.0
  %vm2838 = vcmp.gt.f32.partialorder %v2143, 20.0
  %vm2839 = vcmp.gt.f32.partialorder %v2146, 20.0
  %vm2840 = vcmp.gt.f32.partialorder %v2149, 20.0
  %vm2841 = vcmp.gt.f32.partialorder %v2152, 20.0
  %vm2842 = vcmp.gt.f32.partialorder %v2155, 20.0
  %vm2843 = vcmp.gt.f32.partialorder %v2158, 20.0
  %vm2844 = vcmp.gt.f32.partialorder %v2161, 20.0
  %vm2845 = vcmp.gt.f32.partialorder %v2164, 20.0
  %vm2846 = vcmp.gt.f32.partialorder %v2167, 20.0
  %vm2847 = vcmp.gt.f32.partialorder %v2170, 20.0
  %vm2848 = vcmp.gt.f32.partialorder %v2173, 20.0
  %vm2849 = vcmp.gt.f32.partialorder %v2176, 20.0
  %vm2850 = vcmp.gt.f32.partialorder %v2179, 20.0
  %vm2851 = vcmp.gt.f32.partialorder %v2182, 20.0
  %vm2852 = vcmp.gt.f32.partialorder %v2185, 20.0
  %vm2853 = vcmp.gt.f32.partialorder %v2188, 20.0
  %vm2854 = vcmp.gt.f32.partialorder %v2191, 20.0
  %vm2855 = vcmp.gt.f32.partialorder %v2194, 20.0
  %vm2856 = vcmp.gt.f32.partialorder %v2197, 20.0
  %vm2857 = vcmp.gt.f32.partialorder %v2200, 20.0
  %vm2858 = vcmp.gt.f32.partialorder %v2203, 20.0
  %vm2859 = vcmp.gt.f32.partialorder %v2206, 20.0
  %vm2860 = vcmp.gt.f32.partialorder %v2209, 20.0
  %vm2861 = vcmp.gt.f32.partialorder %v2212, 20.0
  %vm2862 = vcmp.gt.f32.partialorder %v2215, 20.0
  %vm2863 = vcmp.gt.f32.partialorder %v2218, 20.0
  %vm2864 = vcmp.gt.f32.partialorder %v2221, 20.0
  %vm2865 = vcmp.gt.f32.partialorder %v2224, 20.0
  %vm2866 = vcmp.gt.f32.partialorder %v2227, 20.0
  %vm2867 = vcmp.gt.f32.partialorder %v2230, 20.0
  %vm2868 = vcmp.gt.f32.partialorder %v2233, 20.0
  %vm2869 = vcmp.gt.f32.partialorder %v2236, 20.0
  %vm2870 = vcmp.gt.f32.partialorder %v2239, 20.0
  %vm2871 = vcmp.gt.f32.partialorder %v2242, 20.0
  %vm2872 = vcmp.gt.f32.partialorder %v2245, 20.0
  %vm2873 = vcmp.gt.f32.partialorder %v2248, 20.0
  %vm2874 = vcmp.gt.f32.partialorder %v2251, 20.0
  %vm2875 = vcmp.gt.f32.partialorder %v2254, 20.0
  %vm2876 = vcmp.gt.f32.partialorder %v2257, 20.0
  %vm2877 = vcmp.gt.f32.partialorder %v2260, 20.0
  %vm2878 = vcmp.gt.f32.partialorder %v2263, 20.0
  %vm2879 = vcmp.gt.f32.partialorder %v2266, 20.0
  %vm2880 = vcmp.gt.f32.partialorder %v2269, 20.0
  %vm2881 = vcmp.gt.f32.partialorder %v2272, 20.0
  %vm2882 = vcmp.gt.f32.partialorder %v2275, 20.0
  %vm2883 = vcmp.gt.f32.partialorder %v2278, 20.0
  %vm2884 = vcmp.gt.f32.partialorder %v2281, 20.0
  %vm2885 = vcmp.gt.f32.partialorder %v2284, 20.0
  %vm2886 = vcmp.gt.f32.partialorder %v2287, 20.0
  %vm2887 = vcmp.gt.f32.partialorder %v2290, 20.0
  %vm2888 = vcmp.gt.f32.partialorder %v2293, 20.0
  %vm2889 = vcmp.gt.f32.partialorder %v2296, 20.0
  %vm2890 = vcmp.gt.f32.partialorder %v2299, 20.0
  %vm2891 = vcmp.gt.f32.partialorder %v2302, 20.0
  %vm2892 = vcmp.gt.f32.partialorder %v2305, 20.0
  %vm2893 = vcmp.gt.f32.partialorder %v2308, 20.0
  %vm2894 = vcmp.gt.f32.partialorder %v2311, 20.0
  %vm2895 = vcmp.gt.f32.partialorder %v2314, 20.0
  %vm2896 = vcmp.gt.f32.partialorder %v2317, 20.0
  %vm2897 = vcmp.gt.f32.partialorder %v2320, 20.0
  %v2898 = vlog2.pop %v2610
  %v2899 = vmul.f32 %v2898, 0.6931472
  %v2900 = vlog2.pop %v2611
  %v2901 = vmul.f32 %v2900, 0.6931472
  %v2902 = vlog2.pop %v2612
  %v2903 = vmul.f32 %v2902, 0.6931472
  %v2904 = vlog2.pop %v2613
  %v2905 = vmul.f32 %v2904, 0.6931472
  %v2906 = vlog2.pop %v2614
  %v2907 = vmul.f32 %v2906, 0.6931472
  %v2908 = vlog2.pop %v2615
  %v2909 = vmul.f32 %v2908, 0.6931472
  %v2910 = vlog2.pop %v2616
  %v2911 = vmul.f32 %v2910, 0.6931472
  %v2912 = vlog2.pop %v2617
  %v2913 = vmul.f32 %v2912, 0.6931472
  %v2914 = vlog2.pop %v2618
  %v2915 = vmul.f32 %v2914, 0.6931472
  %v2916 = vlog2.pop %v2619
  %v2917 = vmul.f32 %v2916, 0.6931472
  %v2918 = vlog2.pop %v2620
  %v2919 = vmul.f32 %v2918, 0.6931472
  %v2920 = vlog2.pop %v2621
  %v2921 = vmul.f32 %v2920, 0.6931472
  %v2922 = vlog2.pop %v2622
  %v2923 = vmul.f32 %v2922, 0.6931472
  %v2924 = vlog2.pop %v2623
  %v2925 = vmul.f32 %v2924, 0.6931472
  %v2926 = vlog2.pop %v2624
  %v2927 = vmul.f32 %v2926, 0.6931472
  %v2928 = vlog2.pop %v2625
  %v2929 = vmul.f32 %v2928, 0.6931472
  %v2930 = vlog2.pop %v2626
  %v2931 = vmul.f32 %v2930, 0.6931472
  %v2932 = vlog2.pop %v2627
  %v2933 = vmul.f32 %v2932, 0.6931472
  %v2934 = vlog2.pop %v2628
  %v2935 = vmul.f32 %v2934, 0.6931472
  %v2936 = vlog2.pop %v2629
  %v2937 = vmul.f32 %v2936, 0.6931472
  %v2938 = vlog2.pop %v2630
  %v2939 = vmul.f32 %v2938, 0.6931472
  %v2940 = vlog2.pop %v2631
  %v2941 = vmul.f32 %v2940, 0.6931472
  %v2942 = vlog2.pop %v2632
  %v2943 = vmul.f32 %v2942, 0.6931472
  %v2944 = vlog2.pop %v2633
  %v2945 = vmul.f32 %v2944, 0.6931472
  %v2946 = vlog2.pop %v2634
  %v2947 = vmul.f32 %v2946, 0.6931472
  %v2948 = vlog2.pop %v2635
  %v2949 = vmul.f32 %v2948, 0.6931472
  %v2950 = vlog2.pop %v2636
  %v2951 = vmul.f32 %v2950, 0.6931472
  %v2952 = vlog2.pop %v2637
  %v2953 = vmul.f32 %v2952, 0.6931472
  %v2954 = vlog2.pop %v2638
  %v2955 = vmul.f32 %v2954, 0.6931472
  %v2956 = vlog2.pop %v2639
  %v2957 = vmul.f32 %v2956, 0.6931472
  %v2958 = vlog2.pop %v2640
  %v2959 = vmul.f32 %v2958, 0.6931472
  %v2960 = vlog2.pop %v2641
  %v2961 = vmul.f32 %v2960, 0.6931472
  %v2962 = vlog2.pop %v2642
  %v2963 = vmul.f32 %v2962, 0.6931472
  %v2964 = vlog2.pop %v2643
  %v2965 = vmul.f32 %v2964, 0.6931472
  %v2966 = vlog2.pop %v2644
  %v2967 = vmul.f32 %v2966, 0.6931472
  %v2968 = vlog2.pop %v2645
  %v2969 = vmul.f32 %v2968, 0.6931472
  %v2970 = vlog2.pop %v2646
  %v2971 = vmul.f32 %v2970, 0.6931472
  %v2972 = vlog2.pop %v2647
  %v2973 = vmul.f32 %v2972, 0.6931472
  %v2974 = vlog2.pop %v2648
  %v2975 = vmul.f32 %v2974, 0.6931472
  %v2976 = vlog2.pop %v2649
  %v2977 = vmul.f32 %v2976, 0.6931472
  %v2978 = vlog2.pop %v2650
  %v2979 = vmul.f32 %v2978, 0.6931472
  %v2980 = vlog2.pop %v2651
  %v2981 = vmul.f32 %v2980, 0.6931472
  %v2982 = vlog2.pop %v2652
  %v2983 = vmul.f32 %v2982, 0.6931472
  %v2984 = vlog2.pop %v2653
  %v2985 = vmul.f32 %v2984, 0.6931472
  %v2986 = vlog2.pop %v2654
  %v2987 = vmul.f32 %v2986, 0.6931472
  %v2988 = vlog2.pop %v2655
  %v2989 = vmul.f32 %v2988, 0.6931472
  %v2990 = vlog2.pop %v2656
  %v2991 = vmul.f32 %v2990, 0.6931472
  %v2992 = vlog2.pop %v2657
  %v2993 = vmul.f32 %v2992, 0.6931472
  %v2994 = vlog2.pop %v2658
  %v2995 = vmul.f32 %v2994, 0.6931472
  %v2996 = vlog2.pop %v2659
  %v2997 = vmul.f32 %v2996, 0.6931472
  %v2998 = vlog2.pop %v2660
  %v2999 = vmul.f32 %v2998, 0.6931472
  %v3000 = vlog2.pop %v2661
  %v3001 = vmul.f32 %v3000, 0.6931472
  %v3002 = vlog2.pop %v2662
  %v3003 = vmul.f32 %v3002, 0.6931472
  %v3004 = vlog2.pop %v2663
  %v3005 = vmul.f32 %v3004, 0.6931472
  %v3006 = vlog2.pop %v2664
  %v3007 = vmul.f32 %v3006, 0.6931472
  %v3008 = vlog2.pop %v2665
  %v3009 = vmul.f32 %v3008, 0.6931472
  %v3010 = vlog2.pop %v2666
  %v3011 = vmul.f32 %v3010, 0.6931472
  %v3012 = vlog2.pop %v2667
  %v3013 = vmul.f32 %v3012, 0.6931472
  %v3014 = vlog2.pop %v2668
  %v3015 = vmul.f32 %v3014, 0.6931472
  %v3016 = vlog2.pop %v2669
  %v3017 = vmul.f32 %v3016, 0.6931472
  %v3018 = vlog2.pop %v2670
  %v3019 = vmul.f32 %v3018, 0.6931472
  %v3020 = vlog2.pop %v2671
  %v3021 = vmul.f32 %v3020, 0.6931472
  %v3022 = vlog2.pop %v2672
  %v3023 = vmul.f32 %v3022, 0.6931472
  %v3024 = vlog2.pop %v2673
  %v3025 = vmul.f32 %v3024, 0.6931472
  %v3026 = vlog2.pop %v2674
  %v3027 = vmul.f32 %v3026, 0.6931472
  %v3028 = vlog2.pop %v2675
  %v3029 = vmul.f32 %v3028, 0.6931472
  %v3030 = vlog2.pop %v2676
  %v3031 = vmul.f32 %v3030, 0.6931472
  %v3032 = vlog2.pop %v2677
  %v3033 = vmul.f32 %v3032, 0.6931472
  %v3034 = vlog2.pop %v2678
  %v3035 = vmul.f32 %v3034, 0.6931472
  %v3036 = vlog2.pop %v2679
  %v3037 = vmul.f32 %v3036, 0.6931472
  %v3038 = vlog2.pop %v2680
  %v3039 = vmul.f32 %v3038, 0.6931472
  %v3040 = vlog2.pop %v2681
  %v3041 = vmul.f32 %v3040, 0.6931472
  %v3042 = vlog2.pop %v2682
  %v3043 = vmul.f32 %v3042, 0.6931472
  %v3044 = vlog2.pop %v2683
  %v3045 = vmul.f32 %v3044, 0.6931472
  %v3046 = vlog2.pop %v2684
  %v3047 = vmul.f32 %v3046, 0.6931472
  %v3048 = vlog2.pop %v2685
  %v3049 = vmul.f32 %v3048, 0.6931472
  %v3050 = vlog2.pop %v2686
  %v3051 = vmul.f32 %v3050, 0.6931472
  %v3052 = vlog2.pop %v2687
  %v3053 = vmul.f32 %v3052, 0.6931472
  %v3054 = vlog2.pop %v2688
  %v3055 = vmul.f32 %v3054, 0.6931472
  %v3056 = vlog2.pop %v2689
  %v3057 = vmul.f32 %v3056, 0.6931472
  %v3058 = vlog2.pop %v2690
  %v3059 = vmul.f32 %v3058, 0.6931472
  %v3060 = vlog2.pop %v2691
  %v3061 = vmul.f32 %v3060, 0.6931472
  %v3062 = vlog2.pop %v2692
  %v3063 = vmul.f32 %v3062, 0.6931472
  %v3064 = vlog2.pop %v2693
  %v3065 = vmul.f32 %v3064, 0.6931472
  %v3066 = vlog2.pop %v2694
  %v3067 = vmul.f32 %v3066, 0.6931472
  %v3068 = vlog2.pop %v2695
  %v3069 = vmul.f32 %v3068, 0.6931472
  %v3070 = vlog2.pop %v2696
  %v3071 = vmul.f32 %v3070, 0.6931472
  %v3072 = vlog2.pop %v2697
  %v3073 = vmul.f32 %v3072, 0.6931472
  %v3074 = vlog2.pop %v2698
  %v3075 = vmul.f32 %v3074, 0.6931472
  %v3076 = vlog2.pop %v2699
  %v3077 = vmul.f32 %v3076, 0.6931472
  %v3078 = vlog2.pop %v2700
  %v3079 = vmul.f32 %v3078, 0.6931472
  %v3080 = vlog2.pop %v2701
  %v3081 = vmul.f32 %v3080, 0.6931472
  %v3082 = vlog2.pop %v2702
  %v3083 = vmul.f32 %v3082, 0.6931472
  %v3084 = vlog2.pop %v2703
  %v3085 = vmul.f32 %v3084, 0.6931472
  %v3086 = vlog2.pop %v2704
  %v3087 = vmul.f32 %v3086, 0.6931472
  %v3088 = vlog2.pop %v2705
  %v3089 = vmul.f32 %v3088, 0.6931472
  %v3090 = vsel %vm2802, %v2035, %v2899
  %v3091 = vsel %vm2803, %v2038, %v2901
  %v3092 = vsel %vm2804, %v2041, %v2903
  %v3093 = vsel %vm2805, %v2044, %v2905
  %v3094 = vsel %vm2806, %v2047, %v2907
  %v3095 = vsel %vm2807, %v2050, %v2909
  %v3096 = vsel %vm2808, %v2053, %v2911
  %v3097 = vsel %vm2809, %v2056, %v2913
  %v3098 = vsel %vm2810, %v2059, %v2915
  %v3099 = vsel %vm2811, %v2062, %v2917
  %v3100 = vsel %vm2812, %v2065, %v2919
  %v3101 = vsel %vm2813, %v2068, %v2921
  %v3102 = vsel %vm2814, %v2071, %v2923
  %v3103 = vsel %vm2815, %v2074, %v2925
  %v3104 = vsel %vm2816, %v2077, %v2927
  %v3105 = vsel %vm2817, %v2080, %v2929
  %v3106 = vsel %vm2818, %v2083, %v2931
  %v3107 = vsel %vm2819, %v2086, %v2933
  %v3108 = vsel %vm2820, %v2089, %v2935
  %v3109 = vsel %vm2821, %v2092, %v2937
  %v3110 = vsel %vm2822, %v2095, %v2939
  %v3111 = vsel %vm2823, %v2098, %v2941
  %v3112 = vsel %vm2824, %v2101, %v2943
  %v3113 = vsel %vm2825, %v2104, %v2945
  %v3114 = vsel %vm2826, %v2107, %v2947
  %v3115 = vsel %vm2827, %v2110, %v2949
  %v3116 = vsel %vm2828, %v2113, %v2951
  %v3117 = vsel %vm2829, %v2116, %v2953
  %v3118 = vsel %vm2830, %v2119, %v2955
  %v3119 = vsel %vm2831, %v2122, %v2957
  %v3120 = vsel %vm2832, %v2125, %v2959
  %v3121 = vsel %vm2833, %v2128, %v2961
  %v3122 = vsel %vm2834, %v2131, %v2963
  %v3123 = vsel %vm2835, %v2134, %v2965
  %v3124 = vsel %vm2836, %v2137, %v2967
  %v3125 = vsel %vm2837, %v2140, %v2969
  %v3126 = vsel %vm2838, %v2143, %v2971
  %v3127 = vsel %vm2839, %v2146, %v2973
  %v3128 = vsel %vm2840, %v2149, %v2975
  %v3129 = vsel %vm2841, %v2152, %v2977
  %v3130 = vsel %vm2842, %v2155, %v2979
  %v3131 = vsel %vm2843, %v2158, %v2981
  %v3132 = vsel %vm2844, %v2161, %v2983
  %v3133 = vsel %vm2845, %v2164, %v2985
  %v3134 = vsel %vm2846, %v2167, %v2987
  %v3135 = vsel %vm2847, %v2170, %v2989
  %v3136 = vsel %vm2848, %v2173, %v2991
  %v3137 = vsel %vm2849, %v2176, %v2993
  %v3138 = vsel %vm2850, %v2179, %v2995
  %v3139 = vsel %vm2851, %v2182, %v2997
  %v3140 = vsel %vm2852, %v2185, %v2999
  %v3141 = vsel %vm2853, %v2188, %v3001
  %v3142 = vsel %vm2854, %v2191, %v3003
  %v3143 = vsel %vm2855, %v2194, %v3005
  %v3144 = vsel %vm2856, %v2197, %v3007
  %v3145 = vsel %vm2857, %v2200, %v3009
  %v3146 = vsel %vm2858, %v2203, %v3011
  %v3147 = vsel %vm2859, %v2206, %v3013
  %v3148 = vsel %vm2860, %v2209, %v3015
  %v3149 = vsel %vm2861, %v2212, %v3017
  %v3150 = vsel %vm2862, %v2215, %v3019
  %v3151 = vsel %vm2863, %v2218, %v3021
  %v3152 = vsel %vm2864, %v2221, %v3023
  %v3153 = vsel %vm2865, %v2224, %v3025
  %v3154 = vsel %vm2866, %v2227, %v3027
  %v3155 = vsel %vm2867, %v2230, %v3029
  %v3156 = vsel %vm2868, %v2233, %v3031
  %v3157 = vsel %vm2869, %v2236, %v3033
  %v3158 = vsel %vm2870, %v2239, %v3035
  %v3159 = vsel %vm2871, %v2242, %v3037
  %v3160 = vsel %vm2872, %v2245, %v3039
  %v3161 = vsel %vm2873, %v2248, %v3041
  %v3162 = vsel %vm2874, %v2251, %v3043
  %v3163 = vsel %vm2875, %v2254, %v3045
  %v3164 = vsel %vm2876, %v2257, %v3047
  %v3165 = vsel %vm2877, %v2260, %v3049
  %v3166 = vsel %vm2878, %v2263, %v3051
  %v3167 = vsel %vm2879, %v2266, %v3053
  %v3168 = vsel %vm2880, %v2269, %v3055
  %v3169 = vsel %vm2881, %v2272, %v3057
  %v3170 = vsel %vm2882, %v2275, %v3059
  %v3171 = vsel %vm2883, %v2278, %v3061
  %v3172 = vsel %vm2884, %v2281, %v3063
  %v3173 = vsel %vm2885, %v2284, %v3065
  %v3174 = vsel %vm2886, %v2287, %v3067
  %v3175 = vsel %vm2887, %v2290, %v3069
  %v3176 = vsel %vm2888, %v2293, %v3071
  %v3177 = vsel %vm2889, %v2296, %v3073
  %v3178 = vsel %vm2890, %v2299, %v3075
  %v3179 = vsel %vm2891, %v2302, %v3077
  %v3180 = vsel %vm2892, %v2305, %v3079
  %v3181 = vsel %vm2893, %v2308, %v3081
  %v3182 = vsel %vm2894, %v2311, %v3083
  %v3183 = vsel %vm2895, %v2314, %v3085
  %v3184 = vsel %vm2896, %v2317, %v3087
  %v3185 = vsel %vm2897, %v2320, %v3089
  %v3186 = vmul.f32 %v2419, %v2706
  %v3187 = vmul.f32 %v2421, %v2707
  %v3188 = vmul.f32 %v2423, %v2708
  %v3189 = vmul.f32 %v2425, %v2709
  %v3190 = vmul.f32 %v2427, %v2710
  %v3191 = vmul.f32 %v2429, %v2711
  %v3192 = vmul.f32 %v2431, %v2712
  %v3193 = vmul.f32 %v2433, %v2713
  %v3194 = vmul.f32 %v2435, %v2714
  %v3195 = vmul.f32 %v2437, %v2715
  %v3196 = vmul.f32 %v2439, %v2716
  %v3197 = vmul.f32 %v2441, %v2717
  %v3198 = vmul.f32 %v2443, %v2718
  %v3199 = vmul.f32 %v2445, %v2719
  %v3200 = vmul.f32 %v2447, %v2720
  %v3201 = vmul.f32 %v2449, %v2721
  %v3202 = vmul.f32 %v2451, %v2722
  %v3203 = vmul.f32 %v2453, %v2723
  %v3204 = vmul.f32 %v2455, %v2724
  %v3205 = vmul.f32 %v2457, %v2725
  %v3206 = vmul.f32 %v2459, %v2726
  %v3207 = vmul.f32 %v2461, %v2727
  %v3208 = vmul.f32 %v2463, %v2728
  %v3209 = vmul.f32 %v2465, %v2729
  %v3210 = vmul.f32 %v2467, %v2730
  %v3211 = vmul.f32 %v2469, %v2731
  %v3212 = vmul.f32 %v2471, %v2732
  %v3213 = vmul.f32 %v2473, %v2733
  %v3214 = vmul.f32 %v2475, %v2734
  %v3215 = vmul.f32 %v2477, %v2735
  %v3216 = vmul.f32 %v2479, %v2736
  %v3217 = vmul.f32 %v2481, %v2737
  %v3218 = vmul.f32 %v2483, %v2738
  %v3219 = vmul.f32 %v2485, %v2739
  %v3220 = vmul.f32 %v2487, %v2740
  %v3221 = vmul.f32 %v2489, %v2741
  %v3222 = vmul.f32 %v2491, %v2742
  %v3223 = vmul.f32 %v2493, %v2743
  %v3224 = vmul.f32 %v2495, %v2744
  %v3225 = vmul.f32 %v2497, %v2745
  %v3226 = vmul.f32 %v2499, %v2746
  %v3227 = vmul.f32 %v2501, %v2747
  %v3228 = vmul.f32 %v2503, %v2748
  %v3229 = vmul.f32 %v2505, %v2749
  %v3230 = vmul.f32 %v2507, %v2750
  %v3231 = vmul.f32 %v2509, %v2751
  %v3232 = vmul.f32 %v2511, %v2752
  %v3233 = vmul.f32 %v2513, %v2753
  %v3234 = vmul.f32 %v2515, %v2754
  %v3235 = vmul.f32 %v2517, %v2755
  %v3236 = vmul.f32 %v2519, %v2756
  %v3237 = vmul.f32 %v2521, %v2757
  %v3238 = vmul.f32 %v2523, %v2758
  %v3239 = vmul.f32 %v2525, %v2759
  %v3240 = vmul.f32 %v2527, %v2760
  %v3241 = vmul.f32 %v2529, %v2761
  %v3242 = vmul.f32 %v2531, %v2762
  %v3243 = vmul.f32 %v2533, %v2763
  %v3244 = vmul.f32 %v2535, %v2764
  %v3245 = vmul.f32 %v2537, %v2765
  %v3246 = vmul.f32 %v2539, %v2766
  %v3247 = vmul.f32 %v2541, %v2767
  %v3248 = vmul.f32 %v2543, %v2768
  %v3249 = vmul.f32 %v2545, %v2769
  %v3250 = vmul.f32 %v2547, %v2770
  %v3251 = vmul.f32 %v2549, %v2771
  %v3252 = vmul.f32 %v2551, %v2772
  %v3253 = vmul.f32 %v2553, %v2773
  %v3254 = vmul.f32 %v2555, %v2774
  %v3255 = vmul.f32 %v2557, %v2775
  %v3256 = vmul.f32 %v2559, %v2776
  %v3257 = vmul.f32 %v2561, %v2777
  %v3258 = vmul.f32 %v2563, %v2778
  %v3259 = vmul.f32 %v2565, %v2779
  %v3260 = vmul.f32 %v2567, %v2780
  %v3261 = vmul.f32 %v2569, %v2781
  %v3262 = vmul.f32 %v2571, %v2782
  %v3263 = vmul.f32 %v2573, %v2783
  %v3264 = vmul.f32 %v2575, %v2784
  %v3265 = vmul.f32 %v2577, %v2785
  %v3266 = vmul.f32 %v2579, %v2786
  %v3267 = vmul.f32 %v2581, %v2787
  %v3268 = vmul.f32 %v2583, %v2788
  %v3269 = vmul.f32 %v2585, %v2789
  %v3270 = vmul.f32 %v2587, %v2790
  %v3271 = vmul.f32 %v2589, %v2791
  %v3272 = vmul.f32 %v2591, %v2792
  %v3273 = vmul.f32 %v2593, %v2793
  %v3274 = vmul.f32 %v2595, %v2794
  %v3275 = vmul.f32 %v2597, %v2795
  %v3276 = vmul.f32 %v2599, %v2796
  %v3277 = vmul.f32 %v2601, %v2797
  %v3278 = vmul.f32 %v2603, %v2798
  %v3279 = vmul.f32 %v2605, %v2799
  %v3280 = vmul.f32 %v2607, %v2800
  %v3281 = vmul.f32 %v2609, %v2801
  %v3282 = vld [vmem:[%s5] sm:$0xff]
  %v3283 = vld [vmem:[%s5 + $0x8] sm:$0xff]
  %v3284 = vld [vmem:[%s5 + $0x10] sm:$0xff]
  %v3285 = vld [vmem:[%s5 + $0x18] sm:$0xff]
  %v3286 = vld [vmem:[#allocation2] sm:$0x1]
  %v3288 = vperm.slane %v3286, 0
  %v3291 = vsel %vm1728, %v3090, 0
  %v3294 = vsel %vm1728, %v3091, 0
  %v3297 = vsel %vm1728, %v3092, 0
  %v3300 = vsel %vm1728, %v3093, 0
  %v3303 = vsel %vm1728, %v3094, 0
  %v3306 = vsel %vm1728, %v3095, 0
  %v3309 = vsel %vm1728, %v3096, 0
  %v3312 = vsel %vm1728, %v3097, 0
  %v3315 = vsel %vm1728, %v3098, 0
  %v3318 = vsel %vm1728, %v3099, 0
  %v3321 = vsel %vm1728, %v3100, 0
  %v3324 = vsel %vm1728, %v3101, 0
  %v3327 = vsel %vm1728, %v3102, 0
  %v3330 = vsel %vm1728, %v3103, 0
  %v3333 = vsel %vm1728, %v3104, 0
  %v3336 = vsel %vm1728, %v3105, 0
  %v3339 = vsel %vm1728, %v3106, 0
  %v3342 = vsel %vm1728, %v3107, 0
  %v3345 = vsel %vm1728, %v3108, 0
  %v3348 = vsel %vm1728, %v3109, 0
  %v3351 = vsel %vm1728, %v3110, 0
  %v3354 = vsel %vm1728, %v3111, 0
  %v3357 = vsel %vm1728, %v3112, 0
  %v3360 = vsel %vm1728, %v3113, 0
  %v3363 = vsel %vm1728, %v3114, 0
  %v3366 = vsel %vm1728, %v3115, 0
  %v3369 = vsel %vm1728, %v3116, 0
  %v3372 = vsel %vm1728, %v3117, 0
  %v3375 = vsel %vm1728, %v3118, 0
  %v3378 = vsel %vm1728, %v3119, 0
  %v3381 = vsel %vm1728, %v3120, 0
  %v3384 = vsel %vm1728, %v3121, 0
  %v3387 = vsel %vm1728, %v3122, 0
  %v3390 = vsel %vm1728, %v3123, 0
  %v3393 = vsel %vm1728, %v3124, 0
  %v3396 = vsel %vm1728, %v3125, 0
  %v3399 = vsel %vm1728, %v3126, 0
  %v3402 = vsel %vm1728, %v3127, 0
  %v3405 = vsel %vm1728, %v3128, 0
  %v3408 = vsel %vm1728, %v3129, 0
  %v3411 = vsel %vm1728, %v3130, 0
  %v3414 = vsel %vm1728, %v3131, 0
  %v3417 = vsel %vm1728, %v3132, 0
  %v3420 = vsel %vm1728, %v3133, 0
  %v3423 = vsel %vm1728, %v3134, 0
  %v3426 = vsel %vm1728, %v3135, 0
  %v3429 = vsel %vm1728, %v3136, 0
  %v3432 = vsel %vm1728, %v3137, 0
  %v3435 = vsel %vm1728, %v3138, 0
  %v3438 = vsel %vm1728, %v3139, 0
  %v3441 = vsel %vm1728, %v3140, 0
  %v3444 = vsel %vm1728, %v3141, 0
  %v3447 = vsel %vm1728, %v3142, 0
  %v3450 = vsel %vm1728, %v3143, 0
  %v3453 = vsel %vm1728, %v3144, 0
  %v3456 = vsel %vm1728, %v3145, 0
  %v3459 = vsel %vm1728, %v3146, 0
  %v3462 = vsel %vm1728, %v3147, 0
  %v3465 = vsel %vm1728, %v3148, 0
  %v3468 = vsel %vm1728, %v3149, 0
  %v3471 = vsel %vm1728, %v3150, 0
  %v3474 = vsel %vm1728, %v3151, 0
  %v3477 = vsel %vm1728, %v3152, 0
  %v3480 = vsel %vm1728, %v3153, 0
  %v3483 = vsel %vm1728, %v3154, 0
  %v3486 = vsel %vm1728, %v3155, 0
  %v3489 = vsel %vm1728, %v3156, 0
  %v3492 = vsel %vm1728, %v3157, 0
  %v3495 = vsel %vm1728, %v3158, 0
  %v3498 = vsel %vm1728, %v3159, 0
  %v3501 = vsel %vm1728, %v3160, 0
  %v3504 = vsel %vm1728, %v3161, 0
  %v3507 = vsel %vm1728, %v3162, 0
  %v3510 = vsel %vm1728, %v3163, 0
  %v3513 = vsel %vm1728, %v3164, 0
  %v3516 = vsel %vm1728, %v3165, 0
  %v3519 = vsel %vm1728, %v3166, 0
  %v3522 = vsel %vm1728, %v3167, 0
  %v3525 = vsel %vm1728, %v3168, 0
  %v3528 = vsel %vm1728, %v3169, 0
  %v3531 = vsel %vm1728, %v3170, 0
  %v3534 = vsel %vm1728, %v3171, 0
  %v3537 = vsel %vm1728, %v3172, 0
  %v3540 = vsel %vm1728, %v3173, 0
  %v3543 = vsel %vm1728, %v3174, 0
  %v3546 = vsel %vm1728, %v3175, 0
  %v3549 = vsel %vm1728, %v3176, 0
  %v3552 = vsel %vm1728, %v3177, 0
  %v3555 = vsel %vm1728, %v3178, 0
  %v3558 = vsel %vm1728, %v3179, 0
  %v3561 = vsel %vm1728, %v3180, 0
  %v3564 = vsel %vm1728, %v3181, 0
  %v3567 = vsel %vm1728, %v3182, 0
  %v3570 = vsel %vm1728, %v3183, 0
  %v3573 = vsel %vm1728, %v3184, 0
  %v3576 = vsel %vm1728, %v3185, 0
  %3578 = vmatpush.msra.mxu0 0.0
  %3579 = vmatpush.msra.mxu0 0.0
  %3580 = vmatpush.msra.mxu0 0.0
  %3581 = vmatpush.msra.mxu0 0.0
  %3582 = vmatpush.msra.mxu0 0.0
  %3583 = vmatpush.msra.mxu0 0.0
  %3584 = vmatpush.msra.mxu0 0.0
  %3585 = vmatpush.msra.mxu0 0.0
  %3586 = vmatpush.msra.mxu0 0.0
  %3587 = vmatpush.msra.mxu0 0.0
  %3588 = vmatpush.msra.mxu0 0.0
  %3589 = vmatpush.msra.mxu0 0.0
  %3590 = vmatpush.msra.mxu0 %v3285
  %3591 = vmatpush.msra.mxu0 %v3284
  %3592 = vmatpush.msra.mxu0 %v3283
  %3593 = vmatpush.msra.mxu0 %v3282
  %3594 = vmatmul.f32.gmra.mxu0 %v3291
  %v3595 = vpop.f32.mrf.mxu0
  %v3596 = vadd.f32 %v3288, %v3595
  %3597 = vmatmul.f32.gmra.mxu0 %v3294
  %v3598 = vpop.f32.mrf.mxu0
  %v3599 = vadd.f32 %v3288, %v3598
  %3600 = vmatmul.f32.gmra.mxu0 %v3297
  %v3601 = vpop.f32.mrf.mxu0
  %v3602 = vadd.f32 %v3288, %v3601
  %3603 = vmatmul.f32.gmra.mxu0 %v3300
  %v3604 = vpop.f32.mrf.mxu0
  %v3605 = vadd.f32 %v3288, %v3604
  %3606 = vmatmul.f32.gmra.mxu0 %v3303
  %v3607 = vpop.f32.mrf.mxu0
  %v3608 = vadd.f32 %v3288, %v3607
  %3609 = vmatmul.f32.gmra.mxu0 %v3306
  %v3610 = vpop.f32.mrf.mxu0
  %v3611 = vadd.f32 %v3288, %v3610
  %3612 = vmatmul.f32.gmra.mxu0 %v3309
  %v3613 = vpop.f32.mrf.mxu0
  %v3614 = vadd.f32 %v3288, %v3613
  %3615 = vmatmul.f32.gmra.mxu0 %v3312
  %v3616 = vpop.f32.mrf.mxu0
  %v3617 = vadd.f32 %v3288, %v3616
  %3618 = vmatmul.f32.gmra.mxu0 %v3315
  %v3619 = vpop.f32.mrf.mxu0
  %v3620 = vadd.f32 %v3288, %v3619
  %3621 = vmatmul.f32.gmra.mxu0 %v3318
  %v3622 = vpop.f32.mrf.mxu0
  %v3623 = vadd.f32 %v3288, %v3622
  %3624 = vmatmul.f32.gmra.mxu0 %v3321
  %v3625 = vpop.f32.mrf.mxu0
  %v3626 = vadd.f32 %v3288, %v3625
  %3627 = vmatmul.f32.gmra.mxu0 %v3324
  %v3628 = vpop.f32.mrf.mxu0
  %v3629 = vadd.f32 %v3288, %v3628
  %3630 = vmatmul.f32.gmra.mxu0 %v3327
  %v3631 = vpop.f32.mrf.mxu0
  %v3632 = vadd.f32 %v3288, %v3631
  %3633 = vmatmul.f32.gmra.mxu0 %v3330
  %v3634 = vpop.f32.mrf.mxu0
  %v3635 = vadd.f32 %v3288, %v3634
  %3636 = vmatmul.f32.gmra.mxu0 %v3333
  %v3637 = vpop.f32.mrf.mxu0
  %v3638 = vadd.f32 %v3288, %v3637
  %3639 = vmatmul.f32.gmra.mxu0 %v3336
  %v3640 = vpop.f32.mrf.mxu0
  %v3641 = vadd.f32 %v3288, %v3640
  %3642 = vmatmul.f32.gmra.mxu0 %v3339
  %v3643 = vpop.f32.mrf.mxu0
  %v3644 = vadd.f32 %v3288, %v3643
  %3645 = vmatmul.f32.gmra.mxu0 %v3342
  %v3646 = vpop.f32.mrf.mxu0
  %v3647 = vadd.f32 %v3288, %v3646
  %3648 = vmatmul.f32.gmra.mxu0 %v3345
  %v3649 = vpop.f32.mrf.mxu0
  %v3650 = vadd.f32 %v3288, %v3649
  %3651 = vmatmul.f32.gmra.mxu0 %v3348
  %v3652 = vpop.f32.mrf.mxu0
  %v3653 = vadd.f32 %v3288, %v3652
  %3654 = vmatmul.f32.gmra.mxu0 %v3351
  %v3655 = vpop.f32.mrf.mxu0
  %v3656 = vadd.f32 %v3288, %v3655
  %3657 = vmatmul.f32.gmra.mxu0 %v3354
  %v3658 = vpop.f32.mrf.mxu0
  %v3659 = vadd.f32 %v3288, %v3658
  %3660 = vmatmul.f32.gmra.mxu0 %v3357
  %v3661 = vpop.f32.mrf.mxu0
  %v3662 = vadd.f32 %v3288, %v3661
  %3663 = vmatmul.f32.gmra.mxu0 %v3360
  %v3664 = vpop.f32.mrf.mxu0
  %v3665 = vadd.f32 %v3288, %v3664
  %3666 = vmatmul.f32.gmra.mxu0 %v3363
  %v3667 = vpop.f32.mrf.mxu0
  %v3668 = vadd.f32 %v3288, %v3667
  %3669 = vmatmul.f32.gmra.mxu0 %v3366
  %v3670 = vpop.f32.mrf.mxu0
  %v3671 = vadd.f32 %v3288, %v3670
  %3672 = vmatmul.f32.gmra.mxu0 %v3369
  %v3673 = vpop.f32.mrf.mxu0
  %v3674 = vadd.f32 %v3288, %v3673
  %3675 = vmatmul.f32.gmra.mxu0 %v3372
  %v3676 = vpop.f32.mrf.mxu0
  %v3677 = vadd.f32 %v3288, %v3676
  %3678 = vmatmul.f32.gmra.mxu0 %v3375
  %v3679 = vpop.f32.mrf.mxu0
  %v3680 = vadd.f32 %v3288, %v3679
  %3681 = vmatmul.f32.gmra.mxu0 %v3378
  %v3682 = vpop.f32.mrf.mxu0
  %v3683 = vadd.f32 %v3288, %v3682
  %3684 = vmatmul.f32.gmra.mxu0 %v3381
  %v3685 = vpop.f32.mrf.mxu0
  %v3686 = vadd.f32 %v3288, %v3685
  %3687 = vmatmul.f32.gmra.mxu0 %v3384
  %v3688 = vpop.f32.mrf.mxu0
  %v3689 = vadd.f32 %v3288, %v3688
  %3690 = vmatmul.f32.gmra.mxu0 %v3387
  %v3691 = vpop.f32.mrf.mxu0
  %v3692 = vadd.f32 %v3288, %v3691
  %3693 = vmatmul.f32.gmra.mxu0 %v3390
  %v3694 = vpop.f32.mrf.mxu0
  %v3695 = vadd.f32 %v3288, %v3694
  %3696 = vmatmul.f32.gmra.mxu0 %v3393
  %v3697 = vpop.f32.mrf.mxu0
  %v3698 = vadd.f32 %v3288, %v3697
  %3699 = vmatmul.f32.gmra.mxu0 %v3396
  %v3700 = vpop.f32.mrf.mxu0
  %v3701 = vadd.f32 %v3288, %v3700
  %3702 = vmatmul.f32.gmra.mxu0 %v3399
  %v3703 = vpop.f32.mrf.mxu0
  %v3704 = vadd.f32 %v3288, %v3703
  %3705 = vmatmul.f32.gmra.mxu0 %v3402
  %v3706 = vpop.f32.mrf.mxu0
  %v3707 = vadd.f32 %v3288, %v3706
  %3708 = vmatmul.f32.gmra.mxu0 %v3405
  %v3709 = vpop.f32.mrf.mxu0
  %v3710 = vadd.f32 %v3288, %v3709
  %3711 = vmatmul.f32.gmra.mxu0 %v3408
  %v3712 = vpop.f32.mrf.mxu0
  %v3713 = vadd.f32 %v3288, %v3712
  %3714 = vmatmul.f32.gmra.mxu0 %v3411
  %v3715 = vpop.f32.mrf.mxu0
  %v3716 = vadd.f32 %v3288, %v3715
  %3717 = vmatmul.f32.gmra.mxu0 %v3414
  %v3718 = vpop.f32.mrf.mxu0
  %v3719 = vadd.f32 %v3288, %v3718
  %3720 = vmatmul.f32.gmra.mxu0 %v3417
  %v3721 = vpop.f32.mrf.mxu0
  %v3722 = vadd.f32 %v3288, %v3721
  %3723 = vmatmul.f32.gmra.mxu0 %v3420
  %v3724 = vpop.f32.mrf.mxu0
  %v3725 = vadd.f32 %v3288, %v3724
  %3726 = vmatmul.f32.gmra.mxu0 %v3423
  %v3727 = vpop.f32.mrf.mxu0
  %v3728 = vadd.f32 %v3288, %v3727
  %3729 = vmatmul.f32.gmra.mxu0 %v3426
  %v3730 = vpop.f32.mrf.mxu0
  %v3731 = vadd.f32 %v3288, %v3730
  %3732 = vmatmul.f32.gmra.mxu0 %v3429
  %v3733 = vpop.f32.mrf.mxu0
  %v3734 = vadd.f32 %v3288, %v3733
  %3735 = vmatmul.f32.gmra.mxu0 %v3432
  %v3736 = vpop.f32.mrf.mxu0
  %v3737 = vadd.f32 %v3288, %v3736
  %3738 = vmatmul.f32.gmra.mxu0 %v3435
  %v3739 = vpop.f32.mrf.mxu0
  %v3740 = vadd.f32 %v3288, %v3739
  %3741 = vmatmul.f32.gmra.mxu0 %v3438
  %v3742 = vpop.f32.mrf.mxu0
  %v3743 = vadd.f32 %v3288, %v3742
  %3744 = vmatmul.f32.gmra.mxu0 %v3441
  %v3745 = vpop.f32.mrf.mxu0
  %v3746 = vadd.f32 %v3288, %v3745
  %3747 = vmatmul.f32.gmra.mxu0 %v3444
  %v3748 = vpop.f32.mrf.mxu0
  %v3749 = vadd.f32 %v3288, %v3748
  %3750 = vmatmul.f32.gmra.mxu0 %v3447
  %v3751 = vpop.f32.mrf.mxu0
  %v3752 = vadd.f32 %v3288, %v3751
  %3753 = vmatmul.f32.gmra.mxu0 %v3450
  %v3754 = vpop.f32.mrf.mxu0
  %v3755 = vadd.f32 %v3288, %v3754
  %3756 = vmatmul.f32.gmra.mxu0 %v3453
  %v3757 = vpop.f32.mrf.mxu0
  %v3758 = vadd.f32 %v3288, %v3757
  %3759 = vmatmul.f32.gmra.mxu0 %v3456
  %v3760 = vpop.f32.mrf.mxu0
  %v3761 = vadd.f32 %v3288, %v3760
  %3762 = vmatmul.f32.gmra.mxu0 %v3459
  %v3763 = vpop.f32.mrf.mxu0
  %v3764 = vadd.f32 %v3288, %v3763
  %3765 = vmatmul.f32.gmra.mxu0 %v3462
  %v3766 = vpop.f32.mrf.mxu0
  %v3767 = vadd.f32 %v3288, %v3766
  %3768 = vmatmul.f32.gmra.mxu0 %v3465
  %v3769 = vpop.f32.mrf.mxu0
  %v3770 = vadd.f32 %v3288, %v3769
  %3771 = vmatmul.f32.gmra.mxu0 %v3468
  %v3772 = vpop.f32.mrf.mxu0
  %v3773 = vadd.f32 %v3288, %v3772
  %3774 = vmatmul.f32.gmra.mxu0 %v3471
  %v3775 = vpop.f32.mrf.mxu0
  %v3776 = vadd.f32 %v3288, %v3775
  %3777 = vmatmul.f32.gmra.mxu0 %v3474
  %v3778 = vpop.f32.mrf.mxu0
  %v3779 = vadd.f32 %v3288, %v3778
  %3780 = vmatmul.f32.gmra.mxu0 %v3477
  %v3781 = vpop.f32.mrf.mxu0
  %v3782 = vadd.f32 %v3288, %v3781
  %3783 = vmatmul.f32.gmra.mxu0 %v3480
  %v3784 = vpop.f32.mrf.mxu0
  %v3785 = vadd.f32 %v3288, %v3784
  %3786 = vmatmul.f32.gmra.mxu0 %v3483
  %v3787 = vpop.f32.mrf.mxu0
  %v3788 = vadd.f32 %v3288, %v3787
  %3789 = vmatmul.f32.gmra.mxu0 %v3486
  %v3790 = vpop.f32.mrf.mxu0
  %v3791 = vadd.f32 %v3288, %v3790
  %3792 = vmatmul.f32.gmra.mxu0 %v3489
  %v3793 = vpop.f32.mrf.mxu0
  %v3794 = vadd.f32 %v3288, %v3793
  %3795 = vmatmul.f32.gmra.mxu0 %v3492
  %v3796 = vpop.f32.mrf.mxu0
  %v3797 = vadd.f32 %v3288, %v3796
  %3798 = vmatmul.f32.gmra.mxu0 %v3495
  %v3799 = vpop.f32.mrf.mxu0
  %v3800 = vadd.f32 %v3288, %v3799
  %3801 = vmatmul.f32.gmra.mxu0 %v3498
  %v3802 = vpop.f32.mrf.mxu0
  %v3803 = vadd.f32 %v3288, %v3802
  %3804 = vmatmul.f32.gmra.mxu0 %v3501
  %v3805 = vpop.f32.mrf.mxu0
  %v3806 = vadd.f32 %v3288, %v3805
  %3807 = vmatmul.f32.gmra.mxu0 %v3504
  %v3808 = vpop.f32.mrf.mxu0
  %v3809 = vadd.f32 %v3288, %v3808
  %3810 = vmatmul.f32.gmra.mxu0 %v3507
  %v3811 = vpop.f32.mrf.mxu0
  %v3812 = vadd.f32 %v3288, %v3811
  %3813 = vmatmul.f32.gmra.mxu0 %v3510
  %v3814 = vpop.f32.mrf.mxu0
  %v3815 = vadd.f32 %v3288, %v3814
  %3816 = vmatmul.f32.gmra.mxu0 %v3513
  %v3817 = vpop.f32.mrf.mxu0
  %v3818 = vadd.f32 %v3288, %v3817
  %3819 = vmatmul.f32.gmra.mxu0 %v3516
  %v3820 = vpop.f32.mrf.mxu0
  %v3821 = vadd.f32 %v3288, %v3820
  %3822 = vmatmul.f32.gmra.mxu0 %v3519
  %v3823 = vpop.f32.mrf.mxu0
  %v3824 = vadd.f32 %v3288, %v3823
  %3825 = vmatmul.f32.gmra.mxu0 %v3522
  %v3826 = vpop.f32.mrf.mxu0
  %v3827 = vadd.f32 %v3288, %v3826
  %3828 = vmatmul.f32.gmra.mxu0 %v3525
  %v3829 = vpop.f32.mrf.mxu0
  %v3830 = vadd.f32 %v3288, %v3829
  %3831 = vmatmul.f32.gmra.mxu0 %v3528
  %v3832 = vpop.f32.mrf.mxu0
  %v3833 = vadd.f32 %v3288, %v3832
  %3834 = vmatmul.f32.gmra.mxu0 %v3531
  %v3835 = vpop.f32.mrf.mxu0
  %v3836 = vadd.f32 %v3288, %v3835
  %3837 = vmatmul.f32.gmra.mxu0 %v3534
  %v3838 = vpop.f32.mrf.mxu0
  %v3839 = vadd.f32 %v3288, %v3838
  %3840 = vmatmul.f32.gmra.mxu0 %v3537
  %v3841 = vpop.f32.mrf.mxu0
  %v3842 = vadd.f32 %v3288, %v3841
  %3843 = vmatmul.f32.gmra.mxu0 %v3540
  %v3844 = vpop.f32.mrf.mxu0
  %v3845 = vadd.f32 %v3288, %v3844
  %3846 = vmatmul.f32.gmra.mxu0 %v3543
  %v3847 = vpop.f32.mrf.mxu0
  %v3848 = vadd.f32 %v3288, %v3847
  %3849 = vmatmul.f32.gmra.mxu0 %v3546
  %v3850 = vpop.f32.mrf.mxu0
  %v3851 = vadd.f32 %v3288, %v3850
  %3852 = vmatmul.f32.gmra.mxu0 %v3549
  %v3853 = vpop.f32.mrf.mxu0
  %v3854 = vadd.f32 %v3288, %v3853
  %3855 = vmatmul.f32.gmra.mxu0 %v3552
  %v3856 = vpop.f32.mrf.mxu0
  %v3857 = vadd.f32 %v3288, %v3856
  %3858 = vmatmul.f32.gmra.mxu0 %v3555
  %v3859 = vpop.f32.mrf.mxu0
  %v3860 = vadd.f32 %v3288, %v3859
  %3861 = vmatmul.f32.gmra.mxu0 %v3558
  %v3862 = vpop.f32.mrf.mxu0
  %v3863 = vadd.f32 %v3288, %v3862
  %3864 = vmatmul.f32.gmra.mxu0 %v3561
  %v3865 = vpop.f32.mrf.mxu0
  %v3866 = vadd.f32 %v3288, %v3865
  %3867 = vmatmul.f32.gmra.mxu0 %v3564
  %v3868 = vpop.f32.mrf.mxu0
  %v3869 = vadd.f32 %v3288, %v3868
  %3870 = vmatmul.f32.gmra.mxu0 %v3567
  %v3871 = vpop.f32.mrf.mxu0
  %v3872 = vadd.f32 %v3288, %v3871
  %3873 = vmatmul.f32.gmra.mxu0 %v3570
  %v3874 = vpop.f32.mrf.mxu0
  %v3875 = vadd.f32 %v3288, %v3874
  %3876 = vmatmul.f32.gmra.mxu0 %v3573
  %v3877 = vpop.f32.mrf.mxu0
  %v3878 = vadd.f32 %v3288, %v3877
  %3879 = vmatmul.f32.gmra.mxu0 %v3576
  %v3880 = vpop.f32.mrf.mxu0
  %v3881 = vadd.f32 %v3288, %v3880
  %3882 = vdwg.mxu0
  %v3883 = vld [vmem:[%s9] sm:$0x1]
  %v3885 = vperm.slane %v3883, 0
  %v3887 = vmul.f32 %v3186, %v3885
  %v3888 = vmul.f32 %v3187, %v3885
  %v3889 = vmul.f32 %v3188, %v3885
  %v3890 = vmul.f32 %v3189, %v3885
  %v3891 = vmul.f32 %v3190, %v3885
  %v3892 = vmul.f32 %v3191, %v3885
  %v3893 = vmul.f32 %v3192, %v3885
  %v3894 = vmul.f32 %v3193, %v3885
  %v3895 = vmul.f32 %v3194, %v3885
  %v3896 = vmul.f32 %v3195, %v3885
  %v3897 = vmul.f32 %v3196, %v3885
  %v3898 = vmul.f32 %v3197, %v3885
  %v3899 = vmul.f32 %v3198, %v3885
  %v3900 = vmul.f32 %v3199, %v3885
  %v3901 = vmul.f32 %v3200, %v3885
  %v3902 = vmul.f32 %v3201, %v3885
  %v3903 = vmul.f32 %v3202, %v3885
  %v3904 = vmul.f32 %v3203, %v3885
  %v3905 = vmul.f32 %v3204, %v3885
  %v3906 = vmul.f32 %v3205, %v3885
  %v3907 = vmul.f32 %v3206, %v3885
  %v3908 = vmul.f32 %v3207, %v3885
  %v3909 = vmul.f32 %v3208, %v3885
  %v3910 = vmul.f32 %v3209, %v3885
  %v3911 = vmul.f32 %v3210, %v3885
  %v3912 = vmul.f32 %v3211, %v3885
  %v3913 = vmul.f32 %v3212, %v3885
  %v3914 = vmul.f32 %v3213, %v3885
  %v3915 = vmul.f32 %v3214, %v3885
  %v3916 = vmul.f32 %v3215, %v3885
  %v3917 = vmul.f32 %v3216, %v3885
  %v3918 = vmul.f32 %v3217, %v3885
  %v3919 = vmul.f32 %v3218, %v3885
  %v3920 = vmul.f32 %v3219, %v3885
  %v3921 = vmul.f32 %v3220, %v3885
  %v3922 = vmul.f32 %v3221, %v3885
  %v3923 = vmul.f32 %v3222, %v3885
  %v3924 = vmul.f32 %v3223, %v3885
  %v3925 = vmul.f32 %v3224, %v3885
  %v3926 = vmul.f32 %v3225, %v3885
  %v3927 = vmul.f32 %v3226, %v3885
  %v3928 = vmul.f32 %v3227, %v3885
  %v3929 = vmul.f32 %v3228, %v3885
  %v3930 = vmul.f32 %v3229, %v3885
  %v3931 = vmul.f32 %v3230, %v3885
  %v3932 = vmul.f32 %v3231, %v3885
  %v3933 = vmul.f32 %v3232, %v3885
  %v3934 = vmul.f32 %v3233, %v3885
  %v3935 = vmul.f32 %v3234, %v3885
  %v3936 = vmul.f32 %v3235, %v3885
  %v3937 = vmul.f32 %v3236, %v3885
  %v3938 = vmul.f32 %v3237, %v3885
  %v3939 = vmul.f32 %v3238, %v3885
  %v3940 = vmul.f32 %v3239, %v3885
  %v3941 = vmul.f32 %v3240, %v3885
  %v3942 = vmul.f32 %v3241, %v3885
  %v3943 = vmul.f32 %v3242, %v3885
  %v3944 = vmul.f32 %v3243, %v3885
  %v3945 = vmul.f32 %v3244, %v3885
  %v3946 = vmul.f32 %v3245, %v3885
  %v3947 = vmul.f32 %v3246, %v3885
  %v3948 = vmul.f32 %v3247, %v3885
  %v3949 = vmul.f32 %v3248, %v3885
  %v3950 = vmul.f32 %v3249, %v3885
  %v3951 = vmul.f32 %v3250, %v3885
  %v3952 = vmul.f32 %v3251, %v3885
  %v3953 = vmul.f32 %v3252, %v3885
  %v3954 = vmul.f32 %v3253, %v3885
  %v3955 = vmul.f32 %v3254, %v3885
  %v3956 = vmul.f32 %v3255, %v3885
  %v3957 = vmul.f32 %v3256, %v3885
  %v3958 = vmul.f32 %v3257, %v3885
  %v3959 = vmul.f32 %v3258, %v3885
  %v3960 = vmul.f32 %v3259, %v3885
  %v3961 = vmul.f32 %v3260, %v3885
  %v3962 = vmul.f32 %v3261, %v3885
  %v3963 = vmul.f32 %v3262, %v3885
  %v3964 = vmul.f32 %v3263, %v3885
  %v3965 = vmul.f32 %v3264, %v3885
  %v3966 = vmul.f32 %v3265, %v3885
  %v3967 = vmul.f32 %v3266, %v3885
  %v3968 = vmul.f32 %v3267, %v3885
  %v3969 = vmul.f32 %v3268, %v3885
  %v3970 = vmul.f32 %v3269, %v3885
  %v3971 = vmul.f32 %v3270, %v3885
  %v3972 = vmul.f32 %v3271, %v3885
  %v3973 = vmul.f32 %v3272, %v3885
  %v3974 = vmul.f32 %v3273, %v3885
  %v3975 = vmul.f32 %v3274, %v3885
  %v3976 = vmul.f32 %v3275, %v3885
  %v3977 = vmul.f32 %v3276, %v3885
  %v3978 = vmul.f32 %v3277, %v3885
  %v3979 = vmul.f32 %v3278, %v3885
  %v3980 = vmul.f32 %v3279, %v3885
  %v3981 = vmul.f32 %v3280, %v3885
  %v3982 = vmul.f32 %v3281, %v3885
  %v3983 = vld [vmem:[%s8] sm:$0xff]
  %v3984 = vld [vmem:[%s8 + $0x8] sm:$0xff]
  %v3985 = vld [vmem:[%s8 + $0x10] sm:$0xff]
  %v3986 = vld [vmem:[%s8 + $0x18] sm:$0xff]
  %v3988 = vsel %vm1728, %v3887, 0
  %v3991 = vsel %vm1728, %v3888, 0
  %v3994 = vsel %vm1728, %v3889, 0
  %v3997 = vsel %vm1728, %v3890, 0
  %v4000 = vsel %vm1728, %v3891, 0
  %v4003 = vsel %vm1728, %v3892, 0
  %v4006 = vsel %vm1728, %v3893, 0
  %v4009 = vsel %vm1728, %v3894, 0
  %v4012 = vsel %vm1728, %v3895, 0
  %v4015 = vsel %vm1728, %v3896, 0
  %v4018 = vsel %vm1728, %v3897, 0
  %v4021 = vsel %vm1728, %v3898, 0
  %v4024 = vsel %vm1728, %v3899, 0
  %v4027 = vsel %vm1728, %v3900, 0
  %v4030 = vsel %vm1728, %v3901, 0
  %v4033 = vsel %vm1728, %v3902, 0
  %v4036 = vsel %vm1728, %v3903, 0
  %v4039 = vsel %vm1728, %v3904, 0
  %v4042 = vsel %vm1728, %v3905, 0
  %v4045 = vsel %vm1728, %v3906, 0
  %v4048 = vsel %vm1728, %v3907, 0
  %v4051 = vsel %vm1728, %v3908, 0
  %v4054 = vsel %vm1728, %v3909, 0
  %v4057 = vsel %vm1728, %v3910, 0
  %v4060 = vsel %vm1728, %v3911, 0
  %v4063 = vsel %vm1728, %v3912, 0
  %v4066 = vsel %vm1728, %v3913, 0
  %v4069 = vsel %vm1728, %v3914, 0
  %v4072 = vsel %vm1728, %v3915, 0
  %v4075 = vsel %vm1728, %v3916, 0
  %v4078 = vsel %vm1728, %v3917, 0
  %v4081 = vsel %vm1728, %v3918, 0
  %v4084 = vsel %vm1728, %v3919, 0
  %v4087 = vsel %vm1728, %v3920, 0
  %v4090 = vsel %vm1728, %v3921, 0
  %v4093 = vsel %vm1728, %v3922, 0
  %v4096 = vsel %vm1728, %v3923, 0
  %v4099 = vsel %vm1728, %v3924, 0
  %v4102 = vsel %vm1728, %v3925, 0
  %v4105 = vsel %vm1728, %v3926, 0
  %v4108 = vsel %vm1728, %v3927, 0
  %v4111 = vsel %vm1728, %v3928, 0
  %v4114 = vsel %vm1728, %v3929, 0
  %v4117 = vsel %vm1728, %v3930, 0
  %v4120 = vsel %vm1728, %v3931, 0
  %v4123 = vsel %vm1728, %v3932, 0
  %v4126 = vsel %vm1728, %v3933, 0
  %v4129 = vsel %vm1728, %v3934, 0
  %v4132 = vsel %vm1728, %v3935, 0
  %v4135 = vsel %vm1728, %v3936, 0
  %v4138 = vsel %vm1728, %v3937, 0
  %v4141 = vsel %vm1728, %v3938, 0
  %v4144 = vsel %vm1728, %v3939, 0
  %v4147 = vsel %vm1728, %v3940, 0
  %v4150 = vsel %vm1728, %v3941, 0
  %v4153 = vsel %vm1728, %v3942, 0
  %v4156 = vsel %vm1728, %v3943, 0
  %v4159 = vsel %vm1728, %v3944, 0
  %v4162 = vsel %vm1728, %v3945, 0
  %v4165 = vsel %vm1728, %v3946, 0
  %v4168 = vsel %vm1728, %v3947, 0
  %v4171 = vsel %vm1728, %v3948, 0
  %v4174 = vsel %vm1728, %v3949, 0
  %v4177 = vsel %vm1728, %v3950, 0
  %v4180 = vsel %vm1728, %v3951, 0
  %v4183 = vsel %vm1728, %v3952, 0
  %v4186 = vsel %vm1728, %v3953, 0
  %v4189 = vsel %vm1728, %v3954, 0
  %v4192 = vsel %vm1728, %v3955, 0
  %v4195 = vsel %vm1728, %v3956, 0
  %v4198 = vsel %vm1728, %v3957, 0
  %v4201 = vsel %vm1728, %v3958, 0
  %v4204 = vsel %vm1728, %v3959, 0
  %v4207 = vsel %vm1728, %v3960, 0
  %v4210 = vsel %vm1728, %v3961, 0
  %v4213 = vsel %vm1728, %v3962, 0
  %v4216 = vsel %vm1728, %v3963, 0
  %v4219 = vsel %vm1728, %v3964, 0
  %v4222 = vsel %vm1728, %v3965, 0
  %v4225 = vsel %vm1728, %v3966, 0
  %v4228 = vsel %vm1728, %v3967, 0
  %v4231 = vsel %vm1728, %v3968, 0
  %v4234 = vsel %vm1728, %v3969, 0
  %v4237 = vsel %vm1728, %v3970, 0
  %v4240 = vsel %vm1728, %v3971, 0
  %v4243 = vsel %vm1728, %v3972, 0
  %v4246 = vsel %vm1728, %v3973, 0
  %v4249 = vsel %vm1728, %v3974, 0
  %v4252 = vsel %vm1728, %v3975, 0
  %v4255 = vsel %vm1728, %v3976, 0
  %v4258 = vsel %vm1728, %v3977, 0
  %v4261 = vsel %vm1728, %v3978, 0
  %v4264 = vsel %vm1728, %v3979, 0
  %v4267 = vsel %vm1728, %v3980, 0
  %v4270 = vsel %vm1728, %v3981, 0
  %v4273 = vsel %vm1728, %v3982, 0
  %4275 = vmatpush.msra.mxu0 0.0
  %4276 = vmatpush.msra.mxu0 0.0
  %4277 = vmatpush.msra.mxu0 0.0
  %4278 = vmatpush.msra.mxu0 0.0
  %4279 = vmatpush.msra.mxu0 0.0
  %4280 = vmatpush.msra.mxu0 0.0
  %4281 = vmatpush.msra.mxu0 0.0
  %4282 = vmatpush.msra.mxu0 0.0
  %4283 = vmatpush.msra.mxu0 0.0
  %4284 = vmatpush.msra.mxu0 0.0
  %4285 = vmatpush.msra.mxu0 0.0
  %4286 = vmatpush.msra.mxu0 0.0
  %4287 = vmatpush.msra.mxu0 %v3986
  %4288 = vmatpush.msra.mxu0 %v3985
  %4289 = vmatpush.msra.mxu0 %v3984
  %4290 = vmatpush.msra.mxu0 %v3983
  %4291 = vmatmul.f32.gmra.mxu0 %v3988
  %v4292 = vpop.f32.mrf.mxu0
  %v4293 = vadd.f32 0.0, %v4292
  %4294 = vmatmul.f32.gmra.mxu0 %v3991
  %v4295 = vpop.f32.mrf.mxu0
  %v4296 = vadd.f32 0.0, %v4295
  %4297 = vmatmul.f32.gmra.mxu0 %v3994
  %v4298 = vpop.f32.mrf.mxu0
  %v4299 = vadd.f32 0.0, %v4298
  %4300 = vmatmul.f32.gmra.mxu0 %v3997
  %v4301 = vpop.f32.mrf.mxu0
  %v4302 = vadd.f32 0.0, %v4301
  %4303 = vmatmul.f32.gmra.mxu0 %v4000
  %v4304 = vpop.f32.mrf.mxu0
  %v4305 = vadd.f32 0.0, %v4304
  %4306 = vmatmul.f32.gmra.mxu0 %v4003
  %v4307 = vpop.f32.mrf.mxu0
  %v4308 = vadd.f32 0.0, %v4307
  %4309 = vmatmul.f32.gmra.mxu0 %v4006
  %v4310 = vpop.f32.mrf.mxu0
  %v4311 = vadd.f32 0.0, %v4310
  %4312 = vmatmul.f32.gmra.mxu0 %v4009
  %v4313 = vpop.f32.mrf.mxu0
  %v4314 = vadd.f32 0.0, %v4313
  %4315 = vmatmul.f32.gmra.mxu0 %v4012
  %v4316 = vpop.f32.mrf.mxu0
  %v4317 = vadd.f32 0.0, %v4316
  %4318 = vmatmul.f32.gmra.mxu0 %v4015
  %v4319 = vpop.f32.mrf.mxu0
  %v4320 = vadd.f32 0.0, %v4319
  %4321 = vmatmul.f32.gmra.mxu0 %v4018
  %v4322 = vpop.f32.mrf.mxu0
  %v4323 = vadd.f32 0.0, %v4322
  %4324 = vmatmul.f32.gmra.mxu0 %v4021
  %v4325 = vpop.f32.mrf.mxu0
  %v4326 = vadd.f32 0.0, %v4325
  %4327 = vmatmul.f32.gmra.mxu0 %v4024
  %v4328 = vpop.f32.mrf.mxu0
  %v4329 = vadd.f32 0.0, %v4328
  %4330 = vmatmul.f32.gmra.mxu0 %v4027
  %v4331 = vpop.f32.mrf.mxu0
  %v4332 = vadd.f32 0.0, %v4331
  %4333 = vmatmul.f32.gmra.mxu0 %v4030
  %v4334 = vpop.f32.mrf.mxu0
  %v4335 = vadd.f32 0.0, %v4334
  %4336 = vmatmul.f32.gmra.mxu0 %v4033
  %v4337 = vpop.f32.mrf.mxu0
  %v4338 = vadd.f32 0.0, %v4337
  %4339 = vmatmul.f32.gmra.mxu0 %v4036
  %v4340 = vpop.f32.mrf.mxu0
  %v4341 = vadd.f32 0.0, %v4340
  %4342 = vmatmul.f32.gmra.mxu0 %v4039
  %v4343 = vpop.f32.mrf.mxu0
  %v4344 = vadd.f32 0.0, %v4343
  %4345 = vmatmul.f32.gmra.mxu0 %v4042
  %v4346 = vpop.f32.mrf.mxu0
  %v4347 = vadd.f32 0.0, %v4346
  %4348 = vmatmul.f32.gmra.mxu0 %v4045
  %v4349 = vpop.f32.mrf.mxu0
  %v4350 = vadd.f32 0.0, %v4349
  %4351 = vmatmul.f32.gmra.mxu0 %v4048
  %v4352 = vpop.f32.mrf.mxu0
  %v4353 = vadd.f32 0.0, %v4352
  %4354 = vmatmul.f32.gmra.mxu0 %v4051
  %v4355 = vpop.f32.mrf.mxu0
  %v4356 = vadd.f32 0.0, %v4355
  %4357 = vmatmul.f32.gmra.mxu0 %v4054
  %v4358 = vpop.f32.mrf.mxu0
  %v4359 = vadd.f32 0.0, %v4358
  %4360 = vmatmul.f32.gmra.mxu0 %v4057
  %v4361 = vpop.f32.mrf.mxu0
  %v4362 = vadd.f32 0.0, %v4361
  %4363 = vmatmul.f32.gmra.mxu0 %v4060
  %v4364 = vpop.f32.mrf.mxu0
  %v4365 = vadd.f32 0.0, %v4364
  %4366 = vmatmul.f32.gmra.mxu0 %v4063
  %v4367 = vpop.f32.mrf.mxu0
  %v4368 = vadd.f32 0.0, %v4367
  %4369 = vmatmul.f32.gmra.mxu0 %v4066
  %v4370 = vpop.f32.mrf.mxu0
  %v4371 = vadd.f32 0.0, %v4370
  %4372 = vmatmul.f32.gmra.mxu0 %v4069
  %v4373 = vpop.f32.mrf.mxu0
  %v4374 = vadd.f32 0.0, %v4373
  %4375 = vmatmul.f32.gmra.mxu0 %v4072
  %v4376 = vpop.f32.mrf.mxu0
  %v4377 = vadd.f32 0.0, %v4376
  %4378 = vmatmul.f32.gmra.mxu0 %v4075
  %v4379 = vpop.f32.mrf.mxu0
  %v4380 = vadd.f32 0.0, %v4379
  %4381 = vmatmul.f32.gmra.mxu0 %v4078
  %v4382 = vpop.f32.mrf.mxu0
  %v4383 = vadd.f32 0.0, %v4382
  %4384 = vmatmul.f32.gmra.mxu0 %v4081
  %v4385 = vpop.f32.mrf.mxu0
  %v4386 = vadd.f32 0.0, %v4385
  %4387 = vmatmul.f32.gmra.mxu0 %v4084
  %v4388 = vpop.f32.mrf.mxu0
  %v4389 = vadd.f32 0.0, %v4388
  %4390 = vmatmul.f32.gmra.mxu0 %v4087
  %v4391 = vpop.f32.mrf.mxu0
  %v4392 = vadd.f32 0.0, %v4391
  %4393 = vmatmul.f32.gmra.mxu0 %v4090
  %v4394 = vpop.f32.mrf.mxu0
  %v4395 = vadd.f32 0.0, %v4394
  %4396 = vmatmul.f32.gmra.mxu0 %v4093
  %v4397 = vpop.f32.mrf.mxu0
  %v4398 = vadd.f32 0.0, %v4397
  %4399 = vmatmul.f32.gmra.mxu0 %v4096
  %v4400 = vpop.f32.mrf.mxu0
  %v4401 = vadd.f32 0.0, %v4400
  %4402 = vmatmul.f32.gmra.mxu0 %v4099
  %v4403 = vpop.f32.mrf.mxu0
  %v4404 = vadd.f32 0.0, %v4403
  %4405 = vmatmul.f32.gmra.mxu0 %v4102
  %v4406 = vpop.f32.mrf.mxu0
  %v4407 = vadd.f32 0.0, %v4406
  %4408 = vmatmul.f32.gmra.mxu0 %v4105
  %v4409 = vpop.f32.mrf.mxu0
  %v4410 = vadd.f32 0.0, %v4409
  %4411 = vmatmul.f32.gmra.mxu0 %v4108
  %v4412 = vpop.f32.mrf.mxu0
  %v4413 = vadd.f32 0.0, %v4412
  %4414 = vmatmul.f32.gmra.mxu0 %v4111
  %v4415 = vpop.f32.mrf.mxu0
  %v4416 = vadd.f32 0.0, %v4415
  %4417 = vmatmul.f32.gmra.mxu0 %v4114
  %v4418 = vpop.f32.mrf.mxu0
  %v4419 = vadd.f32 0.0, %v4418
  %4420 = vmatmul.f32.gmra.mxu0 %v4117
  %v4421 = vpop.f32.mrf.mxu0
  %v4422 = vadd.f32 0.0, %v4421
  %4423 = vmatmul.f32.gmra.mxu0 %v4120
  %v4424 = vpop.f32.mrf.mxu0
  %v4425 = vadd.f32 0.0, %v4424
  %4426 = vmatmul.f32.gmra.mxu0 %v4123
  %v4427 = vpop.f32.mrf.mxu0
  %v4428 = vadd.f32 0.0, %v4427
  %4429 = vmatmul.f32.gmra.mxu0 %v4126
  %v4430 = vpop.f32.mrf.mxu0
  %v4431 = vadd.f32 0.0, %v4430
  %4432 = vmatmul.f32.gmra.mxu0 %v4129
  %v4433 = vpop.f32.mrf.mxu0
  %v4434 = vadd.f32 0.0, %v4433
  %4435 = vmatmul.f32.gmra.mxu0 %v4132
  %v4436 = vpop.f32.mrf.mxu0
  %v4437 = vadd.f32 0.0, %v4436
  %4438 = vmatmul.f32.gmra.mxu0 %v4135
  %v4439 = vpop.f32.mrf.mxu0
  %v4440 = vadd.f32 0.0, %v4439
  %4441 = vmatmul.f32.gmra.mxu0 %v4138
  %v4442 = vpop.f32.mrf.mxu0
  %v4443 = vadd.f32 0.0, %v4442
  %4444 = vmatmul.f32.gmra.mxu0 %v4141
  %v4445 = vpop.f32.mrf.mxu0
  %v4446 = vadd.f32 0.0, %v4445
  %4447 = vmatmul.f32.gmra.mxu0 %v4144
  %v4448 = vpop.f32.mrf.mxu0
  %v4449 = vadd.f32 0.0, %v4448
  %4450 = vmatmul.f32.gmra.mxu0 %v4147
  %v4451 = vpop.f32.mrf.mxu0
  %v4452 = vadd.f32 0.0, %v4451
  %4453 = vmatmul.f32.gmra.mxu0 %v4150
  %v4454 = vpop.f32.mrf.mxu0
  %v4455 = vadd.f32 0.0, %v4454
  %4456 = vmatmul.f32.gmra.mxu0 %v4153
  %v4457 = vpop.f32.mrf.mxu0
  %v4458 = vadd.f32 0.0, %v4457
  %4459 = vmatmul.f32.gmra.mxu0 %v4156
  %v4460 = vpop.f32.mrf.mxu0
  %v4461 = vadd.f32 0.0, %v4460
  %4462 = vmatmul.f32.gmra.mxu0 %v4159
  %v4463 = vpop.f32.mrf.mxu0
  %v4464 = vadd.f32 0.0, %v4463
  %4465 = vmatmul.f32.gmra.mxu0 %v4162
  %v4466 = vpop.f32.mrf.mxu0
  %v4467 = vadd.f32 0.0, %v4466
  %4468 = vmatmul.f32.gmra.mxu0 %v4165
  %v4469 = vpop.f32.mrf.mxu0
  %v4470 = vadd.f32 0.0, %v4469
  %4471 = vmatmul.f32.gmra.mxu0 %v4168
  %v4472 = vpop.f32.mrf.mxu0
  %v4473 = vadd.f32 0.0, %v4472
  %4474 = vmatmul.f32.gmra.mxu0 %v4171
  %v4475 = vpop.f32.mrf.mxu0
  %v4476 = vadd.f32 0.0, %v4475
  %4477 = vmatmul.f32.gmra.mxu0 %v4174
  %v4478 = vpop.f32.mrf.mxu0
  %v4479 = vadd.f32 0.0, %v4478
  %4480 = vmatmul.f32.gmra.mxu0 %v4177
  %v4481 = vpop.f32.mrf.mxu0
  %v4482 = vadd.f32 0.0, %v4481
  %4483 = vmatmul.f32.gmra.mxu0 %v4180
  %v4484 = vpop.f32.mrf.mxu0
  %v4485 = vadd.f32 0.0, %v4484
  %4486 = vmatmul.f32.gmra.mxu0 %v4183
  %v4487 = vpop.f32.mrf.mxu0
  %v4488 = vadd.f32 0.0, %v4487
  %4489 = vmatmul.f32.gmra.mxu0 %v4186
  %v4490 = vpop.f32.mrf.mxu0
  %v4491 = vadd.f32 0.0, %v4490
  %4492 = vmatmul.f32.gmra.mxu0 %v4189
  %v4493 = vpop.f32.mrf.mxu0
  %v4494 = vadd.f32 0.0, %v4493
  %4495 = vmatmul.f32.gmra.mxu0 %v4192
  %v4496 = vpop.f32.mrf.mxu0
  %v4497 = vadd.f32 0.0, %v4496
  %4498 = vmatmul.f32.gmra.mxu0 %v4195
  %v4499 = vpop.f32.mrf.mxu0
  %v4500 = vadd.f32 0.0, %v4499
  %4501 = vmatmul.f32.gmra.mxu0 %v4198
  %v4502 = vpop.f32.mrf.mxu0
  %v4503 = vadd.f32 0.0, %v4502
  %4504 = vmatmul.f32.gmra.mxu0 %v4201
  %v4505 = vpop.f32.mrf.mxu0
  %v4506 = vadd.f32 0.0, %v4505
  %4507 = vmatmul.f32.gmra.mxu0 %v4204
  %v4508 = vpop.f32.mrf.mxu0
  %v4509 = vadd.f32 0.0, %v4508
  %4510 = vmatmul.f32.gmra.mxu0 %v4207
  %v4511 = vpop.f32.mrf.mxu0
  %v4512 = vadd.f32 0.0, %v4511
  %4513 = vmatmul.f32.gmra.mxu0 %v4210
  %v4514 = vpop.f32.mrf.mxu0
  %v4515 = vadd.f32 0.0, %v4514
  %4516 = vmatmul.f32.gmra.mxu0 %v4213
  %v4517 = vpop.f32.mrf.mxu0
  %v4518 = vadd.f32 0.0, %v4517
  %4519 = vmatmul.f32.gmra.mxu0 %v4216
  %v4520 = vpop.f32.mrf.mxu0
  %v4521 = vadd.f32 0.0, %v4520
  %4522 = vmatmul.f32.gmra.mxu0 %v4219
  %v4523 = vpop.f32.mrf.mxu0
  %v4524 = vadd.f32 0.0, %v4523
  %4525 = vmatmul.f32.gmra.mxu0 %v4222
  %v4526 = vpop.f32.mrf.mxu0
  %v4527 = vadd.f32 0.0, %v4526
  %4528 = vmatmul.f32.gmra.mxu0 %v4225
  %v4529 = vpop.f32.mrf.mxu0
  %v4530 = vadd.f32 0.0, %v4529
  %4531 = vmatmul.f32.gmra.mxu0 %v4228
  %v4532 = vpop.f32.mrf.mxu0
  %v4533 = vadd.f32 0.0, %v4532
  %4534 = vmatmul.f32.gmra.mxu0 %v4231
  %v4535 = vpop.f32.mrf.mxu0
  %v4536 = vadd.f32 0.0, %v4535
  %4537 = vmatmul.f32.gmra.mxu0 %v4234
  %v4538 = vpop.f32.mrf.mxu0
  %v4539 = vadd.f32 0.0, %v4538
  %4540 = vmatmul.f32.gmra.mxu0 %v4237
  %v4541 = vpop.f32.mrf.mxu0
  %v4542 = vadd.f32 0.0, %v4541
  %4543 = vmatmul.f32.gmra.mxu0 %v4240
  %v4544 = vpop.f32.mrf.mxu0
  %v4545 = vadd.f32 0.0, %v4544
  %4546 = vmatmul.f32.gmra.mxu0 %v4243
  %v4547 = vpop.f32.mrf.mxu0
  %v4548 = vadd.f32 0.0, %v4547
  %4549 = vmatmul.f32.gmra.mxu0 %v4246
  %v4550 = vpop.f32.mrf.mxu0
  %v4551 = vadd.f32 0.0, %v4550
  %4552 = vmatmul.f32.gmra.mxu0 %v4249
  %v4553 = vpop.f32.mrf.mxu0
  %v4554 = vadd.f32 0.0, %v4553
  %4555 = vmatmul.f32.gmra.mxu0 %v4252
  %v4556 = vpop.f32.mrf.mxu0
  %v4557 = vadd.f32 0.0, %v4556
  %4558 = vmatmul.f32.gmra.mxu0 %v4255
  %v4559 = vpop.f32.mrf.mxu0
  %v4560 = vadd.f32 0.0, %v4559
  %4561 = vmatmul.f32.gmra.mxu0 %v4258
  %v4562 = vpop.f32.mrf.mxu0
  %v4563 = vadd.f32 0.0, %v4562
  %4564 = vmatmul.f32.gmra.mxu0 %v4261
  %v4565 = vpop.f32.mrf.mxu0
  %v4566 = vadd.f32 0.0, %v4565
  %4567 = vmatmul.f32.gmra.mxu0 %v4264
  %v4568 = vpop.f32.mrf.mxu0
  %v4569 = vadd.f32 0.0, %v4568
  %4570 = vmatmul.f32.gmra.mxu0 %v4267
  %v4571 = vpop.f32.mrf.mxu0
  %v4572 = vadd.f32 0.0, %v4571
  %4573 = vmatmul.f32.gmra.mxu0 %v4270
  %v4574 = vpop.f32.mrf.mxu0
  %v4575 = vadd.f32 0.0, %v4574
  %4576 = vmatmul.f32.gmra.mxu0 %v4273
  %v4577 = vpop.f32.mrf.mxu0
  %v4578 = vadd.f32 0.0, %v4577
  %4579 = vdwg.mxu0
  %v4580 = vmul.f32 %v1624, %v4293
  %v4581 = vmul.f32 %v1625, %v4296
  %v4582 = vmul.f32 %v1626, %v4299
  %v4583 = vmul.f32 %v1627, %v4302
  %v4584 = vmul.f32 %v1628, %v4305
  %v4585 = vmul.f32 %v1629, %v4308
  %v4586 = vmul.f32 %v1630, %v4311
  %v4587 = vmul.f32 %v1631, %v4314
  %v4588 = vmul.f32 %v1632, %v4317
  %v4589 = vmul.f32 %v1633, %v4320
  %v4590 = vmul.f32 %v1634, %v4323
  %v4591 = vmul.f32 %v1635, %v4326
  %v4592 = vmul.f32 %v1636, %v4329
  %v4593 = vmul.f32 %v1637, %v4332
  %v4594 = vmul.f32 %v1638, %v4335
  %v4595 = vmul.f32 %v1639, %v4338
  %v4596 = vmul.f32 %v1640, %v4341
  %v4597 = vmul.f32 %v1641, %v4344
  %v4598 = vmul.f32 %v1642, %v4347
  %v4599 = vmul.f32 %v1643, %v4350
  %v4600 = vmul.f32 %v1644, %v4353
  %v4601 = vmul.f32 %v1645, %v4356
  %v4602 = vmul.f32 %v1646, %v4359
  %v4603 = vmul.f32 %v1647, %v4362
  %v4604 = vmul.f32 %v1648, %v4365
  %v4605 = vmul.f32 %v1649, %v4368
  %v4606 = vmul.f32 %v1650, %v4371
  %v4607 = vmul.f32 %v1651, %v4374
  %v4608 = vmul.f32 %v1652, %v4377
  %v4609 = vmul.f32 %v1653, %v4380
  %v4610 = vmul.f32 %v1654, %v4383
  %v4611 = vmul.f32 %v1655, %v4386
  %v4612 = vmul.f32 %v1656, %v4389
  %v4613 = vmul.f32 %v1657, %v4392
  %v4614 = vmul.f32 %v1658, %v4395
  %v4615 = vmul.f32 %v1659, %v4398
  %v4616 = vmul.f32 %v1660, %v4401
  %v4617 = vmul.f32 %v1661, %v4404
  %v4618 = vmul.f32 %v1662, %v4407
  %v4619 = vmul.f32 %v1663, %v4410
  %v4620 = vmul.f32 %v1664, %v4413
  %v4621 = vmul.f32 %v1665, %v4416
  %v4622 = vmul.f32 %v1666, %v4419
  %v4623 = vmul.f32 %v1667, %v4422
  %v4624 = vmul.f32 %v1668, %v4425
  %v4625 = vmul.f32 %v1669, %v4428
  %v4626 = vmul.f32 %v1670, %v4431
  %v4627 = vmul.f32 %v1671, %v4434
  %v4628 = vmul.f32 %v1672, %v4437
  %v4629 = vmul.f32 %v1673, %v4440
  %v4630 = vmul.f32 %v1674, %v4443
  %v4631 = vmul.f32 %v1675, %v4446
  %v4632 = vmul.f32 %v1676, %v4449
  %v4633 = vmul.f32 %v1677, %v4452
  %v4634 = vmul.f32 %v1678, %v4455
  %v4635 = vmul.f32 %v1679, %v4458
  %v4636 = vmul.f32 %v1680, %v4461
  %v4637 = vmul.f32 %v1681, %v4464
  %v4638 = vmul.f32 %v1682, %v4467
  %v4639 = vmul.f32 %v1683, %v4470
  %v4640 = vmul.f32 %v1684, %v4473
  %v4641 = vmul.f32 %v1685, %v4476
  %v4642 = vmul.f32 %v1686, %v4479
  %v4643 = vmul.f32 %v1687, %v4482
  %v4644 = vmul.f32 %v1688, %v4485
  %v4645 = vmul.f32 %v1689, %v4488
  %v4646 = vmul.f32 %v1690, %v4491
  %v4647 = vmul.f32 %v1691, %v4494
  %v4648 = vmul.f32 %v1692, %v4497
  %v4649 = vmul.f32 %v1693, %v4500
  %v4650 = vmul.f32 %v1694, %v4503
  %v4651 = vmul.f32 %v1695, %v4506
  %v4652 = vmul.f32 %v1696, %v4509
  %v4653 = vmul.f32 %v1697, %v4512
  %v4654 = vmul.f32 %v1698, %v4515
  %v4655 = vmul.f32 %v1699, %v4518
  %v4656 = vmul.f32 %v1700, %v4521
  %v4657 = vmul.f32 %v1701, %v4524
  %v4658 = vmul.f32 %v1702, %v4527
  %v4659 = vmul.f32 %v1703, %v4530
  %v4660 = vmul.f32 %v1704, %v4533
  %v4661 = vmul.f32 %v1705, %v4536
  %v4662 = vmul.f32 %v1706, %v4539
  %v4663 = vmul.f32 %v1707, %v4542
  %v4664 = vmul.f32 %v1708, %v4545
  %v4665 = vmul.f32 %v1709, %v4548
  %v4666 = vmul.f32 %v1710, %v4551
  %v4667 = vmul.f32 %v1711, %v4554
  %v4668 = vmul.f32 %v1712, %v4557
  %v4669 = vmul.f32 %v1713, %v4560
  %v4670 = vmul.f32 %v1714, %v4563
  %v4671 = vmul.f32 %v1715, %v4566
  %v4672 = vmul.f32 %v1716, %v4569
  %v4673 = vmul.f32 %v1717, %v4572
  %v4674 = vmul.f32 %v1718, %v4575
  %v4675 = vmul.f32 %v1719, %v4578
  %v4676 = vld [vmem:[%s7] sm:$0xff]
  %v4677 = vld [vmem:[%s7 + $0x8] sm:$0xff]
  %v4678 = vld [vmem:[%s7 + $0x10] sm:$0xff]
  %v4679 = vld [vmem:[%s7 + $0x18] sm:$0xff]
  %v4681 = vsel %vm1728, %v4580, 0
  %v4684 = vsel %vm1728, %v4581, 0
  %v4687 = vsel %vm1728, %v4582, 0
  %v4690 = vsel %vm1728, %v4583, 0
  %v4693 = vsel %vm1728, %v4584, 0
  %v4696 = vsel %vm1728, %v4585, 0
  %v4699 = vsel %vm1728, %v4586, 0
  %v4702 = vsel %vm1728, %v4587, 0
  %v4705 = vsel %vm1728, %v4588, 0
  %v4708 = vsel %vm1728, %v4589, 0
  %v4711 = vsel %vm1728, %v4590, 0
  %v4714 = vsel %vm1728, %v4591, 0
  %v4717 = vsel %vm1728, %v4592, 0
  %v4720 = vsel %vm1728, %v4593, 0
  %v4723 = vsel %vm1728, %v4594, 0
  %v4726 = vsel %vm1728, %v4595, 0
  %v4729 = vsel %vm1728, %v4596, 0
  %v4732 = vsel %vm1728, %v4597, 0
  %v4735 = vsel %vm1728, %v4598, 0
  %v4738 = vsel %vm1728, %v4599, 0
  %v4741 = vsel %vm1728, %v4600, 0
  %v4744 = vsel %vm1728, %v4601, 0
  %v4747 = vsel %vm1728, %v4602, 0
  %v4750 = vsel %vm1728, %v4603, 0
  %v4753 = vsel %vm1728, %v4604, 0
  %v4756 = vsel %vm1728, %v4605, 0
  %v4759 = vsel %vm1728, %v4606, 0
  %v4762 = vsel %vm1728, %v4607, 0
  %v4765 = vsel %vm1728, %v4608, 0
  %v4768 = vsel %vm1728, %v4609, 0
  %v4771 = vsel %vm1728, %v4610, 0
  %v4774 = vsel %vm1728, %v4611, 0
  %v4777 = vsel %vm1728, %v4612, 0
  %v4780 = vsel %vm1728, %v4613, 0
  %v4783 = vsel %vm1728, %v4614, 0
  %v4786 = vsel %vm1728, %v4615, 0
  %v4789 = vsel %vm1728, %v4616, 0
  %v4792 = vsel %vm1728, %v4617, 0
  %v4795 = vsel %vm1728, %v4618, 0
  %v4798 = vsel %vm1728, %v4619, 0
  %v4801 = vsel %vm1728, %v4620, 0
  %v4804 = vsel %vm1728, %v4621, 0
  %v4807 = vsel %vm1728, %v4622, 0
  %v4810 = vsel %vm1728, %v4623, 0
  %v4813 = vsel %vm1728, %v4624, 0
  %v4816 = vsel %vm1728, %v4625, 0
  %v4819 = vsel %vm1728, %v4626, 0
  %v4822 = vsel %vm1728, %v4627, 0
  %v4825 = vsel %vm1728, %v4628, 0
  %v4828 = vsel %vm1728, %v4629, 0
  %v4831 = vsel %vm1728, %v4630, 0
  %v4834 = vsel %vm1728, %v4631, 0
  %v4837 = vsel %vm1728, %v4632, 0
  %v4840 = vsel %vm1728, %v4633, 0
  %v4843 = vsel %vm1728, %v4634, 0
  %v4846 = vsel %vm1728, %v4635, 0
  %v4849 = vsel %vm1728, %v4636, 0
  %v4852 = vsel %vm1728, %v4637, 0
  %v4855 = vsel %vm1728, %v4638, 0
  %v4858 = vsel %vm1728, %v4639, 0
  %v4861 = vsel %vm1728, %v4640, 0
  %v4864 = vsel %vm1728, %v4641, 0
  %v4867 = vsel %vm1728, %v4642, 0
  %v4870 = vsel %vm1728, %v4643, 0
  %v4873 = vsel %vm1728, %v4644, 0
  %v4876 = vsel %vm1728, %v4645, 0
  %v4879 = vsel %vm1728, %v4646, 0
  %v4882 = vsel %vm1728, %v4647, 0
  %v4885 = vsel %vm1728, %v4648, 0
  %v4888 = vsel %vm1728, %v4649, 0
  %v4891 = vsel %vm1728, %v4650, 0
  %v4894 = vsel %vm1728, %v4651, 0
  %v4897 = vsel %vm1728, %v4652, 0
  %v4900 = vsel %vm1728, %v4653, 0
  %v4903 = vsel %vm1728, %v4654, 0
  %v4906 = vsel %vm1728, %v4655, 0
  %v4909 = vsel %vm1728, %v4656, 0
  %v4912 = vsel %vm1728, %v4657, 0
  %v4915 = vsel %vm1728, %v4658, 0
  %v4918 = vsel %vm1728, %v4659, 0
  %v4921 = vsel %vm1728, %v4660, 0
  %v4924 = vsel %vm1728, %v4661, 0
  %v4927 = vsel %vm1728, %v4662, 0
  %v4930 = vsel %vm1728, %v4663, 0
  %v4933 = vsel %vm1728, %v4664, 0
  %v4936 = vsel %vm1728, %v4665, 0
  %v4939 = vsel %vm1728, %v4666, 0
  %v4942 = vsel %vm1728, %v4667, 0
  %v4945 = vsel %vm1728, %v4668, 0
  %v4948 = vsel %vm1728, %v4669, 0
  %v4951 = vsel %vm1728, %v4670, 0
  %v4954 = vsel %vm1728, %v4671, 0
  %v4957 = vsel %vm1728, %v4672, 0
  %v4960 = vsel %vm1728, %v4673, 0
  %v4963 = vsel %vm1728, %v4674, 0
  %v4966 = vsel %vm1728, %v4675, 0
  %4968 = vmatpush.msra.mxu0 0.0
  %4969 = vmatpush.msra.mxu0 0.0
  %4970 = vmatpush.msra.mxu0 0.0
  %4971 = vmatpush.msra.mxu0 0.0
  %4972 = vmatpush.msra.mxu0 0.0
  %4973 = vmatpush.msra.mxu0 0.0
  %4974 = vmatpush.msra.mxu0 0.0
  %4975 = vmatpush.msra.mxu0 0.0
  %4976 = vmatpush.msra.mxu0 0.0
  %4977 = vmatpush.msra.mxu0 0.0
  %4978 = vmatpush.msra.mxu0 0.0
  %4979 = vmatpush.msra.mxu0 0.0
  %4980 = vmatpush.msra.mxu0 %v4679
  %4981 = vmatpush.msra.mxu0 %v4678
  %4982 = vmatpush.msra.mxu0 %v4677
  %4983 = vmatpush.msra.mxu0 %v4676
  %4984 = vmatmul.f32.gmra.mxu0 %v4681
  %v4985 = vpop.f32.mrf.mxu0
  %v4986 = vadd.f32 0.0, %v4985
  %4987 = vmatmul.f32.gmra.mxu0 %v4684
  %v4988 = vpop.f32.mrf.mxu0
  %v4989 = vadd.f32 0.0, %v4988
  %4990 = vmatmul.f32.gmra.mxu0 %v4687
  %v4991 = vpop.f32.mrf.mxu0
  %v4992 = vadd.f32 0.0, %v4991
  %4993 = vmatmul.f32.gmra.mxu0 %v4690
  %v4994 = vpop.f32.mrf.mxu0
  %v4995 = vadd.f32 0.0, %v4994
  %4996 = vmatmul.f32.gmra.mxu0 %v4693
  %v4997 = vpop.f32.mrf.mxu0
  %v4998 = vadd.f32 0.0, %v4997
  %4999 = vmatmul.f32.gmra.mxu0 %v4696
  %v5000 = vpop.f32.mrf.mxu0
  %v5001 = vadd.f32 0.0, %v5000
  %5002 = vmatmul.f32.gmra.mxu0 %v4699
  %v5003 = vpop.f32.mrf.mxu0
  %v5004 = vadd.f32 0.0, %v5003
  %5005 = vmatmul.f32.gmra.mxu0 %v4702
  %v5006 = vpop.f32.mrf.mxu0
  %v5007 = vadd.f32 0.0, %v5006
  %5008 = vmatmul.f32.gmra.mxu0 %v4705
  %v5009 = vpop.f32.mrf.mxu0
  %v5010 = vadd.f32 0.0, %v5009
  %5011 = vmatmul.f32.gmra.mxu0 %v4708
  %v5012 = vpop.f32.mrf.mxu0
  %v5013 = vadd.f32 0.0, %v5012
  %5014 = vmatmul.f32.gmra.mxu0 %v4711
  %v5015 = vpop.f32.mrf.mxu0
  %v5016 = vadd.f32 0.0, %v5015
  %5017 = vmatmul.f32.gmra.mxu0 %v4714
  %v5018 = vpop.f32.mrf.mxu0
  %v5019 = vadd.f32 0.0, %v5018
  %5020 = vmatmul.f32.gmra.mxu0 %v4717
  %v5021 = vpop.f32.mrf.mxu0
  %v5022 = vadd.f32 0.0, %v5021
  %5023 = vmatmul.f32.gmra.mxu0 %v4720
  %v5024 = vpop.f32.mrf.mxu0
  %v5025 = vadd.f32 0.0, %v5024
  %5026 = vmatmul.f32.gmra.mxu0 %v4723
  %v5027 = vpop.f32.mrf.mxu0
  %v5028 = vadd.f32 0.0, %v5027
  %5029 = vmatmul.f32.gmra.mxu0 %v4726
  %v5030 = vpop.f32.mrf.mxu0
  %v5031 = vadd.f32 0.0, %v5030
  %5032 = vmatmul.f32.gmra.mxu0 %v4729
  %v5033 = vpop.f32.mrf.mxu0
  %v5034 = vadd.f32 0.0, %v5033
  %5035 = vmatmul.f32.gmra.mxu0 %v4732
  %v5036 = vpop.f32.mrf.mxu0
  %v5037 = vadd.f32 0.0, %v5036
  %5038 = vmatmul.f32.gmra.mxu0 %v4735
  %v5039 = vpop.f32.mrf.mxu0
  %v5040 = vadd.f32 0.0, %v5039
  %5041 = vmatmul.f32.gmra.mxu0 %v4738
  %v5042 = vpop.f32.mrf.mxu0
  %v5043 = vadd.f32 0.0, %v5042
  %5044 = vmatmul.f32.gmra.mxu0 %v4741
  %v5045 = vpop.f32.mrf.mxu0
  %v5046 = vadd.f32 0.0, %v5045
  %5047 = vmatmul.f32.gmra.mxu0 %v4744
  %v5048 = vpop.f32.mrf.mxu0
  %v5049 = vadd.f32 0.0, %v5048
  %5050 = vmatmul.f32.gmra.mxu0 %v4747
  %v5051 = vpop.f32.mrf.mxu0
  %v5052 = vadd.f32 0.0, %v5051
  %5053 = vmatmul.f32.gmra.mxu0 %v4750
  %v5054 = vpop.f32.mrf.mxu0
  %v5055 = vadd.f32 0.0, %v5054
  %5056 = vmatmul.f32.gmra.mxu0 %v4753
  %v5057 = vpop.f32.mrf.mxu0
  %v5058 = vadd.f32 0.0, %v5057
  %5059 = vmatmul.f32.gmra.mxu0 %v4756
  %v5060 = vpop.f32.mrf.mxu0
  %v5061 = vadd.f32 0.0, %v5060
  %5062 = vmatmul.f32.gmra.mxu0 %v4759
  %v5063 = vpop.f32.mrf.mxu0
  %v5064 = vadd.f32 0.0, %v5063
  %5065 = vmatmul.f32.gmra.mxu0 %v4762
  %v5066 = vpop.f32.mrf.mxu0
  %v5067 = vadd.f32 0.0, %v5066
  %5068 = vmatmul.f32.gmra.mxu0 %v4765
  %v5069 = vpop.f32.mrf.mxu0
  %v5070 = vadd.f32 0.0, %v5069
  %5071 = vmatmul.f32.gmra.mxu0 %v4768
  %v5072 = vpop.f32.mrf.mxu0
  %v5073 = vadd.f32 0.0, %v5072
  %5074 = vmatmul.f32.gmra.mxu0 %v4771
  %v5075 = vpop.f32.mrf.mxu0
  %v5076 = vadd.f32 0.0, %v5075
  %5077 = vmatmul.f32.gmra.mxu0 %v4774
  %v5078 = vpop.f32.mrf.mxu0
  %v5079 = vadd.f32 0.0, %v5078
  %5080 = vmatmul.f32.gmra.mxu0 %v4777
  %v5081 = vpop.f32.mrf.mxu0
  %v5082 = vadd.f32 0.0, %v5081
  %5083 = vmatmul.f32.gmra.mxu0 %v4780
  %v5084 = vpop.f32.mrf.mxu0
  %v5085 = vadd.f32 0.0, %v5084
  %5086 = vmatmul.f32.gmra.mxu0 %v4783
  %v5087 = vpop.f32.mrf.mxu0
  %v5088 = vadd.f32 0.0, %v5087
  %5089 = vmatmul.f32.gmra.mxu0 %v4786
  %v5090 = vpop.f32.mrf.mxu0
  %v5091 = vadd.f32 0.0, %v5090
  %5092 = vmatmul.f32.gmra.mxu0 %v4789
  %v5093 = vpop.f32.mrf.mxu0
  %v5094 = vadd.f32 0.0, %v5093
  %5095 = vmatmul.f32.gmra.mxu0 %v4792
  %v5096 = vpop.f32.mrf.mxu0
  %v5097 = vadd.f32 0.0, %v5096
  %5098 = vmatmul.f32.gmra.mxu0 %v4795
  %v5099 = vpop.f32.mrf.mxu0
  %v5100 = vadd.f32 0.0, %v5099
  %5101 = vmatmul.f32.gmra.mxu0 %v4798
  %v5102 = vpop.f32.mrf.mxu0
  %v5103 = vadd.f32 0.0, %v5102
  %5104 = vmatmul.f32.gmra.mxu0 %v4801
  %v5105 = vpop.f32.mrf.mxu0
  %v5106 = vadd.f32 0.0, %v5105
  %5107 = vmatmul.f32.gmra.mxu0 %v4804
  %v5108 = vpop.f32.mrf.mxu0
  %v5109 = vadd.f32 0.0, %v5108
  %5110 = vmatmul.f32.gmra.mxu0 %v4807
  %v5111 = vpop.f32.mrf.mxu0
  %v5112 = vadd.f32 0.0, %v5111
  %5113 = vmatmul.f32.gmra.mxu0 %v4810
  %v5114 = vpop.f32.mrf.mxu0
  %v5115 = vadd.f32 0.0, %v5114
  %5116 = vmatmul.f32.gmra.mxu0 %v4813
  %v5117 = vpop.f32.mrf.mxu0
  %v5118 = vadd.f32 0.0, %v5117
  %5119 = vmatmul.f32.gmra.mxu0 %v4816
  %v5120 = vpop.f32.mrf.mxu0
  %v5121 = vadd.f32 0.0, %v5120
  %5122 = vmatmul.f32.gmra.mxu0 %v4819
  %v5123 = vpop.f32.mrf.mxu0
  %v5124 = vadd.f32 0.0, %v5123
  %5125 = vmatmul.f32.gmra.mxu0 %v4822
  %v5126 = vpop.f32.mrf.mxu0
  %v5127 = vadd.f32 0.0, %v5126
  %5128 = vmatmul.f32.gmra.mxu0 %v4825
  %v5129 = vpop.f32.mrf.mxu0
  %v5130 = vadd.f32 0.0, %v5129
  %5131 = vmatmul.f32.gmra.mxu0 %v4828
  %v5132 = vpop.f32.mrf.mxu0
  %v5133 = vadd.f32 0.0, %v5132
  %5134 = vmatmul.f32.gmra.mxu0 %v4831
  %v5135 = vpop.f32.mrf.mxu0
  %v5136 = vadd.f32 0.0, %v5135
  %5137 = vmatmul.f32.gmra.mxu0 %v4834
  %v5138 = vpop.f32.mrf.mxu0
  %v5139 = vadd.f32 0.0, %v5138
  %5140 = vmatmul.f32.gmra.mxu0 %v4837
  %v5141 = vpop.f32.mrf.mxu0
  %v5142 = vadd.f32 0.0, %v5141
  %5143 = vmatmul.f32.gmra.mxu0 %v4840
  %v5144 = vpop.f32.mrf.mxu0
  %v5145 = vadd.f32 0.0, %v5144
  %5146 = vmatmul.f32.gmra.mxu0 %v4843
  %v5147 = vpop.f32.mrf.mxu0
  %v5148 = vadd.f32 0.0, %v5147
  %5149 = vmatmul.f32.gmra.mxu0 %v4846
  %v5150 = vpop.f32.mrf.mxu0
  %v5151 = vadd.f32 0.0, %v5150
  %5152 = vmatmul.f32.gmra.mxu0 %v4849
  %v5153 = vpop.f32.mrf.mxu0
  %v5154 = vadd.f32 0.0, %v5153
  %5155 = vmatmul.f32.gmra.mxu0 %v4852
  %v5156 = vpop.f32.mrf.mxu0
  %v5157 = vadd.f32 0.0, %v5156
  %5158 = vmatmul.f32.gmra.mxu0 %v4855
  %v5159 = vpop.f32.mrf.mxu0
  %v5160 = vadd.f32 0.0, %v5159
  %5161 = vmatmul.f32.gmra.mxu0 %v4858
  %v5162 = vpop.f32.mrf.mxu0
  %v5163 = vadd.f32 0.0, %v5162
  %5164 = vmatmul.f32.gmra.mxu0 %v4861
  %v5165 = vpop.f32.mrf.mxu0
  %v5166 = vadd.f32 0.0, %v5165
  %5167 = vmatmul.f32.gmra.mxu0 %v4864
  %v5168 = vpop.f32.mrf.mxu0
  %v5169 = vadd.f32 0.0, %v5168
  %5170 = vmatmul.f32.gmra.mxu0 %v4867
  %v5171 = vpop.f32.mrf.mxu0
  %v5172 = vadd.f32 0.0, %v5171
  %5173 = vmatmul.f32.gmra.mxu0 %v4870
  %v5174 = vpop.f32.mrf.mxu0
  %v5175 = vadd.f32 0.0, %v5174
  %5176 = vmatmul.f32.gmra.mxu0 %v4873
  %v5177 = vpop.f32.mrf.mxu0
  %v5178 = vadd.f32 0.0, %v5177
  %5179 = vmatmul.f32.gmra.mxu0 %v4876
  %v5180 = vpop.f32.mrf.mxu0
  %v5181 = vadd.f32 0.0, %v5180
  %5182 = vmatmul.f32.gmra.mxu0 %v4879
  %v5183 = vpop.f32.mrf.mxu0
  %v5184 = vadd.f32 0.0, %v5183
  %5185 = vmatmul.f32.gmra.mxu0 %v4882
  %v5186 = vpop.f32.mrf.mxu0
  %v5187 = vadd.f32 0.0, %v5186
  %5188 = vmatmul.f32.gmra.mxu0 %v4885
  %v5189 = vpop.f32.mrf.mxu0
  %v5190 = vadd.f32 0.0, %v5189
  %5191 = vmatmul.f32.gmra.mxu0 %v4888
  %v5192 = vpop.f32.mrf.mxu0
  %v5193 = vadd.f32 0.0, %v5192
  %5194 = vmatmul.f32.gmra.mxu0 %v4891
  %v5195 = vpop.f32.mrf.mxu0
  %v5196 = vadd.f32 0.0, %v5195
  %5197 = vmatmul.f32.gmra.mxu0 %v4894
  %v5198 = vpop.f32.mrf.mxu0
  %v5199 = vadd.f32 0.0, %v5198
  %5200 = vmatmul.f32.gmra.mxu0 %v4897
  %v5201 = vpop.f32.mrf.mxu0
  %v5202 = vadd.f32 0.0, %v5201
  %5203 = vmatmul.f32.gmra.mxu0 %v4900
  %v5204 = vpop.f32.mrf.mxu0
  %v5205 = vadd.f32 0.0, %v5204
  %5206 = vmatmul.f32.gmra.mxu0 %v4903
  %v5207 = vpop.f32.mrf.mxu0
  %v5208 = vadd.f32 0.0, %v5207
  %5209 = vmatmul.f32.gmra.mxu0 %v4906
  %v5210 = vpop.f32.mrf.mxu0
  %v5211 = vadd.f32 0.0, %v5210
  %5212 = vmatmul.f32.gmra.mxu0 %v4909
  %v5213 = vpop.f32.mrf.mxu0
  %v5214 = vadd.f32 0.0, %v5213
  %5215 = vmatmul.f32.gmra.mxu0 %v4912
  %v5216 = vpop.f32.mrf.mxu0
  %v5217 = vadd.f32 0.0, %v5216
  %5218 = vmatmul.f32.gmra.mxu0 %v4915
  %v5219 = vpop.f32.mrf.mxu0
  %v5220 = vadd.f32 0.0, %v5219
  %5221 = vmatmul.f32.gmra.mxu0 %v4918
  %v5222 = vpop.f32.mrf.mxu0
  %v5223 = vadd.f32 0.0, %v5222
  %5224 = vmatmul.f32.gmra.mxu0 %v4921
  %v5225 = vpop.f32.mrf.mxu0
  %v5226 = vadd.f32 0.0, %v5225
  %5227 = vmatmul.f32.gmra.mxu0 %v4924
  %v5228 = vpop.f32.mrf.mxu0
  %v5229 = vadd.f32 0.0, %v5228
  %5230 = vmatmul.f32.gmra.mxu0 %v4927
  %v5231 = vpop.f32.mrf.mxu0
  %v5232 = vadd.f32 0.0, %v5231
  %5233 = vmatmul.f32.gmra.mxu0 %v4930
  %v5234 = vpop.f32.mrf.mxu0
  %v5235 = vadd.f32 0.0, %v5234
  %5236 = vmatmul.f32.gmra.mxu0 %v4933
  %v5237 = vpop.f32.mrf.mxu0
  %v5238 = vadd.f32 0.0, %v5237
  %5239 = vmatmul.f32.gmra.mxu0 %v4936
  %v5240 = vpop.f32.mrf.mxu0
  %v5241 = vadd.f32 0.0, %v5240
  %5242 = vmatmul.f32.gmra.mxu0 %v4939
  %v5243 = vpop.f32.mrf.mxu0
  %v5244 = vadd.f32 0.0, %v5243
  %5245 = vmatmul.f32.gmra.mxu0 %v4942
  %v5246 = vpop.f32.mrf.mxu0
  %v5247 = vadd.f32 0.0, %v5246
  %5248 = vmatmul.f32.gmra.mxu0 %v4945
  %v5249 = vpop.f32.mrf.mxu0
  %v5250 = vadd.f32 0.0, %v5249
  %5251 = vmatmul.f32.gmra.mxu0 %v4948
  %v5252 = vpop.f32.mrf.mxu0
  %v5253 = vadd.f32 0.0, %v5252
  %5254 = vmatmul.f32.gmra.mxu0 %v4951
  %v5255 = vpop.f32.mrf.mxu0
  %v5256 = vadd.f32 0.0, %v5255
  %5257 = vmatmul.f32.gmra.mxu0 %v4954
  %v5258 = vpop.f32.mrf.mxu0
  %v5259 = vadd.f32 0.0, %v5258
  %5260 = vmatmul.f32.gmra.mxu0 %v4957
  %v5261 = vpop.f32.mrf.mxu0
  %v5262 = vadd.f32 0.0, %v5261
  %5263 = vmatmul.f32.gmra.mxu0 %v4960
  %v5264 = vpop.f32.mrf.mxu0
  %v5265 = vadd.f32 0.0, %v5264
  %5266 = vmatmul.f32.gmra.mxu0 %v4963
  %v5267 = vpop.f32.mrf.mxu0
  %v5268 = vadd.f32 0.0, %v5267
  %5269 = vmatmul.f32.gmra.mxu0 %v4966
  %v5270 = vpop.f32.mrf.mxu0
  %v5271 = vadd.f32 0.0, %v5270
  %5272 = vdwg.mxu0
  %v5273 = vmul.f32 %v4986, %v4986
  %v5274 = vmul.f32 %v4989, %v4989
  %v5275 = vmul.f32 %v4992, %v4992
  %v5276 = vmul.f32 %v4995, %v4995
  %v5277 = vmul.f32 %v4998, %v4998
  %v5278 = vmul.f32 %v5001, %v5001
  %v5279 = vmul.f32 %v5004, %v5004
  %v5280 = vmul.f32 %v5007, %v5007
  %v5281 = vmul.f32 %v5010, %v5010
  %v5282 = vmul.f32 %v5013, %v5013
  %v5283 = vmul.f32 %v5016, %v5016
  %v5284 = vmul.f32 %v5019, %v5019
  %v5285 = vmul.f32 %v5022, %v5022
  %v5286 = vmul.f32 %v5025, %v5025
  %v5287 = vmul.f32 %v5028, %v5028
  %v5288 = vmul.f32 %v5031, %v5031
  %v5289 = vmul.f32 %v5034, %v5034
  %v5290 = vmul.f32 %v5037, %v5037
  %v5291 = vmul.f32 %v5040, %v5040
  %v5292 = vmul.f32 %v5043, %v5043
  %v5293 = vmul.f32 %v5046, %v5046
  %v5294 = vmul.f32 %v5049, %v5049
  %v5295 = vmul.f32 %v5052, %v5052
  %v5296 = vmul.f32 %v5055, %v5055
  %v5297 = vmul.f32 %v5058, %v5058
  %v5298 = vmul.f32 %v5061, %v5061
  %v5299 = vmul.f32 %v5064, %v5064
  %v5300 = vmul.f32 %v5067, %v5067
  %v5301 = vmul.f32 %v5070, %v5070
  %v5302 = vmul.f32 %v5073, %v5073
  %v5303 = vmul.f32 %v5076, %v5076
  %v5304 = vmul.f32 %v5079, %v5079
  %v5305 = vmul.f32 %v5082, %v5082
  %v5306 = vmul.f32 %v5085, %v5085
  %v5307 = vmul.f32 %v5088, %v5088
  %v5308 = vmul.f32 %v5091, %v5091
  %v5309 = vmul.f32 %v5094, %v5094
  %v5310 = vmul.f32 %v5097, %v5097
  %v5311 = vmul.f32 %v5100, %v5100
  %v5312 = vmul.f32 %v5103, %v5103
  %v5313 = vmul.f32 %v5106, %v5106
  %v5314 = vmul.f32 %v5109, %v5109
  %v5315 = vmul.f32 %v5112, %v5112
  %v5316 = vmul.f32 %v5115, %v5115
  %v5317 = vmul.f32 %v5118, %v5118
  %v5318 = vmul.f32 %v5121, %v5121
  %v5319 = vmul.f32 %v5124, %v5124
  %v5320 = vmul.f32 %v5127, %v5127
  %v5321 = vmul.f32 %v5130, %v5130
  %v5322 = vmul.f32 %v5133, %v5133
  %v5323 = vmul.f32 %v5136, %v5136
  %v5324 = vmul.f32 %v5139, %v5139
  %v5325 = vmul.f32 %v5142, %v5142
  %v5326 = vmul.f32 %v5145, %v5145
  %v5327 = vmul.f32 %v5148, %v5148
  %v5328 = vmul.f32 %v5151, %v5151
  %v5329 = vmul.f32 %v5154, %v5154
  %v5330 = vmul.f32 %v5157, %v5157
  %v5331 = vmul.f32 %v5160, %v5160
  %v5332 = vmul.f32 %v5163, %v5163
  %v5333 = vmul.f32 %v5166, %v5166
  %v5334 = vmul.f32 %v5169, %v5169
  %v5335 = vmul.f32 %v5172, %v5172
  %v5336 = vmul.f32 %v5175, %v5175
  %v5337 = vmul.f32 %v5178, %v5178
  %v5338 = vmul.f32 %v5181, %v5181
  %v5339 = vmul.f32 %v5184, %v5184
  %v5340 = vmul.f32 %v5187, %v5187
  %v5341 = vmul.f32 %v5190, %v5190
  %v5342 = vmul.f32 %v5193, %v5193
  %v5343 = vmul.f32 %v5196, %v5196
  %v5344 = vmul.f32 %v5199, %v5199
  %v5345 = vmul.f32 %v5202, %v5202
  %v5346 = vmul.f32 %v5205, %v5205
  %v5347 = vmul.f32 %v5208, %v5208
  %v5348 = vmul.f32 %v5211, %v5211
  %v5349 = vmul.f32 %v5214, %v5214
  %v5350 = vmul.f32 %v5217, %v5217
  %v5351 = vmul.f32 %v5220, %v5220
  %v5352 = vmul.f32 %v5223, %v5223
  %v5353 = vmul.f32 %v5226, %v5226
  %v5354 = vmul.f32 %v5229, %v5229
  %v5355 = vmul.f32 %v5232, %v5232
  %v5356 = vmul.f32 %v5235, %v5235
  %v5357 = vmul.f32 %v5238, %v5238
  %v5358 = vmul.f32 %v5241, %v5241
  %v5359 = vmul.f32 %v5244, %v5244
  %v5360 = vmul.f32 %v5247, %v5247
  %v5361 = vmul.f32 %v5250, %v5250
  %v5362 = vmul.f32 %v5253, %v5253
  %v5363 = vmul.f32 %v5256, %v5256
  %v5364 = vmul.f32 %v5259, %v5259
  %v5365 = vmul.f32 %v5262, %v5262
  %v5366 = vmul.f32 %v5265, %v5265
  %v5367 = vmul.f32 %v5268, %v5268
  %v5368 = vmul.f32 %v5271, %v5271
  %v5369 = vsel %vm162, %v5273, 0.0
  %5370 = vadd.xlane.f32.xlu0 %v5369
  %v5371 = vpop.xlane.xlu0 %5370
  %v5372 = vsel %vm162, %v5274, 0.0
  %5373 = vadd.xlane.f32.xlu0 %v5372
  %v5374 = vpop.xlane.xlu0 %5373
  %v5375 = vsel %vm162, %v5275, 0.0
  %5376 = vadd.xlane.f32.xlu0 %v5375
  %v5377 = vpop.xlane.xlu0 %5376
  %v5378 = vsel %vm162, %v5276, 0.0
  %5379 = vadd.xlane.f32.xlu0 %v5378
  %v5380 = vpop.xlane.xlu0 %5379
  %v5381 = vsel %vm162, %v5277, 0.0
  %5382 = vadd.xlane.f32.xlu0 %v5381
  %v5383 = vpop.xlane.xlu0 %5382
  %v5384 = vsel %vm162, %v5278, 0.0
  %5385 = vadd.xlane.f32.xlu0 %v5384
  %v5386 = vpop.xlane.xlu0 %5385
  %v5387 = vsel %vm162, %v5279, 0.0
  %5388 = vadd.xlane.f32.xlu0 %v5387
  %v5389 = vpop.xlane.xlu0 %5388
  %v5390 = vsel %vm162, %v5280, 0.0
  %5391 = vadd.xlane.f32.xlu0 %v5390
  %v5392 = vpop.xlane.xlu0 %5391
  %v5393 = vsel %vm162, %v5281, 0.0
  %5394 = vadd.xlane.f32.xlu0 %v5393
  %v5395 = vpop.xlane.xlu0 %5394
  %v5396 = vsel %vm162, %v5282, 0.0
  %5397 = vadd.xlane.f32.xlu0 %v5396
  %v5398 = vpop.xlane.xlu0 %5397
  %v5399 = vsel %vm162, %v5283, 0.0
  %5400 = vadd.xlane.f32.xlu0 %v5399
  %v5401 = vpop.xlane.xlu0 %5400
  %v5402 = vsel %vm162, %v5284, 0.0
  %5403 = vadd.xlane.f32.xlu0 %v5402
  %v5404 = vpop.xlane.xlu0 %5403
  %v5405 = vsel %vm162, %v5285, 0.0
  %5406 = vadd.xlane.f32.xlu0 %v5405
  %v5407 = vpop.xlane.xlu0 %5406
  %v5408 = vsel %vm162, %v5286, 0.0
  %5409 = vadd.xlane.f32.xlu0 %v5408
  %v5410 = vpop.xlane.xlu0 %5409
  %v5411 = vsel %vm162, %v5287, 0.0
  %5412 = vadd.xlane.f32.xlu0 %v5411
  %v5413 = vpop.xlane.xlu0 %5412
  %v5414 = vsel %vm162, %v5288, 0.0
  %5415 = vadd.xlane.f32.xlu0 %v5414
  %v5416 = vpop.xlane.xlu0 %5415
  %v5417 = vsel %vm162, %v5289, 0.0
  %5418 = vadd.xlane.f32.xlu0 %v5417
  %v5419 = vpop.xlane.xlu0 %5418
  %v5420 = vsel %vm162, %v5290, 0.0
  %5421 = vadd.xlane.f32.xlu0 %v5420
  %v5422 = vpop.xlane.xlu0 %5421
  %v5423 = vsel %vm162, %v5291, 0.0
  %5424 = vadd.xlane.f32.xlu0 %v5423
  %v5425 = vpop.xlane.xlu0 %5424
  %v5426 = vsel %vm162, %v5292, 0.0
  %5427 = vadd.xlane.f32.xlu0 %v5426
  %v5428 = vpop.xlane.xlu0 %5427
  %v5429 = vsel %vm162, %v5293, 0.0
  %5430 = vadd.xlane.f32.xlu0 %v5429
  %v5431 = vpop.xlane.xlu0 %5430
  %v5432 = vsel %vm162, %v5294, 0.0
  %5433 = vadd.xlane.f32.xlu0 %v5432
  %v5434 = vpop.xlane.xlu0 %5433
  %v5435 = vsel %vm162, %v5295, 0.0
  %5436 = vadd.xlane.f32.xlu0 %v5435
  %v5437 = vpop.xlane.xlu0 %5436
  %v5438 = vsel %vm162, %v5296, 0.0
  %5439 = vadd.xlane.f32.xlu0 %v5438
  %v5440 = vpop.xlane.xlu0 %5439
  %v5441 = vsel %vm162, %v5297, 0.0
  %5442 = vadd.xlane.f32.xlu0 %v5441
  %v5443 = vpop.xlane.xlu0 %5442
  %v5444 = vsel %vm162, %v5298, 0.0
  %5445 = vadd.xlane.f32.xlu0 %v5444
  %v5446 = vpop.xlane.xlu0 %5445
  %v5447 = vsel %vm162, %v5299, 0.0
  %5448 = vadd.xlane.f32.xlu0 %v5447
  %v5449 = vpop.xlane.xlu0 %5448
  %v5450 = vsel %vm162, %v5300, 0.0
  %5451 = vadd.xlane.f32.xlu0 %v5450
  %v5452 = vpop.xlane.xlu0 %5451
  %v5453 = vsel %vm162, %v5301, 0.0
  %5454 = vadd.xlane.f32.xlu0 %v5453
  %v5455 = vpop.xlane.xlu0 %5454
  %v5456 = vsel %vm162, %v5302, 0.0
  %5457 = vadd.xlane.f32.xlu0 %v5456
  %v5458 = vpop.xlane.xlu0 %5457
  %v5459 = vsel %vm162, %v5303, 0.0
  %5460 = vadd.xlane.f32.xlu0 %v5459
  %v5461 = vpop.xlane.xlu0 %5460
  %v5462 = vsel %vm162, %v5304, 0.0
  %5463 = vadd.xlane.f32.xlu0 %v5462
  %v5464 = vpop.xlane.xlu0 %5463
  %v5465 = vsel %vm162, %v5305, 0.0
  %5466 = vadd.xlane.f32.xlu0 %v5465
  %v5467 = vpop.xlane.xlu0 %5466
  %v5468 = vsel %vm162, %v5306, 0.0
  %5469 = vadd.xlane.f32.xlu0 %v5468
  %v5470 = vpop.xlane.xlu0 %5469
  %v5471 = vsel %vm162, %v5307, 0.0
  %5472 = vadd.xlane.f32.xlu0 %v5471
  %v5473 = vpop.xlane.xlu0 %5472
  %v5474 = vsel %vm162, %v5308, 0.0
  %5475 = vadd.xlane.f32.xlu0 %v5474
  %v5476 = vpop.xlane.xlu0 %5475
  %v5477 = vsel %vm162, %v5309, 0.0
  %5478 = vadd.xlane.f32.xlu0 %v5477
  %v5479 = vpop.xlane.xlu0 %5478
  %v5480 = vsel %vm162, %v5310, 0.0
  %5481 = vadd.xlane.f32.xlu0 %v5480
  %v5482 = vpop.xlane.xlu0 %5481
  %v5483 = vsel %vm162, %v5311, 0.0
  %5484 = vadd.xlane.f32.xlu0 %v5483
  %v5485 = vpop.xlane.xlu0 %5484
  %v5486 = vsel %vm162, %v5312, 0.0
  %5487 = vadd.xlane.f32.xlu0 %v5486
  %v5488 = vpop.xlane.xlu0 %5487
  %v5489 = vsel %vm162, %v5313, 0.0
  %5490 = vadd.xlane.f32.xlu0 %v5489
  %v5491 = vpop.xlane.xlu0 %5490
  %v5492 = vsel %vm162, %v5314, 0.0
  %5493 = vadd.xlane.f32.xlu0 %v5492
  %v5494 = vpop.xlane.xlu0 %5493
  %v5495 = vsel %vm162, %v5315, 0.0
  %5496 = vadd.xlane.f32.xlu0 %v5495
  %v5497 = vpop.xlane.xlu0 %5496
  %v5498 = vsel %vm162, %v5316, 0.0
  %5499 = vadd.xlane.f32.xlu0 %v5498
  %v5500 = vpop.xlane.xlu0 %5499
  %v5501 = vsel %vm162, %v5317, 0.0
  %5502 = vadd.xlane.f32.xlu0 %v5501
  %v5503 = vpop.xlane.xlu0 %5502
  %v5504 = vsel %vm162, %v5318, 0.0
  %5505 = vadd.xlane.f32.xlu0 %v5504
  %v5506 = vpop.xlane.xlu0 %5505
  %v5507 = vsel %vm162, %v5319, 0.0
  %5508 = vadd.xlane.f32.xlu0 %v5507
  %v5509 = vpop.xlane.xlu0 %5508
  %v5510 = vsel %vm162, %v5320, 0.0
  %5511 = vadd.xlane.f32.xlu0 %v5510
  %v5512 = vpop.xlane.xlu0 %5511
  %v5513 = vsel %vm162, %v5321, 0.0
  %5514 = vadd.xlane.f32.xlu0 %v5513
  %v5515 = vpop.xlane.xlu0 %5514
  %v5516 = vsel %vm162, %v5322, 0.0
  %5517 = vadd.xlane.f32.xlu0 %v5516
  %v5518 = vpop.xlane.xlu0 %5517
  %v5519 = vsel %vm162, %v5323, 0.0
  %5520 = vadd.xlane.f32.xlu0 %v5519
  %v5521 = vpop.xlane.xlu0 %5520
  %v5522 = vsel %vm162, %v5324, 0.0
  %5523 = vadd.xlane.f32.xlu0 %v5522
  %v5524 = vpop.xlane.xlu0 %5523
  %v5525 = vsel %vm162, %v5325, 0.0
  %5526 = vadd.xlane.f32.xlu0 %v5525
  %v5527 = vpop.xlane.xlu0 %5526
  %v5528 = vsel %vm162, %v5326, 0.0
  %5529 = vadd.xlane.f32.xlu0 %v5528
  %v5530 = vpop.xlane.xlu0 %5529
  %v5531 = vsel %vm162, %v5327, 0.0
  %5532 = vadd.xlane.f32.xlu0 %v5531
  %v5533 = vpop.xlane.xlu0 %5532
  %v5534 = vsel %vm162, %v5328, 0.0
  %5535 = vadd.xlane.f32.xlu0 %v5534
  %v5536 = vpop.xlane.xlu0 %5535
  %v5537 = vsel %vm162, %v5329, 0.0
  %5538 = vadd.xlane.f32.xlu0 %v5537
  %v5539 = vpop.xlane.xlu0 %5538
  %v5540 = vsel %vm162, %v5330, 0.0
  %5541 = vadd.xlane.f32.xlu0 %v5540
  %v5542 = vpop.xlane.xlu0 %5541
  %v5543 = vsel %vm162, %v5331, 0.0
  %5544 = vadd.xlane.f32.xlu0 %v5543
  %v5545 = vpop.xlane.xlu0 %5544
  %v5546 = vsel %vm162, %v5332, 0.0
  %5547 = vadd.xlane.f32.xlu0 %v5546
  %v5548 = vpop.xlane.xlu0 %5547
  %v5549 = vsel %vm162, %v5333, 0.0
  %5550 = vadd.xlane.f32.xlu0 %v5549
  %v5551 = vpop.xlane.xlu0 %5550
  %v5552 = vsel %vm162, %v5334, 0.0
  %5553 = vadd.xlane.f32.xlu0 %v5552
  %v5554 = vpop.xlane.xlu0 %5553
  %v5555 = vsel %vm162, %v5335, 0.0
  %5556 = vadd.xlane.f32.xlu0 %v5555
  %v5557 = vpop.xlane.xlu0 %5556
  %v5558 = vsel %vm162, %v5336, 0.0
  %5559 = vadd.xlane.f32.xlu0 %v5558
  %v5560 = vpop.xlane.xlu0 %5559
  %v5561 = vsel %vm162, %v5337, 0.0
  %5562 = vadd.xlane.f32.xlu0 %v5561
  %v5563 = vpop.xlane.xlu0 %5562
  %v5564 = vsel %vm162, %v5338, 0.0
  %5565 = vadd.xlane.f32.xlu0 %v5564
  %v5566 = vpop.xlane.xlu0 %5565
  %v5567 = vsel %vm162, %v5339, 0.0
  %5568 = vadd.xlane.f32.xlu0 %v5567
  %v5569 = vpop.xlane.xlu0 %5568
  %v5570 = vsel %vm162, %v5340, 0.0
  %5571 = vadd.xlane.f32.xlu0 %v5570
  %v5572 = vpop.xlane.xlu0 %5571
  %v5573 = vsel %vm162, %v5341, 0.0
  %5574 = vadd.xlane.f32.xlu0 %v5573
  %v5575 = vpop.xlane.xlu0 %5574
  %v5576 = vsel %vm162, %v5342, 0.0
  %5577 = vadd.xlane.f32.xlu0 %v5576
  %v5578 = vpop.xlane.xlu0 %5577
  %v5579 = vsel %vm162, %v5343, 0.0
  %5580 = vadd.xlane.f32.xlu0 %v5579
  %v5581 = vpop.xlane.xlu0 %5580
  %v5582 = vsel %vm162, %v5344, 0.0
  %5583 = vadd.xlane.f32.xlu0 %v5582
  %v5584 = vpop.xlane.xlu0 %5583
  %v5585 = vsel %vm162, %v5345, 0.0
  %5586 = vadd.xlane.f32.xlu0 %v5585
  %v5587 = vpop.xlane.xlu0 %5586
  %v5588 = vsel %vm162, %v5346, 0.0
  %5589 = vadd.xlane.f32.xlu0 %v5588
  %v5590 = vpop.xlane.xlu0 %5589
  %v5591 = vsel %vm162, %v5347, 0.0
  %5592 = vadd.xlane.f32.xlu0 %v5591
  %v5593 = vpop.xlane.xlu0 %5592
  %v5594 = vsel %vm162, %v5348, 0.0
  %5595 = vadd.xlane.f32.xlu0 %v5594
  %v5596 = vpop.xlane.xlu0 %5595
  %v5597 = vsel %vm162, %v5349, 0.0
  %5598 = vadd.xlane.f32.xlu0 %v5597
  %v5599 = vpop.xlane.xlu0 %5598
  %v5600 = vsel %vm162, %v5350, 0.0
  %5601 = vadd.xlane.f32.xlu0 %v5600
  %v5602 = vpop.xlane.xlu0 %5601
  %v5603 = vsel %vm162, %v5351, 0.0
  %5604 = vadd.xlane.f32.xlu0 %v5603
  %v5605 = vpop.xlane.xlu0 %5604
  %v5606 = vsel %vm162, %v5352, 0.0
  %5607 = vadd.xlane.f32.xlu0 %v5606
  %v5608 = vpop.xlane.xlu0 %5607
  %v5609 = vsel %vm162, %v5353, 0.0
  %5610 = vadd.xlane.f32.xlu0 %v5609
  %v5611 = vpop.xlane.xlu0 %5610
  %v5612 = vsel %vm162, %v5354, 0.0
  %5613 = vadd.xlane.f32.xlu0 %v5612
  %v5614 = vpop.xlane.xlu0 %5613
  %v5615 = vsel %vm162, %v5355, 0.0
  %5616 = vadd.xlane.f32.xlu0 %v5615
  %v5617 = vpop.xlane.xlu0 %5616
  %v5618 = vsel %vm162, %v5356, 0.0
  %5619 = vadd.xlane.f32.xlu0 %v5618
  %v5620 = vpop.xlane.xlu0 %5619
  %v5621 = vsel %vm162, %v5357, 0.0
  %5622 = vadd.xlane.f32.xlu0 %v5621
  %v5623 = vpop.xlane.xlu0 %5622
  %v5624 = vsel %vm162, %v5358, 0.0
  %5625 = vadd.xlane.f32.xlu0 %v5624
  %v5626 = vpop.xlane.xlu0 %5625
  %v5627 = vsel %vm162, %v5359, 0.0
  %5628 = vadd.xlane.f32.xlu0 %v5627
  %v5629 = vpop.xlane.xlu0 %5628
  %v5630 = vsel %vm162, %v5360, 0.0
  %5631 = vadd.xlane.f32.xlu0 %v5630
  %v5632 = vpop.xlane.xlu0 %5631
  %v5633 = vsel %vm162, %v5361, 0.0
  %5634 = vadd.xlane.f32.xlu0 %v5633
  %v5635 = vpop.xlane.xlu0 %5634
  %v5636 = vsel %vm162, %v5362, 0.0
  %5637 = vadd.xlane.f32.xlu0 %v5636
  %v5638 = vpop.xlane.xlu0 %5637
  %v5639 = vsel %vm162, %v5363, 0.0
  %5640 = vadd.xlane.f32.xlu0 %v5639
  %v5641 = vpop.xlane.xlu0 %5640
  %v5642 = vsel %vm162, %v5364, 0.0
  %5643 = vadd.xlane.f32.xlu0 %v5642
  %v5644 = vpop.xlane.xlu0 %5643
  %v5645 = vsel %vm162, %v5365, 0.0
  %5646 = vadd.xlane.f32.xlu0 %v5645
  %v5647 = vpop.xlane.xlu0 %5646
  %v5648 = vsel %vm162, %v5366, 0.0
  %5649 = vadd.xlane.f32.xlu0 %v5648
  %v5650 = vpop.xlane.xlu0 %5649
  %v5651 = vsel %vm162, %v5367, 0.0
  %5652 = vadd.xlane.f32.xlu0 %v5651
  %v5653 = vpop.xlane.xlu0 %5652
  %v5654 = vsel %vm162, %v5368, 0.0
  %5655 = vadd.xlane.f32.xlu0 %v5654
  %v5656 = vpop.xlane.xlu0 %5655
  %v5657 = vmax.f32 %v5371, 1e-24
  %v5658 = vmax.f32 %v5374, 1e-24
  %v5659 = vmax.f32 %v5377, 1e-24
  %v5660 = vmax.f32 %v5380, 1e-24
  %v5661 = vmax.f32 %v5383, 1e-24
  %v5662 = vmax.f32 %v5386, 1e-24
  %v5663 = vmax.f32 %v5389, 1e-24
  %v5664 = vmax.f32 %v5392, 1e-24
  %v5665 = vmax.f32 %v5395, 1e-24
  %v5666 = vmax.f32 %v5398, 1e-24
  %v5667 = vmax.f32 %v5401, 1e-24
  %v5668 = vmax.f32 %v5404, 1e-24
  %v5669 = vmax.f32 %v5407, 1e-24
  %v5670 = vmax.f32 %v5410, 1e-24
  %v5671 = vmax.f32 %v5413, 1e-24
  %v5672 = vmax.f32 %v5416, 1e-24
  %v5673 = vmax.f32 %v5419, 1e-24
  %v5674 = vmax.f32 %v5422, 1e-24
  %v5675 = vmax.f32 %v5425, 1e-24
  %v5676 = vmax.f32 %v5428, 1e-24
  %v5677 = vmax.f32 %v5431, 1e-24
  %v5678 = vmax.f32 %v5434, 1e-24
  %v5679 = vmax.f32 %v5437, 1e-24
  %v5680 = vmax.f32 %v5440, 1e-24
  %v5681 = vmax.f32 %v5443, 1e-24
  %v5682 = vmax.f32 %v5446, 1e-24
  %v5683 = vmax.f32 %v5449, 1e-24
  %v5684 = vmax.f32 %v5452, 1e-24
  %v5685 = vmax.f32 %v5455, 1e-24
  %v5686 = vmax.f32 %v5458, 1e-24
  %v5687 = vmax.f32 %v5461, 1e-24
  %v5688 = vmax.f32 %v5464, 1e-24
  %v5689 = vmax.f32 %v5467, 1e-24
  %v5690 = vmax.f32 %v5470, 1e-24
  %v5691 = vmax.f32 %v5473, 1e-24
  %v5692 = vmax.f32 %v5476, 1e-24
  %v5693 = vmax.f32 %v5479, 1e-24
  %v5694 = vmax.f32 %v5482, 1e-24
  %v5695 = vmax.f32 %v5485, 1e-24
  %v5696 = vmax.f32 %v5488, 1e-24
  %v5697 = vmax.f32 %v5491, 1e-24
  %v5698 = vmax.f32 %v5494, 1e-24
  %v5699 = vmax.f32 %v5497, 1e-24
  %v5700 = vmax.f32 %v5500, 1e-24
  %v5701 = vmax.f32 %v5503, 1e-24
  %v5702 = vmax.f32 %v5506, 1e-24
  %v5703 = vmax.f32 %v5509, 1e-24
  %v5704 = vmax.f32 %v5512, 1e-24
  %v5705 = vmax.f32 %v5515, 1e-24
  %v5706 = vmax.f32 %v5518, 1e-24
  %v5707 = vmax.f32 %v5521, 1e-24
  %v5708 = vmax.f32 %v5524, 1e-24
  %v5709 = vmax.f32 %v5527, 1e-24
  %v5710 = vmax.f32 %v5530, 1e-24
  %v5711 = vmax.f32 %v5533, 1e-24
  %v5712 = vmax.f32 %v5536, 1e-24
  %v5713 = vmax.f32 %v5539, 1e-24
  %v5714 = vmax.f32 %v5542, 1e-24
  %v5715 = vmax.f32 %v5545, 1e-24
  %v5716 = vmax.f32 %v5548, 1e-24
  %v5717 = vmax.f32 %v5551, 1e-24
  %v5718 = vmax.f32 %v5554, 1e-24
  %v5719 = vmax.f32 %v5557, 1e-24
  %v5720 = vmax.f32 %v5560, 1e-24
  %v5721 = vmax.f32 %v5563, 1e-24
  %v5722 = vmax.f32 %v5566, 1e-24
  %v5723 = vmax.f32 %v5569, 1e-24
  %v5724 = vmax.f32 %v5572, 1e-24
  %v5725 = vmax.f32 %v5575, 1e-24
  %v5726 = vmax.f32 %v5578, 1e-24
  %v5727 = vmax.f32 %v5581, 1e-24
  %v5728 = vmax.f32 %v5584, 1e-24
  %v5729 = vmax.f32 %v5587, 1e-24
  %v5730 = vmax.f32 %v5590, 1e-24
  %v5731 = vmax.f32 %v5593, 1e-24
  %v5732 = vmax.f32 %v5596, 1e-24
  %v5733 = vmax.f32 %v5599, 1e-24
  %v5734 = vmax.f32 %v5602, 1e-24
  %v5735 = vmax.f32 %v5605, 1e-24
  %v5736 = vmax.f32 %v5608, 1e-24
  %v5737 = vmax.f32 %v5611, 1e-24
  %v5738 = vmax.f32 %v5614, 1e-24
  %v5739 = vmax.f32 %v5617, 1e-24
  %v5740 = vmax.f32 %v5620, 1e-24
  %v5741 = vmax.f32 %v5623, 1e-24
  %v5742 = vmax.f32 %v5626, 1e-24
  %v5743 = vmax.f32 %v5629, 1e-24
  %v5744 = vmax.f32 %v5632, 1e-24
  %v5745 = vmax.f32 %v5635, 1e-24
  %v5746 = vmax.f32 %v5638, 1e-24
  %v5747 = vmax.f32 %v5641, 1e-24
  %v5748 = vmax.f32 %v5644, 1e-24
  %v5749 = vmax.f32 %v5647, 1e-24
  %v5750 = vmax.f32 %v5650, 1e-24
  %v5751 = vmax.f32 %v5653, 1e-24
  %v5752 = vmax.f32 %v5656, 1e-24
  %v5753 = vrsqrt.pop %v5657
  %v5754 = vmul.f32 %v5753, %v5657
  %v5755 = vmul.f32 %v5754, %v5753
  %v5756 = vmul.f32 0.5, %v5755
  %v5757 = vsub.f32 1.5, %v5756
  %v5758 = vmul.f32 %v5753, %v5757
  %vm5759 = vweird.f32 %v5657
  %vm5760 = vweird.f32 %v5753
  %vm5761 = vmor %vm5759, %vm5760
  %v5762 = vsel %vm5761, %v5753, %v5758
  %v5763 = vrsqrt.pop %v5658
  %v5764 = vmul.f32 %v5763, %v5658
  %v5765 = vmul.f32 %v5764, %v5763
  %v5766 = vmul.f32 0.5, %v5765
  %v5767 = vsub.f32 1.5, %v5766
  %v5768 = vmul.f32 %v5763, %v5767
  %vm5769 = vweird.f32 %v5658
  %vm5770 = vweird.f32 %v5763
  %vm5771 = vmor %vm5769, %vm5770
  %v5772 = vsel %vm5771, %v5763, %v5768
  %v5773 = vrsqrt.pop %v5659
  %v5774 = vmul.f32 %v5773, %v5659
  %v5775 = vmul.f32 %v5774, %v5773
  %v5776 = vmul.f32 0.5, %v5775
  %v5777 = vsub.f32 1.5, %v5776
  %v5778 = vmul.f32 %v5773, %v5777
  %vm5779 = vweird.f32 %v5659
  %vm5780 = vweird.f32 %v5773
  %vm5781 = vmor %vm5779, %vm5780
  %v5782 = vsel %vm5781, %v5773, %v5778
  %v5783 = vrsqrt.pop %v5660
  %v5784 = vmul.f32 %v5783, %v5660
  %v5785 = vmul.f32 %v5784, %v5783
  %v5786 = vmul.f32 0.5, %v5785
  %v5787 = vsub.f32 1.5, %v5786
  %v5788 = vmul.f32 %v5783, %v5787
  %vm5789 = vweird.f32 %v5660
  %vm5790 = vweird.f32 %v5783
  %vm5791 = vmor %vm5789, %vm5790
  %v5792 = vsel %vm5791, %v5783, %v5788
  %v5793 = vrsqrt.pop %v5661
  %v5794 = vmul.f32 %v5793, %v5661
  %v5795 = vmul.f32 %v5794, %v5793
  %v5796 = vmul.f32 0.5, %v5795
  %v5797 = vsub.f32 1.5, %v5796
  %v5798 = vmul.f32 %v5793, %v5797
  %vm5799 = vweird.f32 %v5661
  %vm5800 = vweird.f32 %v5793
  %vm5801 = vmor %vm5799, %vm5800
  %v5802 = vsel %vm5801, %v5793, %v5798
  %v5803 = vrsqrt.pop %v5662
  %v5804 = vmul.f32 %v5803, %v5662
  %v5805 = vmul.f32 %v5804, %v5803
  %v5806 = vmul.f32 0.5, %v5805
  %v5807 = vsub.f32 1.5, %v5806
  %v5808 = vmul.f32 %v5803, %v5807
  %vm5809 = vweird.f32 %v5662
  %vm5810 = vweird.f32 %v5803
  %vm5811 = vmor %vm5809, %vm5810
  %v5812 = vsel %vm5811, %v5803, %v5808
  %v5813 = vrsqrt.pop %v5663
  %v5814 = vmul.f32 %v5813, %v5663
  %v5815 = vmul.f32 %v5814, %v5813
  %v5816 = vmul.f32 0.5, %v5815
  %v5817 = vsub.f32 1.5, %v5816
  %v5818 = vmul.f32 %v5813, %v5817
  %vm5819 = vweird.f32 %v5663
  %vm5820 = vweird.f32 %v5813
  %vm5821 = vmor %vm5819, %vm5820
  %v5822 = vsel %vm5821, %v5813, %v5818
  %v5823 = vrsqrt.pop %v5664
  %v5824 = vmul.f32 %v5823, %v5664
  %v5825 = vmul.f32 %v5824, %v5823
  %v5826 = vmul.f32 0.5, %v5825
  %v5827 = vsub.f32 1.5, %v5826
  %v5828 = vmul.f32 %v5823, %v5827
  %vm5829 = vweird.f32 %v5664
  %vm5830 = vweird.f32 %v5823
  %vm5831 = vmor %vm5829, %vm5830
  %v5832 = vsel %vm5831, %v5823, %v5828
  %v5833 = vrsqrt.pop %v5665
  %v5834 = vmul.f32 %v5833, %v5665
  %v5835 = vmul.f32 %v5834, %v5833
  %v5836 = vmul.f32 0.5, %v5835
  %v5837 = vsub.f32 1.5, %v5836
  %v5838 = vmul.f32 %v5833, %v5837
  %vm5839 = vweird.f32 %v5665
  %vm5840 = vweird.f32 %v5833
  %vm5841 = vmor %vm5839, %vm5840
  %v5842 = vsel %vm5841, %v5833, %v5838
  %v5843 = vrsqrt.pop %v5666
  %v5844 = vmul.f32 %v5843, %v5666
  %v5845 = vmul.f32 %v5844, %v5843
  %v5846 = vmul.f32 0.5, %v5845
  %v5847 = vsub.f32 1.5, %v5846
  %v5848 = vmul.f32 %v5843, %v5847
  %vm5849 = vweird.f32 %v5666
  %vm5850 = vweird.f32 %v5843
  %vm5851 = vmor %vm5849, %vm5850
  %v5852 = vsel %vm5851, %v5843, %v5848
  %v5853 = vrsqrt.pop %v5667
  %v5854 = vmul.f32 %v5853, %v5667
  %v5855 = vmul.f32 %v5854, %v5853
  %v5856 = vmul.f32 0.5, %v5855
  %v5857 = vsub.f32 1.5, %v5856
  %v5858 = vmul.f32 %v5853, %v5857
  %vm5859 = vweird.f32 %v5667
  %vm5860 = vweird.f32 %v5853
  %vm5861 = vmor %vm5859, %vm5860
  %v5862 = vsel %vm5861, %v5853, %v5858
  %v5863 = vrsqrt.pop %v5668
  %v5864 = vmul.f32 %v5863, %v5668
  %v5865 = vmul.f32 %v5864, %v5863
  %v5866 = vmul.f32 0.5, %v5865
  %v5867 = vsub.f32 1.5, %v5866
  %v5868 = vmul.f32 %v5863, %v5867
  %vm5869 = vweird.f32 %v5668
  %vm5870 = vweird.f32 %v5863
  %vm5871 = vmor %vm5869, %vm5870
  %v5872 = vsel %vm5871, %v5863, %v5868
  %v5873 = vrsqrt.pop %v5669
  %v5874 = vmul.f32 %v5873, %v5669
  %v5875 = vmul.f32 %v5874, %v5873
  %v5876 = vmul.f32 0.5, %v5875
  %v5877 = vsub.f32 1.5, %v5876
  %v5878 = vmul.f32 %v5873, %v5877
  %vm5879 = vweird.f32 %v5669
  %vm5880 = vweird.f32 %v5873
  %vm5881 = vmor %vm5879, %vm5880
  %v5882 = vsel %vm5881, %v5873, %v5878
  %v5883 = vrsqrt.pop %v5670
  %v5884 = vmul.f32 %v5883, %v5670
  %v5885 = vmul.f32 %v5884, %v5883
  %v5886 = vmul.f32 0.5, %v5885
  %v5887 = vsub.f32 1.5, %v5886
  %v5888 = vmul.f32 %v5883, %v5887
  %vm5889 = vweird.f32 %v5670
  %vm5890 = vweird.f32 %v5883
  %vm5891 = vmor %vm5889, %vm5890
  %v5892 = vsel %vm5891, %v5883, %v5888
  %v5893 = vrsqrt.pop %v5671
  %v5894 = vmul.f32 %v5893, %v5671
  %v5895 = vmul.f32 %v5894, %v5893
  %v5896 = vmul.f32 0.5, %v5895
  %v5897 = vsub.f32 1.5, %v5896
  %v5898 = vmul.f32 %v5893, %v5897
  %vm5899 = vweird.f32 %v5671
  %vm5900 = vweird.f32 %v5893
  %vm5901 = vmor %vm5899, %vm5900
  %v5902 = vsel %vm5901, %v5893, %v5898
  %v5903 = vrsqrt.pop %v5672
  %v5904 = vmul.f32 %v5903, %v5672
  %v5905 = vmul.f32 %v5904, %v5903
  %v5906 = vmul.f32 0.5, %v5905
  %v5907 = vsub.f32 1.5, %v5906
  %v5908 = vmul.f32 %v5903, %v5907
  %vm5909 = vweird.f32 %v5672
  %vm5910 = vweird.f32 %v5903
  %vm5911 = vmor %vm5909, %vm5910
  %v5912 = vsel %vm5911, %v5903, %v5908
  %v5913 = vrsqrt.pop %v5673
  %v5914 = vmul.f32 %v5913, %v5673
  %v5915 = vmul.f32 %v5914, %v5913
  %v5916 = vmul.f32 0.5, %v5915
  %v5917 = vsub.f32 1.5, %v5916
  %v5918 = vmul.f32 %v5913, %v5917
  %vm5919 = vweird.f32 %v5673
  %vm5920 = vweird.f32 %v5913
  %vm5921 = vmor %vm5919, %vm5920
  %v5922 = vsel %vm5921, %v5913, %v5918
  %v5923 = vrsqrt.pop %v5674
  %v5924 = vmul.f32 %v5923, %v5674
  %v5925 = vmul.f32 %v5924, %v5923
  %v5926 = vmul.f32 0.5, %v5925
  %v5927 = vsub.f32 1.5, %v5926
  %v5928 = vmul.f32 %v5923, %v5927
  %vm5929 = vweird.f32 %v5674
  %vm5930 = vweird.f32 %v5923
  %vm5931 = vmor %vm5929, %vm5930
  %v5932 = vsel %vm5931, %v5923, %v5928
  %v5933 = vrsqrt.pop %v5675
  %v5934 = vmul.f32 %v5933, %v5675
  %v5935 = vmul.f32 %v5934, %v5933
  %v5936 = vmul.f32 0.5, %v5935
  %v5937 = vsub.f32 1.5, %v5936
  %v5938 = vmul.f32 %v5933, %v5937
  %vm5939 = vweird.f32 %v5675
  %vm5940 = vweird.f32 %v5933
  %vm5941 = vmor %vm5939, %vm5940
  %v5942 = vsel %vm5941, %v5933, %v5938
  %v5943 = vrsqrt.pop %v5676
  %v5944 = vmul.f32 %v5943, %v5676
  %v5945 = vmul.f32 %v5944, %v5943
  %v5946 = vmul.f32 0.5, %v5945
  %v5947 = vsub.f32 1.5, %v5946
  %v5948 = vmul.f32 %v5943, %v5947
  %vm5949 = vweird.f32 %v5676
  %vm5950 = vweird.f32 %v5943
  %vm5951 = vmor %vm5949, %vm5950
  %v5952 = vsel %vm5951, %v5943, %v5948
  %v5953 = vrsqrt.pop %v5677
  %v5954 = vmul.f32 %v5953, %v5677
  %v5955 = vmul.f32 %v5954, %v5953
  %v5956 = vmul.f32 0.5, %v5955
  %v5957 = vsub.f32 1.5, %v5956
  %v5958 = vmul.f32 %v5953, %v5957
  %vm5959 = vweird.f32 %v5677
  %vm5960 = vweird.f32 %v5953
  %vm5961 = vmor %vm5959, %vm5960
  %v5962 = vsel %vm5961, %v5953, %v5958
  %v5963 = vrsqrt.pop %v5678
  %v5964 = vmul.f32 %v5963, %v5678
  %v5965 = vmul.f32 %v5964, %v5963
  %v5966 = vmul.f32 0.5, %v5965
  %v5967 = vsub.f32 1.5, %v5966
  %v5968 = vmul.f32 %v5963, %v5967
  %vm5969 = vweird.f32 %v5678
  %vm5970 = vweird.f32 %v5963
  %vm5971 = vmor %vm5969, %vm5970
  %v5972 = vsel %vm5971, %v5963, %v5968
  %v5973 = vrsqrt.pop %v5679
  %v5974 = vmul.f32 %v5973, %v5679
  %v5975 = vmul.f32 %v5974, %v5973
  %v5976 = vmul.f32 0.5, %v5975
  %v5977 = vsub.f32 1.5, %v5976
  %v5978 = vmul.f32 %v5973, %v5977
  %vm5979 = vweird.f32 %v5679
  %vm5980 = vweird.f32 %v5973
  %vm5981 = vmor %vm5979, %vm5980
  %v5982 = vsel %vm5981, %v5973, %v5978
  %v5983 = vrsqrt.pop %v5680
  %v5984 = vmul.f32 %v5983, %v5680
  %v5985 = vmul.f32 %v5984, %v5983
  %v5986 = vmul.f32 0.5, %v5985
  %v5987 = vsub.f32 1.5, %v5986
  %v5988 = vmul.f32 %v5983, %v5987
  %vm5989 = vweird.f32 %v5680
  %vm5990 = vweird.f32 %v5983
  %vm5991 = vmor %vm5989, %vm5990
  %v5992 = vsel %vm5991, %v5983, %v5988
  %v5993 = vrsqrt.pop %v5681
  %v5994 = vmul.f32 %v5993, %v5681
  %v5995 = vmul.f32 %v5994, %v5993
  %v5996 = vmul.f32 0.5, %v5995
  %v5997 = vsub.f32 1.5, %v5996
  %v5998 = vmul.f32 %v5993, %v5997
  %vm5999 = vweird.f32 %v5681
  %vm6000 = vweird.f32 %v5993
  %vm6001 = vmor %vm5999, %vm6000
  %v6002 = vsel %vm6001, %v5993, %v5998
  %v6003 = vrsqrt.pop %v5682
  %v6004 = vmul.f32 %v6003, %v5682
  %v6005 = vmul.f32 %v6004, %v6003
  %v6006 = vmul.f32 0.5, %v6005
  %v6007 = vsub.f32 1.5, %v6006
  %v6008 = vmul.f32 %v6003, %v6007
  %vm6009 = vweird.f32 %v5682
  %vm6010 = vweird.f32 %v6003
  %vm6011 = vmor %vm6009, %vm6010
  %v6012 = vsel %vm6011, %v6003, %v6008
  %v6013 = vrsqrt.pop %v5683
  %v6014 = vmul.f32 %v6013, %v5683
  %v6015 = vmul.f32 %v6014, %v6013
  %v6016 = vmul.f32 0.5, %v6015
  %v6017 = vsub.f32 1.5, %v6016
  %v6018 = vmul.f32 %v6013, %v6017
  %vm6019 = vweird.f32 %v5683
  %vm6020 = vweird.f32 %v6013
  %vm6021 = vmor %vm6019, %vm6020
  %v6022 = vsel %vm6021, %v6013, %v6018
  %v6023 = vrsqrt.pop %v5684
  %v6024 = vmul.f32 %v6023, %v5684
  %v6025 = vmul.f32 %v6024, %v6023
  %v6026 = vmul.f32 0.5, %v6025
  %v6027 = vsub.f32 1.5, %v6026
  %v6028 = vmul.f32 %v6023, %v6027
  %vm6029 = vweird.f32 %v5684
  %vm6030 = vweird.f32 %v6023
  %vm6031 = vmor %vm6029, %vm6030
  %v6032 = vsel %vm6031, %v6023, %v6028
  %v6033 = vrsqrt.pop %v5685
  %v6034 = vmul.f32 %v6033, %v5685
  %v6035 = vmul.f32 %v6034, %v6033
  %v6036 = vmul.f32 0.5, %v6035
  %v6037 = vsub.f32 1.5, %v6036
  %v6038 = vmul.f32 %v6033, %v6037
  %vm6039 = vweird.f32 %v5685
  %vm6040 = vweird.f32 %v6033
  %vm6041 = vmor %vm6039, %vm6040
  %v6042 = vsel %vm6041, %v6033, %v6038
  %v6043 = vrsqrt.pop %v5686
  %v6044 = vmul.f32 %v6043, %v5686
  %v6045 = vmul.f32 %v6044, %v6043
  %v6046 = vmul.f32 0.5, %v6045
  %v6047 = vsub.f32 1.5, %v6046
  %v6048 = vmul.f32 %v6043, %v6047
  %vm6049 = vweird.f32 %v5686
  %vm6050 = vweird.f32 %v6043
  %vm6051 = vmor %vm6049, %vm6050
  %v6052 = vsel %vm6051, %v6043, %v6048
  %v6053 = vrsqrt.pop %v5687
  %v6054 = vmul.f32 %v6053, %v5687
  %v6055 = vmul.f32 %v6054, %v6053
  %v6056 = vmul.f32 0.5, %v6055
  %v6057 = vsub.f32 1.5, %v6056
  %v6058 = vmul.f32 %v6053, %v6057
  %vm6059 = vweird.f32 %v5687
  %vm6060 = vweird.f32 %v6053
  %vm6061 = vmor %vm6059, %vm6060
  %v6062 = vsel %vm6061, %v6053, %v6058
  %v6063 = vrsqrt.pop %v5688
  %v6064 = vmul.f32 %v6063, %v5688
  %v6065 = vmul.f32 %v6064, %v6063
  %v6066 = vmul.f32 0.5, %v6065
  %v6067 = vsub.f32 1.5, %v6066
  %v6068 = vmul.f32 %v6063, %v6067
  %vm6069 = vweird.f32 %v5688
  %vm6070 = vweird.f32 %v6063
  %vm6071 = vmor %vm6069, %vm6070
  %v6072 = vsel %vm6071, %v6063, %v6068
  %v6073 = vrsqrt.pop %v5689
  %v6074 = vmul.f32 %v6073, %v5689
  %v6075 = vmul.f32 %v6074, %v6073
  %v6076 = vmul.f32 0.5, %v6075
  %v6077 = vsub.f32 1.5, %v6076
  %v6078 = vmul.f32 %v6073, %v6077
  %vm6079 = vweird.f32 %v5689
  %vm6080 = vweird.f32 %v6073
  %vm6081 = vmor %vm6079, %vm6080
  %v6082 = vsel %vm6081, %v6073, %v6078
  %v6083 = vrsqrt.pop %v5690
  %v6084 = vmul.f32 %v6083, %v5690
  %v6085 = vmul.f32 %v6084, %v6083
  %v6086 = vmul.f32 0.5, %v6085
  %v6087 = vsub.f32 1.5, %v6086
  %v6088 = vmul.f32 %v6083, %v6087
  %vm6089 = vweird.f32 %v5690
  %vm6090 = vweird.f32 %v6083
  %vm6091 = vmor %vm6089, %vm6090
  %v6092 = vsel %vm6091, %v6083, %v6088
  %v6093 = vrsqrt.pop %v5691
  %v6094 = vmul.f32 %v6093, %v5691
  %v6095 = vmul.f32 %v6094, %v6093
  %v6096 = vmul.f32 0.5, %v6095
  %v6097 = vsub.f32 1.5, %v6096
  %v6098 = vmul.f32 %v6093, %v6097
  %vm6099 = vweird.f32 %v5691
  %vm6100 = vweird.f32 %v6093
  %vm6101 = vmor %vm6099, %vm6100
  %v6102 = vsel %vm6101, %v6093, %v6098
  %v6103 = vrsqrt.pop %v5692
  %v6104 = vmul.f32 %v6103, %v5692
  %v6105 = vmul.f32 %v6104, %v6103
  %v6106 = vmul.f32 0.5, %v6105
  %v6107 = vsub.f32 1.5, %v6106
  %v6108 = vmul.f32 %v6103, %v6107
  %vm6109 = vweird.f32 %v5692
  %vm6110 = vweird.f32 %v6103
  %vm6111 = vmor %vm6109, %vm6110
  %v6112 = vsel %vm6111, %v6103, %v6108
  %v6113 = vrsqrt.pop %v5693
  %v6114 = vmul.f32 %v6113, %v5693
  %v6115 = vmul.f32 %v6114, %v6113
  %v6116 = vmul.f32 0.5, %v6115
  %v6117 = vsub.f32 1.5, %v6116
  %v6118 = vmul.f32 %v6113, %v6117
  %vm6119 = vweird.f32 %v5693
  %vm6120 = vweird.f32 %v6113
  %vm6121 = vmor %vm6119, %vm6120
  %v6122 = vsel %vm6121, %v6113, %v6118
  %v6123 = vrsqrt.pop %v5694
  %v6124 = vmul.f32 %v6123, %v5694
  %v6125 = vmul.f32 %v6124, %v6123
  %v6126 = vmul.f32 0.5, %v6125
  %v6127 = vsub.f32 1.5, %v6126
  %v6128 = vmul.f32 %v6123, %v6127
  %vm6129 = vweird.f32 %v5694
  %vm6130 = vweird.f32 %v6123
  %vm6131 = vmor %vm6129, %vm6130
  %v6132 = vsel %vm6131, %v6123, %v6128
  %v6133 = vrsqrt.pop %v5695
  %v6134 = vmul.f32 %v6133, %v5695
  %v6135 = vmul.f32 %v6134, %v6133
  %v6136 = vmul.f32 0.5, %v6135
  %v6137 = vsub.f32 1.5, %v6136
  %v6138 = vmul.f32 %v6133, %v6137
  %vm6139 = vweird.f32 %v5695
  %vm6140 = vweird.f32 %v6133
  %vm6141 = vmor %vm6139, %vm6140
  %v6142 = vsel %vm6141, %v6133, %v6138
  %v6143 = vrsqrt.pop %v5696
  %v6144 = vmul.f32 %v6143, %v5696
  %v6145 = vmul.f32 %v6144, %v6143
  %v6146 = vmul.f32 0.5, %v6145
  %v6147 = vsub.f32 1.5, %v6146
  %v6148 = vmul.f32 %v6143, %v6147
  %vm6149 = vweird.f32 %v5696
  %vm6150 = vweird.f32 %v6143
  %vm6151 = vmor %vm6149, %vm6150
  %v6152 = vsel %vm6151, %v6143, %v6148
  %v6153 = vrsqrt.pop %v5697
  %v6154 = vmul.f32 %v6153, %v5697
  %v6155 = vmul.f32 %v6154, %v6153
  %v6156 = vmul.f32 0.5, %v6155
  %v6157 = vsub.f32 1.5, %v6156
  %v6158 = vmul.f32 %v6153, %v6157
  %vm6159 = vweird.f32 %v5697
  %vm6160 = vweird.f32 %v6153
  %vm6161 = vmor %vm6159, %vm6160
  %v6162 = vsel %vm6161, %v6153, %v6158
  %v6163 = vrsqrt.pop %v5698
  %v6164 = vmul.f32 %v6163, %v5698
  %v6165 = vmul.f32 %v6164, %v6163
  %v6166 = vmul.f32 0.5, %v6165
  %v6167 = vsub.f32 1.5, %v6166
  %v6168 = vmul.f32 %v6163, %v6167
  %vm6169 = vweird.f32 %v5698
  %vm6170 = vweird.f32 %v6163
  %vm6171 = vmor %vm6169, %vm6170
  %v6172 = vsel %vm6171, %v6163, %v6168
  %v6173 = vrsqrt.pop %v5699
  %v6174 = vmul.f32 %v6173, %v5699
  %v6175 = vmul.f32 %v6174, %v6173
  %v6176 = vmul.f32 0.5, %v6175
  %v6177 = vsub.f32 1.5, %v6176
  %v6178 = vmul.f32 %v6173, %v6177
  %vm6179 = vweird.f32 %v5699
  %vm6180 = vweird.f32 %v6173
  %vm6181 = vmor %vm6179, %vm6180
  %v6182 = vsel %vm6181, %v6173, %v6178
  %v6183 = vrsqrt.pop %v5700
  %v6184 = vmul.f32 %v6183, %v5700
  %v6185 = vmul.f32 %v6184, %v6183
  %v6186 = vmul.f32 0.5, %v6185
  %v6187 = vsub.f32 1.5, %v6186
  %v6188 = vmul.f32 %v6183, %v6187
  %vm6189 = vweird.f32 %v5700
  %vm6190 = vweird.f32 %v6183
  %vm6191 = vmor %vm6189, %vm6190
  %v6192 = vsel %vm6191, %v6183, %v6188
  %v6193 = vrsqrt.pop %v5701
  %v6194 = vmul.f32 %v6193, %v5701
  %v6195 = vmul.f32 %v6194, %v6193
  %v6196 = vmul.f32 0.5, %v6195
  %v6197 = vsub.f32 1.5, %v6196
  %v6198 = vmul.f32 %v6193, %v6197
  %vm6199 = vweird.f32 %v5701
  %vm6200 = vweird.f32 %v6193
  %vm6201 = vmor %vm6199, %vm6200
  %v6202 = vsel %vm6201, %v6193, %v6198
  %v6203 = vrsqrt.pop %v5702
  %v6204 = vmul.f32 %v6203, %v5702
  %v6205 = vmul.f32 %v6204, %v6203
  %v6206 = vmul.f32 0.5, %v6205
  %v6207 = vsub.f32 1.5, %v6206
  %v6208 = vmul.f32 %v6203, %v6207
  %vm6209 = vweird.f32 %v5702
  %vm6210 = vweird.f32 %v6203
  %vm6211 = vmor %vm6209, %vm6210
  %v6212 = vsel %vm6211, %v6203, %v6208
  %v6213 = vrsqrt.pop %v5703
  %v6214 = vmul.f32 %v6213, %v5703
  %v6215 = vmul.f32 %v6214, %v6213
  %v6216 = vmul.f32 0.5, %v6215
  %v6217 = vsub.f32 1.5, %v6216
  %v6218 = vmul.f32 %v6213, %v6217
  %vm6219 = vweird.f32 %v5703
  %vm6220 = vweird.f32 %v6213
  %vm6221 = vmor %vm6219, %vm6220
  %v6222 = vsel %vm6221, %v6213, %v6218
  %v6223 = vrsqrt.pop %v5704
  %v6224 = vmul.f32 %v6223, %v5704
  %v6225 = vmul.f32 %v6224, %v6223
  %v6226 = vmul.f32 0.5, %v6225
  %v6227 = vsub.f32 1.5, %v6226
  %v6228 = vmul.f32 %v6223, %v6227
  %vm6229 = vweird.f32 %v5704
  %vm6230 = vweird.f32 %v6223
  %vm6231 = vmor %vm6229, %vm6230
  %v6232 = vsel %vm6231, %v6223, %v6228
  %v6233 = vrsqrt.pop %v5705
  %v6234 = vmul.f32 %v6233, %v5705
  %v6235 = vmul.f32 %v6234, %v6233
  %v6236 = vmul.f32 0.5, %v6235
  %v6237 = vsub.f32 1.5, %v6236
  %v6238 = vmul.f32 %v6233, %v6237
  %vm6239 = vweird.f32 %v5705
  %vm6240 = vweird.f32 %v6233
  %vm6241 = vmor %vm6239, %vm6240
  %v6242 = vsel %vm6241, %v6233, %v6238
  %v6243 = vrsqrt.pop %v5706
  %v6244 = vmul.f32 %v6243, %v5706
  %v6245 = vmul.f32 %v6244, %v6243
  %v6246 = vmul.f32 0.5, %v6245
  %v6247 = vsub.f32 1.5, %v6246
  %v6248 = vmul.f32 %v6243, %v6247
  %vm6249 = vweird.f32 %v5706
  %vm6250 = vweird.f32 %v6243
  %vm6251 = vmor %vm6249, %vm6250
  %v6252 = vsel %vm6251, %v6243, %v6248
  %v6253 = vrsqrt.pop %v5707
  %v6254 = vmul.f32 %v6253, %v5707
  %v6255 = vmul.f32 %v6254, %v6253
  %v6256 = vmul.f32 0.5, %v6255
  %v6257 = vsub.f32 1.5, %v6256
  %v6258 = vmul.f32 %v6253, %v6257
  %vm6259 = vweird.f32 %v5707
  %vm6260 = vweird.f32 %v6253
  %vm6261 = vmor %vm6259, %vm6260
  %v6262 = vsel %vm6261, %v6253, %v6258
  %v6263 = vrsqrt.pop %v5708
  %v6264 = vmul.f32 %v6263, %v5708
  %v6265 = vmul.f32 %v6264, %v6263
  %v6266 = vmul.f32 0.5, %v6265
  %v6267 = vsub.f32 1.5, %v6266
  %v6268 = vmul.f32 %v6263, %v6267
  %vm6269 = vweird.f32 %v5708
  %vm6270 = vweird.f32 %v6263
  %vm6271 = vmor %vm6269, %vm6270
  %v6272 = vsel %vm6271, %v6263, %v6268
  %v6273 = vrsqrt.pop %v5709
  %v6274 = vmul.f32 %v6273, %v5709
  %v6275 = vmul.f32 %v6274, %v6273
  %v6276 = vmul.f32 0.5, %v6275
  %v6277 = vsub.f32 1.5, %v6276
  %v6278 = vmul.f32 %v6273, %v6277
  %vm6279 = vweird.f32 %v5709
  %vm6280 = vweird.f32 %v6273
  %vm6281 = vmor %vm6279, %vm6280
  %v6282 = vsel %vm6281, %v6273, %v6278
  %v6283 = vrsqrt.pop %v5710
  %v6284 = vmul.f32 %v6283, %v5710
  %v6285 = vmul.f32 %v6284, %v6283
  %v6286 = vmul.f32 0.5, %v6285
  %v6287 = vsub.f32 1.5, %v6286
  %v6288 = vmul.f32 %v6283, %v6287
  %vm6289 = vweird.f32 %v5710
  %vm6290 = vweird.f32 %v6283
  %vm6291 = vmor %vm6289, %vm6290
  %v6292 = vsel %vm6291, %v6283, %v6288
  %v6293 = vrsqrt.pop %v5711
  %v6294 = vmul.f32 %v6293, %v5711
  %v6295 = vmul.f32 %v6294, %v6293
  %v6296 = vmul.f32 0.5, %v6295
  %v6297 = vsub.f32 1.5, %v6296
  %v6298 = vmul.f32 %v6293, %v6297
  %vm6299 = vweird.f32 %v5711
  %vm6300 = vweird.f32 %v6293
  %vm6301 = vmor %vm6299, %vm6300
  %v6302 = vsel %vm6301, %v6293, %v6298
  %v6303 = vrsqrt.pop %v5712
  %v6304 = vmul.f32 %v6303, %v5712
  %v6305 = vmul.f32 %v6304, %v6303
  %v6306 = vmul.f32 0.5, %v6305
  %v6307 = vsub.f32 1.5, %v6306
  %v6308 = vmul.f32 %v6303, %v6307
  %vm6309 = vweird.f32 %v5712
  %vm6310 = vweird.f32 %v6303
  %vm6311 = vmor %vm6309, %vm6310
  %v6312 = vsel %vm6311, %v6303, %v6308
  %v6313 = vrsqrt.pop %v5713
  %v6314 = vmul.f32 %v6313, %v5713
  %v6315 = vmul.f32 %v6314, %v6313
  %v6316 = vmul.f32 0.5, %v6315
  %v6317 = vsub.f32 1.5, %v6316
  %v6318 = vmul.f32 %v6313, %v6317
  %vm6319 = vweird.f32 %v5713
  %vm6320 = vweird.f32 %v6313
  %vm6321 = vmor %vm6319, %vm6320
  %v6322 = vsel %vm6321, %v6313, %v6318
  %v6323 = vrsqrt.pop %v5714
  %v6324 = vmul.f32 %v6323, %v5714
  %v6325 = vmul.f32 %v6324, %v6323
  %v6326 = vmul.f32 0.5, %v6325
  %v6327 = vsub.f32 1.5, %v6326
  %v6328 = vmul.f32 %v6323, %v6327
  %vm6329 = vweird.f32 %v5714
  %vm6330 = vweird.f32 %v6323
  %vm6331 = vmor %vm6329, %vm6330
  %v6332 = vsel %vm6331, %v6323, %v6328
  %v6333 = vrsqrt.pop %v5715
  %v6334 = vmul.f32 %v6333, %v5715
  %v6335 = vmul.f32 %v6334, %v6333
  %v6336 = vmul.f32 0.5, %v6335
  %v6337 = vsub.f32 1.5, %v6336
  %v6338 = vmul.f32 %v6333, %v6337
  %vm6339 = vweird.f32 %v5715
  %vm6340 = vweird.f32 %v6333
  %vm6341 = vmor %vm6339, %vm6340
  %v6342 = vsel %vm6341, %v6333, %v6338
  %v6343 = vrsqrt.pop %v5716
  %v6344 = vmul.f32 %v6343, %v5716
  %v6345 = vmul.f32 %v6344, %v6343
  %v6346 = vmul.f32 0.5, %v6345
  %v6347 = vsub.f32 1.5, %v6346
  %v6348 = vmul.f32 %v6343, %v6347
  %vm6349 = vweird.f32 %v5716
  %vm6350 = vweird.f32 %v6343
  %vm6351 = vmor %vm6349, %vm6350
  %v6352 = vsel %vm6351, %v6343, %v6348
  %v6353 = vrsqrt.pop %v5717
  %v6354 = vmul.f32 %v6353, %v5717
  %v6355 = vmul.f32 %v6354, %v6353
  %v6356 = vmul.f32 0.5, %v6355
  %v6357 = vsub.f32 1.5, %v6356
  %v6358 = vmul.f32 %v6353, %v6357
  %vm6359 = vweird.f32 %v5717
  %vm6360 = vweird.f32 %v6353
  %vm6361 = vmor %vm6359, %vm6360
  %v6362 = vsel %vm6361, %v6353, %v6358
  %v6363 = vrsqrt.pop %v5718
  %v6364 = vmul.f32 %v6363, %v5718
  %v6365 = vmul.f32 %v6364, %v6363
  %v6366 = vmul.f32 0.5, %v6365
  %v6367 = vsub.f32 1.5, %v6366
  %v6368 = vmul.f32 %v6363, %v6367
  %vm6369 = vweird.f32 %v5718
  %vm6370 = vweird.f32 %v6363
  %vm6371 = vmor %vm6369, %vm6370
  %v6372 = vsel %vm6371, %v6363, %v6368
  %v6373 = vrsqrt.pop %v5719
  %v6374 = vmul.f32 %v6373, %v5719
  %v6375 = vmul.f32 %v6374, %v6373
  %v6376 = vmul.f32 0.5, %v6375
  %v6377 = vsub.f32 1.5, %v6376
  %v6378 = vmul.f32 %v6373, %v6377
  %vm6379 = vweird.f32 %v5719
  %vm6380 = vweird.f32 %v6373
  %vm6381 = vmor %vm6379, %vm6380
  %v6382 = vsel %vm6381, %v6373, %v6378
  %v6383 = vrsqrt.pop %v5720
  %v6384 = vmul.f32 %v6383, %v5720
  %v6385 = vmul.f32 %v6384, %v6383
  %v6386 = vmul.f32 0.5, %v6385
  %v6387 = vsub.f32 1.5, %v6386
  %v6388 = vmul.f32 %v6383, %v6387
  %vm6389 = vweird.f32 %v5720
  %vm6390 = vweird.f32 %v6383
  %vm6391 = vmor %vm6389, %vm6390
  %v6392 = vsel %vm6391, %v6383, %v6388
  %v6393 = vrsqrt.pop %v5721
  %v6394 = vmul.f32 %v6393, %v5721
  %v6395 = vmul.f32 %v6394, %v6393
  %v6396 = vmul.f32 0.5, %v6395
  %v6397 = vsub.f32 1.5, %v6396
  %v6398 = vmul.f32 %v6393, %v6397
  %vm6399 = vweird.f32 %v5721
  %vm6400 = vweird.f32 %v6393
  %vm6401 = vmor %vm6399, %vm6400
  %v6402 = vsel %vm6401, %v6393, %v6398
  %v6403 = vrsqrt.pop %v5722
  %v6404 = vmul.f32 %v6403, %v5722
  %v6405 = vmul.f32 %v6404, %v6403
  %v6406 = vmul.f32 0.5, %v6405
  %v6407 = vsub.f32 1.5, %v6406
  %v6408 = vmul.f32 %v6403, %v6407
  %vm6409 = vweird.f32 %v5722
  %vm6410 = vweird.f32 %v6403
  %vm6411 = vmor %vm6409, %vm6410
  %v6412 = vsel %vm6411, %v6403, %v6408
  %v6413 = vrsqrt.pop %v5723
  %v6414 = vmul.f32 %v6413, %v5723
  %v6415 = vmul.f32 %v6414, %v6413
  %v6416 = vmul.f32 0.5, %v6415
  %v6417 = vsub.f32 1.5, %v6416
  %v6418 = vmul.f32 %v6413, %v6417
  %vm6419 = vweird.f32 %v5723
  %vm6420 = vweird.f32 %v6413
  %vm6421 = vmor %vm6419, %vm6420
  %v6422 = vsel %vm6421, %v6413, %v6418
  %v6423 = vrsqrt.pop %v5724
  %v6424 = vmul.f32 %v6423, %v5724
  %v6425 = vmul.f32 %v6424, %v6423
  %v6426 = vmul.f32 0.5, %v6425
  %v6427 = vsub.f32 1.5, %v6426
  %v6428 = vmul.f32 %v6423, %v6427
  %vm6429 = vweird.f32 %v5724
  %vm6430 = vweird.f32 %v6423
  %vm6431 = vmor %vm6429, %vm6430
  %v6432 = vsel %vm6431, %v6423, %v6428
  %v6433 = vrsqrt.pop %v5725
  %v6434 = vmul.f32 %v6433, %v5725
  %v6435 = vmul.f32 %v6434, %v6433
  %v6436 = vmul.f32 0.5, %v6435
  %v6437 = vsub.f32 1.5, %v6436
  %v6438 = vmul.f32 %v6433, %v6437
  %vm6439 = vweird.f32 %v5725
  %vm6440 = vweird.f32 %v6433
  %vm6441 = vmor %vm6439, %vm6440
  %v6442 = vsel %vm6441, %v6433, %v6438
  %v6443 = vrsqrt.pop %v5726
  %v6444 = vmul.f32 %v6443, %v5726
  %v6445 = vmul.f32 %v6444, %v6443
  %v6446 = vmul.f32 0.5, %v6445
  %v6447 = vsub.f32 1.5, %v6446
  %v6448 = vmul.f32 %v6443, %v6447
  %vm6449 = vweird.f32 %v5726
  %vm6450 = vweird.f32 %v6443
  %vm6451 = vmor %vm6449, %vm6450
  %v6452 = vsel %vm6451, %v6443, %v6448
  %v6453 = vrsqrt.pop %v5727
  %v6454 = vmul.f32 %v6453, %v5727
  %v6455 = vmul.f32 %v6454, %v6453
  %v6456 = vmul.f32 0.5, %v6455
  %v6457 = vsub.f32 1.5, %v6456
  %v6458 = vmul.f32 %v6453, %v6457
  %vm6459 = vweird.f32 %v5727
  %vm6460 = vweird.f32 %v6453
  %vm6461 = vmor %vm6459, %vm6460
  %v6462 = vsel %vm6461, %v6453, %v6458
  %v6463 = vrsqrt.pop %v5728
  %v6464 = vmul.f32 %v6463, %v5728
  %v6465 = vmul.f32 %v6464, %v6463
  %v6466 = vmul.f32 0.5, %v6465
  %v6467 = vsub.f32 1.5, %v6466
  %v6468 = vmul.f32 %v6463, %v6467
  %vm6469 = vweird.f32 %v5728
  %vm6470 = vweird.f32 %v6463
  %vm6471 = vmor %vm6469, %vm6470
  %v6472 = vsel %vm6471, %v6463, %v6468
  %v6473 = vrsqrt.pop %v5729
  %v6474 = vmul.f32 %v6473, %v5729
  %v6475 = vmul.f32 %v6474, %v6473
  %v6476 = vmul.f32 0.5, %v6475
  %v6477 = vsub.f32 1.5, %v6476
  %v6478 = vmul.f32 %v6473, %v6477
  %vm6479 = vweird.f32 %v5729
  %vm6480 = vweird.f32 %v6473
  %vm6481 = vmor %vm6479, %vm6480
  %v6482 = vsel %vm6481, %v6473, %v6478
  %v6483 = vrsqrt.pop %v5730
  %v6484 = vmul.f32 %v6483, %v5730
  %v6485 = vmul.f32 %v6484, %v6483
  %v6486 = vmul.f32 0.5, %v6485
  %v6487 = vsub.f32 1.5, %v6486
  %v6488 = vmul.f32 %v6483, %v6487
  %vm6489 = vweird.f32 %v5730
  %vm6490 = vweird.f32 %v6483
  %vm6491 = vmor %vm6489, %vm6490
  %v6492 = vsel %vm6491, %v6483, %v6488
  %v6493 = vrsqrt.pop %v5731
  %v6494 = vmul.f32 %v6493, %v5731
  %v6495 = vmul.f32 %v6494, %v6493
  %v6496 = vmul.f32 0.5, %v6495
  %v6497 = vsub.f32 1.5, %v6496
  %v6498 = vmul.f32 %v6493, %v6497
  %vm6499 = vweird.f32 %v5731
  %vm6500 = vweird.f32 %v6493
  %vm6501 = vmor %vm6499, %vm6500
  %v6502 = vsel %vm6501, %v6493, %v6498
  %v6503 = vrsqrt.pop %v5732
  %v6504 = vmul.f32 %v6503, %v5732
  %v6505 = vmul.f32 %v6504, %v6503
  %v6506 = vmul.f32 0.5, %v6505
  %v6507 = vsub.f32 1.5, %v6506
  %v6508 = vmul.f32 %v6503, %v6507
  %vm6509 = vweird.f32 %v5732
  %vm6510 = vweird.f32 %v6503
  %vm6511 = vmor %vm6509, %vm6510
  %v6512 = vsel %vm6511, %v6503, %v6508
  %v6513 = vrsqrt.pop %v5733
  %v6514 = vmul.f32 %v6513, %v5733
  %v6515 = vmul.f32 %v6514, %v6513
  %v6516 = vmul.f32 0.5, %v6515
  %v6517 = vsub.f32 1.5, %v6516
  %v6518 = vmul.f32 %v6513, %v6517
  %vm6519 = vweird.f32 %v5733
  %vm6520 = vweird.f32 %v6513
  %vm6521 = vmor %vm6519, %vm6520
  %v6522 = vsel %vm6521, %v6513, %v6518
  %v6523 = vrsqrt.pop %v5734
  %v6524 = vmul.f32 %v6523, %v5734
  %v6525 = vmul.f32 %v6524, %v6523
  %v6526 = vmul.f32 0.5, %v6525
  %v6527 = vsub.f32 1.5, %v6526
  %v6528 = vmul.f32 %v6523, %v6527
  %vm6529 = vweird.f32 %v5734
  %vm6530 = vweird.f32 %v6523
  %vm6531 = vmor %vm6529, %vm6530
  %v6532 = vsel %vm6531, %v6523, %v6528
  %v6533 = vrsqrt.pop %v5735
  %v6534 = vmul.f32 %v6533, %v5735
  %v6535 = vmul.f32 %v6534, %v6533
  %v6536 = vmul.f32 0.5, %v6535
  %v6537 = vsub.f32 1.5, %v6536
  %v6538 = vmul.f32 %v6533, %v6537
  %vm6539 = vweird.f32 %v5735
  %vm6540 = vweird.f32 %v6533
  %vm6541 = vmor %vm6539, %vm6540
  %v6542 = vsel %vm6541, %v6533, %v6538
  %v6543 = vrsqrt.pop %v5736
  %v6544 = vmul.f32 %v6543, %v5736
  %v6545 = vmul.f32 %v6544, %v6543
  %v6546 = vmul.f32 0.5, %v6545
  %v6547 = vsub.f32 1.5, %v6546
  %v6548 = vmul.f32 %v6543, %v6547
  %vm6549 = vweird.f32 %v5736
  %vm6550 = vweird.f32 %v6543
  %vm6551 = vmor %vm6549, %vm6550
  %v6552 = vsel %vm6551, %v6543, %v6548
  %v6553 = vrsqrt.pop %v5737
  %v6554 = vmul.f32 %v6553, %v5737
  %v6555 = vmul.f32 %v6554, %v6553
  %v6556 = vmul.f32 0.5, %v6555
  %v6557 = vsub.f32 1.5, %v6556
  %v6558 = vmul.f32 %v6553, %v6557
  %vm6559 = vweird.f32 %v5737
  %vm6560 = vweird.f32 %v6553
  %vm6561 = vmor %vm6559, %vm6560
  %v6562 = vsel %vm6561, %v6553, %v6558
  %v6563 = vrsqrt.pop %v5738
  %v6564 = vmul.f32 %v6563, %v5738
  %v6565 = vmul.f32 %v6564, %v6563
  %v6566 = vmul.f32 0.5, %v6565
  %v6567 = vsub.f32 1.5, %v6566
  %v6568 = vmul.f32 %v6563, %v6567
  %vm6569 = vweird.f32 %v5738
  %vm6570 = vweird.f32 %v6563
  %vm6571 = vmor %vm6569, %vm6570
  %v6572 = vsel %vm6571, %v6563, %v6568
  %v6573 = vrsqrt.pop %v5739
  %v6574 = vmul.f32 %v6573, %v5739
  %v6575 = vmul.f32 %v6574, %v6573
  %v6576 = vmul.f32 0.5, %v6575
  %v6577 = vsub.f32 1.5, %v6576
  %v6578 = vmul.f32 %v6573, %v6577
  %vm6579 = vweird.f32 %v5739
  %vm6580 = vweird.f32 %v6573
  %vm6581 = vmor %vm6579, %vm6580
  %v6582 = vsel %vm6581, %v6573, %v6578
  %v6583 = vrsqrt.pop %v5740
  %v6584 = vmul.f32 %v6583, %v5740
  %v6585 = vmul.f32 %v6584, %v6583
  %v6586 = vmul.f32 0.5, %v6585
  %v6587 = vsub.f32 1.5, %v6586
  %v6588 = vmul.f32 %v6583, %v6587
  %vm6589 = vweird.f32 %v5740
  %vm6590 = vweird.f32 %v6583
  %vm6591 = vmor %vm6589, %vm6590
  %v6592 = vsel %vm6591, %v6583, %v6588
  %v6593 = vrsqrt.pop %v5741
  %v6594 = vmul.f32 %v6593, %v5741
  %v6595 = vmul.f32 %v6594, %v6593
  %v6596 = vmul.f32 0.5, %v6595
  %v6597 = vsub.f32 1.5, %v6596
  %v6598 = vmul.f32 %v6593, %v6597
  %vm6599 = vweird.f32 %v5741
  %vm6600 = vweird.f32 %v6593
  %vm6601 = vmor %vm6599, %vm6600
  %v6602 = vsel %vm6601, %v6593, %v6598
  %v6603 = vrsqrt.pop %v5742
  %v6604 = vmul.f32 %v6603, %v5742
  %v6605 = vmul.f32 %v6604, %v6603
  %v6606 = vmul.f32 0.5, %v6605
  %v6607 = vsub.f32 1.5, %v6606
  %v6608 = vmul.f32 %v6603, %v6607
  %vm6609 = vweird.f32 %v5742
  %vm6610 = vweird.f32 %v6603
  %vm6611 = vmor %vm6609, %vm6610
  %v6612 = vsel %vm6611, %v6603, %v6608
  %v6613 = vrsqrt.pop %v5743
  %v6614 = vmul.f32 %v6613, %v5743
  %v6615 = vmul.f32 %v6614, %v6613
  %v6616 = vmul.f32 0.5, %v6615
  %v6617 = vsub.f32 1.5, %v6616
  %v6618 = vmul.f32 %v6613, %v6617
  %vm6619 = vweird.f32 %v5743
  %vm6620 = vweird.f32 %v6613
  %vm6621 = vmor %vm6619, %vm6620
  %v6622 = vsel %vm6621, %v6613, %v6618
  %v6623 = vrsqrt.pop %v5744
  %v6624 = vmul.f32 %v6623, %v5744
  %v6625 = vmul.f32 %v6624, %v6623
  %v6626 = vmul.f32 0.5, %v6625
  %v6627 = vsub.f32 1.5, %v6626
  %v6628 = vmul.f32 %v6623, %v6627
  %vm6629 = vweird.f32 %v5744
  %vm6630 = vweird.f32 %v6623
  %vm6631 = vmor %vm6629, %vm6630
  %v6632 = vsel %vm6631, %v6623, %v6628
  %v6633 = vrsqrt.pop %v5745
  %v6634 = vmul.f32 %v6633, %v5745
  %v6635 = vmul.f32 %v6634, %v6633
  %v6636 = vmul.f32 0.5, %v6635
  %v6637 = vsub.f32 1.5, %v6636
  %v6638 = vmul.f32 %v6633, %v6637
  %vm6639 = vweird.f32 %v5745
  %vm6640 = vweird.f32 %v6633
  %vm6641 = vmor %vm6639, %vm6640
  %v6642 = vsel %vm6641, %v6633, %v6638
  %v6643 = vrsqrt.pop %v5746
  %v6644 = vmul.f32 %v6643, %v5746
  %v6645 = vmul.f32 %v6644, %v6643
  %v6646 = vmul.f32 0.5, %v6645
  %v6647 = vsub.f32 1.5, %v6646
  %v6648 = vmul.f32 %v6643, %v6647
  %vm6649 = vweird.f32 %v5746
  %vm6650 = vweird.f32 %v6643
  %vm6651 = vmor %vm6649, %vm6650
  %v6652 = vsel %vm6651, %v6643, %v6648
  %v6653 = vrsqrt.pop %v5747
  %v6654 = vmul.f32 %v6653, %v5747
  %v6655 = vmul.f32 %v6654, %v6653
  %v6656 = vmul.f32 0.5, %v6655
  %v6657 = vsub.f32 1.5, %v6656
  %v6658 = vmul.f32 %v6653, %v6657
  %vm6659 = vweird.f32 %v5747
  %vm6660 = vweird.f32 %v6653
  %vm6661 = vmor %vm6659, %vm6660
  %v6662 = vsel %vm6661, %v6653, %v6658
  %v6663 = vrsqrt.pop %v5748
  %v6664 = vmul.f32 %v6663, %v5748
  %v6665 = vmul.f32 %v6664, %v6663
  %v6666 = vmul.f32 0.5, %v6665
  %v6667 = vsub.f32 1.5, %v6666
  %v6668 = vmul.f32 %v6663, %v6667
  %vm6669 = vweird.f32 %v5748
  %vm6670 = vweird.f32 %v6663
  %vm6671 = vmor %vm6669, %vm6670
  %v6672 = vsel %vm6671, %v6663, %v6668
  %v6673 = vrsqrt.pop %v5749
  %v6674 = vmul.f32 %v6673, %v5749
  %v6675 = vmul.f32 %v6674, %v6673
  %v6676 = vmul.f32 0.5, %v6675
  %v6677 = vsub.f32 1.5, %v6676
  %v6678 = vmul.f32 %v6673, %v6677
  %vm6679 = vweird.f32 %v5749
  %vm6680 = vweird.f32 %v6673
  %vm6681 = vmor %vm6679, %vm6680
  %v6682 = vsel %vm6681, %v6673, %v6678
  %v6683 = vrsqrt.pop %v5750
  %v6684 = vmul.f32 %v6683, %v5750
  %v6685 = vmul.f32 %v6684, %v6683
  %v6686 = vmul.f32 0.5, %v6685
  %v6687 = vsub.f32 1.5, %v6686
  %v6688 = vmul.f32 %v6683, %v6687
  %vm6689 = vweird.f32 %v5750
  %vm6690 = vweird.f32 %v6683
  %vm6691 = vmor %vm6689, %vm6690
  %v6692 = vsel %vm6691, %v6683, %v6688
  %v6693 = vrsqrt.pop %v5751
  %v6694 = vmul.f32 %v6693, %v5751
  %v6695 = vmul.f32 %v6694, %v6693
  %v6696 = vmul.f32 0.5, %v6695
  %v6697 = vsub.f32 1.5, %v6696
  %v6698 = vmul.f32 %v6693, %v6697
  %vm6699 = vweird.f32 %v5751
  %vm6700 = vweird.f32 %v6693
  %vm6701 = vmor %vm6699, %vm6700
  %v6702 = vsel %vm6701, %v6693, %v6698
  %v6703 = vrsqrt.pop %v5752
  %v6704 = vmul.f32 %v6703, %v5752
  %v6705 = vmul.f32 %v6704, %v6703
  %v6706 = vmul.f32 0.5, %v6705
  %v6707 = vsub.f32 1.5, %v6706
  %v6708 = vmul.f32 %v6703, %v6707
  %vm6709 = vweird.f32 %v5752
  %vm6710 = vweird.f32 %v6703
  %vm6711 = vmor %vm6709, %vm6710
  %v6712 = vsel %vm6711, %v6703, %v6708
  %v6713 = vmul.f32 %v4986, %v5762
  %v6714 = vmul.f32 %v4989, %v5772
  %v6715 = vmul.f32 %v4992, %v5782
  %v6716 = vmul.f32 %v4995, %v5792
  %v6717 = vmul.f32 %v4998, %v5802
  %v6718 = vmul.f32 %v5001, %v5812
  %v6719 = vmul.f32 %v5004, %v5822
  %v6720 = vmul.f32 %v5007, %v5832
  %v6721 = vmul.f32 %v5010, %v5842
  %v6722 = vmul.f32 %v5013, %v5852
  %v6723 = vmul.f32 %v5016, %v5862
  %v6724 = vmul.f32 %v5019, %v5872
  %v6725 = vmul.f32 %v5022, %v5882
  %v6726 = vmul.f32 %v5025, %v5892
  %v6727 = vmul.f32 %v5028, %v5902
  %v6728 = vmul.f32 %v5031, %v5912
  %v6729 = vmul.f32 %v5034, %v5922
  %v6730 = vmul.f32 %v5037, %v5932
  %v6731 = vmul.f32 %v5040, %v5942
  %v6732 = vmul.f32 %v5043, %v5952
  %v6733 = vmul.f32 %v5046, %v5962
  %v6734 = vmul.f32 %v5049, %v5972
  %v6735 = vmul.f32 %v5052, %v5982
  %v6736 = vmul.f32 %v5055, %v5992
  %v6737 = vmul.f32 %v5058, %v6002
  %v6738 = vmul.f32 %v5061, %v6012
  %v6739 = vmul.f32 %v5064, %v6022
  %v6740 = vmul.f32 %v5067, %v6032
  %v6741 = vmul.f32 %v5070, %v6042
  %v6742 = vmul.f32 %v5073, %v6052
  %v6743 = vmul.f32 %v5076, %v6062
  %v6744 = vmul.f32 %v5079, %v6072
  %v6745 = vmul.f32 %v5082, %v6082
  %v6746 = vmul.f32 %v5085, %v6092
  %v6747 = vmul.f32 %v5088, %v6102
  %v6748 = vmul.f32 %v5091, %v6112
  %v6749 = vmul.f32 %v5094, %v6122
  %v6750 = vmul.f32 %v5097, %v6132
  %v6751 = vmul.f32 %v5100, %v6142
  %v6752 = vmul.f32 %v5103, %v6152
  %v6753 = vmul.f32 %v5106, %v6162
  %v6754 = vmul.f32 %v5109, %v6172
  %v6755 = vmul.f32 %v5112, %v6182
  %v6756 = vmul.f32 %v5115, %v6192
  %v6757 = vmul.f32 %v5118, %v6202
  %v6758 = vmul.f32 %v5121, %v6212
  %v6759 = vmul.f32 %v5124, %v6222
  %v6760 = vmul.f32 %v5127, %v6232
  %v6761 = vmul.f32 %v5130, %v6242
  %v6762 = vmul.f32 %v5133, %v6252
  %v6763 = vmul.f32 %v5136, %v6262
  %v6764 = vmul.f32 %v5139, %v6272
  %v6765 = vmul.f32 %v5142, %v6282
  %v6766 = vmul.f32 %v5145, %v6292
  %v6767 = vmul.f32 %v5148, %v6302
  %v6768 = vmul.f32 %v5151, %v6312
  %v6769 = vmul.f32 %v5154, %v6322
  %v6770 = vmul.f32 %v5157, %v6332
  %v6771 = vmul.f32 %v5160, %v6342
  %v6772 = vmul.f32 %v5163, %v6352
  %v6773 = vmul.f32 %v5166, %v6362
  %v6774 = vmul.f32 %v5169, %v6372
  %v6775 = vmul.f32 %v5172, %v6382
  %v6776 = vmul.f32 %v5175, %v6392
  %v6777 = vmul.f32 %v5178, %v6402
  %v6778 = vmul.f32 %v5181, %v6412
  %v6779 = vmul.f32 %v5184, %v6422
  %v6780 = vmul.f32 %v5187, %v6432
  %v6781 = vmul.f32 %v5190, %v6442
  %v6782 = vmul.f32 %v5193, %v6452
  %v6783 = vmul.f32 %v5196, %v6462
  %v6784 = vmul.f32 %v5199, %v6472
  %v6785 = vmul.f32 %v5202, %v6482
  %v6786 = vmul.f32 %v5205, %v6492
  %v6787 = vmul.f32 %v5208, %v6502
  %v6788 = vmul.f32 %v5211, %v6512
  %v6789 = vmul.f32 %v5214, %v6522
  %v6790 = vmul.f32 %v5217, %v6532
  %v6791 = vmul.f32 %v5220, %v6542
  %v6792 = vmul.f32 %v5223, %v6552
  %v6793 = vmul.f32 %v5226, %v6562
  %v6794 = vmul.f32 %v5229, %v6572
  %v6795 = vmul.f32 %v5232, %v6582
  %v6796 = vmul.f32 %v5235, %v6592
  %v6797 = vmul.f32 %v5238, %v6602
  %v6798 = vmul.f32 %v5241, %v6612
  %v6799 = vmul.f32 %v5244, %v6622
  %v6800 = vmul.f32 %v5247, %v6632
  %v6801 = vmul.f32 %v5250, %v6642
  %v6802 = vmul.f32 %v5253, %v6652
  %v6803 = vmul.f32 %v5256, %v6662
  %v6804 = vmul.f32 %v5259, %v6672
  %v6805 = vmul.f32 %v5262, %v6682
  %v6806 = vmul.f32 %v5265, %v6692
  %v6807 = vmul.f32 %v5268, %v6702
  %v6808 = vmul.f32 %v5271, %v6712
  %v6809 = vld [vmem:[%s10] sm:$0x3f]
  %v6810 = vld [vmem:[%s11] sm:$0x7]
  %v6812 = vsel %vm162, %v6713, 0
  %v6815 = vsel %vm162, %v6714, 0
  %v6818 = vsel %vm162, %v6715, 0
  %v6821 = vsel %vm162, %v6716, 0
  %v6824 = vsel %vm162, %v6717, 0
  %v6827 = vsel %vm162, %v6718, 0
  %v6830 = vsel %vm162, %v6719, 0
  %v6833 = vsel %vm162, %v6720, 0
  %v6836 = vsel %vm162, %v6721, 0
  %v6839 = vsel %vm162, %v6722, 0
  %v6842 = vsel %vm162, %v6723, 0
  %v6845 = vsel %vm162, %v6724, 0
  %v6848 = vsel %vm162, %v6725, 0
  %v6851 = vsel %vm162, %v6726, 0
  %v6854 = vsel %vm162, %v6727, 0
  %v6857 = vsel %vm162, %v6728, 0
  %v6860 = vsel %vm162, %v6729, 0
  %v6863 = vsel %vm162, %v6730, 0
  %v6866 = vsel %vm162, %v6731, 0
  %v6869 = vsel %vm162, %v6732, 0
  %v6872 = vsel %vm162, %v6733, 0
  %v6875 = vsel %vm162, %v6734, 0
  %v6878 = vsel %vm162, %v6735, 0
  %v6881 = vsel %vm162, %v6736, 0
  %v6884 = vsel %vm162, %v6737, 0
  %v6887 = vsel %vm162, %v6738, 0
  %v6890 = vsel %vm162, %v6739, 0
  %v6893 = vsel %vm162, %v6740, 0
  %v6896 = vsel %vm162, %v6741, 0
  %v6899 = vsel %vm162, %v6742, 0
  %v6902 = vsel %vm162, %v6743, 0
  %v6905 = vsel %vm162, %v6744, 0
  %v6908 = vsel %vm162, %v6745, 0
  %v6911 = vsel %vm162, %v6746, 0
  %v6914 = vsel %vm162, %v6747, 0
  %v6917 = vsel %vm162, %v6748, 0
  %v6920 = vsel %vm162, %v6749, 0
  %v6923 = vsel %vm162, %v6750, 0
  %v6926 = vsel %vm162, %v6751, 0
  %v6929 = vsel %vm162, %v6752, 0
  %v6932 = vsel %vm162, %v6753, 0
  %v6935 = vsel %vm162, %v6754, 0
  %v6938 = vsel %vm162, %v6755, 0
  %v6941 = vsel %vm162, %v6756, 0
  %v6944 = vsel %vm162, %v6757, 0
  %v6947 = vsel %vm162, %v6758, 0
  %v6950 = vsel %vm162, %v6759, 0
  %v6953 = vsel %vm162, %v6760, 0
  %v6956 = vsel %vm162, %v6761, 0
  %v6959 = vsel %vm162, %v6762, 0
  %v6962 = vsel %vm162, %v6763, 0
  %v6965 = vsel %vm162, %v6764, 0
  %v6968 = vsel %vm162, %v6765, 0
  %v6971 = vsel %vm162, %v6766, 0
  %v6974 = vsel %vm162, %v6767, 0
  %v6977 = vsel %vm162, %v6768, 0
  %v6980 = vsel %vm162, %v6769, 0
  %v6983 = vsel %vm162, %v6770, 0
  %v6986 = vsel %vm162, %v6771, 0
  %v6989 = vsel %vm162, %v6772, 0
  %v6992 = vsel %vm162, %v6773, 0
  %v6995 = vsel %vm162, %v6774, 0
  %v6998 = vsel %vm162, %v6775, 0
  %v7001 = vsel %vm162, %v6776, 0
  %v7004 = vsel %vm162, %v6777, 0
  %v7007 = vsel %vm162, %v6778, 0
  %v7010 = vsel %vm162, %v6779, 0
  %v7013 = vsel %vm162, %v6780, 0
  %v7016 = vsel %vm162, %v6781, 0
  %v7019 = vsel %vm162, %v6782, 0
  %v7022 = vsel %vm162, %v6783, 0
  %v7025 = vsel %vm162, %v6784, 0
  %v7028 = vsel %vm162, %v6785, 0
  %v7031 = vsel %vm162, %v6786, 0
  %v7034 = vsel %vm162, %v6787, 0
  %v7037 = vsel %vm162, %v6788, 0
  %v7040 = vsel %vm162, %v6789, 0
  %v7043 = vsel %vm162, %v6790, 0
  %v7046 = vsel %vm162, %v6791, 0
  %v7049 = vsel %vm162, %v6792, 0
  %v7052 = vsel %vm162, %v6793, 0
  %v7055 = vsel %vm162, %v6794, 0
  %v7058 = vsel %vm162, %v6795, 0
  %v7061 = vsel %vm162, %v6796, 0
  %v7064 = vsel %vm162, %v6797, 0
  %v7067 = vsel %vm162, %v6798, 0
  %v7070 = vsel %vm162, %v6799, 0
  %v7073 = vsel %vm162, %v6800, 0
  %v7076 = vsel %vm162, %v6801, 0
  %v7079 = vsel %vm162, %v6802, 0
  %v7082 = vsel %vm162, %v6803, 0
  %v7085 = vsel %vm162, %v6804, 0
  %v7088 = vsel %vm162, %v6805, 0
  %v7091 = vsel %vm162, %v6806, 0
  %v7094 = vsel %vm162, %v6807, 0
  %v7097 = vsel %vm162, %v6808, 0
  %v7100 = vsel %vm451, %v6810, 0
  %7102 = vmatpush.msra.mxu0 0.0
  %7103 = vmatpush.msra.mxu0 0.0
  %7104 = vmatpush.msra.mxu0 0.0
  %7105 = vmatpush.msra.mxu0 0.0
  %7106 = vmatpush.msra.mxu0 0.0
  %7107 = vmatpush.msra.mxu0 0.0
  %7108 = vmatpush.msra.mxu0 0.0
  %7109 = vmatpush.msra.mxu0 0.0
  %7110 = vmatpush.msra.mxu0 0.0
  %7111 = vmatpush.msra.mxu0 0.0
  %7112 = vmatpush.msra.mxu0 0.0
  %7113 = vmatpush.msra.mxu0 0.0
  %7114 = vmatpush.msra.mxu0 0.0
  %7115 = vmatpush.msra.mxu0 0.0
  %7116 = vmatpush.msra.mxu0 0.0
  %7117 = vmatpush.msra.mxu0 %v7100
  %7118 = vmatmul.f32.gmra.mxu0 %v6812
  %v7119 = vpop.f32.mrf.mxu0
  %v7120 = vadd.f32 0.0, %v7119
  %7121 = vmatmul.f32.gmra.mxu0 %v6815
  %v7122 = vpop.f32.mrf.mxu0
  %v7123 = vadd.f32 0.0, %v7122
  %7124 = vmatmul.f32.gmra.mxu0 %v6818
  %v7125 = vpop.f32.mrf.mxu0
  %v7126 = vadd.f32 0.0, %v7125
  %7127 = vmatmul.f32.gmra.mxu0 %v6821
  %v7128 = vpop.f32.mrf.mxu0
  %v7129 = vadd.f32 0.0, %v7128
  %7130 = vmatmul.f32.gmra.mxu0 %v6824
  %v7131 = vpop.f32.mrf.mxu0
  %v7132 = vadd.f32 0.0, %v7131
  %7133 = vmatmul.f32.gmra.mxu0 %v6827
  %v7134 = vpop.f32.mrf.mxu0
  %v7135 = vadd.f32 0.0, %v7134
  %7136 = vmatmul.f32.gmra.mxu0 %v6830
  %v7137 = vpop.f32.mrf.mxu0
  %v7138 = vadd.f32 0.0, %v7137
  %7139 = vmatmul.f32.gmra.mxu0 %v6833
  %v7140 = vpop.f32.mrf.mxu0
  %v7141 = vadd.f32 0.0, %v7140
  %7142 = vmatmul.f32.gmra.mxu0 %v6836
  %v7143 = vpop.f32.mrf.mxu0
  %v7144 = vadd.f32 0.0, %v7143
  %7145 = vmatmul.f32.gmra.mxu0 %v6839
  %v7146 = vpop.f32.mrf.mxu0
  %v7147 = vadd.f32 0.0, %v7146
  %7148 = vmatmul.f32.gmra.mxu0 %v6842
  %v7149 = vpop.f32.mrf.mxu0
  %v7150 = vadd.f32 0.0, %v7149
  %7151 = vmatmul.f32.gmra.mxu0 %v6845
  %v7152 = vpop.f32.mrf.mxu0
  %v7153 = vadd.f32 0.0, %v7152
  %7154 = vmatmul.f32.gmra.mxu0 %v6848
  %v7155 = vpop.f32.mrf.mxu0
  %v7156 = vadd.f32 0.0, %v7155
  %7157 = vmatmul.f32.gmra.mxu0 %v6851
  %v7158 = vpop.f32.mrf.mxu0
  %v7159 = vadd.f32 0.0, %v7158
  %7160 = vmatmul.f32.gmra.mxu0 %v6854
  %v7161 = vpop.f32.mrf.mxu0
  %v7162 = vadd.f32 0.0, %v7161
  %7163 = vmatmul.f32.gmra.mxu0 %v6857
  %v7164 = vpop.f32.mrf.mxu0
  %v7165 = vadd.f32 0.0, %v7164
  %7166 = vmatmul.f32.gmra.mxu0 %v6860
  %v7167 = vpop.f32.mrf.mxu0
  %v7168 = vadd.f32 0.0, %v7167
  %7169 = vmatmul.f32.gmra.mxu0 %v6863
  %v7170 = vpop.f32.mrf.mxu0
  %v7171 = vadd.f32 0.0, %v7170
  %7172 = vmatmul.f32.gmra.mxu0 %v6866
  %v7173 = vpop.f32.mrf.mxu0
  %v7174 = vadd.f32 0.0, %v7173
  %7175 = vmatmul.f32.gmra.mxu0 %v6869
  %v7176 = vpop.f32.mrf.mxu0
  %v7177 = vadd.f32 0.0, %v7176
  %7178 = vmatmul.f32.gmra.mxu0 %v6872
  %v7179 = vpop.f32.mrf.mxu0
  %v7180 = vadd.f32 0.0, %v7179
  %7181 = vmatmul.f32.gmra.mxu0 %v6875
  %v7182 = vpop.f32.mrf.mxu0
  %v7183 = vadd.f32 0.0, %v7182
  %7184 = vmatmul.f32.gmra.mxu0 %v6878
  %v7185 = vpop.f32.mrf.mxu0
  %v7186 = vadd.f32 0.0, %v7185
  %7187 = vmatmul.f32.gmra.mxu0 %v6881
  %v7188 = vpop.f32.mrf.mxu0
  %v7189 = vadd.f32 0.0, %v7188
  %7190 = vmatmul.f32.gmra.mxu0 %v6884
  %v7191 = vpop.f32.mrf.mxu0
  %v7192 = vadd.f32 0.0, %v7191
  %7193 = vmatmul.f32.gmra.mxu0 %v6887
  %v7194 = vpop.f32.mrf.mxu0
  %v7195 = vadd.f32 0.0, %v7194
  %7196 = vmatmul.f32.gmra.mxu0 %v6890
  %v7197 = vpop.f32.mrf.mxu0
  %v7198 = vadd.f32 0.0, %v7197
  %7199 = vmatmul.f32.gmra.mxu0 %v6893
  %v7200 = vpop.f32.mrf.mxu0
  %v7201 = vadd.f32 0.0, %v7200
  %7202 = vmatmul.f32.gmra.mxu0 %v6896
  %v7203 = vpop.f32.mrf.mxu0
  %v7204 = vadd.f32 0.0, %v7203
  %7205 = vmatmul.f32.gmra.mxu0 %v6899
  %v7206 = vpop.f32.mrf.mxu0
  %v7207 = vadd.f32 0.0, %v7206
  %7208 = vmatmul.f32.gmra.mxu0 %v6902
  %v7209 = vpop.f32.mrf.mxu0
  %v7210 = vadd.f32 0.0, %v7209
  %7211 = vmatmul.f32.gmra.mxu0 %v6905
  %v7212 = vpop.f32.mrf.mxu0
  %v7213 = vadd.f32 0.0, %v7212
  %7214 = vmatmul.f32.gmra.mxu0 %v6908
  %v7215 = vpop.f32.mrf.mxu0
  %v7216 = vadd.f32 0.0, %v7215
  %7217 = vmatmul.f32.gmra.mxu0 %v6911
  %v7218 = vpop.f32.mrf.mxu0
  %v7219 = vadd.f32 0.0, %v7218
  %7220 = vmatmul.f32.gmra.mxu0 %v6914
  %v7221 = vpop.f32.mrf.mxu0
  %v7222 = vadd.f32 0.0, %v7221
  %7223 = vmatmul.f32.gmra.mxu0 %v6917
  %v7224 = vpop.f32.mrf.mxu0
  %v7225 = vadd.f32 0.0, %v7224
  %7226 = vmatmul.f32.gmra.mxu0 %v6920
  %v7227 = vpop.f32.mrf.mxu0
  %v7228 = vadd.f32 0.0, %v7227
  %7229 = vmatmul.f32.gmra.mxu0 %v6923
  %v7230 = vpop.f32.mrf.mxu0
  %v7231 = vadd.f32 0.0, %v7230
  %7232 = vmatmul.f32.gmra.mxu0 %v6926
  %v7233 = vpop.f32.mrf.mxu0
  %v7234 = vadd.f32 0.0, %v7233
  %7235 = vmatmul.f32.gmra.mxu0 %v6929
  %v7236 = vpop.f32.mrf.mxu0
  %v7237 = vadd.f32 0.0, %v7236
  %7238 = vmatmul.f32.gmra.mxu0 %v6932
  %v7239 = vpop.f32.mrf.mxu0
  %v7240 = vadd.f32 0.0, %v7239
  %7241 = vmatmul.f32.gmra.mxu0 %v6935
  %v7242 = vpop.f32.mrf.mxu0
  %v7243 = vadd.f32 0.0, %v7242
  %7244 = vmatmul.f32.gmra.mxu0 %v6938
  %v7245 = vpop.f32.mrf.mxu0
  %v7246 = vadd.f32 0.0, %v7245
  %7247 = vmatmul.f32.gmra.mxu0 %v6941
  %v7248 = vpop.f32.mrf.mxu0
  %v7249 = vadd.f32 0.0, %v7248
  %7250 = vmatmul.f32.gmra.mxu0 %v6944
  %v7251 = vpop.f32.mrf.mxu0
  %v7252 = vadd.f32 0.0, %v7251
  %7253 = vmatmul.f32.gmra.mxu0 %v6947
  %v7254 = vpop.f32.mrf.mxu0
  %v7255 = vadd.f32 0.0, %v7254
  %7256 = vmatmul.f32.gmra.mxu0 %v6950
  %v7257 = vpop.f32.mrf.mxu0
  %v7258 = vadd.f32 0.0, %v7257
  %7259 = vmatmul.f32.gmra.mxu0 %v6953
  %v7260 = vpop.f32.mrf.mxu0
  %v7261 = vadd.f32 0.0, %v7260
  %7262 = vmatmul.f32.gmra.mxu0 %v6956
  %v7263 = vpop.f32.mrf.mxu0
  %v7264 = vadd.f32 0.0, %v7263
  %7265 = vmatmul.f32.gmra.mxu0 %v6959
  %v7266 = vpop.f32.mrf.mxu0
  %v7267 = vadd.f32 0.0, %v7266
  %7268 = vmatmul.f32.gmra.mxu0 %v6962
  %v7269 = vpop.f32.mrf.mxu0
  %v7270 = vadd.f32 0.0, %v7269
  %7271 = vmatmul.f32.gmra.mxu0 %v6965
  %v7272 = vpop.f32.mrf.mxu0
  %v7273 = vadd.f32 0.0, %v7272
  %7274 = vmatmul.f32.gmra.mxu0 %v6968
  %v7275 = vpop.f32.mrf.mxu0
  %v7276 = vadd.f32 0.0, %v7275
  %7277 = vmatmul.f32.gmra.mxu0 %v6971
  %v7278 = vpop.f32.mrf.mxu0
  %v7279 = vadd.f32 0.0, %v7278
  %7280 = vmatmul.f32.gmra.mxu0 %v6974
  %v7281 = vpop.f32.mrf.mxu0
  %v7282 = vadd.f32 0.0, %v7281
  %7283 = vmatmul.f32.gmra.mxu0 %v6977
  %v7284 = vpop.f32.mrf.mxu0
  %v7285 = vadd.f32 0.0, %v7284
  %7286 = vmatmul.f32.gmra.mxu0 %v6980
  %v7287 = vpop.f32.mrf.mxu0
  %v7288 = vadd.f32 0.0, %v7287
  %7289 = vmatmul.f32.gmra.mxu0 %v6983
  %v7290 = vpop.f32.mrf.mxu0
  %v7291 = vadd.f32 0.0, %v7290
  %7292 = vmatmul.f32.gmra.mxu0 %v6986
  %v7293 = vpop.f32.mrf.mxu0
  %v7294 = vadd.f32 0.0, %v7293
  %7295 = vmatmul.f32.gmra.mxu0 %v6989
  %v7296 = vpop.f32.mrf.mxu0
  %v7297 = vadd.f32 0.0, %v7296
  %7298 = vmatmul.f32.gmra.mxu0 %v6992
  %v7299 = vpop.f32.mrf.mxu0
  %v7300 = vadd.f32 0.0, %v7299
  %7301 = vmatmul.f32.gmra.mxu0 %v6995
  %v7302 = vpop.f32.mrf.mxu0
  %v7303 = vadd.f32 0.0, %v7302
  %7304 = vmatmul.f32.gmra.mxu0 %v6998
  %v7305 = vpop.f32.mrf.mxu0
  %v7306 = vadd.f32 0.0, %v7305
  %7307 = vmatmul.f32.gmra.mxu0 %v7001
  %v7308 = vpop.f32.mrf.mxu0
  %v7309 = vadd.f32 0.0, %v7308
  %7310 = vmatmul.f32.gmra.mxu0 %v7004
  %v7311 = vpop.f32.mrf.mxu0
  %v7312 = vadd.f32 0.0, %v7311
  %7313 = vmatmul.f32.gmra.mxu0 %v7007
  %v7314 = vpop.f32.mrf.mxu0
  %v7315 = vadd.f32 0.0, %v7314
  %7316 = vmatmul.f32.gmra.mxu0 %v7010
  %v7317 = vpop.f32.mrf.mxu0
  %v7318 = vadd.f32 0.0, %v7317
  %7319 = vmatmul.f32.gmra.mxu0 %v7013
  %v7320 = vpop.f32.mrf.mxu0
  %v7321 = vadd.f32 0.0, %v7320
  %7322 = vmatmul.f32.gmra.mxu0 %v7016
  %v7323 = vpop.f32.mrf.mxu0
  %v7324 = vadd.f32 0.0, %v7323
  %7325 = vmatmul.f32.gmra.mxu0 %v7019
  %v7326 = vpop.f32.mrf.mxu0
  %v7327 = vadd.f32 0.0, %v7326
  %7328 = vmatmul.f32.gmra.mxu0 %v7022
  %v7329 = vpop.f32.mrf.mxu0
  %v7330 = vadd.f32 0.0, %v7329
  %7331 = vmatmul.f32.gmra.mxu0 %v7025
  %v7332 = vpop.f32.mrf.mxu0
  %v7333 = vadd.f32 0.0, %v7332
  %7334 = vmatmul.f32.gmra.mxu0 %v7028
  %v7335 = vpop.f32.mrf.mxu0
  %v7336 = vadd.f32 0.0, %v7335
  %7337 = vmatmul.f32.gmra.mxu0 %v7031
  %v7338 = vpop.f32.mrf.mxu0
  %v7339 = vadd.f32 0.0, %v7338
  %7340 = vmatmul.f32.gmra.mxu0 %v7034
  %v7341 = vpop.f32.mrf.mxu0
  %v7342 = vadd.f32 0.0, %v7341
  %7343 = vmatmul.f32.gmra.mxu0 %v7037
  %v7344 = vpop.f32.mrf.mxu0
  %v7345 = vadd.f32 0.0, %v7344
  %7346 = vmatmul.f32.gmra.mxu0 %v7040
  %v7347 = vpop.f32.mrf.mxu0
  %v7348 = vadd.f32 0.0, %v7347
  %7349 = vmatmul.f32.gmra.mxu0 %v7043
  %v7350 = vpop.f32.mrf.mxu0
  %v7351 = vadd.f32 0.0, %v7350
  %7352 = vmatmul.f32.gmra.mxu0 %v7046
  %v7353 = vpop.f32.mrf.mxu0
  %v7354 = vadd.f32 0.0, %v7353
  %7355 = vmatmul.f32.gmra.mxu0 %v7049
  %v7356 = vpop.f32.mrf.mxu0
  %v7357 = vadd.f32 0.0, %v7356
  %7358 = vmatmul.f32.gmra.mxu0 %v7052
  %v7359 = vpop.f32.mrf.mxu0
  %v7360 = vadd.f32 0.0, %v7359
  %7361 = vmatmul.f32.gmra.mxu0 %v7055
  %v7362 = vpop.f32.mrf.mxu0
  %v7363 = vadd.f32 0.0, %v7362
  %7364 = vmatmul.f32.gmra.mxu0 %v7058
  %v7365 = vpop.f32.mrf.mxu0
  %v7366 = vadd.f32 0.0, %v7365
  %7367 = vmatmul.f32.gmra.mxu0 %v7061
  %v7368 = vpop.f32.mrf.mxu0
  %v7369 = vadd.f32 0.0, %v7368
  %7370 = vmatmul.f32.gmra.mxu0 %v7064
  %v7371 = vpop.f32.mrf.mxu0
  %v7372 = vadd.f32 0.0, %v7371
  %7373 = vmatmul.f32.gmra.mxu0 %v7067
  %v7374 = vpop.f32.mrf.mxu0
  %v7375 = vadd.f32 0.0, %v7374
  %7376 = vmatmul.f32.gmra.mxu0 %v7070
  %v7377 = vpop.f32.mrf.mxu0
  %v7378 = vadd.f32 0.0, %v7377
  %7379 = vmatmul.f32.gmra.mxu0 %v7073
  %v7380 = vpop.f32.mrf.mxu0
  %v7381 = vadd.f32 0.0, %v7380
  %7382 = vmatmul.f32.gmra.mxu0 %v7076
  %v7383 = vpop.f32.mrf.mxu0
  %v7384 = vadd.f32 0.0, %v7383
  %7385 = vmatmul.f32.gmra.mxu0 %v7079
  %v7386 = vpop.f32.mrf.mxu0
  %v7387 = vadd.f32 0.0, %v7386
  %7388 = vmatmul.f32.gmra.mxu0 %v7082
  %v7389 = vpop.f32.mrf.mxu0
  %v7390 = vadd.f32 0.0, %v7389
  %7391 = vmatmul.f32.gmra.mxu0 %v7085
  %v7392 = vpop.f32.mrf.mxu0
  %v7393 = vadd.f32 0.0, %v7392
  %7394 = vmatmul.f32.gmra.mxu0 %v7088
  %v7395 = vpop.f32.mrf.mxu0
  %v7396 = vadd.f32 0.0, %v7395
  %7397 = vmatmul.f32.gmra.mxu0 %v7091
  %v7398 = vpop.f32.mrf.mxu0
  %v7399 = vadd.f32 0.0, %v7398
  %7400 = vmatmul.f32.gmra.mxu0 %v7094
  %v7401 = vpop.f32.mrf.mxu0
  %v7402 = vadd.f32 0.0, %v7401
  %7403 = vmatmul.f32.gmra.mxu0 %v7097
  %v7404 = vpop.f32.mrf.mxu0
  %v7405 = vadd.f32 0.0, %v7404
  %7406 = vdwg.mxu0
  %vm7407 = vcmask 48128
  %v7408 = vsel %vm7407, %v61, 0
  %v7410 = vsel %vm7407, %v62, 0
  %v7412 = vsel %vm7407, %v63, 0
  %v7414 = vsel %vm7407, %v64, 0
  %v7416 = vsel %vm7407, %v65, 0
  %v7418 = vsel %vm7407, %v66, 0
  %v7420 = vsel %vm7407, %v67, 0
  %v7422 = vsel %vm7407, %v68, 0
  %v7424 = vsel %vm7407, %v69, 0
  %v7426 = vsel %vm7407, %v70, 0
  %v7428 = vsel %vm7407, %v71, 0
  %v7430 = vsel %vm7407, %v72, 0
  %v7432 = vsel %vm7407, %v73, 0
  %v7434 = vsel %vm7407, %v74, 0
  %v7436 = vsel %vm7407, %v75, 0
  %v7438 = vsel %vm7407, %v76, 0
  %v7440 = vsel %vm7407, %v77, 0
  %v7442 = vsel %vm7407, %v78, 0
  %v7444 = vsel %vm7407, %v79, 0
  %v7446 = vsel %vm7407, %v80, 0
  %v7448 = vsel %vm7407, %v81, 0
  %v7450 = vsel %vm7407, %v82, 0
  %v7452 = vsel %vm7407, %v83, 0
  %v7454 = vsel %vm7407, %v84, 0
  %v7456 = vsel %vm7407, %v85, 0
  %v7458 = vsel %vm7407, %v86, 0
  %v7460 = vsel %vm7407, %v87, 0
  %v7462 = vsel %vm7407, %v88, 0
  %v7464 = vsel %vm7407, %v89, 0
  %v7466 = vsel %vm7407, %v90, 0
  %v7468 = vsel %vm7407, %v91, 0
  %v7470 = vsel %vm7407, %v92, 0
  %v7472 = vsel %vm7407, %v93, 0
  %v7474 = vsel %vm7407, %v94, 0
  %v7476 = vsel %vm7407, %v95, 0
  %v7478 = vsel %vm7407, %v96, 0
  %v7480 = vsel %vm7407, %v97, 0
  %v7482 = vsel %vm7407, %v98, 0
  %v7484 = vsel %vm7407, %v99, 0
  %v7486 = vsel %vm7407, %v100, 0
  %v7488 = vsel %vm7407, %v101, 0
  %v7490 = vsel %vm7407, %v102, 0
  %v7492 = vsel %vm7407, %v103, 0
  %v7494 = vsel %vm7407, %v104, 0
  %v7496 = vsel %vm7407, %v105, 0
  %v7498 = vsel %vm7407, %v106, 0
  %v7500 = vsel %vm7407, %v107, 0
  %v7502 = vsel %vm7407, %v108, 0
  %v7504 = vsel %vm7407, %v109, 0
  %v7506 = vsel %vm7407, %v110, 0
  %v7508 = vsel %vm7407, %v111, 0
  %v7510 = vsel %vm7407, %v112, 0
  %v7512 = vsel %vm7407, %v113, 0
  %v7514 = vsel %vm7407, %v114, 0
  %v7516 = vsel %vm7407, %v115, 0
  %v7518 = vsel %vm7407, %v116, 0
  %v7520 = vsel %vm7407, %v117, 0
  %v7522 = vsel %vm7407, %v118, 0
  %v7524 = vsel %vm7407, %v119, 0
  %v7526 = vsel %vm7407, %v120, 0
  %v7528 = vsel %vm7407, %v121, 0
  %v7530 = vsel %vm7407, %v122, 0
  %v7532 = vsel %vm7407, %v123, 0
  %v7534 = vsel %vm7407, %v124, 0
  %v7536 = vsel %vm7407, %v125, 0
  %v7538 = vsel %vm7407, %v126, 0
  %v7540 = vsel %vm7407, %v127, 0
  %v7542 = vsel %vm7407, %v128, 0
  %v7544 = vsel %vm7407, %v129, 0
  %v7546 = vsel %vm7407, %v130, 0
  %v7548 = vsel %vm7407, %v131, 0
  %v7550 = vsel %vm7407, %v132, 0
  %v7552 = vsel %vm7407, %v133, 0
  %v7554 = vsel %vm7407, %v134, 0
  %v7556 = vsel %vm7407, %v135, 0
  %v7558 = vsel %vm7407, %v136, 0
  %v7560 = vsel %vm7407, %v137, 0
  %v7562 = vsel %vm7407, %v138, 0
  %v7564 = vsel %vm7407, %v139, 0
  %v7566 = vsel %vm7407, %v140, 0
  %v7568 = vsel %vm7407, %v141, 0
  %v7570 = vsel %vm7407, %v142, 0
  %v7572 = vsel %vm7407, %v143, 0
  %v7574 = vsel %vm7407, %v144, 0
  %v7576 = vsel %vm7407, %v145, 0
  %v7578 = vsel %vm7407, %v146, 0
  %v7580 = vsel %vm7407, %v147, 0
  %v7582 = vsel %vm7407, %v148, 0
  %v7584 = vsel %vm7407, %v149, 0
  %v7586 = vsel %vm7407, %v150, 0
  %v7588 = vsel %vm7407, %v151, 0
  %v7590 = vsel %vm7407, %v152, 0
  %v7592 = vsel %vm7407, %v153, 0
  %v7594 = vsel %vm7407, %v154, 0
  %v7596 = vsel %vm7407, %v155, 0
  %v7598 = vsel %vm7407, %v156, 0
  %vm7600 = vcmask 1045504
  %v7602 = vsel %vm7600, %v6809, 0
  %7604 = vmatpush.msra.mxu0 0.0
  %7605 = vmatpush.msra.mxu0 0.0
  %7606 = vmatpush.msra.mxu0 0.0
  %7607 = vmatpush.msra.mxu0 0.0
  %7608 = vmatpush.msra.mxu0 0.0
  %7609 = vmatpush.msra.mxu0 0.0
  %7610 = vmatpush.msra.mxu0 0.0
  %7611 = vmatpush.msra.mxu0 0.0
  %7612 = vmatpush.msra.mxu0 0.0
  %7613 = vmatpush.msra.mxu0 0.0
  %7614 = vmatpush.msra.mxu0 0.0
  %7615 = vmatpush.msra.mxu0 0.0
  %7616 = vmatpush.msra.mxu0 0.0
  %7617 = vmatpush.msra.mxu0 0.0
  %7618 = vmatpush.msra.mxu0 0.0
  %7619 = vmatpush.msra.mxu0 %v7602
  %7620 = vmatmul.f32.gmra.mxu0 %v7408
  %v7621 = vpop.f32.mrf.mxu0
  %v7622 = vadd.f32 %v7120, %v7621
  %7623 = vmatmul.f32.gmra.mxu0 %v7410
  %v7624 = vpop.f32.mrf.mxu0
  %v7625 = vadd.f32 %v7123, %v7624
  %7626 = vmatmul.f32.gmra.mxu0 %v7412
  %v7627 = vpop.f32.mrf.mxu0
  %v7628 = vadd.f32 %v7126, %v7627
  %7629 = vmatmul.f32.gmra.mxu0 %v7414
  %v7630 = vpop.f32.mrf.mxu0
  %v7631 = vadd.f32 %v7129, %v7630
  %7632 = vmatmul.f32.gmra.mxu0 %v7416
  %v7633 = vpop.f32.mrf.mxu0
  %v7634 = vadd.f32 %v7132, %v7633
  %7635 = vmatmul.f32.gmra.mxu0 %v7418
  %v7636 = vpop.f32.mrf.mxu0
  %v7637 = vadd.f32 %v7135, %v7636
  %7638 = vmatmul.f32.gmra.mxu0 %v7420
  %v7639 = vpop.f32.mrf.mxu0
  %v7640 = vadd.f32 %v7138, %v7639
  %7641 = vmatmul.f32.gmra.mxu0 %v7422
  %v7642 = vpop.f32.mrf.mxu0
  %v7643 = vadd.f32 %v7141, %v7642
  %7644 = vmatmul.f32.gmra.mxu0 %v7424
  %v7645 = vpop.f32.mrf.mxu0
  %v7646 = vadd.f32 %v7144, %v7645
  %7647 = vmatmul.f32.gmra.mxu0 %v7426
  %v7648 = vpop.f32.mrf.mxu0
  %v7649 = vadd.f32 %v7147, %v7648
  %7650 = vmatmul.f32.gmra.mxu0 %v7428
  %v7651 = vpop.f32.mrf.mxu0
  %v7652 = vadd.f32 %v7150, %v7651
  %7653 = vmatmul.f32.gmra.mxu0 %v7430
  %v7654 = vpop.f32.mrf.mxu0
  %v7655 = vadd.f32 %v7153, %v7654
  %7656 = vmatmul.f32.gmra.mxu0 %v7432
  %v7657 = vpop.f32.mrf.mxu0
  %v7658 = vadd.f32 %v7156, %v7657
  %7659 = vmatmul.f32.gmra.mxu0 %v7434
  %v7660 = vpop.f32.mrf.mxu0
  %v7661 = vadd.f32 %v7159, %v7660
  %7662 = vmatmul.f32.gmra.mxu0 %v7436
  %v7663 = vpop.f32.mrf.mxu0
  %v7664 = vadd.f32 %v7162, %v7663
  %7665 = vmatmul.f32.gmra.mxu0 %v7438
  %v7666 = vpop.f32.mrf.mxu0
  %v7667 = vadd.f32 %v7165, %v7666
  %7668 = vmatmul.f32.gmra.mxu0 %v7440
  %v7669 = vpop.f32.mrf.mxu0
  %v7670 = vadd.f32 %v7168, %v7669
  %7671 = vmatmul.f32.gmra.mxu0 %v7442
  %v7672 = vpop.f32.mrf.mxu0
  %v7673 = vadd.f32 %v7171, %v7672
  %7674 = vmatmul.f32.gmra.mxu0 %v7444
  %v7675 = vpop.f32.mrf.mxu0
  %v7676 = vadd.f32 %v7174, %v7675
  %7677 = vmatmul.f32.gmra.mxu0 %v7446
  %v7678 = vpop.f32.mrf.mxu0
  %v7679 = vadd.f32 %v7177, %v7678
  %7680 = vmatmul.f32.gmra.mxu0 %v7448
  %v7681 = vpop.f32.mrf.mxu0
  %v7682 = vadd.f32 %v7180, %v7681
  %7683 = vmatmul.f32.gmra.mxu0 %v7450
  %v7684 = vpop.f32.mrf.mxu0
  %v7685 = vadd.f32 %v7183, %v7684
  %7686 = vmatmul.f32.gmra.mxu0 %v7452
  %v7687 = vpop.f32.mrf.mxu0
  %v7688 = vadd.f32 %v7186, %v7687
  %7689 = vmatmul.f32.gmra.mxu0 %v7454
  %v7690 = vpop.f32.mrf.mxu0
  %v7691 = vadd.f32 %v7189, %v7690
  %7692 = vmatmul.f32.gmra.mxu0 %v7456
  %v7693 = vpop.f32.mrf.mxu0
  %v7694 = vadd.f32 %v7192, %v7693
  %7695 = vmatmul.f32.gmra.mxu0 %v7458
  %v7696 = vpop.f32.mrf.mxu0
  %v7697 = vadd.f32 %v7195, %v7696
  %7698 = vmatmul.f32.gmra.mxu0 %v7460
  %v7699 = vpop.f32.mrf.mxu0
  %v7700 = vadd.f32 %v7198, %v7699
  %7701 = vmatmul.f32.gmra.mxu0 %v7462
  %v7702 = vpop.f32.mrf.mxu0
  %v7703 = vadd.f32 %v7201, %v7702
  %7704 = vmatmul.f32.gmra.mxu0 %v7464
  %v7705 = vpop.f32.mrf.mxu0
  %v7706 = vadd.f32 %v7204, %v7705
  %7707 = vmatmul.f32.gmra.mxu0 %v7466
  %v7708 = vpop.f32.mrf.mxu0
  %v7709 = vadd.f32 %v7207, %v7708
  %7710 = vmatmul.f32.gmra.mxu0 %v7468
  %v7711 = vpop.f32.mrf.mxu0
  %v7712 = vadd.f32 %v7210, %v7711
  %7713 = vmatmul.f32.gmra.mxu0 %v7470
  %v7714 = vpop.f32.mrf.mxu0
  %v7715 = vadd.f32 %v7213, %v7714
  %7716 = vmatmul.f32.gmra.mxu0 %v7472
  %v7717 = vpop.f32.mrf.mxu0
  %v7718 = vadd.f32 %v7216, %v7717
  %7719 = vmatmul.f32.gmra.mxu0 %v7474
  %v7720 = vpop.f32.mrf.mxu0
  %v7721 = vadd.f32 %v7219, %v7720
  %7722 = vmatmul.f32.gmra.mxu0 %v7476
  %v7723 = vpop.f32.mrf.mxu0
  %v7724 = vadd.f32 %v7222, %v7723
  %7725 = vmatmul.f32.gmra.mxu0 %v7478
  %v7726 = vpop.f32.mrf.mxu0
  %v7727 = vadd.f32 %v7225, %v7726
  %7728 = vmatmul.f32.gmra.mxu0 %v7480
  %v7729 = vpop.f32.mrf.mxu0
  %v7730 = vadd.f32 %v7228, %v7729
  %7731 = vmatmul.f32.gmra.mxu0 %v7482
  %v7732 = vpop.f32.mrf.mxu0
  %v7733 = vadd.f32 %v7231, %v7732
  %7734 = vmatmul.f32.gmra.mxu0 %v7484
  %v7735 = vpop.f32.mrf.mxu0
  %v7736 = vadd.f32 %v7234, %v7735
  %7737 = vmatmul.f32.gmra.mxu0 %v7486
  %v7738 = vpop.f32.mrf.mxu0
  %v7739 = vadd.f32 %v7237, %v7738
  %7740 = vmatmul.f32.gmra.mxu0 %v7488
  %v7741 = vpop.f32.mrf.mxu0
  %v7742 = vadd.f32 %v7240, %v7741
  %7743 = vmatmul.f32.gmra.mxu0 %v7490
  %v7744 = vpop.f32.mrf.mxu0
  %v7745 = vadd.f32 %v7243, %v7744
  %7746 = vmatmul.f32.gmra.mxu0 %v7492
  %v7747 = vpop.f32.mrf.mxu0
  %v7748 = vadd.f32 %v7246, %v7747
  %7749 = vmatmul.f32.gmra.mxu0 %v7494
  %v7750 = vpop.f32.mrf.mxu0
  %v7751 = vadd.f32 %v7249, %v7750
  %7752 = vmatmul.f32.gmra.mxu0 %v7496
  %v7753 = vpop.f32.mrf.mxu0
  %v7754 = vadd.f32 %v7252, %v7753
  %7755 = vmatmul.f32.gmra.mxu0 %v7498
  %v7756 = vpop.f32.mrf.mxu0
  %v7757 = vadd.f32 %v7255, %v7756
  %7758 = vmatmul.f32.gmra.mxu0 %v7500
  %v7759 = vpop.f32.mrf.mxu0
  %v7760 = vadd.f32 %v7258, %v7759
  %7761 = vmatmul.f32.gmra.mxu0 %v7502
  %v7762 = vpop.f32.mrf.mxu0
  %v7763 = vadd.f32 %v7261, %v7762
  %7764 = vmatmul.f32.gmra.mxu0 %v7504
  %v7765 = vpop.f32.mrf.mxu0
  %v7766 = vadd.f32 %v7264, %v7765
  %7767 = vmatmul.f32.gmra.mxu0 %v7506
  %v7768 = vpop.f32.mrf.mxu0
  %v7769 = vadd.f32 %v7267, %v7768
  %7770 = vmatmul.f32.gmra.mxu0 %v7508
  %v7771 = vpop.f32.mrf.mxu0
  %v7772 = vadd.f32 %v7270, %v7771
  %7773 = vmatmul.f32.gmra.mxu0 %v7510
  %v7774 = vpop.f32.mrf.mxu0
  %v7775 = vadd.f32 %v7273, %v7774
  %7776 = vmatmul.f32.gmra.mxu0 %v7512
  %v7777 = vpop.f32.mrf.mxu0
  %v7778 = vadd.f32 %v7276, %v7777
  %7779 = vmatmul.f32.gmra.mxu0 %v7514
  %v7780 = vpop.f32.mrf.mxu0
  %v7781 = vadd.f32 %v7279, %v7780
  %7782 = vmatmul.f32.gmra.mxu0 %v7516
  %v7783 = vpop.f32.mrf.mxu0
  %v7784 = vadd.f32 %v7282, %v7783
  %7785 = vmatmul.f32.gmra.mxu0 %v7518
  %v7786 = vpop.f32.mrf.mxu0
  %v7787 = vadd.f32 %v7285, %v7786
  %7788 = vmatmul.f32.gmra.mxu0 %v7520
  %v7789 = vpop.f32.mrf.mxu0
  %v7790 = vadd.f32 %v7288, %v7789
  %7791 = vmatmul.f32.gmra.mxu0 %v7522
  %v7792 = vpop.f32.mrf.mxu0
  %v7793 = vadd.f32 %v7291, %v7792
  %7794 = vmatmul.f32.gmra.mxu0 %v7524
  %v7795 = vpop.f32.mrf.mxu0
  %v7796 = vadd.f32 %v7294, %v7795
  %7797 = vmatmul.f32.gmra.mxu0 %v7526
  %v7798 = vpop.f32.mrf.mxu0
  %v7799 = vadd.f32 %v7297, %v7798
  %7800 = vmatmul.f32.gmra.mxu0 %v7528
  %v7801 = vpop.f32.mrf.mxu0
  %v7802 = vadd.f32 %v7300, %v7801
  %7803 = vmatmul.f32.gmra.mxu0 %v7530
  %v7804 = vpop.f32.mrf.mxu0
  %v7805 = vadd.f32 %v7303, %v7804
  %7806 = vmatmul.f32.gmra.mxu0 %v7532
  %v7807 = vpop.f32.mrf.mxu0
  %v7808 = vadd.f32 %v7306, %v7807
  %7809 = vmatmul.f32.gmra.mxu0 %v7534
  %v7810 = vpop.f32.mrf.mxu0
  %v7811 = vadd.f32 %v7309, %v7810
  %7812 = vmatmul.f32.gmra.mxu0 %v7536
  %v7813 = vpop.f32.mrf.mxu0
  %v7814 = vadd.f32 %v7312, %v7813
  %7815 = vmatmul.f32.gmra.mxu0 %v7538
  %v7816 = vpop.f32.mrf.mxu0
  %v7817 = vadd.f32 %v7315, %v7816
  %7818 = vmatmul.f32.gmra.mxu0 %v7540
  %v7819 = vpop.f32.mrf.mxu0
  %v7820 = vadd.f32 %v7318, %v7819
  %7821 = vmatmul.f32.gmra.mxu0 %v7542
  %v7822 = vpop.f32.mrf.mxu0
  %v7823 = vadd.f32 %v7321, %v7822
  %7824 = vmatmul.f32.gmra.mxu0 %v7544
  %v7825 = vpop.f32.mrf.mxu0
  %v7826 = vadd.f32 %v7324, %v7825
  %7827 = vmatmul.f32.gmra.mxu0 %v7546
  %v7828 = vpop.f32.mrf.mxu0
  %v7829 = vadd.f32 %v7327, %v7828
  %7830 = vmatmul.f32.gmra.mxu0 %v7548
  %v7831 = vpop.f32.mrf.mxu0
  %v7832 = vadd.f32 %v7330, %v7831
  %7833 = vmatmul.f32.gmra.mxu0 %v7550
  %v7834 = vpop.f32.mrf.mxu0
  %v7835 = vadd.f32 %v7333, %v7834
  %7836 = vmatmul.f32.gmra.mxu0 %v7552
  %v7837 = vpop.f32.mrf.mxu0
  %v7838 = vadd.f32 %v7336, %v7837
  %7839 = vmatmul.f32.gmra.mxu0 %v7554
  %v7840 = vpop.f32.mrf.mxu0
  %v7841 = vadd.f32 %v7339, %v7840
  %7842 = vmatmul.f32.gmra.mxu0 %v7556
  %v7843 = vpop.f32.mrf.mxu0
  %v7844 = vadd.f32 %v7342, %v7843
  %7845 = vmatmul.f32.gmra.mxu0 %v7558
  %v7846 = vpop.f32.mrf.mxu0
  %v7847 = vadd.f32 %v7345, %v7846
  %7848 = vmatmul.f32.gmra.mxu0 %v7560
  %v7849 = vpop.f32.mrf.mxu0
  %v7850 = vadd.f32 %v7348, %v7849
  %7851 = vmatmul.f32.gmra.mxu0 %v7562
  %v7852 = vpop.f32.mrf.mxu0
  %v7853 = vadd.f32 %v7351, %v7852
  %7854 = vmatmul.f32.gmra.mxu0 %v7564
  %v7855 = vpop.f32.mrf.mxu0
  %v7856 = vadd.f32 %v7354, %v7855
  %7857 = vmatmul.f32.gmra.mxu0 %v7566
  %v7858 = vpop.f32.mrf.mxu0
  %v7859 = vadd.f32 %v7357, %v7858
  %7860 = vmatmul.f32.gmra.mxu0 %v7568
  %v7861 = vpop.f32.mrf.mxu0
  %v7862 = vadd.f32 %v7360, %v7861
  %7863 = vmatmul.f32.gmra.mxu0 %v7570
  %v7864 = vpop.f32.mrf.mxu0
  %v7865 = vadd.f32 %v7363, %v7864
  %7866 = vmatmul.f32.gmra.mxu0 %v7572
  %v7867 = vpop.f32.mrf.mxu0
  %v7868 = vadd.f32 %v7366, %v7867
  %7869 = vmatmul.f32.gmra.mxu0 %v7574
  %v7870 = vpop.f32.mrf.mxu0
  %v7871 = vadd.f32 %v7369, %v7870
  %7872 = vmatmul.f32.gmra.mxu0 %v7576
  %v7873 = vpop.f32.mrf.mxu0
  %v7874 = vadd.f32 %v7372, %v7873
  %7875 = vmatmul.f32.gmra.mxu0 %v7578
  %v7876 = vpop.f32.mrf.mxu0
  %v7877 = vadd.f32 %v7375, %v7876
  %7878 = vmatmul.f32.gmra.mxu0 %v7580
  %v7879 = vpop.f32.mrf.mxu0
  %v7880 = vadd.f32 %v7378, %v7879
  %7881 = vmatmul.f32.gmra.mxu0 %v7582
  %v7882 = vpop.f32.mrf.mxu0
  %v7883 = vadd.f32 %v7381, %v7882
  %7884 = vmatmul.f32.gmra.mxu0 %v7584
  %v7885 = vpop.f32.mrf.mxu0
  %v7886 = vadd.f32 %v7384, %v7885
  %7887 = vmatmul.f32.gmra.mxu0 %v7586
  %v7888 = vpop.f32.mrf.mxu0
  %v7889 = vadd.f32 %v7387, %v7888
  %7890 = vmatmul.f32.gmra.mxu0 %v7588
  %v7891 = vpop.f32.mrf.mxu0
  %v7892 = vadd.f32 %v7390, %v7891
  %7893 = vmatmul.f32.gmra.mxu0 %v7590
  %v7894 = vpop.f32.mrf.mxu0
  %v7895 = vadd.f32 %v7393, %v7894
  %7896 = vmatmul.f32.gmra.mxu0 %v7592
  %v7897 = vpop.f32.mrf.mxu0
  %v7898 = vadd.f32 %v7396, %v7897
  %7899 = vmatmul.f32.gmra.mxu0 %v7594
  %v7900 = vpop.f32.mrf.mxu0
  %v7901 = vadd.f32 %v7399, %v7900
  %7902 = vmatmul.f32.gmra.mxu0 %v7596
  %v7903 = vpop.f32.mrf.mxu0
  %v7904 = vadd.f32 %v7402, %v7903
  %7905 = vmatmul.f32.gmra.mxu0 %v7598
  %v7906 = vpop.f32.mrf.mxu0
  %v7907 = vadd.f32 %v7405, %v7906
  %7908 = vdwg.mxu0
  %v7909 = vld [vmem:[%s12] sm:$0xff]
  %v7910 = vld [vmem:[%s12 + $0x8] sm:$0xff]
  %v7911 = vld [vmem:[%s12 + $0x10] sm:$0xff]
  %v7912 = vld [vmem:[%s12 + $0x18] sm:$0xff]
  %7913 = vmatpush.msra.mxu0 0.0
  %7914 = vmatpush.msra.mxu0 0.0
  %7915 = vmatpush.msra.mxu0 0.0
  %7916 = vmatpush.msra.mxu0 0.0
  %7917 = vmatpush.msra.mxu0 0.0
  %7918 = vmatpush.msra.mxu0 0.0
  %7919 = vmatpush.msra.mxu0 0.0
  %7920 = vmatpush.msra.mxu0 0.0
  %7921 = vmatpush.msra.mxu0 0.0
  %7922 = vmatpush.msra.mxu0 0.0
  %7923 = vmatpush.msra.mxu0 0.0
  %7924 = vmatpush.msra.mxu0 0.0
  %7925 = vmatpush.msra.mxu0 %v7912
  %7926 = vmatpush.msra.mxu0 %v7911
  %7927 = vmatpush.msra.mxu0 %v7910
  %7928 = vmatpush.msra.mxu0 %v7909
  %7929 = vmatmul.f32.gmra.mxu0 %v3291
  %v7930 = vpop.f32.mrf.mxu0
  %v7931 = vadd.f32 0.0, %v7930
  %7932 = vmatmul.f32.gmra.mxu0 %v3294
  %v7933 = vpop.f32.mrf.mxu0
  %v7934 = vadd.f32 0.0, %v7933
  %7935 = vmatmul.f32.gmra.mxu0 %v3297
  %v7936 = vpop.f32.mrf.mxu0
  %v7937 = vadd.f32 0.0, %v7936
  %7938 = vmatmul.f32.gmra.mxu0 %v3300
  %v7939 = vpop.f32.mrf.mxu0
  %v7940 = vadd.f32 0.0, %v7939
  %7941 = vmatmul.f32.gmra.mxu0 %v3303
  %v7942 = vpop.f32.mrf.mxu0
  %v7943 = vadd.f32 0.0, %v7942
  %7944 = vmatmul.f32.gmra.mxu0 %v3306
  %v7945 = vpop.f32.mrf.mxu0
  %v7946 = vadd.f32 0.0, %v7945
  %7947 = vmatmul.f32.gmra.mxu0 %v3309
  %v7948 = vpop.f32.mrf.mxu0
  %v7949 = vadd.f32 0.0, %v7948
  %7950 = vmatmul.f32.gmra.mxu0 %v3312
  %v7951 = vpop.f32.mrf.mxu0
  %v7952 = vadd.f32 0.0, %v7951
  %7953 = vmatmul.f32.gmra.mxu0 %v3315
  %v7954 = vpop.f32.mrf.mxu0
  %v7955 = vadd.f32 0.0, %v7954
  %7956 = vmatmul.f32.gmra.mxu0 %v3318
  %v7957 = vpop.f32.mrf.mxu0
  %v7958 = vadd.f32 0.0, %v7957
  %7959 = vmatmul.f32.gmra.mxu0 %v3321
  %v7960 = vpop.f32.mrf.mxu0
  %v7961 = vadd.f32 0.0, %v7960
  %7962 = vmatmul.f32.gmra.mxu0 %v3324
  %v7963 = vpop.f32.mrf.mxu0
  %v7964 = vadd.f32 0.0, %v7963
  %7965 = vmatmul.f32.gmra.mxu0 %v3327
  %v7966 = vpop.f32.mrf.mxu0
  %v7967 = vadd.f32 0.0, %v7966
  %7968 = vmatmul.f32.gmra.mxu0 %v3330
  %v7969 = vpop.f32.mrf.mxu0
  %v7970 = vadd.f32 0.0, %v7969
  %7971 = vmatmul.f32.gmra.mxu0 %v3333
  %v7972 = vpop.f32.mrf.mxu0
  %v7973 = vadd.f32 0.0, %v7972
  %7974 = vmatmul.f32.gmra.mxu0 %v3336
  %v7975 = vpop.f32.mrf.mxu0
  %v7976 = vadd.f32 0.0, %v7975
  %7977 = vmatmul.f32.gmra.mxu0 %v3339
  %v7978 = vpop.f32.mrf.mxu0
  %v7979 = vadd.f32 0.0, %v7978
  %7980 = vmatmul.f32.gmra.mxu0 %v3342
  %v7981 = vpop.f32.mrf.mxu0
  %v7982 = vadd.f32 0.0, %v7981
  %7983 = vmatmul.f32.gmra.mxu0 %v3345
  %v7984 = vpop.f32.mrf.mxu0
  %v7985 = vadd.f32 0.0, %v7984
  %7986 = vmatmul.f32.gmra.mxu0 %v3348
  %v7987 = vpop.f32.mrf.mxu0
  %v7988 = vadd.f32 0.0, %v7987
  %7989 = vmatmul.f32.gmra.mxu0 %v3351
  %v7990 = vpop.f32.mrf.mxu0
  %v7991 = vadd.f32 0.0, %v7990
  %7992 = vmatmul.f32.gmra.mxu0 %v3354
  %v7993 = vpop.f32.mrf.mxu0
  %v7994 = vadd.f32 0.0, %v7993
  %7995 = vmatmul.f32.gmra.mxu0 %v3357
  %v7996 = vpop.f32.mrf.mxu0
  %v7997 = vadd.f32 0.0, %v7996
  %7998 = vmatmul.f32.gmra.mxu0 %v3360
  %v7999 = vpop.f32.mrf.mxu0
  %v8000 = vadd.f32 0.0, %v7999
  %8001 = vmatmul.f32.gmra.mxu0 %v3363
  %v8002 = vpop.f32.mrf.mxu0
  %v8003 = vadd.f32 0.0, %v8002
  %8004 = vmatmul.f32.gmra.mxu0 %v3366
  %v8005 = vpop.f32.mrf.mxu0
  %v8006 = vadd.f32 0.0, %v8005
  %8007 = vmatmul.f32.gmra.mxu0 %v3369
  %v8008 = vpop.f32.mrf.mxu0
  %v8009 = vadd.f32 0.0, %v8008
  %8010 = vmatmul.f32.gmra.mxu0 %v3372
  %v8011 = vpop.f32.mrf.mxu0
  %v8012 = vadd.f32 0.0, %v8011
  %8013 = vmatmul.f32.gmra.mxu0 %v3375
  %v8014 = vpop.f32.mrf.mxu0
  %v8015 = vadd.f32 0.0, %v8014
  %8016 = vmatmul.f32.gmra.mxu0 %v3378
  %v8017 = vpop.f32.mrf.mxu0
  %v8018 = vadd.f32 0.0, %v8017
  %8019 = vmatmul.f32.gmra.mxu0 %v3381
  %v8020 = vpop.f32.mrf.mxu0
  %v8021 = vadd.f32 0.0, %v8020
  %8022 = vmatmul.f32.gmra.mxu0 %v3384
  %v8023 = vpop.f32.mrf.mxu0
  %v8024 = vadd.f32 0.0, %v8023
  %8025 = vmatmul.f32.gmra.mxu0 %v3387
  %v8026 = vpop.f32.mrf.mxu0
  %v8027 = vadd.f32 0.0, %v8026
  %8028 = vmatmul.f32.gmra.mxu0 %v3390
  %v8029 = vpop.f32.mrf.mxu0
  %v8030 = vadd.f32 0.0, %v8029
  %8031 = vmatmul.f32.gmra.mxu0 %v3393
  %v8032 = vpop.f32.mrf.mxu0
  %v8033 = vadd.f32 0.0, %v8032
  %8034 = vmatmul.f32.gmra.mxu0 %v3396
  %v8035 = vpop.f32.mrf.mxu0
  %v8036 = vadd.f32 0.0, %v8035
  %8037 = vmatmul.f32.gmra.mxu0 %v3399
  %v8038 = vpop.f32.mrf.mxu0
  %v8039 = vadd.f32 0.0, %v8038
  %8040 = vmatmul.f32.gmra.mxu0 %v3402
  %v8041 = vpop.f32.mrf.mxu0
  %v8042 = vadd.f32 0.0, %v8041
  %8043 = vmatmul.f32.gmra.mxu0 %v3405
  %v8044 = vpop.f32.mrf.mxu0
  %v8045 = vadd.f32 0.0, %v8044
  %8046 = vmatmul.f32.gmra.mxu0 %v3408
  %v8047 = vpop.f32.mrf.mxu0
  %v8048 = vadd.f32 0.0, %v8047
  %8049 = vmatmul.f32.gmra.mxu0 %v3411
  %v8050 = vpop.f32.mrf.mxu0
  %v8051 = vadd.f32 0.0, %v8050
  %8052 = vmatmul.f32.gmra.mxu0 %v3414
  %v8053 = vpop.f32.mrf.mxu0
  %v8054 = vadd.f32 0.0, %v8053
  %8055 = vmatmul.f32.gmra.mxu0 %v3417
  %v8056 = vpop.f32.mrf.mxu0
  %v8057 = vadd.f32 0.0, %v8056
  %8058 = vmatmul.f32.gmra.mxu0 %v3420
  %v8059 = vpop.f32.mrf.mxu0
  %v8060 = vadd.f32 0.0, %v8059
  %8061 = vmatmul.f32.gmra.mxu0 %v3423
  %v8062 = vpop.f32.mrf.mxu0
  %v8063 = vadd.f32 0.0, %v8062
  %8064 = vmatmul.f32.gmra.mxu0 %v3426
  %v8065 = vpop.f32.mrf.mxu0
  %v8066 = vadd.f32 0.0, %v8065
  %8067 = vmatmul.f32.gmra.mxu0 %v3429
  %v8068 = vpop.f32.mrf.mxu0
  %v8069 = vadd.f32 0.0, %v8068
  %8070 = vmatmul.f32.gmra.mxu0 %v3432
  %v8071 = vpop.f32.mrf.mxu0
  %v8072 = vadd.f32 0.0, %v8071
  %8073 = vmatmul.f32.gmra.mxu0 %v3435
  %v8074 = vpop.f32.mrf.mxu0
  %v8075 = vadd.f32 0.0, %v8074
  %8076 = vmatmul.f32.gmra.mxu0 %v3438
  %v8077 = vpop.f32.mrf.mxu0
  %v8078 = vadd.f32 0.0, %v8077
  %8079 = vmatmul.f32.gmra.mxu0 %v3441
  %v8080 = vpop.f32.mrf.mxu0
  %v8081 = vadd.f32 0.0, %v8080
  %8082 = vmatmul.f32.gmra.mxu0 %v3444
  %v8083 = vpop.f32.mrf.mxu0
  %v8084 = vadd.f32 0.0, %v8083
  %8085 = vmatmul.f32.gmra.mxu0 %v3447
  %v8086 = vpop.f32.mrf.mxu0
  %v8087 = vadd.f32 0.0, %v8086
  %8088 = vmatmul.f32.gmra.mxu0 %v3450
  %v8089 = vpop.f32.mrf.mxu0
  %v8090 = vadd.f32 0.0, %v8089
  %8091 = vmatmul.f32.gmra.mxu0 %v3453
  %v8092 = vpop.f32.mrf.mxu0
  %v8093 = vadd.f32 0.0, %v8092
  %8094 = vmatmul.f32.gmra.mxu0 %v3456
  %v8095 = vpop.f32.mrf.mxu0
  %v8096 = vadd.f32 0.0, %v8095
  %8097 = vmatmul.f32.gmra.mxu0 %v3459
  %v8098 = vpop.f32.mrf.mxu0
  %v8099 = vadd.f32 0.0, %v8098
  %8100 = vmatmul.f32.gmra.mxu0 %v3462
  %v8101 = vpop.f32.mrf.mxu0
  %v8102 = vadd.f32 0.0, %v8101
  %8103 = vmatmul.f32.gmra.mxu0 %v3465
  %v8104 = vpop.f32.mrf.mxu0
  %v8105 = vadd.f32 0.0, %v8104
  %8106 = vmatmul.f32.gmra.mxu0 %v3468
  %v8107 = vpop.f32.mrf.mxu0
  %v8108 = vadd.f32 0.0, %v8107
  %8109 = vmatmul.f32.gmra.mxu0 %v3471
  %v8110 = vpop.f32.mrf.mxu0
  %v8111 = vadd.f32 0.0, %v8110
  %8112 = vmatmul.f32.gmra.mxu0 %v3474
  %v8113 = vpop.f32.mrf.mxu0
  %v8114 = vadd.f32 0.0, %v8113
  %8115 = vmatmul.f32.gmra.mxu0 %v3477
  %v8116 = vpop.f32.mrf.mxu0
  %v8117 = vadd.f32 0.0, %v8116
  %8118 = vmatmul.f32.gmra.mxu0 %v3480
  %v8119 = vpop.f32.mrf.mxu0
  %v8120 = vadd.f32 0.0, %v8119
  %8121 = vmatmul.f32.gmra.mxu0 %v3483
  %v8122 = vpop.f32.mrf.mxu0
  %v8123 = vadd.f32 0.0, %v8122
  %8124 = vmatmul.f32.gmra.mxu0 %v3486
  %v8125 = vpop.f32.mrf.mxu0
  %v8126 = vadd.f32 0.0, %v8125
  %8127 = vmatmul.f32.gmra.mxu0 %v3489
  %v8128 = vpop.f32.mrf.mxu0
  %v8129 = vadd.f32 0.0, %v8128
  %8130 = vmatmul.f32.gmra.mxu0 %v3492
  %v8131 = vpop.f32.mrf.mxu0
  %v8132 = vadd.f32 0.0, %v8131
  %8133 = vmatmul.f32.gmra.mxu0 %v3495
  %v8134 = vpop.f32.mrf.mxu0
  %v8135 = vadd.f32 0.0, %v8134
  %8136 = vmatmul.f32.gmra.mxu0 %v3498
  %v8137 = vpop.f32.mrf.mxu0
  %v8138 = vadd.f32 0.0, %v8137
  %8139 = vmatmul.f32.gmra.mxu0 %v3501
  %v8140 = vpop.f32.mrf.mxu0
  %v8141 = vadd.f32 0.0, %v8140
  %8142 = vmatmul.f32.gmra.mxu0 %v3504
  %v8143 = vpop.f32.mrf.mxu0
  %v8144 = vadd.f32 0.0, %v8143
  %8145 = vmatmul.f32.gmra.mxu0 %v3507
  %v8146 = vpop.f32.mrf.mxu0
  %v8147 = vadd.f32 0.0, %v8146
  %8148 = vmatmul.f32.gmra.mxu0 %v3510
  %v8149 = vpop.f32.mrf.mxu0
  %v8150 = vadd.f32 0.0, %v8149
  %8151 = vmatmul.f32.gmra.mxu0 %v3513
  %v8152 = vpop.f32.mrf.mxu0
  %v8153 = vadd.f32 0.0, %v8152
  %8154 = vmatmul.f32.gmra.mxu0 %v3516
  %v8155 = vpop.f32.mrf.mxu0
  %v8156 = vadd.f32 0.0, %v8155
  %8157 = vmatmul.f32.gmra.mxu0 %v3519
  %v8158 = vpop.f32.mrf.mxu0
  %v8159 = vadd.f32 0.0, %v8158
  %8160 = vmatmul.f32.gmra.mxu0 %v3522
  %v8161 = vpop.f32.mrf.mxu0
  %v8162 = vadd.f32 0.0, %v8161
  %8163 = vmatmul.f32.gmra.mxu0 %v3525
  %v8164 = vpop.f32.mrf.mxu0
  %v8165 = vadd.f32 0.0, %v8164
  %8166 = vmatmul.f32.gmra.mxu0 %v3528
  %v8167 = vpop.f32.mrf.mxu0
  %v8168 = vadd.f32 0.0, %v8167
  %8169 = vmatmul.f32.gmra.mxu0 %v3531
  %v8170 = vpop.f32.mrf.mxu0
  %v8171 = vadd.f32 0.0, %v8170
  %8172 = vmatmul.f32.gmra.mxu0 %v3534
  %v8173 = vpop.f32.mrf.mxu0
  %v8174 = vadd.f32 0.0, %v8173
  %8175 = vmatmul.f32.gmra.mxu0 %v3537
  %v8176 = vpop.f32.mrf.mxu0
  %v8177 = vadd.f32 0.0, %v8176
  %8178 = vmatmul.f32.gmra.mxu0 %v3540
  %v8179 = vpop.f32.mrf.mxu0
  %v8180 = vadd.f32 0.0, %v8179
  %8181 = vmatmul.f32.gmra.mxu0 %v3543
  %v8182 = vpop.f32.mrf.mxu0
  %v8183 = vadd.f32 0.0, %v8182
  %8184 = vmatmul.f32.gmra.mxu0 %v3546
  %v8185 = vpop.f32.mrf.mxu0
  %v8186 = vadd.f32 0.0, %v8185
  %8187 = vmatmul.f32.gmra.mxu0 %v3549
  %v8188 = vpop.f32.mrf.mxu0
  %v8189 = vadd.f32 0.0, %v8188
  %8190 = vmatmul.f32.gmra.mxu0 %v3552
  %v8191 = vpop.f32.mrf.mxu0
  %v8192 = vadd.f32 0.0, %v8191
  %8193 = vmatmul.f32.gmra.mxu0 %v3555
  %v8194 = vpop.f32.mrf.mxu0
  %v8195 = vadd.f32 0.0, %v8194
  %8196 = vmatmul.f32.gmra.mxu0 %v3558
  %v8197 = vpop.f32.mrf.mxu0
  %v8198 = vadd.f32 0.0, %v8197
  %8199 = vmatmul.f32.gmra.mxu0 %v3561
  %v8200 = vpop.f32.mrf.mxu0
  %v8201 = vadd.f32 0.0, %v8200
  %8202 = vmatmul.f32.gmra.mxu0 %v3564
  %v8203 = vpop.f32.mrf.mxu0
  %v8204 = vadd.f32 0.0, %v8203
  %8205 = vmatmul.f32.gmra.mxu0 %v3567
  %v8206 = vpop.f32.mrf.mxu0
  %v8207 = vadd.f32 0.0, %v8206
  %8208 = vmatmul.f32.gmra.mxu0 %v3570
  %v8209 = vpop.f32.mrf.mxu0
  %v8210 = vadd.f32 0.0, %v8209
  %8211 = vmatmul.f32.gmra.mxu0 %v3573
  %v8212 = vpop.f32.mrf.mxu0
  %v8213 = vadd.f32 0.0, %v8212
  %8214 = vmatmul.f32.gmra.mxu0 %v3576
  %v8215 = vpop.f32.mrf.mxu0
  %v8216 = vadd.f32 0.0, %v8215
  %8217 = vdwg.mxu0
  %v8218 = vadd.f32 %v7622, %v7931
  %v8219 = vadd.f32 %v7625, %v7934
  %v8220 = vadd.f32 %v7628, %v7937
  %v8221 = vadd.f32 %v7631, %v7940
  %v8222 = vadd.f32 %v7634, %v7943
  %v8223 = vadd.f32 %v7637, %v7946
  %v8224 = vadd.f32 %v7640, %v7949
  %v8225 = vadd.f32 %v7643, %v7952
  %v8226 = vadd.f32 %v7646, %v7955
  %v8227 = vadd.f32 %v7649, %v7958
  %v8228 = vadd.f32 %v7652, %v7961
  %v8229 = vadd.f32 %v7655, %v7964
  %v8230 = vadd.f32 %v7658, %v7967
  %v8231 = vadd.f32 %v7661, %v7970
  %v8232 = vadd.f32 %v7664, %v7973
  %v8233 = vadd.f32 %v7667, %v7976
  %v8234 = vadd.f32 %v7670, %v7979
  %v8235 = vadd.f32 %v7673, %v7982
  %v8236 = vadd.f32 %v7676, %v7985
  %v8237 = vadd.f32 %v7679, %v7988
  %v8238 = vadd.f32 %v7682, %v7991
  %v8239 = vadd.f32 %v7685, %v7994
  %v8240 = vadd.f32 %v7688, %v7997
  %v8241 = vadd.f32 %v7691, %v8000
  %v8242 = vadd.f32 %v7694, %v8003
  %v8243 = vadd.f32 %v7697, %v8006
  %v8244 = vadd.f32 %v7700, %v8009
  %v8245 = vadd.f32 %v7703, %v8012
  %v8246 = vadd.f32 %v7706, %v8015
  %v8247 = vadd.f32 %v7709, %v8018
  %v8248 = vadd.f32 %v7712, %v8021
  %v8249 = vadd.f32 %v7715, %v8024
  %v8250 = vadd.f32 %v7718, %v8027
  %v8251 = vadd.f32 %v7721, %v8030
  %v8252 = vadd.f32 %v7724, %v8033
  %v8253 = vadd.f32 %v7727, %v8036
  %v8254 = vadd.f32 %v7730, %v8039
  %v8255 = vadd.f32 %v7733, %v8042
  %v8256 = vadd.f32 %v7736, %v8045
  %v8257 = vadd.f32 %v7739, %v8048
  %v8258 = vadd.f32 %v7742, %v8051
  %v8259 = vadd.f32 %v7745, %v8054
  %v8260 = vadd.f32 %v7748, %v8057
  %v8261 = vadd.f32 %v7751, %v8060
  %v8262 = vadd.f32 %v7754, %v8063
  %v8263 = vadd.f32 %v7757, %v8066
  %v8264 = vadd.f32 %v7760, %v8069
  %v8265 = vadd.f32 %v7763, %v8072
  %v8266 = vadd.f32 %v7766, %v8075
  %v8267 = vadd.f32 %v7769, %v8078
  %v8268 = vadd.f32 %v7772, %v8081
  %v8269 = vadd.f32 %v7775, %v8084
  %v8270 = vadd.f32 %v7778, %v8087
  %v8271 = vadd.f32 %v7781, %v8090
  %v8272 = vadd.f32 %v7784, %v8093
  %v8273 = vadd.f32 %v7787, %v8096
  %v8274 = vadd.f32 %v7790, %v8099
  %v8275 = vadd.f32 %v7793, %v8102
  %v8276 = vadd.f32 %v7796, %v8105
  %v8277 = vadd.f32 %v7799, %v8108
  %v8278 = vadd.f32 %v7802, %v8111
  %v8279 = vadd.f32 %v7805, %v8114
  %v8280 = vadd.f32 %v7808, %v8117
  %v8281 = vadd.f32 %v7811, %v8120
  %v8282 = vadd.f32 %v7814, %v8123
  %v8283 = vadd.f32 %v7817, %v8126
  %v8284 = vadd.f32 %v7820, %v8129
  %v8285 = vadd.f32 %v7823, %v8132
  %v8286 = vadd.f32 %v7826, %v8135
  %v8287 = vadd.f32 %v7829, %v8138
  %v8288 = vadd.f32 %v7832, %v8141
  %v8289 = vadd.f32 %v7835, %v8144
  %v8290 = vadd.f32 %v7838, %v8147
  %v8291 = vadd.f32 %v7841, %v8150
  %v8292 = vadd.f32 %v7844, %v8153
  %v8293 = vadd.f32 %v7847, %v8156
  %v8294 = vadd.f32 %v7850, %v8159
  %v8295 = vadd.f32 %v7853, %v8162
  %v8296 = vadd.f32 %v7856, %v8165
  %v8297 = vadd.f32 %v7859, %v8168
  %v8298 = vadd.f32 %v7862, %v8171
  %v8299 = vadd.f32 %v7865, %v8174
  %v8300 = vadd.f32 %v7868, %v8177
  %v8301 = vadd.f32 %v7871, %v8180
  %v8302 = vadd.f32 %v7874, %v8183
  %v8303 = vadd.f32 %v7877, %v8186
  %v8304 = vadd.f32 %v7880, %v8189
  %v8305 = vadd.f32 %v7883, %v8192
  %v8306 = vadd.f32 %v7886, %v8195
  %v8307 = vadd.f32 %v7889, %v8198
  %v8308 = vadd.f32 %v7892, %v8201
  %v8309 = vadd.f32 %v7895, %v8204
  %v8310 = vadd.f32 %v7898, %v8207
  %v8311 = vadd.f32 %v7901, %v8210
  %v8312 = vadd.f32 %v7904, %v8213
  %v8313 = vadd.f32 %v7907, %v8216
  %v8314 = vld [vmem:[%s13] sm:$0x1]
  %v8316 = vperm.slane %v8314, 0
  %v8318 = vadd.f32 %v8218, %v8316
  %v8319 = vadd.f32 %v8219, %v8316
  %v8320 = vadd.f32 %v8220, %v8316
  %v8321 = vadd.f32 %v8221, %v8316
  %v8322 = vadd.f32 %v8222, %v8316
  %v8323 = vadd.f32 %v8223, %v8316
  %v8324 = vadd.f32 %v8224, %v8316
  %v8325 = vadd.f32 %v8225, %v8316
  %v8326 = vadd.f32 %v8226, %v8316
  %v8327 = vadd.f32 %v8227, %v8316
  %v8328 = vadd.f32 %v8228, %v8316
  %v8329 = vadd.f32 %v8229, %v8316
  %v8330 = vadd.f32 %v8230, %v8316
  %v8331 = vadd.f32 %v8231, %v8316
  %v8332 = vadd.f32 %v8232, %v8316
  %v8333 = vadd.f32 %v8233, %v8316
  %v8334 = vadd.f32 %v8234, %v8316
  %v8335 = vadd.f32 %v8235, %v8316
  %v8336 = vadd.f32 %v8236, %v8316
  %v8337 = vadd.f32 %v8237, %v8316
  %v8338 = vadd.f32 %v8238, %v8316
  %v8339 = vadd.f32 %v8239, %v8316
  %v8340 = vadd.f32 %v8240, %v8316
  %v8341 = vadd.f32 %v8241, %v8316
  %v8342 = vadd.f32 %v8242, %v8316
  %v8343 = vadd.f32 %v8243, %v8316
  %v8344 = vadd.f32 %v8244, %v8316
  %v8345 = vadd.f32 %v8245, %v8316
  %v8346 = vadd.f32 %v8246, %v8316
  %v8347 = vadd.f32 %v8247, %v8316
  %v8348 = vadd.f32 %v8248, %v8316
  %v8349 = vadd.f32 %v8249, %v8316
  %v8350 = vadd.f32 %v8250, %v8316
  %v8351 = vadd.f32 %v8251, %v8316
  %v8352 = vadd.f32 %v8252, %v8316
  %v8353 = vadd.f32 %v8253, %v8316
  %v8354 = vadd.f32 %v8254, %v8316
  %v8355 = vadd.f32 %v8255, %v8316
  %v8356 = vadd.f32 %v8256, %v8316
  %v8357 = vadd.f32 %v8257, %v8316
  %v8358 = vadd.f32 %v8258, %v8316
  %v8359 = vadd.f32 %v8259, %v8316
  %v8360 = vadd.f32 %v8260, %v8316
  %v8361 = vadd.f32 %v8261, %v8316
  %v8362 = vadd.f32 %v8262, %v8316
  %v8363 = vadd.f32 %v8263, %v8316
  %v8364 = vadd.f32 %v8264, %v8316
  %v8365 = vadd.f32 %v8265, %v8316
  %v8366 = vadd.f32 %v8266, %v8316
  %v8367 = vadd.f32 %v8267, %v8316
  %v8368 = vadd.f32 %v8268, %v8316
  %v8369 = vadd.f32 %v8269, %v8316
  %v8370 = vadd.f32 %v8270, %v8316
  %v8371 = vadd.f32 %v8271, %v8316
  %v8372 = vadd.f32 %v8272, %v8316
  %v8373 = vadd.f32 %v8273, %v8316
  %v8374 = vadd.f32 %v8274, %v8316
  %v8375 = vadd.f32 %v8275, %v8316
  %v8376 = vadd.f32 %v8276, %v8316
  %v8377 = vadd.f32 %v8277, %v8316
  %v8378 = vadd.f32 %v8278, %v8316
  %v8379 = vadd.f32 %v8279, %v8316
  %v8380 = vadd.f32 %v8280, %v8316
  %v8381 = vadd.f32 %v8281, %v8316
  %v8382 = vadd.f32 %v8282, %v8316
  %v8383 = vadd.f32 %v8283, %v8316
  %v8384 = vadd.f32 %v8284, %v8316
  %v8385 = vadd.f32 %v8285, %v8316
  %v8386 = vadd.f32 %v8286, %v8316
  %v8387 = vadd.f32 %v8287, %v8316
  %v8388 = vadd.f32 %v8288, %v8316
  %v8389 = vadd.f32 %v8289, %v8316
  %v8390 = vadd.f32 %v8290, %v8316
  %v8391 = vadd.f32 %v8291, %v8316
  %v8392 = vadd.f32 %v8292, %v8316
  %v8393 = vadd.f32 %v8293, %v8316
  %v8394 = vadd.f32 %v8294, %v8316
  %v8395 = vadd.f32 %v8295, %v8316
  %v8396 = vadd.f32 %v8296, %v8316
  %v8397 = vadd.f32 %v8297, %v8316
  %v8398 = vadd.f32 %v8298, %v8316
  %v8399 = vadd.f32 %v8299, %v8316
  %v8400 = vadd.f32 %v8300, %v8316
  %v8401 = vadd.f32 %v8301, %v8316
  %v8402 = vadd.f32 %v8302, %v8316
  %v8403 = vadd.f32 %v8303, %v8316
  %v8404 = vadd.f32 %v8304, %v8316
  %v8405 = vadd.f32 %v8305, %v8316
  %v8406 = vadd.f32 %v8306, %v8316
  %v8407 = vadd.f32 %v8307, %v8316
  %v8408 = vadd.f32 %v8308, %v8316
  %v8409 = vadd.f32 %v8309, %v8316
  %v8410 = vadd.f32 %v8310, %v8316
  %v8411 = vadd.f32 %v8311, %v8316
  %v8412 = vadd.f32 %v8312, %v8316
  %v8413 = vadd.f32 %v8313, %v8316
  %v8414 = vmax.f32 %v8318, 0.0
  %v8415 = vmax.f32 %v8319, 0.0
  %v8416 = vmax.f32 %v8320, 0.0
  %v8417 = vmax.f32 %v8321, 0.0
  %v8418 = vmax.f32 %v8322, 0.0
  %v8419 = vmax.f32 %v8323, 0.0
  %v8420 = vmax.f32 %v8324, 0.0
  %v8421 = vmax.f32 %v8325, 0.0
  %v8422 = vmax.f32 %v8326, 0.0
  %v8423 = vmax.f32 %v8327, 0.0
  %v8424 = vmax.f32 %v8328, 0.0
  %v8425 = vmax.f32 %v8329, 0.0
  %v8426 = vmax.f32 %v8330, 0.0
  %v8427 = vmax.f32 %v8331, 0.0
  %v8428 = vmax.f32 %v8332, 0.0
  %v8429 = vmax.f32 %v8333, 0.0
  %v8430 = vmax.f32 %v8334, 0.0
  %v8431 = vmax.f32 %v8335, 0.0
  %v8432 = vmax.f32 %v8336, 0.0
  %v8433 = vmax.f32 %v8337, 0.0
  %v8434 = vmax.f32 %v8338, 0.0
  %v8435 = vmax.f32 %v8339, 0.0
  %v8436 = vmax.f32 %v8340, 0.0
  %v8437 = vmax.f32 %v8341, 0.0
  %v8438 = vmax.f32 %v8342, 0.0
  %v8439 = vmax.f32 %v8343, 0.0
  %v8440 = vmax.f32 %v8344, 0.0
  %v8441 = vmax.f32 %v8345, 0.0
  %v8442 = vmax.f32 %v8346, 0.0
  %v8443 = vmax.f32 %v8347, 0.0
  %v8444 = vmax.f32 %v8348, 0.0
  %v8445 = vmax.f32 %v8349, 0.0
  %v8446 = vmax.f32 %v8350, 0.0
  %v8447 = vmax.f32 %v8351, 0.0
  %v8448 = vmax.f32 %v8352, 0.0
  %v8449 = vmax.f32 %v8353, 0.0
  %v8450 = vmax.f32 %v8354, 0.0
  %v8451 = vmax.f32 %v8355, 0.0
  %v8452 = vmax.f32 %v8356, 0.0
  %v8453 = vmax.f32 %v8357, 0.0
  %v8454 = vmax.f32 %v8358, 0.0
  %v8455 = vmax.f32 %v8359, 0.0
  %v8456 = vmax.f32 %v8360, 0.0
  %v8457 = vmax.f32 %v8361, 0.0
  %v8458 = vmax.f32 %v8362, 0.0
  %v8459 = vmax.f32 %v8363, 0.0
  %v8460 = vmax.f32 %v8364, 0.0
  %v8461 = vmax.f32 %v8365, 0.0
  %v8462 = vmax.f32 %v8366, 0.0
  %v8463 = vmax.f32 %v8367, 0.0
  %v8464 = vmax.f32 %v8368, 0.0
  %v8465 = vmax.f32 %v8369, 0.0
  %v8466 = vmax.f32 %v8370, 0.0
  %v8467 = vmax.f32 %v8371, 0.0
  %v8468 = vmax.f32 %v8372, 0.0
  %v8469 = vmax.f32 %v8373, 0.0
  %v8470 = vmax.f32 %v8374, 0.0
  %v8471 = vmax.f32 %v8375, 0.0
  %v8472 = vmax.f32 %v8376, 0.0
  %v8473 = vmax.f32 %v8377, 0.0
  %v8474 = vmax.f32 %v8378, 0.0
  %v8475 = vmax.f32 %v8379, 0.0
  %v8476 = vmax.f32 %v8380, 0.0
  %v8477 = vmax.f32 %v8381, 0.0
  %v8478 = vmax.f32 %v8382, 0.0
  %v8479 = vmax.f32 %v8383, 0.0
  %v8480 = vmax.f32 %v8384, 0.0
  %v8481 = vmax.f32 %v8385, 0.0
  %v8482 = vmax.f32 %v8386, 0.0
  %v8483 = vmax.f32 %v8387, 0.0
  %v8484 = vmax.f32 %v8388, 0.0
  %v8485 = vmax.f32 %v8389, 0.0
  %v8486 = vmax.f32 %v8390, 0.0
  %v8487 = vmax.f32 %v8391, 0.0
  %v8488 = vmax.f32 %v8392, 0.0
  %v8489 = vmax.f32 %v8393, 0.0
  %v8490 = vmax.f32 %v8394, 0.0
  %v8491 = vmax.f32 %v8395, 0.0
  %v8492 = vmax.f32 %v8396, 0.0
  %v8493 = vmax.f32 %v8397, 0.0
  %v8494 = vmax.f32 %v8398, 0.0
  %v8495 = vmax.f32 %v8399, 0.0
  %v8496 = vmax.f32 %v8400, 0.0
  %v8497 = vmax.f32 %v8401, 0.0
  %v8498 = vmax.f32 %v8402, 0.0
  %v8499 = vmax.f32 %v8403, 0.0
  %v8500 = vmax.f32 %v8404, 0.0
  %v8501 = vmax.f32 %v8405, 0.0
  %v8502 = vmax.f32 %v8406, 0.0
  %v8503 = vmax.f32 %v8407, 0.0
  %v8504 = vmax.f32 %v8408, 0.0
  %v8505 = vmax.f32 %v8409, 0.0
  %v8506 = vmax.f32 %v8410, 0.0
  %v8507 = vmax.f32 %v8411, 0.0
  %v8508 = vmax.f32 %v8412, 0.0
  %v8509 = vmax.f32 %v8413, 0.0
  %v8510 = vld [vmem:[%s14] sm:$0xff]
  %v8511 = vld [vmem:[%s14 + $0x8] sm:$0xff]
  %v8512 = vld [vmem:[%s14 + $0x10] sm:$0xff]
  %v8513 = vld [vmem:[%s14 + $0x18] sm:$0xff]
  %v8514 = vld [vmem:[%s15] sm:$0x1]
  %v8516 = vperm.slane %v8514, 0
  %v8519 = vsel %vm1728, %v8414, 0
  %v8522 = vsel %vm1728, %v8415, 0
  %v8525 = vsel %vm1728, %v8416, 0
  %v8528 = vsel %vm1728, %v8417, 0
  %v8531 = vsel %vm1728, %v8418, 0
  %v8534 = vsel %vm1728, %v8419, 0
  %v8537 = vsel %vm1728, %v8420, 0
  %v8540 = vsel %vm1728, %v8421, 0
  %v8543 = vsel %vm1728, %v8422, 0
  %v8546 = vsel %vm1728, %v8423, 0
  %v8549 = vsel %vm1728, %v8424, 0
  %v8552 = vsel %vm1728, %v8425, 0
  %v8555 = vsel %vm1728, %v8426, 0
  %v8558 = vsel %vm1728, %v8427, 0
  %v8561 = vsel %vm1728, %v8428, 0
  %v8564 = vsel %vm1728, %v8429, 0
  %v8567 = vsel %vm1728, %v8430, 0
  %v8570 = vsel %vm1728, %v8431, 0
  %v8573 = vsel %vm1728, %v8432, 0
  %v8576 = vsel %vm1728, %v8433, 0
  %v8579 = vsel %vm1728, %v8434, 0
  %v8582 = vsel %vm1728, %v8435, 0
  %v8585 = vsel %vm1728, %v8436, 0
  %v8588 = vsel %vm1728, %v8437, 0
  %v8591 = vsel %vm1728, %v8438, 0
  %v8594 = vsel %vm1728, %v8439, 0
  %v8597 = vsel %vm1728, %v8440, 0
  %v8600 = vsel %vm1728, %v8441, 0
  %v8603 = vsel %vm1728, %v8442, 0
  %v8606 = vsel %vm1728, %v8443, 0
  %v8609 = vsel %vm1728, %v8444, 0
  %v8612 = vsel %vm1728, %v8445, 0
  %v8615 = vsel %vm1728, %v8446, 0
  %v8618 = vsel %vm1728, %v8447, 0
  %v8621 = vsel %vm1728, %v8448, 0
  %v8624 = vsel %vm1728, %v8449, 0
  %v8627 = vsel %vm1728, %v8450, 0
  %v8630 = vsel %vm1728, %v8451, 0
  %v8633 = vsel %vm1728, %v8452, 0
  %v8636 = vsel %vm1728, %v8453, 0
  %v8639 = vsel %vm1728, %v8454, 0
  %v8642 = vsel %vm1728, %v8455, 0
  %v8645 = vsel %vm1728, %v8456, 0
  %v8648 = vsel %vm1728, %v8457, 0
  %v8651 = vsel %vm1728, %v8458, 0
  %v8654 = vsel %vm1728, %v8459, 0
  %v8657 = vsel %vm1728, %v8460, 0
  %v8660 = vsel %vm1728, %v8461, 0
  %v8663 = vsel %vm1728, %v8462, 0
  %v8666 = vsel %vm1728, %v8463, 0
  %v8669 = vsel %vm1728, %v8464, 0
  %v8672 = vsel %vm1728, %v8465, 0
  %v8675 = vsel %vm1728, %v8466, 0
  %v8678 = vsel %vm1728, %v8467, 0
  %v8681 = vsel %vm1728, %v8468, 0
  %v8684 = vsel %vm1728, %v8469, 0
  %v8687 = vsel %vm1728, %v8470, 0
  %v8690 = vsel %vm1728, %v8471, 0
  %v8693 = vsel %vm1728, %v8472, 0
  %v8696 = vsel %vm1728, %v8473, 0
  %v8699 = vsel %vm1728, %v8474, 0
  %v8702 = vsel %vm1728, %v8475, 0
  %v8705 = vsel %vm1728, %v8476, 0
  %v8708 = vsel %vm1728, %v8477, 0
  %v8711 = vsel %vm1728, %v8478, 0
  %v8714 = vsel %vm1728, %v8479, 0
  %v8717 = vsel %vm1728, %v8480, 0
  %v8720 = vsel %vm1728, %v8481, 0
  %v8723 = vsel %vm1728, %v8482, 0
  %v8726 = vsel %vm1728, %v8483, 0
  %v8729 = vsel %vm1728, %v8484, 0
  %v8732 = vsel %vm1728, %v8485, 0
  %v8735 = vsel %vm1728, %v8486, 0
  %v8738 = vsel %vm1728, %v8487, 0
  %v8741 = vsel %vm1728, %v8488, 0
  %v8744 = vsel %vm1728, %v8489, 0
  %v8747 = vsel %vm1728, %v8490, 0
  %v8750 = vsel %vm1728, %v8491, 0
  %v8753 = vsel %vm1728, %v8492, 0
  %v8756 = vsel %vm1728, %v8493, 0
  %v8759 = vsel %vm1728, %v8494, 0
  %v8762 = vsel %vm1728, %v8495, 0
  %v8765 = vsel %vm1728, %v8496, 0
  %v8768 = vsel %vm1728, %v8497, 0
  %v8771 = vsel %vm1728, %v8498, 0
  %v8774 = vsel %vm1728, %v8499, 0
  %v8777 = vsel %vm1728, %v8500, 0
  %v8780 = vsel %vm1728, %v8501, 0
  %v8783 = vsel %vm1728, %v8502, 0
  %v8786 = vsel %vm1728, %v8503, 0
  %v8789 = vsel %vm1728, %v8504, 0
  %v8792 = vsel %vm1728, %v8505, 0
  %v8795 = vsel %vm1728, %v8506, 0
  %v8798 = vsel %vm1728, %v8507, 0
  %v8801 = vsel %vm1728, %v8508, 0
  %v8804 = vsel %vm1728, %v8509, 0
  %8806 = vmatpush.msra.mxu0 0.0
  %8807 = vmatpush.msra.mxu0 0.0
  %8808 = vmatpush.msra.mxu0 0.0
  %8809 = vmatpush.msra.mxu0 0.0
  %8810 = vmatpush.msra.mxu0 0.0
  %8811 = vmatpush.msra.mxu0 0.0
  %8812 = vmatpush.msra.mxu0 0.0
  %8813 = vmatpush.msra.mxu0 0.0
  %8814 = vmatpush.msra.mxu0 0.0
  %8815 = vmatpush.msra.mxu0 0.0
  %8816 = vmatpush.msra.mxu0 0.0
  %8817 = vmatpush.msra.mxu0 0.0
  %8818 = vmatpush.msra.mxu0 %v8513
  %8819 = vmatpush.msra.mxu0 %v8512
  %8820 = vmatpush.msra.mxu0 %v8511
  %8821 = vmatpush.msra.mxu0 %v8510
  %8822 = vmatmul.f32.gmra.mxu0 %v8519
  %v8823 = vpop.f32.mrf.mxu0
  %v8824 = vadd.f32 %v8516, %v8823
  %8825 = vmatmul.f32.gmra.mxu0 %v8522
  %v8826 = vpop.f32.mrf.mxu0
  %v8827 = vadd.f32 %v8516, %v8826
  %8828 = vmatmul.f32.gmra.mxu0 %v8525
  %v8829 = vpop.f32.mrf.mxu0
  %v8830 = vadd.f32 %v8516, %v8829
  %8831 = vmatmul.f32.gmra.mxu0 %v8528
  %v8832 = vpop.f32.mrf.mxu0
  %v8833 = vadd.f32 %v8516, %v8832
  %8834 = vmatmul.f32.gmra.mxu0 %v8531
  %v8835 = vpop.f32.mrf.mxu0
  %v8836 = vadd.f32 %v8516, %v8835
  %8837 = vmatmul.f32.gmra.mxu0 %v8534
  %v8838 = vpop.f32.mrf.mxu0
  %v8839 = vadd.f32 %v8516, %v8838
  %8840 = vmatmul.f32.gmra.mxu0 %v8537
  %v8841 = vpop.f32.mrf.mxu0
  %v8842 = vadd.f32 %v8516, %v8841
  %8843 = vmatmul.f32.gmra.mxu0 %v8540
  %v8844 = vpop.f32.mrf.mxu0
  %v8845 = vadd.f32 %v8516, %v8844
  %8846 = vmatmul.f32.gmra.mxu0 %v8543
  %v8847 = vpop.f32.mrf.mxu0
  %v8848 = vadd.f32 %v8516, %v8847
  %8849 = vmatmul.f32.gmra.mxu0 %v8546
  %v8850 = vpop.f32.mrf.mxu0
  %v8851 = vadd.f32 %v8516, %v8850
  %8852 = vmatmul.f32.gmra.mxu0 %v8549
  %v8853 = vpop.f32.mrf.mxu0
  %v8854 = vadd.f32 %v8516, %v8853
  %8855 = vmatmul.f32.gmra.mxu0 %v8552
  %v8856 = vpop.f32.mrf.mxu0
  %v8857 = vadd.f32 %v8516, %v8856
  %8858 = vmatmul.f32.gmra.mxu0 %v8555
  %v8859 = vpop.f32.mrf.mxu0
  %v8860 = vadd.f32 %v8516, %v8859
  %8861 = vmatmul.f32.gmra.mxu0 %v8558
  %v8862 = vpop.f32.mrf.mxu0
  %v8863 = vadd.f32 %v8516, %v8862
  %8864 = vmatmul.f32.gmra.mxu0 %v8561
  %v8865 = vpop.f32.mrf.mxu0
  %v8866 = vadd.f32 %v8516, %v8865
  %8867 = vmatmul.f32.gmra.mxu0 %v8564
  %v8868 = vpop.f32.mrf.mxu0
  %v8869 = vadd.f32 %v8516, %v8868
  %8870 = vmatmul.f32.gmra.mxu0 %v8567
  %v8871 = vpop.f32.mrf.mxu0
  %v8872 = vadd.f32 %v8516, %v8871
  %8873 = vmatmul.f32.gmra.mxu0 %v8570
  %v8874 = vpop.f32.mrf.mxu0
  %v8875 = vadd.f32 %v8516, %v8874
  %8876 = vmatmul.f32.gmra.mxu0 %v8573
  %v8877 = vpop.f32.mrf.mxu0
  %v8878 = vadd.f32 %v8516, %v8877
  %8879 = vmatmul.f32.gmra.mxu0 %v8576
  %v8880 = vpop.f32.mrf.mxu0
  %v8881 = vadd.f32 %v8516, %v8880
  %8882 = vmatmul.f32.gmra.mxu0 %v8579
  %v8883 = vpop.f32.mrf.mxu0
  %v8884 = vadd.f32 %v8516, %v8883
  %8885 = vmatmul.f32.gmra.mxu0 %v8582
  %v8886 = vpop.f32.mrf.mxu0
  %v8887 = vadd.f32 %v8516, %v8886
  %8888 = vmatmul.f32.gmra.mxu0 %v8585
  %v8889 = vpop.f32.mrf.mxu0
  %v8890 = vadd.f32 %v8516, %v8889
  %8891 = vmatmul.f32.gmra.mxu0 %v8588
  %v8892 = vpop.f32.mrf.mxu0
  %v8893 = vadd.f32 %v8516, %v8892
  %8894 = vmatmul.f32.gmra.mxu0 %v8591
  %v8895 = vpop.f32.mrf.mxu0
  %v8896 = vadd.f32 %v8516, %v8895
  %8897 = vmatmul.f32.gmra.mxu0 %v8594
  %v8898 = vpop.f32.mrf.mxu0
  %v8899 = vadd.f32 %v8516, %v8898
  %8900 = vmatmul.f32.gmra.mxu0 %v8597
  %v8901 = vpop.f32.mrf.mxu0
  %v8902 = vadd.f32 %v8516, %v8901
  %8903 = vmatmul.f32.gmra.mxu0 %v8600
  %v8904 = vpop.f32.mrf.mxu0
  %v8905 = vadd.f32 %v8516, %v8904
  %8906 = vmatmul.f32.gmra.mxu0 %v8603
  %v8907 = vpop.f32.mrf.mxu0
  %v8908 = vadd.f32 %v8516, %v8907
  %8909 = vmatmul.f32.gmra.mxu0 %v8606
  %v8910 = vpop.f32.mrf.mxu0
  %v8911 = vadd.f32 %v8516, %v8910
  %8912 = vmatmul.f32.gmra.mxu0 %v8609
  %v8913 = vpop.f32.mrf.mxu0
  %v8914 = vadd.f32 %v8516, %v8913
  %8915 = vmatmul.f32.gmra.mxu0 %v8612
  %v8916 = vpop.f32.mrf.mxu0
  %v8917 = vadd.f32 %v8516, %v8916
  %8918 = vmatmul.f32.gmra.mxu0 %v8615
  %v8919 = vpop.f32.mrf.mxu0
  %v8920 = vadd.f32 %v8516, %v8919
  %8921 = vmatmul.f32.gmra.mxu0 %v8618
  %v8922 = vpop.f32.mrf.mxu0
  %v8923 = vadd.f32 %v8516, %v8922
  %8924 = vmatmul.f32.gmra.mxu0 %v8621
  %v8925 = vpop.f32.mrf.mxu0
  %v8926 = vadd.f32 %v8516, %v8925
  %8927 = vmatmul.f32.gmra.mxu0 %v8624
  %v8928 = vpop.f32.mrf.mxu0
  %v8929 = vadd.f32 %v8516, %v8928
  %8930 = vmatmul.f32.gmra.mxu0 %v8627
  %v8931 = vpop.f32.mrf.mxu0
  %v8932 = vadd.f32 %v8516, %v8931
  %8933 = vmatmul.f32.gmra.mxu0 %v8630
  %v8934 = vpop.f32.mrf.mxu0
  %v8935 = vadd.f32 %v8516, %v8934
  %8936 = vmatmul.f32.gmra.mxu0 %v8633
  %v8937 = vpop.f32.mrf.mxu0
  %v8938 = vadd.f32 %v8516, %v8937
  %8939 = vmatmul.f32.gmra.mxu0 %v8636
  %v8940 = vpop.f32.mrf.mxu0
  %v8941 = vadd.f32 %v8516, %v8940
  %8942 = vmatmul.f32.gmra.mxu0 %v8639
  %v8943 = vpop.f32.mrf.mxu0
  %v8944 = vadd.f32 %v8516, %v8943
  %8945 = vmatmul.f32.gmra.mxu0 %v8642
  %v8946 = vpop.f32.mrf.mxu0
  %v8947 = vadd.f32 %v8516, %v8946
  %8948 = vmatmul.f32.gmra.mxu0 %v8645
  %v8949 = vpop.f32.mrf.mxu0
  %v8950 = vadd.f32 %v8516, %v8949
  %8951 = vmatmul.f32.gmra.mxu0 %v8648
  %v8952 = vpop.f32.mrf.mxu0
  %v8953 = vadd.f32 %v8516, %v8952
  %8954 = vmatmul.f32.gmra.mxu0 %v8651
  %v8955 = vpop.f32.mrf.mxu0
  %v8956 = vadd.f32 %v8516, %v8955
  %8957 = vmatmul.f32.gmra.mxu0 %v8654
  %v8958 = vpop.f32.mrf.mxu0
  %v8959 = vadd.f32 %v8516, %v8958
  %8960 = vmatmul.f32.gmra.mxu0 %v8657
  %v8961 = vpop.f32.mrf.mxu0
  %v8962 = vadd.f32 %v8516, %v8961
  %8963 = vmatmul.f32.gmra.mxu0 %v8660
  %v8964 = vpop.f32.mrf.mxu0
  %v8965 = vadd.f32 %v8516, %v8964
  %8966 = vmatmul.f32.gmra.mxu0 %v8663
  %v8967 = vpop.f32.mrf.mxu0
  %v8968 = vadd.f32 %v8516, %v8967
  %8969 = vmatmul.f32.gmra.mxu0 %v8666
  %v8970 = vpop.f32.mrf.mxu0
  %v8971 = vadd.f32 %v8516, %v8970
  %8972 = vmatmul.f32.gmra.mxu0 %v8669
  %v8973 = vpop.f32.mrf.mxu0
  %v8974 = vadd.f32 %v8516, %v8973
  %8975 = vmatmul.f32.gmra.mxu0 %v8672
  %v8976 = vpop.f32.mrf.mxu0
  %v8977 = vadd.f32 %v8516, %v8976
  %8978 = vmatmul.f32.gmra.mxu0 %v8675
  %v8979 = vpop.f32.mrf.mxu0
  %v8980 = vadd.f32 %v8516, %v8979
  %8981 = vmatmul.f32.gmra.mxu0 %v8678
  %v8982 = vpop.f32.mrf.mxu0
  %v8983 = vadd.f32 %v8516, %v8982
  %8984 = vmatmul.f32.gmra.mxu0 %v8681
  %v8985 = vpop.f32.mrf.mxu0
  %v8986 = vadd.f32 %v8516, %v8985
  %8987 = vmatmul.f32.gmra.mxu0 %v8684
  %v8988 = vpop.f32.mrf.mxu0
  %v8989 = vadd.f32 %v8516, %v8988
  %8990 = vmatmul.f32.gmra.mxu0 %v8687
  %v8991 = vpop.f32.mrf.mxu0
  %v8992 = vadd.f32 %v8516, %v8991
  %8993 = vmatmul.f32.gmra.mxu0 %v8690
  %v8994 = vpop.f32.mrf.mxu0
  %v8995 = vadd.f32 %v8516, %v8994
  %8996 = vmatmul.f32.gmra.mxu0 %v8693
  %v8997 = vpop.f32.mrf.mxu0
  %v8998 = vadd.f32 %v8516, %v8997
  %8999 = vmatmul.f32.gmra.mxu0 %v8696
  %v9000 = vpop.f32.mrf.mxu0
  %v9001 = vadd.f32 %v8516, %v9000
  %9002 = vmatmul.f32.gmra.mxu0 %v8699
  %v9003 = vpop.f32.mrf.mxu0
  %v9004 = vadd.f32 %v8516, %v9003
  %9005 = vmatmul.f32.gmra.mxu0 %v8702
  %v9006 = vpop.f32.mrf.mxu0
  %v9007 = vadd.f32 %v8516, %v9006
  %9008 = vmatmul.f32.gmra.mxu0 %v8705
  %v9009 = vpop.f32.mrf.mxu0
  %v9010 = vadd.f32 %v8516, %v9009
  %9011 = vmatmul.f32.gmra.mxu0 %v8708
  %v9012 = vpop.f32.mrf.mxu0
  %v9013 = vadd.f32 %v8516, %v9012
  %9014 = vmatmul.f32.gmra.mxu0 %v8711
  %v9015 = vpop.f32.mrf.mxu0
  %v9016 = vadd.f32 %v8516, %v9015
  %9017 = vmatmul.f32.gmra.mxu0 %v8714
  %v9018 = vpop.f32.mrf.mxu0
  %v9019 = vadd.f32 %v8516, %v9018
  %9020 = vmatmul.f32.gmra.mxu0 %v8717
  %v9021 = vpop.f32.mrf.mxu0
  %v9022 = vadd.f32 %v8516, %v9021
  %9023 = vmatmul.f32.gmra.mxu0 %v8720
  %v9024 = vpop.f32.mrf.mxu0
  %v9025 = vadd.f32 %v8516, %v9024
  %9026 = vmatmul.f32.gmra.mxu0 %v8723
  %v9027 = vpop.f32.mrf.mxu0
  %v9028 = vadd.f32 %v8516, %v9027
  %9029 = vmatmul.f32.gmra.mxu0 %v8726
  %v9030 = vpop.f32.mrf.mxu0
  %v9031 = vadd.f32 %v8516, %v9030
  %9032 = vmatmul.f32.gmra.mxu0 %v8729
  %v9033 = vpop.f32.mrf.mxu0
  %v9034 = vadd.f32 %v8516, %v9033
  %9035 = vmatmul.f32.gmra.mxu0 %v8732
  %v9036 = vpop.f32.mrf.mxu0
  %v9037 = vadd.f32 %v8516, %v9036
  %9038 = vmatmul.f32.gmra.mxu0 %v8735
  %v9039 = vpop.f32.mrf.mxu0
  %v9040 = vadd.f32 %v8516, %v9039
  %9041 = vmatmul.f32.gmra.mxu0 %v8738
  %v9042 = vpop.f32.mrf.mxu0
  %v9043 = vadd.f32 %v8516, %v9042
  %9044 = vmatmul.f32.gmra.mxu0 %v8741
  %v9045 = vpop.f32.mrf.mxu0
  %v9046 = vadd.f32 %v8516, %v9045
  %9047 = vmatmul.f32.gmra.mxu0 %v8744
  %v9048 = vpop.f32.mrf.mxu0
  %v9049 = vadd.f32 %v8516, %v9048
  %9050 = vmatmul.f32.gmra.mxu0 %v8747
  %v9051 = vpop.f32.mrf.mxu0
  %v9052 = vadd.f32 %v8516, %v9051
  %9053 = vmatmul.f32.gmra.mxu0 %v8750
  %v9054 = vpop.f32.mrf.mxu0
  %v9055 = vadd.f32 %v8516, %v9054
  %9056 = vmatmul.f32.gmra.mxu0 %v8753
  %v9057 = vpop.f32.mrf.mxu0
  %v9058 = vadd.f32 %v8516, %v9057
  %9059 = vmatmul.f32.gmra.mxu0 %v8756
  %v9060 = vpop.f32.mrf.mxu0
  %v9061 = vadd.f32 %v8516, %v9060
  %9062 = vmatmul.f32.gmra.mxu0 %v8759
  %v9063 = vpop.f32.mrf.mxu0
  %v9064 = vadd.f32 %v8516, %v9063
  %9065 = vmatmul.f32.gmra.mxu0 %v8762
  %v9066 = vpop.f32.mrf.mxu0
  %v9067 = vadd.f32 %v8516, %v9066
  %9068 = vmatmul.f32.gmra.mxu0 %v8765
  %v9069 = vpop.f32.mrf.mxu0
  %v9070 = vadd.f32 %v8516, %v9069
  %9071 = vmatmul.f32.gmra.mxu0 %v8768
  %v9072 = vpop.f32.mrf.mxu0
  %v9073 = vadd.f32 %v8516, %v9072
  %9074 = vmatmul.f32.gmra.mxu0 %v8771
  %v9075 = vpop.f32.mrf.mxu0
  %v9076 = vadd.f32 %v8516, %v9075
  %9077 = vmatmul.f32.gmra.mxu0 %v8774
  %v9078 = vpop.f32.mrf.mxu0
  %v9079 = vadd.f32 %v8516, %v9078
  %9080 = vmatmul.f32.gmra.mxu0 %v8777
  %v9081 = vpop.f32.mrf.mxu0
  %v9082 = vadd.f32 %v8516, %v9081
  %9083 = vmatmul.f32.gmra.mxu0 %v8780
  %v9084 = vpop.f32.mrf.mxu0
  %v9085 = vadd.f32 %v8516, %v9084
  %9086 = vmatmul.f32.gmra.mxu0 %v8783
  %v9087 = vpop.f32.mrf.mxu0
  %v9088 = vadd.f32 %v8516, %v9087
  %9089 = vmatmul.f32.gmra.mxu0 %v8786
  %v9090 = vpop.f32.mrf.mxu0
  %v9091 = vadd.f32 %v8516, %v9090
  %9092 = vmatmul.f32.gmra.mxu0 %v8789
  %v9093 = vpop.f32.mrf.mxu0
  %v9094 = vadd.f32 %v8516, %v9093
  %9095 = vmatmul.f32.gmra.mxu0 %v8792
  %v9096 = vpop.f32.mrf.mxu0
  %v9097 = vadd.f32 %v8516, %v9096
  %9098 = vmatmul.f32.gmra.mxu0 %v8795
  %v9099 = vpop.f32.mrf.mxu0
  %v9100 = vadd.f32 %v8516, %v9099
  %9101 = vmatmul.f32.gmra.mxu0 %v8798
  %v9102 = vpop.f32.mrf.mxu0
  %v9103 = vadd.f32 %v8516, %v9102
  %9104 = vmatmul.f32.gmra.mxu0 %v8801
  %v9105 = vpop.f32.mrf.mxu0
  %v9106 = vadd.f32 %v8516, %v9105
  %9107 = vmatmul.f32.gmra.mxu0 %v8804
  %v9108 = vpop.f32.mrf.mxu0
  %v9109 = vadd.f32 %v8516, %v9108
  %9110 = vdwg.mxu0
  %v9111 = vmax.f32 %v8824, 0.0
  %v9112 = vmax.f32 %v8827, 0.0
  %v9113 = vmax.f32 %v8830, 0.0
  %v9114 = vmax.f32 %v8833, 0.0
  %v9115 = vmax.f32 %v8836, 0.0
  %v9116 = vmax.f32 %v8839, 0.0
  %v9117 = vmax.f32 %v8842, 0.0
  %v9118 = vmax.f32 %v8845, 0.0
  %v9119 = vmax.f32 %v8848, 0.0
  %v9120 = vmax.f32 %v8851, 0.0
  %v9121 = vmax.f32 %v8854, 0.0
  %v9122 = vmax.f32 %v8857, 0.0
  %v9123 = vmax.f32 %v8860, 0.0
  %v9124 = vmax.f32 %v8863, 0.0
  %v9125 = vmax.f32 %v8866, 0.0
  %v9126 = vmax.f32 %v8869, 0.0
  %v9127 = vmax.f32 %v8872, 0.0
  %v9128 = vmax.f32 %v8875, 0.0
  %v9129 = vmax.f32 %v8878, 0.0
  %v9130 = vmax.f32 %v8881, 0.0
  %v9131 = vmax.f32 %v8884, 0.0
  %v9132 = vmax.f32 %v8887, 0.0
  %v9133 = vmax.f32 %v8890, 0.0
  %v9134 = vmax.f32 %v8893, 0.0
  %v9135 = vmax.f32 %v8896, 0.0
  %v9136 = vmax.f32 %v8899, 0.0
  %v9137 = vmax.f32 %v8902, 0.0
  %v9138 = vmax.f32 %v8905, 0.0
  %v9139 = vmax.f32 %v8908, 0.0
  %v9140 = vmax.f32 %v8911, 0.0
  %v9141 = vmax.f32 %v8914, 0.0
  %v9142 = vmax.f32 %v8917, 0.0
  %v9143 = vmax.f32 %v8920, 0.0
  %v9144 = vmax.f32 %v8923, 0.0
  %v9145 = vmax.f32 %v8926, 0.0
  %v9146 = vmax.f32 %v8929, 0.0
  %v9147 = vmax.f32 %v8932, 0.0
  %v9148 = vmax.f32 %v8935, 0.0
  %v9149 = vmax.f32 %v8938, 0.0
  %v9150 = vmax.f32 %v8941, 0.0
  %v9151 = vmax.f32 %v8944, 0.0
  %v9152 = vmax.f32 %v8947, 0.0
  %v9153 = vmax.f32 %v8950, 0.0
  %v9154 = vmax.f32 %v8953, 0.0
  %v9155 = vmax.f32 %v8956, 0.0
  %v9156 = vmax.f32 %v8959, 0.0
  %v9157 = vmax.f32 %v8962, 0.0
  %v9158 = vmax.f32 %v8965, 0.0
  %v9159 = vmax.f32 %v8968, 0.0
  %v9160 = vmax.f32 %v8971, 0.0
  %v9161 = vmax.f32 %v8974, 0.0
  %v9162 = vmax.f32 %v8977, 0.0
  %v9163 = vmax.f32 %v8980, 0.0
  %v9164 = vmax.f32 %v8983, 0.0
  %v9165 = vmax.f32 %v8986, 0.0
  %v9166 = vmax.f32 %v8989, 0.0
  %v9167 = vmax.f32 %v8992, 0.0
  %v9168 = vmax.f32 %v8995, 0.0
  %v9169 = vmax.f32 %v8998, 0.0
  %v9170 = vmax.f32 %v9001, 0.0
  %v9171 = vmax.f32 %v9004, 0.0
  %v9172 = vmax.f32 %v9007, 0.0
  %v9173 = vmax.f32 %v9010, 0.0
  %v9174 = vmax.f32 %v9013, 0.0
  %v9175 = vmax.f32 %v9016, 0.0
  %v9176 = vmax.f32 %v9019, 0.0
  %v9177 = vmax.f32 %v9022, 0.0
  %v9178 = vmax.f32 %v9025, 0.0
  %v9179 = vmax.f32 %v9028, 0.0
  %v9180 = vmax.f32 %v9031, 0.0
  %v9181 = vmax.f32 %v9034, 0.0
  %v9182 = vmax.f32 %v9037, 0.0
  %v9183 = vmax.f32 %v9040, 0.0
  %v9184 = vmax.f32 %v9043, 0.0
  %v9185 = vmax.f32 %v9046, 0.0
  %v9186 = vmax.f32 %v9049, 0.0
  %v9187 = vmax.f32 %v9052, 0.0
  %v9188 = vmax.f32 %v9055, 0.0
  %v9189 = vmax.f32 %v9058, 0.0
  %v9190 = vmax.f32 %v9061, 0.0
  %v9191 = vmax.f32 %v9064, 0.0
  %v9192 = vmax.f32 %v9067, 0.0
  %v9193 = vmax.f32 %v9070, 0.0
  %v9194 = vmax.f32 %v9073, 0.0
  %v9195 = vmax.f32 %v9076, 0.0
  %v9196 = vmax.f32 %v9079, 0.0
  %v9197 = vmax.f32 %v9082, 0.0
  %v9198 = vmax.f32 %v9085, 0.0
  %v9199 = vmax.f32 %v9088, 0.0
  %v9200 = vmax.f32 %v9091, 0.0
  %v9201 = vmax.f32 %v9094, 0.0
  %v9202 = vmax.f32 %v9097, 0.0
  %v9203 = vmax.f32 %v9100, 0.0
  %v9204 = vmax.f32 %v9103, 0.0
  %v9205 = vmax.f32 %v9106, 0.0
  %v9206 = vmax.f32 %v9109, 0.0
  %v9207 = vld [vmem:[%s16] sm:$0xff]
  %v9208 = vld [vmem:[%s16 + $0x8] sm:$0xff]
  %v9209 = vld [vmem:[%s16 + $0x10] sm:$0xff]
  %v9210 = vld [vmem:[%s16 + $0x18] sm:$0xff]
  %v9211 = vld [vmem:[%s17] sm:$0x1]
  %v9213 = vperm.slane %v9211, 0
  %v9216 = vsel %vm1728, %v9111, 0
  %v9219 = vsel %vm1728, %v9112, 0
  %v9222 = vsel %vm1728, %v9113, 0
  %v9225 = vsel %vm1728, %v9114, 0
  %v9228 = vsel %vm1728, %v9115, 0
  %v9231 = vsel %vm1728, %v9116, 0
  %v9234 = vsel %vm1728, %v9117, 0
  %v9237 = vsel %vm1728, %v9118, 0
  %v9240 = vsel %vm1728, %v9119, 0
  %v9243 = vsel %vm1728, %v9120, 0
  %v9246 = vsel %vm1728, %v9121, 0
  %v9249 = vsel %vm1728, %v9122, 0
  %v9252 = vsel %vm1728, %v9123, 0
  %v9255 = vsel %vm1728, %v9124, 0
  %v9258 = vsel %vm1728, %v9125, 0
  %v9261 = vsel %vm1728, %v9126, 0
  %v9264 = vsel %vm1728, %v9127, 0
  %v9267 = vsel %vm1728, %v9128, 0
  %v9270 = vsel %vm1728, %v9129, 0
  %v9273 = vsel %vm1728, %v9130, 0
  %v9276 = vsel %vm1728, %v9131, 0
  %v9279 = vsel %vm1728, %v9132, 0
  %v9282 = vsel %vm1728, %v9133, 0
  %v9285 = vsel %vm1728, %v9134, 0
  %v9288 = vsel %vm1728, %v9135, 0
  %v9291 = vsel %vm1728, %v9136, 0
  %v9294 = vsel %vm1728, %v9137, 0
  %v9297 = vsel %vm1728, %v9138, 0
  %v9300 = vsel %vm1728, %v9139, 0
  %v9303 = vsel %vm1728, %v9140, 0
  %v9306 = vsel %vm1728, %v9141, 0
  %v9309 = vsel %vm1728, %v9142, 0
  %v9312 = vsel %vm1728, %v9143, 0
  %v9315 = vsel %vm1728, %v9144, 0
  %v9318 = vsel %vm1728, %v9145, 0
  %v9321 = vsel %vm1728, %v9146, 0
  %v9324 = vsel %vm1728, %v9147, 0
  %v9327 = vsel %vm1728, %v9148, 0
  %v9330 = vsel %vm1728, %v9149, 0
  %v9333 = vsel %vm1728, %v9150, 0
  %v9336 = vsel %vm1728, %v9151, 0
  %v9339 = vsel %vm1728, %v9152, 0
  %v9342 = vsel %vm1728, %v9153, 0
  %v9345 = vsel %vm1728, %v9154, 0
  %v9348 = vsel %vm1728, %v9155, 0
  %v9351 = vsel %vm1728, %v9156, 0
  %v9354 = vsel %vm1728, %v9157, 0
  %v9357 = vsel %vm1728, %v9158, 0
  %v9360 = vsel %vm1728, %v9159, 0
  %v9363 = vsel %vm1728, %v9160, 0
  %v9366 = vsel %vm1728, %v9161, 0
  %v9369 = vsel %vm1728, %v9162, 0
  %v9372 = vsel %vm1728, %v9163, 0
  %v9375 = vsel %vm1728, %v9164, 0
  %v9378 = vsel %vm1728, %v9165, 0
  %v9381 = vsel %vm1728, %v9166, 0
  %v9384 = vsel %vm1728, %v9167, 0
  %v9387 = vsel %vm1728, %v9168, 0
  %v9390 = vsel %vm1728, %v9169, 0
  %v9393 = vsel %vm1728, %v9170, 0
  %v9396 = vsel %vm1728, %v9171, 0
  %v9399 = vsel %vm1728, %v9172, 0
  %v9402 = vsel %vm1728, %v9173, 0
  %v9405 = vsel %vm1728, %v9174, 0
  %v9408 = vsel %vm1728, %v9175, 0
  %v9411 = vsel %vm1728, %v9176, 0
  %v9414 = vsel %vm1728, %v9177, 0
  %v9417 = vsel %vm1728, %v9178, 0
  %v9420 = vsel %vm1728, %v9179, 0
  %v9423 = vsel %vm1728, %v9180, 0
  %v9426 = vsel %vm1728, %v9181, 0
  %v9429 = vsel %vm1728, %v9182, 0
  %v9432 = vsel %vm1728, %v9183, 0
  %v9435 = vsel %vm1728, %v9184, 0
  %v9438 = vsel %vm1728, %v9185, 0
  %v9441 = vsel %vm1728, %v9186, 0
  %v9444 = vsel %vm1728, %v9187, 0
  %v9447 = vsel %vm1728, %v9188, 0
  %v9450 = vsel %vm1728, %v9189, 0
  %v9453 = vsel %vm1728, %v9190, 0
  %v9456 = vsel %vm1728, %v9191, 0
  %v9459 = vsel %vm1728, %v9192, 0
  %v9462 = vsel %vm1728, %v9193, 0
  %v9465 = vsel %vm1728, %v9194, 0
  %v9468 = vsel %vm1728, %v9195, 0
  %v9471 = vsel %vm1728, %v9196, 0
  %v9474 = vsel %vm1728, %v9197, 0
  %v9477 = vsel %vm1728, %v9198, 0
  %v9480 = vsel %vm1728, %v9199, 0
  %v9483 = vsel %vm1728, %v9200, 0
  %v9486 = vsel %vm1728, %v9201, 0
  %v9489 = vsel %vm1728, %v9202, 0
  %v9492 = vsel %vm1728, %v9203, 0
  %v9495 = vsel %vm1728, %v9204, 0
  %v9498 = vsel %vm1728, %v9205, 0
  %v9501 = vsel %vm1728, %v9206, 0
  %9503 = vmatpush.msra.mxu0 0.0
  %9504 = vmatpush.msra.mxu0 0.0
  %9505 = vmatpush.msra.mxu0 0.0
  %9506 = vmatpush.msra.mxu0 0.0
  %9507 = vmatpush.msra.mxu0 0.0
  %9508 = vmatpush.msra.mxu0 0.0
  %9509 = vmatpush.msra.mxu0 0.0
  %9510 = vmatpush.msra.mxu0 0.0
  %9511 = vmatpush.msra.mxu0 0.0
  %9512 = vmatpush.msra.mxu0 0.0
  %9513 = vmatpush.msra.mxu0 0.0
  %9514 = vmatpush.msra.mxu0 0.0
  %9515 = vmatpush.msra.mxu0 %v9210
  %9516 = vmatpush.msra.mxu0 %v9209
  %9517 = vmatpush.msra.mxu0 %v9208
  %9518 = vmatpush.msra.mxu0 %v9207
  %9519 = vmatmul.f32.gmra.mxu0 %v9216
  %v9520 = vpop.f32.mrf.mxu0
  %v9521 = vadd.f32 %v9213, %v9520
  %9522 = vmatmul.f32.gmra.mxu0 %v9219
  %v9523 = vpop.f32.mrf.mxu0
  %v9524 = vadd.f32 %v9213, %v9523
  %9525 = vmatmul.f32.gmra.mxu0 %v9222
  %v9526 = vpop.f32.mrf.mxu0
  %v9527 = vadd.f32 %v9213, %v9526
  %9528 = vmatmul.f32.gmra.mxu0 %v9225
  %v9529 = vpop.f32.mrf.mxu0
  %v9530 = vadd.f32 %v9213, %v9529
  %9531 = vmatmul.f32.gmra.mxu0 %v9228
  %v9532 = vpop.f32.mrf.mxu0
  %v9533 = vadd.f32 %v9213, %v9532
  %9534 = vmatmul.f32.gmra.mxu0 %v9231
  %v9535 = vpop.f32.mrf.mxu0
  %v9536 = vadd.f32 %v9213, %v9535
  %9537 = vmatmul.f32.gmra.mxu0 %v9234
  %v9538 = vpop.f32.mrf.mxu0
  %v9539 = vadd.f32 %v9213, %v9538
  %9540 = vmatmul.f32.gmra.mxu0 %v9237
  %v9541 = vpop.f32.mrf.mxu0
  %v9542 = vadd.f32 %v9213, %v9541
  %9543 = vmatmul.f32.gmra.mxu0 %v9240
  %v9544 = vpop.f32.mrf.mxu0
  %v9545 = vadd.f32 %v9213, %v9544
  %9546 = vmatmul.f32.gmra.mxu0 %v9243
  %v9547 = vpop.f32.mrf.mxu0
  %v9548 = vadd.f32 %v9213, %v9547
  %9549 = vmatmul.f32.gmra.mxu0 %v9246
  %v9550 = vpop.f32.mrf.mxu0
  %v9551 = vadd.f32 %v9213, %v9550
  %9552 = vmatmul.f32.gmra.mxu0 %v9249
  %v9553 = vpop.f32.mrf.mxu0
  %v9554 = vadd.f32 %v9213, %v9553
  %9555 = vmatmul.f32.gmra.mxu0 %v9252
  %v9556 = vpop.f32.mrf.mxu0
  %v9557 = vadd.f32 %v9213, %v9556
  %9558 = vmatmul.f32.gmra.mxu0 %v9255
  %v9559 = vpop.f32.mrf.mxu0
  %v9560 = vadd.f32 %v9213, %v9559
  %9561 = vmatmul.f32.gmra.mxu0 %v9258
  %v9562 = vpop.f32.mrf.mxu0
  %v9563 = vadd.f32 %v9213, %v9562
  %9564 = vmatmul.f32.gmra.mxu0 %v9261
  %v9565 = vpop.f32.mrf.mxu0
  %v9566 = vadd.f32 %v9213, %v9565
  %9567 = vmatmul.f32.gmra.mxu0 %v9264
  %v9568 = vpop.f32.mrf.mxu0
  %v9569 = vadd.f32 %v9213, %v9568
  %9570 = vmatmul.f32.gmra.mxu0 %v9267
  %v9571 = vpop.f32.mrf.mxu0
  %v9572 = vadd.f32 %v9213, %v9571
  %9573 = vmatmul.f32.gmra.mxu0 %v9270
  %v9574 = vpop.f32.mrf.mxu0
  %v9575 = vadd.f32 %v9213, %v9574
  %9576 = vmatmul.f32.gmra.mxu0 %v9273
  %v9577 = vpop.f32.mrf.mxu0
  %v9578 = vadd.f32 %v9213, %v9577
  %9579 = vmatmul.f32.gmra.mxu0 %v9276
  %v9580 = vpop.f32.mrf.mxu0
  %v9581 = vadd.f32 %v9213, %v9580
  %9582 = vmatmul.f32.gmra.mxu0 %v9279
  %v9583 = vpop.f32.mrf.mxu0
  %v9584 = vadd.f32 %v9213, %v9583
  %9585 = vmatmul.f32.gmra.mxu0 %v9282
  %v9586 = vpop.f32.mrf.mxu0
  %v9587 = vadd.f32 %v9213, %v9586
  %9588 = vmatmul.f32.gmra.mxu0 %v9285
  %v9589 = vpop.f32.mrf.mxu0
  %v9590 = vadd.f32 %v9213, %v9589
  %9591 = vmatmul.f32.gmra.mxu0 %v9288
  %v9592 = vpop.f32.mrf.mxu0
  %v9593 = vadd.f32 %v9213, %v9592
  %9594 = vmatmul.f32.gmra.mxu0 %v9291
  %v9595 = vpop.f32.mrf.mxu0
  %v9596 = vadd.f32 %v9213, %v9595
  %9597 = vmatmul.f32.gmra.mxu0 %v9294
  %v9598 = vpop.f32.mrf.mxu0
  %v9599 = vadd.f32 %v9213, %v9598
  %9600 = vmatmul.f32.gmra.mxu0 %v9297
  %v9601 = vpop.f32.mrf.mxu0
  %v9602 = vadd.f32 %v9213, %v9601
  %9603 = vmatmul.f32.gmra.mxu0 %v9300
  %v9604 = vpop.f32.mrf.mxu0
  %v9605 = vadd.f32 %v9213, %v9604
  %9606 = vmatmul.f32.gmra.mxu0 %v9303
  %v9607 = vpop.f32.mrf.mxu0
  %v9608 = vadd.f32 %v9213, %v9607
  %9609 = vmatmul.f32.gmra.mxu0 %v9306
  %v9610 = vpop.f32.mrf.mxu0
  %v9611 = vadd.f32 %v9213, %v9610
  %9612 = vmatmul.f32.gmra.mxu0 %v9309
  %v9613 = vpop.f32.mrf.mxu0
  %v9614 = vadd.f32 %v9213, %v9613
  %9615 = vmatmul.f32.gmra.mxu0 %v9312
  %v9616 = vpop.f32.mrf.mxu0
  %v9617 = vadd.f32 %v9213, %v9616
  %9618 = vmatmul.f32.gmra.mxu0 %v9315
  %v9619 = vpop.f32.mrf.mxu0
  %v9620 = vadd.f32 %v9213, %v9619
  %9621 = vmatmul.f32.gmra.mxu0 %v9318
  %v9622 = vpop.f32.mrf.mxu0
  %v9623 = vadd.f32 %v9213, %v9622
  %9624 = vmatmul.f32.gmra.mxu0 %v9321
  %v9625 = vpop.f32.mrf.mxu0
  %v9626 = vadd.f32 %v9213, %v9625
  %9627 = vmatmul.f32.gmra.mxu0 %v9324
  %v9628 = vpop.f32.mrf.mxu0
  %v9629 = vadd.f32 %v9213, %v9628
  %9630 = vmatmul.f32.gmra.mxu0 %v9327
  %v9631 = vpop.f32.mrf.mxu0
  %v9632 = vadd.f32 %v9213, %v9631
  %9633 = vmatmul.f32.gmra.mxu0 %v9330
  %v9634 = vpop.f32.mrf.mxu0
  %v9635 = vadd.f32 %v9213, %v9634
  %9636 = vmatmul.f32.gmra.mxu0 %v9333
  %v9637 = vpop.f32.mrf.mxu0
  %v9638 = vadd.f32 %v9213, %v9637
  %9639 = vmatmul.f32.gmra.mxu0 %v9336
  %v9640 = vpop.f32.mrf.mxu0
  %v9641 = vadd.f32 %v9213, %v9640
  %9642 = vmatmul.f32.gmra.mxu0 %v9339
  %v9643 = vpop.f32.mrf.mxu0
  %v9644 = vadd.f32 %v9213, %v9643
  %9645 = vmatmul.f32.gmra.mxu0 %v9342
  %v9646 = vpop.f32.mrf.mxu0
  %v9647 = vadd.f32 %v9213, %v9646
  %9648 = vmatmul.f32.gmra.mxu0 %v9345
  %v9649 = vpop.f32.mrf.mxu0
  %v9650 = vadd.f32 %v9213, %v9649
  %9651 = vmatmul.f32.gmra.mxu0 %v9348
  %v9652 = vpop.f32.mrf.mxu0
  %v9653 = vadd.f32 %v9213, %v9652
  %9654 = vmatmul.f32.gmra.mxu0 %v9351
  %v9655 = vpop.f32.mrf.mxu0
  %v9656 = vadd.f32 %v9213, %v9655
  %9657 = vmatmul.f32.gmra.mxu0 %v9354
  %v9658 = vpop.f32.mrf.mxu0
  %v9659 = vadd.f32 %v9213, %v9658
  %9660 = vmatmul.f32.gmra.mxu0 %v9357
  %v9661 = vpop.f32.mrf.mxu0
  %v9662 = vadd.f32 %v9213, %v9661
  %9663 = vmatmul.f32.gmra.mxu0 %v9360
  %v9664 = vpop.f32.mrf.mxu0
  %v9665 = vadd.f32 %v9213, %v9664
  %9666 = vmatmul.f32.gmra.mxu0 %v9363
  %v9667 = vpop.f32.mrf.mxu0
  %v9668 = vadd.f32 %v9213, %v9667
  %9669 = vmatmul.f32.gmra.mxu0 %v9366
  %v9670 = vpop.f32.mrf.mxu0
  %v9671 = vadd.f32 %v9213, %v9670
  %9672 = vmatmul.f32.gmra.mxu0 %v9369
  %v9673 = vpop.f32.mrf.mxu0
  %v9674 = vadd.f32 %v9213, %v9673
  %9675 = vmatmul.f32.gmra.mxu0 %v9372
  %v9676 = vpop.f32.mrf.mxu0
  %v9677 = vadd.f32 %v9213, %v9676
  %9678 = vmatmul.f32.gmra.mxu0 %v9375
  %v9679 = vpop.f32.mrf.mxu0
  %v9680 = vadd.f32 %v9213, %v9679
  %9681 = vmatmul.f32.gmra.mxu0 %v9378
  %v9682 = vpop.f32.mrf.mxu0
  %v9683 = vadd.f32 %v9213, %v9682
  %9684 = vmatmul.f32.gmra.mxu0 %v9381
  %v9685 = vpop.f32.mrf.mxu0
  %v9686 = vadd.f32 %v9213, %v9685
  %9687 = vmatmul.f32.gmra.mxu0 %v9384
  %v9688 = vpop.f32.mrf.mxu0
  %v9689 = vadd.f32 %v9213, %v9688
  %9690 = vmatmul.f32.gmra.mxu0 %v9387
  %v9691 = vpop.f32.mrf.mxu0
  %v9692 = vadd.f32 %v9213, %v9691
  %9693 = vmatmul.f32.gmra.mxu0 %v9390
  %v9694 = vpop.f32.mrf.mxu0
  %v9695 = vadd.f32 %v9213, %v9694
  %9696 = vmatmul.f32.gmra.mxu0 %v9393
  %v9697 = vpop.f32.mrf.mxu0
  %v9698 = vadd.f32 %v9213, %v9697
  %9699 = vmatmul.f32.gmra.mxu0 %v9396
  %v9700 = vpop.f32.mrf.mxu0
  %v9701 = vadd.f32 %v9213, %v9700
  %9702 = vmatmul.f32.gmra.mxu0 %v9399
  %v9703 = vpop.f32.mrf.mxu0
  %v9704 = vadd.f32 %v9213, %v9703
  %9705 = vmatmul.f32.gmra.mxu0 %v9402
  %v9706 = vpop.f32.mrf.mxu0
  %v9707 = vadd.f32 %v9213, %v9706
  %9708 = vmatmul.f32.gmra.mxu0 %v9405
  %v9709 = vpop.f32.mrf.mxu0
  %v9710 = vadd.f32 %v9213, %v9709
  %9711 = vmatmul.f32.gmra.mxu0 %v9408
  %v9712 = vpop.f32.mrf.mxu0
  %v9713 = vadd.f32 %v9213, %v9712
  %9714 = vmatmul.f32.gmra.mxu0 %v9411
  %v9715 = vpop.f32.mrf.mxu0
  %v9716 = vadd.f32 %v9213, %v9715
  %9717 = vmatmul.f32.gmra.mxu0 %v9414
  %v9718 = vpop.f32.mrf.mxu0
  %v9719 = vadd.f32 %v9213, %v9718
  %9720 = vmatmul.f32.gmra.mxu0 %v9417
  %v9721 = vpop.f32.mrf.mxu0
  %v9722 = vadd.f32 %v9213, %v9721
  %9723 = vmatmul.f32.gmra.mxu0 %v9420
  %v9724 = vpop.f32.mrf.mxu0
  %v9725 = vadd.f32 %v9213, %v9724
  %9726 = vmatmul.f32.gmra.mxu0 %v9423
  %v9727 = vpop.f32.mrf.mxu0
  %v9728 = vadd.f32 %v9213, %v9727
  %9729 = vmatmul.f32.gmra.mxu0 %v9426
  %v9730 = vpop.f32.mrf.mxu0
  %v9731 = vadd.f32 %v9213, %v9730
  %9732 = vmatmul.f32.gmra.mxu0 %v9429
  %v9733 = vpop.f32.mrf.mxu0
  %v9734 = vadd.f32 %v9213, %v9733
  %9735 = vmatmul.f32.gmra.mxu0 %v9432
  %v9736 = vpop.f32.mrf.mxu0
  %v9737 = vadd.f32 %v9213, %v9736
  %9738 = vmatmul.f32.gmra.mxu0 %v9435
  %v9739 = vpop.f32.mrf.mxu0
  %v9740 = vadd.f32 %v9213, %v9739
  %9741 = vmatmul.f32.gmra.mxu0 %v9438
  %v9742 = vpop.f32.mrf.mxu0
  %v9743 = vadd.f32 %v9213, %v9742
  %9744 = vmatmul.f32.gmra.mxu0 %v9441
  %v9745 = vpop.f32.mrf.mxu0
  %v9746 = vadd.f32 %v9213, %v9745
  %9747 = vmatmul.f32.gmra.mxu0 %v9444
  %v9748 = vpop.f32.mrf.mxu0
  %v9749 = vadd.f32 %v9213, %v9748
  %9750 = vmatmul.f32.gmra.mxu0 %v9447
  %v9751 = vpop.f32.mrf.mxu0
  %v9752 = vadd.f32 %v9213, %v9751
  %9753 = vmatmul.f32.gmra.mxu0 %v9450
  %v9754 = vpop.f32.mrf.mxu0
  %v9755 = vadd.f32 %v9213, %v9754
  %9756 = vmatmul.f32.gmra.mxu0 %v9453
  %v9757 = vpop.f32.mrf.mxu0
  %v9758 = vadd.f32 %v9213, %v9757
  %9759 = vmatmul.f32.gmra.mxu0 %v9456
  %v9760 = vpop.f32.mrf.mxu0
  %v9761 = vadd.f32 %v9213, %v9760
  %9762 = vmatmul.f32.gmra.mxu0 %v9459
  %v9763 = vpop.f32.mrf.mxu0
  %v9764 = vadd.f32 %v9213, %v9763
  %9765 = vmatmul.f32.gmra.mxu0 %v9462
  %v9766 = vpop.f32.mrf.mxu0
  %v9767 = vadd.f32 %v9213, %v9766
  %9768 = vmatmul.f32.gmra.mxu0 %v9465
  %v9769 = vpop.f32.mrf.mxu0
  %v9770 = vadd.f32 %v9213, %v9769
  %9771 = vmatmul.f32.gmra.mxu0 %v9468
  %v9772 = vpop.f32.mrf.mxu0
  %v9773 = vadd.f32 %v9213, %v9772
  %9774 = vmatmul.f32.gmra.mxu0 %v9471
  %v9775 = vpop.f32.mrf.mxu0
  %v9776 = vadd.f32 %v9213, %v9775
  %9777 = vmatmul.f32.gmra.mxu0 %v9474
  %v9778 = vpop.f32.mrf.mxu0
  %v9779 = vadd.f32 %v9213, %v9778
  %9780 = vmatmul.f32.gmra.mxu0 %v9477
  %v9781 = vpop.f32.mrf.mxu0
  %v9782 = vadd.f32 %v9213, %v9781
  %9783 = vmatmul.f32.gmra.mxu0 %v9480
  %v9784 = vpop.f32.mrf.mxu0
  %v9785 = vadd.f32 %v9213, %v9784
  %9786 = vmatmul.f32.gmra.mxu0 %v9483
  %v9787 = vpop.f32.mrf.mxu0
  %v9788 = vadd.f32 %v9213, %v9787
  %9789 = vmatmul.f32.gmra.mxu0 %v9486
  %v9790 = vpop.f32.mrf.mxu0
  %v9791 = vadd.f32 %v9213, %v9790
  %9792 = vmatmul.f32.gmra.mxu0 %v9489
  %v9793 = vpop.f32.mrf.mxu0
  %v9794 = vadd.f32 %v9213, %v9793
  %9795 = vmatmul.f32.gmra.mxu0 %v9492
  %v9796 = vpop.f32.mrf.mxu0
  %v9797 = vadd.f32 %v9213, %v9796
  %9798 = vmatmul.f32.gmra.mxu0 %v9495
  %v9799 = vpop.f32.mrf.mxu0
  %v9800 = vadd.f32 %v9213, %v9799
  %9801 = vmatmul.f32.gmra.mxu0 %v9498
  %v9802 = vpop.f32.mrf.mxu0
  %v9803 = vadd.f32 %v9213, %v9802
  %9804 = vmatmul.f32.gmra.mxu0 %v9501
  %v9805 = vpop.f32.mrf.mxu0
  %v9806 = vadd.f32 %v9213, %v9805
  %9807 = vdwg.mxu0
  %v9808 = vmax.f32 %v9521, -60.0
  %v9809 = vmax.f32 %v9524, -60.0
  %v9810 = vmax.f32 %v9527, -60.0
  %v9811 = vmax.f32 %v9530, -60.0
  %v9812 = vmax.f32 %v9533, -60.0
  %v9813 = vmax.f32 %v9536, -60.0
  %v9814 = vmax.f32 %v9539, -60.0
  %v9815 = vmax.f32 %v9542, -60.0
  %v9816 = vmax.f32 %v9545, -60.0
  %v9817 = vmax.f32 %v9548, -60.0
  %v9818 = vmax.f32 %v9551, -60.0
  %v9819 = vmax.f32 %v9554, -60.0
  %v9820 = vmax.f32 %v9557, -60.0
  %v9821 = vmax.f32 %v9560, -60.0
  %v9822 = vmax.f32 %v9563, -60.0
  %v9823 = vmax.f32 %v9566, -60.0
  %v9824 = vmax.f32 %v9569, -60.0
  %v9825 = vmax.f32 %v9572, -60.0
  %v9826 = vmax.f32 %v9575, -60.0
  %v9827 = vmax.f32 %v9578, -60.0
  %v9828 = vmax.f32 %v9581, -60.0
  %v9829 = vmax.f32 %v9584, -60.0
  %v9830 = vmax.f32 %v9587, -60.0
  %v9831 = vmax.f32 %v9590, -60.0
  %v9832 = vmax.f32 %v9593, -60.0
  %v9833 = vmax.f32 %v9596, -60.0
  %v9834 = vmax.f32 %v9599, -60.0
  %v9835 = vmax.f32 %v9602, -60.0
  %v9836 = vmax.f32 %v9605, -60.0
  %v9837 = vmax.f32 %v9608, -60.0
  %v9838 = vmax.f32 %v9611, -60.0
  %v9839 = vmax.f32 %v9614, -60.0
  %v9840 = vmax.f32 %v9617, -60.0
  %v9841 = vmax.f32 %v9620, -60.0
  %v9842 = vmax.f32 %v9623, -60.0
  %v9843 = vmax.f32 %v9626, -60.0
  %v9844 = vmax.f32 %v9629, -60.0
  %v9845 = vmax.f32 %v9632, -60.0
  %v9846 = vmax.f32 %v9635, -60.0
  %v9847 = vmax.f32 %v9638, -60.0
  %v9848 = vmax.f32 %v9641, -60.0
  %v9849 = vmax.f32 %v9644, -60.0
  %v9850 = vmax.f32 %v9647, -60.0
  %v9851 = vmax.f32 %v9650, -60.0
  %v9852 = vmax.f32 %v9653, -60.0
  %v9853 = vmax.f32 %v9656, -60.0
  %v9854 = vmax.f32 %v9659, -60.0
  %v9855 = vmax.f32 %v9662, -60.0
  %v9856 = vmax.f32 %v9665, -60.0
  %v9857 = vmax.f32 %v9668, -60.0
  %v9858 = vmax.f32 %v9671, -60.0
  %v9859 = vmax.f32 %v9674, -60.0
  %v9860 = vmax.f32 %v9677, -60.0
  %v9861 = vmax.f32 %v9680, -60.0
  %v9862 = vmax.f32 %v9683, -60.0
  %v9863 = vmax.f32 %v9686, -60.0
  %v9864 = vmax.f32 %v9689, -60.0
  %v9865 = vmax.f32 %v9692, -60.0
  %v9866 = vmax.f32 %v9695, -60.0
  %v9867 = vmax.f32 %v9698, -60.0
  %v9868 = vmax.f32 %v9701, -60.0
  %v9869 = vmax.f32 %v9704, -60.0
  %v9870 = vmax.f32 %v9707, -60.0
  %v9871 = vmax.f32 %v9710, -60.0
  %v9872 = vmax.f32 %v9713, -60.0
  %v9873 = vmax.f32 %v9716, -60.0
  %v9874 = vmax.f32 %v9719, -60.0
  %v9875 = vmax.f32 %v9722, -60.0
  %v9876 = vmax.f32 %v9725, -60.0
  %v9877 = vmax.f32 %v9728, -60.0
  %v9878 = vmax.f32 %v9731, -60.0
  %v9879 = vmax.f32 %v9734, -60.0
  %v9880 = vmax.f32 %v9737, -60.0
  %v9881 = vmax.f32 %v9740, -60.0
  %v9882 = vmax.f32 %v9743, -60.0
  %v9883 = vmax.f32 %v9746, -60.0
  %v9884 = vmax.f32 %v9749, -60.0
  %v9885 = vmax.f32 %v9752, -60.0
  %v9886 = vmax.f32 %v9755, -60.0
  %v9887 = vmax.f32 %v9758, -60.0
  %v9888 = vmax.f32 %v9761, -60.0
  %v9889 = vmax.f32 %v9764, -60.0
  %v9890 = vmax.f32 %v9767, -60.0
  %v9891 = vmax.f32 %v9770, -60.0
  %v9892 = vmax.f32 %v9773, -60.0
  %v9893 = vmax.f32 %v9776, -60.0
  %v9894 = vmax.f32 %v9779, -60.0
  %v9895 = vmax.f32 %v9782, -60.0
  %v9896 = vmax.f32 %v9785, -60.0
  %v9897 = vmax.f32 %v9788, -60.0
  %v9898 = vmax.f32 %v9791, -60.0
  %v9899 = vmax.f32 %v9794, -60.0
  %v9900 = vmax.f32 %v9797, -60.0
  %v9901 = vmax.f32 %v9800, -60.0
  %v9902 = vmax.f32 %v9803, -60.0
  %v9903 = vmax.f32 %v9806, -60.0
  %v9904 = vsub.f32 0.0, %v9808
  %v9905 = vsub.f32 0.0, %v9809
  %v9906 = vsub.f32 0.0, %v9810
  %v9907 = vsub.f32 0.0, %v9811
  %v9908 = vsub.f32 0.0, %v9812
  %v9909 = vsub.f32 0.0, %v9813
  %v9910 = vsub.f32 0.0, %v9814
  %v9911 = vsub.f32 0.0, %v9815
  %v9912 = vsub.f32 0.0, %v9816
  %v9913 = vsub.f32 0.0, %v9817
  %v9914 = vsub.f32 0.0, %v9818
  %v9915 = vsub.f32 0.0, %v9819
  %v9916 = vsub.f32 0.0, %v9820
  %v9917 = vsub.f32 0.0, %v9821
  %v9918 = vsub.f32 0.0, %v9822
  %v9919 = vsub.f32 0.0, %v9823
  %v9920 = vsub.f32 0.0, %v9824
  %v9921 = vsub.f32 0.0, %v9825
  %v9922 = vsub.f32 0.0, %v9826
  %v9923 = vsub.f32 0.0, %v9827
  %v9924 = vsub.f32 0.0, %v9828
  %v9925 = vsub.f32 0.0, %v9829
  %v9926 = vsub.f32 0.0, %v9830
  %v9927 = vsub.f32 0.0, %v9831
  %v9928 = vsub.f32 0.0, %v9832
  %v9929 = vsub.f32 0.0, %v9833
  %v9930 = vsub.f32 0.0, %v9834
  %v9931 = vsub.f32 0.0, %v9835
  %v9932 = vsub.f32 0.0, %v9836
  %v9933 = vsub.f32 0.0, %v9837
  %v9934 = vsub.f32 0.0, %v9838
  %v9935 = vsub.f32 0.0, %v9839
  %v9936 = vsub.f32 0.0, %v9840
  %v9937 = vsub.f32 0.0, %v9841
  %v9938 = vsub.f32 0.0, %v9842
  %v9939 = vsub.f32 0.0, %v9843
  %v9940 = vsub.f32 0.0, %v9844
  %v9941 = vsub.f32 0.0, %v9845
  %v9942 = vsub.f32 0.0, %v9846
  %v9943 = vsub.f32 0.0, %v9847
  %v9944 = vsub.f32 0.0, %v9848
  %v9945 = vsub.f32 0.0, %v9849
  %v9946 = vsub.f32 0.0, %v9850
  %v9947 = vsub.f32 0.0, %v9851
  %v9948 = vsub.f32 0.0, %v9852
  %v9949 = vsub.f32 0.0, %v9853
  %v9950 = vsub.f32 0.0, %v9854
  %v9951 = vsub.f32 0.0, %v9855
  %v9952 = vsub.f32 0.0, %v9856
  %v9953 = vsub.f32 0.0, %v9857
  %v9954 = vsub.f32 0.0, %v9858
  %v9955 = vsub.f32 0.0, %v9859
  %v9956 = vsub.f32 0.0, %v9860
  %v9957 = vsub.f32 0.0, %v9861
  %v9958 = vsub.f32 0.0, %v9862
  %v9959 = vsub.f32 0.0, %v9863
  %v9960 = vsub.f32 0.0, %v9864
  %v9961 = vsub.f32 0.0, %v9865
  %v9962 = vsub.f32 0.0, %v9866
  %v9963 = vsub.f32 0.0, %v9867
  %v9964 = vsub.f32 0.0, %v9868
  %v9965 = vsub.f32 0.0, %v9869
  %v9966 = vsub.f32 0.0, %v9870
  %v9967 = vsub.f32 0.0, %v9871
  %v9968 = vsub.f32 0.0, %v9872
  %v9969 = vsub.f32 0.0, %v9873
  %v9970 = vsub.f32 0.0, %v9874
  %v9971 = vsub.f32 0.0, %v9875
  %v9972 = vsub.f32 0.0, %v9876
  %v9973 = vsub.f32 0.0, %v9877
  %v9974 = vsub.f32 0.0, %v9878
  %v9975 = vsub.f32 0.0, %v9879
  %v9976 = vsub.f32 0.0, %v9880
  %v9977 = vsub.f32 0.0, %v9881
  %v9978 = vsub.f32 0.0, %v9882
  %v9979 = vsub.f32 0.0, %v9883
  %v9980 = vsub.f32 0.0, %v9884
  %v9981 = vsub.f32 0.0, %v9885
  %v9982 = vsub.f32 0.0, %v9886
  %v9983 = vsub.f32 0.0, %v9887
  %v9984 = vsub.f32 0.0, %v9888
  %v9985 = vsub.f32 0.0, %v9889
  %v9986 = vsub.f32 0.0, %v9890
  %v9987 = vsub.f32 0.0, %v9891
  %v9988 = vsub.f32 0.0, %v9892
  %v9989 = vsub.f32 0.0, %v9893
  %v9990 = vsub.f32 0.0, %v9894
  %v9991 = vsub.f32 0.0, %v9895
  %v9992 = vsub.f32 0.0, %v9896
  %v9993 = vsub.f32 0.0, %v9897
  %v9994 = vsub.f32 0.0, %v9898
  %v9995 = vsub.f32 0.0, %v9899
  %v9996 = vsub.f32 0.0, %v9900
  %v9997 = vsub.f32 0.0, %v9901
  %v9998 = vsub.f32 0.0, %v9902
  %v9999 = vsub.f32 0.0, %v9903
  %v10000 = vmul.f32 %v9904, 1.442695
  %v10001 = vpow.pop %v10000
  %v10002 = vmul.f32 %v9905, 1.442695
  %v10003 = vpow.pop %v10002
  %v10004 = vmul.f32 %v9906, 1.442695
  %v10005 = vpow.pop %v10004
  %v10006 = vmul.f32 %v9907, 1.442695
  %v10007 = vpow.pop %v10006
  %v10008 = vmul.f32 %v9908, 1.442695
  %v10009 = vpow.pop %v10008
  %v10010 = vmul.f32 %v9909, 1.442695
  %v10011 = vpow.pop %v10010
  %v10012 = vmul.f32 %v9910, 1.442695
  %v10013 = vpow.pop %v10012
  %v10014 = vmul.f32 %v9911, 1.442695
  %v10015 = vpow.pop %v10014
  %v10016 = vmul.f32 %v9912, 1.442695
  %v10017 = vpow.pop %v10016
  %v10018 = vmul.f32 %v9913, 1.442695
  %v10019 = vpow.pop %v10018
  %v10020 = vmul.f32 %v9914, 1.442695
  %v10021 = vpow.pop %v10020
  %v10022 = vmul.f32 %v9915, 1.442695
  %v10023 = vpow.pop %v10022
  %v10024 = vmul.f32 %v9916, 1.442695
  %v10025 = vpow.pop %v10024
  %v10026 = vmul.f32 %v9917, 1.442695
  %v10027 = vpow.pop %v10026
  %v10028 = vmul.f32 %v9918, 1.442695
  %v10029 = vpow.pop %v10028
  %v10030 = vmul.f32 %v9919, 1.442695
  %v10031 = vpow.pop %v10030
  %v10032 = vmul.f32 %v9920, 1.442695
  %v10033 = vpow.pop %v10032
  %v10034 = vmul.f32 %v9921, 1.442695
  %v10035 = vpow.pop %v10034
  %v10036 = vmul.f32 %v9922, 1.442695
  %v10037 = vpow.pop %v10036
  %v10038 = vmul.f32 %v9923, 1.442695
  %v10039 = vpow.pop %v10038
  %v10040 = vmul.f32 %v9924, 1.442695
  %v10041 = vpow.pop %v10040
  %v10042 = vmul.f32 %v9925, 1.442695
  %v10043 = vpow.pop %v10042
  %v10044 = vmul.f32 %v9926, 1.442695
  %v10045 = vpow.pop %v10044
  %v10046 = vmul.f32 %v9927, 1.442695
  %v10047 = vpow.pop %v10046
  %v10048 = vmul.f32 %v9928, 1.442695
  %v10049 = vpow.pop %v10048
  %v10050 = vmul.f32 %v9929, 1.442695
  %v10051 = vpow.pop %v10050
  %v10052 = vmul.f32 %v9930, 1.442695
  %v10053 = vpow.pop %v10052
  %v10054 = vmul.f32 %v9931, 1.442695
  %v10055 = vpow.pop %v10054
  %v10056 = vmul.f32 %v9932, 1.442695
  %v10057 = vpow.pop %v10056
  %v10058 = vmul.f32 %v9933, 1.442695
  %v10059 = vpow.pop %v10058
  %v10060 = vmul.f32 %v9934, 1.442695
  %v10061 = vpow.pop %v10060
  %v10062 = vmul.f32 %v9935, 1.442695
  %v10063 = vpow.pop %v10062
  %v10064 = vmul.f32 %v9936, 1.442695
  %v10065 = vpow.pop %v10064
  %v10066 = vmul.f32 %v9937, 1.442695
  %v10067 = vpow.pop %v10066
  %v10068 = vmul.f32 %v9938, 1.442695
  %v10069 = vpow.pop %v10068
  %v10070 = vmul.f32 %v9939, 1.442695
  %v10071 = vpow.pop %v10070
  %v10072 = vmul.f32 %v9940, 1.442695
  %v10073 = vpow.pop %v10072
  %v10074 = vmul.f32 %v9941, 1.442695
  %v10075 = vpow.pop %v10074
  %v10076 = vmul.f32 %v9942, 1.442695
  %v10077 = vpow.pop %v10076
  %v10078 = vmul.f32 %v9943, 1.442695
  %v10079 = vpow.pop %v10078
  %v10080 = vmul.f32 %v9944, 1.442695
  %v10081 = vpow.pop %v10080
  %v10082 = vmul.f32 %v9945, 1.442695
  %v10083 = vpow.pop %v10082
  %v10084 = vmul.f32 %v9946, 1.442695
  %v10085 = vpow.pop %v10084
  %v10086 = vmul.f32 %v9947, 1.442695
  %v10087 = vpow.pop %v10086
  %v10088 = vmul.f32 %v9948, 1.442695
  %v10089 = vpow.pop %v10088
  %v10090 = vmul.f32 %v9949, 1.442695
  %v10091 = vpow.pop %v10090
  %v10092 = vmul.f32 %v9950, 1.442695
  %v10093 = vpow.pop %v10092
  %v10094 = vmul.f32 %v9951, 1.442695
  %v10095 = vpow.pop %v10094
  %v10096 = vmul.f32 %v9952, 1.442695
  %v10097 = vpow.pop %v10096
  %v10098 = vmul.f32 %v9953, 1.442695
  %v10099 = vpow.pop %v10098
  %v10100 = vmul.f32 %v9954, 1.442695
  %v10101 = vpow.pop %v10100
  %v10102 = vmul.f32 %v9955, 1.442695
  %v10103 = vpow.pop %v10102
  %v10104 = vmul.f32 %v9956, 1.442695
  %v10105 = vpow.pop %v10104
  %v10106 = vmul.f32 %v9957, 1.442695
  %v10107 = vpow.pop %v10106
  %v10108 = vmul.f32 %v9958, 1.442695
  %v10109 = vpow.pop %v10108
  %v10110 = vmul.f32 %v9959, 1.442695
  %v10111 = vpow.pop %v10110
  %v10112 = vmul.f32 %v9960, 1.442695
  %v10113 = vpow.pop %v10112
  %v10114 = vmul.f32 %v9961, 1.442695
  %v10115 = vpow.pop %v10114
  %v10116 = vmul.f32 %v9962, 1.442695
  %v10117 = vpow.pop %v10116
  %v10118 = vmul.f32 %v9963, 1.442695
  %v10119 = vpow.pop %v10118
  %v10120 = vmul.f32 %v9964, 1.442695
  %v10121 = vpow.pop %v10120
  %v10122 = vmul.f32 %v9965, 1.442695
  %v10123 = vpow.pop %v10122
  %v10124 = vmul.f32 %v9966, 1.442695
  %v10125 = vpow.pop %v10124
  %v10126 = vmul.f32 %v9967, 1.442695
  %v10127 = vpow.pop %v10126
  %v10128 = vmul.f32 %v9968, 1.442695
  %v10129 = vpow.pop %v10128
  %v10130 = vmul.f32 %v9969, 1.442695
  %v10131 = vpow.pop %v10130
  %v10132 = vmul.f32 %v9970, 1.442695
  %v10133 = vpow.pop %v10132
  %v10134 = vmul.f32 %v9971, 1.442695
  %v10135 = vpow.pop %v10134
  %v10136 = vmul.f32 %v9972, 1.442695
  %v10137 = vpow.pop %v10136
  %v10138 = vmul.f32 %v9973, 1.442695
  %v10139 = vpow.pop %v10138
  %v10140 = vmul.f32 %v9974, 1.442695
  %v10141 = vpow.pop %v10140
  %v10142 = vmul.f32 %v9975, 1.442695
  %v10143 = vpow.pop %v10142
  %v10144 = vmul.f32 %v9976, 1.442695
  %v10145 = vpow.pop %v10144
  %v10146 = vmul.f32 %v9977, 1.442695
  %v10147 = vpow.pop %v10146
  %v10148 = vmul.f32 %v9978, 1.442695
  %v10149 = vpow.pop %v10148
  %v10150 = vmul.f32 %v9979, 1.442695
  %v10151 = vpow.pop %v10150
  %v10152 = vmul.f32 %v9980, 1.442695
  %v10153 = vpow.pop %v10152
  %v10154 = vmul.f32 %v9981, 1.442695
  %v10155 = vpow.pop %v10154
  %v10156 = vmul.f32 %v9982, 1.442695
  %v10157 = vpow.pop %v10156
  %v10158 = vmul.f32 %v9983, 1.442695
  %v10159 = vpow.pop %v10158
  %v10160 = vmul.f32 %v9984, 1.442695
  %v10161 = vpow.pop %v10160
  %v10162 = vmul.f32 %v9985, 1.442695
  %v10163 = vpow.pop %v10162
  %v10164 = vmul.f32 %v9986, 1.442695
  %v10165 = vpow.pop %v10164
  %v10166 = vmul.f32 %v9987, 1.442695
  %v10167 = vpow.pop %v10166
  %v10168 = vmul.f32 %v9988, 1.442695
  %v10169 = vpow.pop %v10168
  %v10170 = vmul.f32 %v9989, 1.442695
  %v10171 = vpow.pop %v10170
  %v10172 = vmul.f32 %v9990, 1.442695
  %v10173 = vpow.pop %v10172
  %v10174 = vmul.f32 %v9991, 1.442695
  %v10175 = vpow.pop %v10174
  %v10176 = vmul.f32 %v9992, 1.442695
  %v10177 = vpow.pop %v10176
  %v10178 = vmul.f32 %v9993, 1.442695
  %v10179 = vpow.pop %v10178
  %v10180 = vmul.f32 %v9994, 1.442695
  %v10181 = vpow.pop %v10180
  %v10182 = vmul.f32 %v9995, 1.442695
  %v10183 = vpow.pop %v10182
  %v10184 = vmul.f32 %v9996, 1.442695
  %v10185 = vpow.pop %v10184
  %v10186 = vmul.f32 %v9997, 1.442695
  %v10187 = vpow.pop %v10186
  %v10188 = vmul.f32 %v9998, 1.442695
  %v10189 = vpow.pop %v10188
  %v10190 = vmul.f32 %v9999, 1.442695
  %v10191 = vpow.pop %v10190
  %v10192 = vadd.f32 %v10001, 1.0
  %v10193 = vadd.f32 %v10003, 1.0
  %v10194 = vadd.f32 %v10005, 1.0
  %v10195 = vadd.f32 %v10007, 1.0
  %v10196 = vadd.f32 %v10009, 1.0
  %v10197 = vadd.f32 %v10011, 1.0
  %v10198 = vadd.f32 %v10013, 1.0
  %v10199 = vadd.f32 %v10015, 1.0
  %v10200 = vadd.f32 %v10017, 1.0
  %v10201 = vadd.f32 %v10019, 1.0
  %v10202 = vadd.f32 %v10021, 1.0
  %v10203 = vadd.f32 %v10023, 1.0
  %v10204 = vadd.f32 %v10025, 1.0
  %v10205 = vadd.f32 %v10027, 1.0
  %v10206 = vadd.f32 %v10029, 1.0
  %v10207 = vadd.f32 %v10031, 1.0
  %v10208 = vadd.f32 %v10033, 1.0
  %v10209 = vadd.f32 %v10035, 1.0
  %v10210 = vadd.f32 %v10037, 1.0
  %v10211 = vadd.f32 %v10039, 1.0
  %v10212 = vadd.f32 %v10041, 1.0
  %v10213 = vadd.f32 %v10043, 1.0
  %v10214 = vadd.f32 %v10045, 1.0
  %v10215 = vadd.f32 %v10047, 1.0
  %v10216 = vadd.f32 %v10049, 1.0
  %v10217 = vadd.f32 %v10051, 1.0
  %v10218 = vadd.f32 %v10053, 1.0
  %v10219 = vadd.f32 %v10055, 1.0
  %v10220 = vadd.f32 %v10057, 1.0
  %v10221 = vadd.f32 %v10059, 1.0
  %v10222 = vadd.f32 %v10061, 1.0
  %v10223 = vadd.f32 %v10063, 1.0
  %v10224 = vadd.f32 %v10065, 1.0
  %v10225 = vadd.f32 %v10067, 1.0
  %v10226 = vadd.f32 %v10069, 1.0
  %v10227 = vadd.f32 %v10071, 1.0
  %v10228 = vadd.f32 %v10073, 1.0
  %v10229 = vadd.f32 %v10075, 1.0
  %v10230 = vadd.f32 %v10077, 1.0
  %v10231 = vadd.f32 %v10079, 1.0
  %v10232 = vadd.f32 %v10081, 1.0
  %v10233 = vadd.f32 %v10083, 1.0
  %v10234 = vadd.f32 %v10085, 1.0
  %v10235 = vadd.f32 %v10087, 1.0
  %v10236 = vadd.f32 %v10089, 1.0
  %v10237 = vadd.f32 %v10091, 1.0
  %v10238 = vadd.f32 %v10093, 1.0
  %v10239 = vadd.f32 %v10095, 1.0
  %v10240 = vadd.f32 %v10097, 1.0
  %v10241 = vadd.f32 %v10099, 1.0
  %v10242 = vadd.f32 %v10101, 1.0
  %v10243 = vadd.f32 %v10103, 1.0
  %v10244 = vadd.f32 %v10105, 1.0
  %v10245 = vadd.f32 %v10107, 1.0
  %v10246 = vadd.f32 %v10109, 1.0
  %v10247 = vadd.f32 %v10111, 1.0
  %v10248 = vadd.f32 %v10113, 1.0
  %v10249 = vadd.f32 %v10115, 1.0
  %v10250 = vadd.f32 %v10117, 1.0
  %v10251 = vadd.f32 %v10119, 1.0
  %v10252 = vadd.f32 %v10121, 1.0
  %v10253 = vadd.f32 %v10123, 1.0
  %v10254 = vadd.f32 %v10125, 1.0
  %v10255 = vadd.f32 %v10127, 1.0
  %v10256 = vadd.f32 %v10129, 1.0
  %v10257 = vadd.f32 %v10131, 1.0
  %v10258 = vadd.f32 %v10133, 1.0
  %v10259 = vadd.f32 %v10135, 1.0
  %v10260 = vadd.f32 %v10137, 1.0
  %v10261 = vadd.f32 %v10139, 1.0
  %v10262 = vadd.f32 %v10141, 1.0
  %v10263 = vadd.f32 %v10143, 1.0
  %v10264 = vadd.f32 %v10145, 1.0
  %v10265 = vadd.f32 %v10147, 1.0
  %v10266 = vadd.f32 %v10149, 1.0
  %v10267 = vadd.f32 %v10151, 1.0
  %v10268 = vadd.f32 %v10153, 1.0
  %v10269 = vadd.f32 %v10155, 1.0
  %v10270 = vadd.f32 %v10157, 1.0
  %v10271 = vadd.f32 %v10159, 1.0
  %v10272 = vadd.f32 %v10161, 1.0
  %v10273 = vadd.f32 %v10163, 1.0
  %v10274 = vadd.f32 %v10165, 1.0
  %v10275 = vadd.f32 %v10167, 1.0
  %v10276 = vadd.f32 %v10169, 1.0
  %v10277 = vadd.f32 %v10171, 1.0
  %v10278 = vadd.f32 %v10173, 1.0
  %v10279 = vadd.f32 %v10175, 1.0
  %v10280 = vadd.f32 %v10177, 1.0
  %v10281 = vadd.f32 %v10179, 1.0
  %v10282 = vadd.f32 %v10181, 1.0
  %v10283 = vadd.f32 %v10183, 1.0
  %v10284 = vadd.f32 %v10185, 1.0
  %v10285 = vadd.f32 %v10187, 1.0
  %v10286 = vadd.f32 %v10189, 1.0
  %v10287 = vadd.f32 %v10191, 1.0
  %v10288 = vrcp.pop %v10192
  %v10289 = vrcp.pop %v10193
  %v10290 = vrcp.pop %v10194
  %v10291 = vrcp.pop %v10195
  %v10292 = vrcp.pop %v10196
  %v10293 = vrcp.pop %v10197
  %v10294 = vrcp.pop %v10198
  %v10295 = vrcp.pop %v10199
  %v10296 = vrcp.pop %v10200
  %v10297 = vrcp.pop %v10201
  %v10298 = vrcp.pop %v10202
  %v10299 = vrcp.pop %v10203
  %v10300 = vrcp.pop %v10204
  %v10301 = vrcp.pop %v10205
  %v10302 = vrcp.pop %v10206
  %v10303 = vrcp.pop %v10207
  %v10304 = vrcp.pop %v10208
  %v10305 = vrcp.pop %v10209
  %v10306 = vrcp.pop %v10210
  %v10307 = vrcp.pop %v10211
  %v10308 = vrcp.pop %v10212
  %v10309 = vrcp.pop %v10213
  %v10310 = vrcp.pop %v10214
  %v10311 = vrcp.pop %v10215
  %v10312 = vrcp.pop %v10216
  %v10313 = vrcp.pop %v10217
  %v10314 = vrcp.pop %v10218
  %v10315 = vrcp.pop %v10219
  %v10316 = vrcp.pop %v10220
  %v10317 = vrcp.pop %v10221
  %v10318 = vrcp.pop %v10222
  %v10319 = vrcp.pop %v10223
  %v10320 = vrcp.pop %v10224
  %v10321 = vrcp.pop %v10225
  %v10322 = vrcp.pop %v10226
  %v10323 = vrcp.pop %v10227
  %v10324 = vrcp.pop %v10228
  %v10325 = vrcp.pop %v10229
  %v10326 = vrcp.pop %v10230
  %v10327 = vrcp.pop %v10231
  %v10328 = vrcp.pop %v10232
  %v10329 = vrcp.pop %v10233
  %v10330 = vrcp.pop %v10234
  %v10331 = vrcp.pop %v10235
  %v10332 = vrcp.pop %v10236
  %v10333 = vrcp.pop %v10237
  %v10334 = vrcp.pop %v10238
  %v10335 = vrcp.pop %v10239
  %v10336 = vrcp.pop %v10240
  %v10337 = vrcp.pop %v10241
  %v10338 = vrcp.pop %v10242
  %v10339 = vrcp.pop %v10243
  %v10340 = vrcp.pop %v10244
  %v10341 = vrcp.pop %v10245
  %v10342 = vrcp.pop %v10246
  %v10343 = vrcp.pop %v10247
  %v10344 = vrcp.pop %v10248
  %v10345 = vrcp.pop %v10249
  %v10346 = vrcp.pop %v10250
  %v10347 = vrcp.pop %v10251
  %v10348 = vrcp.pop %v10252
  %v10349 = vrcp.pop %v10253
  %v10350 = vrcp.pop %v10254
  %v10351 = vrcp.pop %v10255
  %v10352 = vrcp.pop %v10256
  %v10353 = vrcp.pop %v10257
  %v10354 = vrcp.pop %v10258
  %v10355 = vrcp.pop %v10259
  %v10356 = vrcp.pop %v10260
  %v10357 = vrcp.pop %v10261
  %v10358 = vrcp.pop %v10262
  %v10359 = vrcp.pop %v10263
  %v10360 = vrcp.pop %v10264
  %v10361 = vrcp.pop %v10265
  %v10362 = vrcp.pop %v10266
  %v10363 = vrcp.pop %v10267
  %v10364 = vrcp.pop %v10268
  %v10365 = vrcp.pop %v10269
  %v10366 = vrcp.pop %v10270
  %v10367 = vrcp.pop %v10271
  %v10368 = vrcp.pop %v10272
  %v10369 = vrcp.pop %v10273
  %v10370 = vrcp.pop %v10274
  %v10371 = vrcp.pop %v10275
  %v10372 = vrcp.pop %v10276
  %v10373 = vrcp.pop %v10277
  %v10374 = vrcp.pop %v10278
  %v10375 = vrcp.pop %v10279
  %v10376 = vrcp.pop %v10280
  %v10377 = vrcp.pop %v10281
  %v10378 = vrcp.pop %v10282
  %v10379 = vrcp.pop %v10283
  %v10380 = vrcp.pop %v10284
  %v10381 = vrcp.pop %v10285
  %v10382 = vrcp.pop %v10286
  %v10383 = vrcp.pop %v10287
  %vm10384 = vcmask 7168
  %10385 = vst.msk [vmem:[%s18] sm:$0xff] %vm10384, %v3596
  %10386 = vst.msk [vmem:[%s18 + $0x8] sm:$0xff] %vm10384, %v3599
  %10387 = vst.msk [vmem:[%s18 + $0x10] sm:$0xff] %vm10384, %v3602
  %10388 = vst.msk [vmem:[%s18 + $0x18] sm:$0xff] %vm10384, %v3605
  %10389 = vst.msk [vmem:[%s18 + $0x20] sm:$0xff] %vm10384, %v3608
  %10390 = vst.msk [vmem:[%s18 + $0x28] sm:$0xff] %vm10384, %v3611
  %10391 = vst.msk [vmem:[%s18 + $0x30] sm:$0xff] %vm10384, %v3614
  %10392 = vst.msk [vmem:[%s18 + $0x38] sm:$0xff] %vm10384, %v3617
  %10393 = vst.msk [vmem:[%s18 + $0x40] sm:$0xff] %vm10384, %v3620
  %10394 = vst.msk [vmem:[%s18 + $0x48] sm:$0xff] %vm10384, %v3623
  %10395 = vst.msk [vmem:[%s18 + $0x50] sm:$0xff] %vm10384, %v3626
  %10396 = vst.msk [vmem:[%s18 + $0x58] sm:$0xff] %vm10384, %v3629
  %10397 = vst.msk [vmem:[%s18 + $0x60] sm:$0xff] %vm10384, %v3632
  %10398 = vst.msk [vmem:[%s18 + $0x68] sm:$0xff] %vm10384, %v3635
  %10399 = vst.msk [vmem:[%s18 + $0x70] sm:$0xff] %vm10384, %v3638
  %10400 = vst.msk [vmem:[%s18 + $0x78] sm:$0xff] %vm10384, %v3641
  %10401 = vst.msk [vmem:[%s18 + $0x80] sm:$0xff] %vm10384, %v3644
  %10402 = vst.msk [vmem:[%s18 + $0x88] sm:$0xff] %vm10384, %v3647
  %10403 = vst.msk [vmem:[%s18 + $0x90] sm:$0xff] %vm10384, %v3650
  %10404 = vst.msk [vmem:[%s18 + $0x98] sm:$0xff] %vm10384, %v3653
  %10405 = vst.msk [vmem:[%s18 + $0xa0] sm:$0xff] %vm10384, %v3656
  %10406 = vst.msk [vmem:[%s18 + $0xa8] sm:$0xff] %vm10384, %v3659
  %10407 = vst.msk [vmem:[%s18 + $0xb0] sm:$0xff] %vm10384, %v3662
  %10408 = vst.msk [vmem:[%s18 + $0xb8] sm:$0xff] %vm10384, %v3665
  %10409 = vst.msk [vmem:[%s18 + $0xc0] sm:$0xff] %vm10384, %v3668
  %10410 = vst.msk [vmem:[%s18 + $0xc8] sm:$0xff] %vm10384, %v3671
  %10411 = vst.msk [vmem:[%s18 + $0xd0] sm:$0xff] %vm10384, %v3674
  %10412 = vst.msk [vmem:[%s18 + $0xd8] sm:$0xff] %vm10384, %v3677
  %10413 = vst.msk [vmem:[%s18 + $0xe0] sm:$0xff] %vm10384, %v3680
  %10414 = vst.msk [vmem:[%s18 + $0xe8] sm:$0xff] %vm10384, %v3683
  %10415 = vst.msk [vmem:[%s18 + $0xf0] sm:$0xff] %vm10384, %v3686
  %10416 = vst.msk [vmem:[%s18 + $0xf8] sm:$0xff] %vm10384, %v3689
  %10417 = vst.msk [vmem:[%s18 + $0x100] sm:$0xff] %vm10384, %v3692
  %10418 = vst.msk [vmem:[%s18 + $0x108] sm:$0xff] %vm10384, %v3695
  %10419 = vst.msk [vmem:[%s18 + $0x110] sm:$0xff] %vm10384, %v3698
  %10420 = vst.msk [vmem:[%s18 + $0x118] sm:$0xff] %vm10384, %v3701
  %10421 = vst.msk [vmem:[%s18 + $0x120] sm:$0xff] %vm10384, %v3704
  %10422 = vst.msk [vmem:[%s18 + $0x128] sm:$0xff] %vm10384, %v3707
  %10423 = vst.msk [vmem:[%s18 + $0x130] sm:$0xff] %vm10384, %v3710
  %10424 = vst.msk [vmem:[%s18 + $0x138] sm:$0xff] %vm10384, %v3713
  %10425 = vst.msk [vmem:[%s18 + $0x140] sm:$0xff] %vm10384, %v3716
  %10426 = vst.msk [vmem:[%s18 + $0x148] sm:$0xff] %vm10384, %v3719
  %10427 = vst.msk [vmem:[%s18 + $0x150] sm:$0xff] %vm10384, %v3722
  %10428 = vst.msk [vmem:[%s18 + $0x158] sm:$0xff] %vm10384, %v3725
  %10429 = vst.msk [vmem:[%s18 + $0x160] sm:$0xff] %vm10384, %v3728
  %10430 = vst.msk [vmem:[%s18 + $0x168] sm:$0xff] %vm10384, %v3731
  %10431 = vst.msk [vmem:[%s18 + $0x170] sm:$0xff] %vm10384, %v3734
  %10432 = vst.msk [vmem:[%s18 + $0x178] sm:$0xff] %vm10384, %v3737
  %10433 = vst.msk [vmem:[%s18 + $0x180] sm:$0xff] %vm10384, %v3740
  %10434 = vst.msk [vmem:[%s18 + $0x188] sm:$0xff] %vm10384, %v3743
  %10435 = vst.msk [vmem:[%s18 + $0x190] sm:$0xff] %vm10384, %v3746
  %10436 = vst.msk [vmem:[%s18 + $0x198] sm:$0xff] %vm10384, %v3749
  %10437 = vst.msk [vmem:[%s18 + $0x1a0] sm:$0xff] %vm10384, %v3752
  %10438 = vst.msk [vmem:[%s18 + $0x1a8] sm:$0xff] %vm10384, %v3755
  %10439 = vst.msk [vmem:[%s18 + $0x1b0] sm:$0xff] %vm10384, %v3758
  %10440 = vst.msk [vmem:[%s18 + $0x1b8] sm:$0xff] %vm10384, %v3761
  %10441 = vst.msk [vmem:[%s18 + $0x1c0] sm:$0xff] %vm10384, %v3764
  %10442 = vst.msk [vmem:[%s18 + $0x1c8] sm:$0xff] %vm10384, %v3767
  %10443 = vst.msk [vmem:[%s18 + $0x1d0] sm:$0xff] %vm10384, %v3770
  %10444 = vst.msk [vmem:[%s18 + $0x1d8] sm:$0xff] %vm10384, %v3773
  %10445 = vst.msk [vmem:[%s18 + $0x1e0] sm:$0xff] %vm10384, %v3776
  %10446 = vst.msk [vmem:[%s18 + $0x1e8] sm:$0xff] %vm10384, %v3779
  %10447 = vst.msk [vmem:[%s18 + $0x1f0] sm:$0xff] %vm10384, %v3782
  %10448 = vst.msk [vmem:[%s18 + $0x1f8] sm:$0xff] %vm10384, %v3785
  %10449 = vst.msk [vmem:[%s18 + $0x200] sm:$0xff] %vm10384, %v3788
  %10450 = vst.msk [vmem:[%s18 + $0x208] sm:$0xff] %vm10384, %v3791
  %10451 = vst.msk [vmem:[%s18 + $0x210] sm:$0xff] %vm10384, %v3794
  %10452 = vst.msk [vmem:[%s18 + $0x218] sm:$0xff] %vm10384, %v3797
  %10453 = vst.msk [vmem:[%s18 + $0x220] sm:$0xff] %vm10384, %v3800
  %10454 = vst.msk [vmem:[%s18 + $0x228] sm:$0xff] %vm10384, %v3803
  %10455 = vst.msk [vmem:[%s18 + $0x230] sm:$0xff] %vm10384, %v3806
  %10456 = vst.msk [vmem:[%s18 + $0x238] sm:$0xff] %vm10384, %v3809
  %10457 = vst.msk [vmem:[%s18 + $0x240] sm:$0xff] %vm10384, %v3812
  %10458 = vst.msk [vmem:[%s18 + $0x248] sm:$0xff] %vm10384, %v3815
  %10459 = vst.msk [vmem:[%s18 + $0x250] sm:$0xff] %vm10384, %v3818
  %10460 = vst.msk [vmem:[%s18 + $0x258] sm:$0xff] %vm10384, %v3821
  %10461 = vst.msk [vmem:[%s18 + $0x260] sm:$0xff] %vm10384, %v3824
  %10462 = vst.msk [vmem:[%s18 + $0x268] sm:$0xff] %vm10384, %v3827
  %10463 = vst.msk [vmem:[%s18 + $0x270] sm:$0xff] %vm10384, %v3830
  %10464 = vst.msk [vmem:[%s18 + $0x278] sm:$0xff] %vm10384, %v3833
  %10465 = vst.msk [vmem:[%s18 + $0x280] sm:$0xff] %vm10384, %v3836
  %10466 = vst.msk [vmem:[%s18 + $0x288] sm:$0xff] %vm10384, %v3839
  %10467 = vst.msk [vmem:[%s18 + $0x290] sm:$0xff] %vm10384, %v3842
  %10468 = vst.msk [vmem:[%s18 + $0x298] sm:$0xff] %vm10384, %v3845
  %10469 = vst.msk [vmem:[%s18 + $0x2a0] sm:$0xff] %vm10384, %v3848
  %10470 = vst.msk [vmem:[%s18 + $0x2a8] sm:$0xff] %vm10384, %v3851
  %10471 = vst.msk [vmem:[%s18 + $0x2b0] sm:$0xff] %vm10384, %v3854
  %10472 = vst.msk [vmem:[%s18 + $0x2b8] sm:$0xff] %vm10384, %v3857
  %10473 = vst.msk [vmem:[%s18 + $0x2c0] sm:$0xff] %vm10384, %v3860
  %10474 = vst.msk [vmem:[%s18 + $0x2c8] sm:$0xff] %vm10384, %v3863
  %10475 = vst.msk [vmem:[%s18 + $0x2d0] sm:$0xff] %vm10384, %v3866
  %10476 = vst.msk [vmem:[%s18 + $0x2d8] sm:$0xff] %vm10384, %v3869
  %10477 = vst.msk [vmem:[%s18 + $0x2e0] sm:$0xff] %vm10384, %v3872
  %10478 = vst.msk [vmem:[%s18 + $0x2e8] sm:$0xff] %vm10384, %v3875
  %10479 = vst.msk [vmem:[%s18 + $0x2f0] sm:$0xff] %vm10384, %v3878
  %10480 = vst.msk [vmem:[%s18 + $0x2f8] sm:$0xff] %vm10384, %v3881
  %10577 = vrot.lane.b32.xlu0 %v4986, 1
  %v10578 = vpop.permute.xlu0 %10577
  %10579 = vrot.lane.b32.xlu0 %v4989, 1
  %v10580 = vpop.permute.xlu0 %10579
  %10581 = vrot.lane.b32.xlu0 %v4992, 1
  %v10582 = vpop.permute.xlu0 %10581
  %10583 = vrot.lane.b32.xlu0 %v4995, 1
  %v10584 = vpop.permute.xlu0 %10583
  %10585 = vrot.lane.b32.xlu0 %v4998, 1
  %v10586 = vpop.permute.xlu0 %10585
  %10587 = vrot.lane.b32.xlu0 %v5001, 1
  %v10588 = vpop.permute.xlu0 %10587
  %10589 = vrot.lane.b32.xlu0 %v5004, 1
  %v10590 = vpop.permute.xlu0 %10589
  %10591 = vrot.lane.b32.xlu0 %v5007, 1
  %v10592 = vpop.permute.xlu0 %10591
  %10593 = vrot.lane.b32.xlu0 %v5010, 1
  %v10594 = vpop.permute.xlu0 %10593
  %10595 = vrot.lane.b32.xlu0 %v5013, 1
  %v10596 = vpop.permute.xlu0 %10595
  %10597 = vrot.lane.b32.xlu0 %v5016, 1
  %v10598 = vpop.permute.xlu0 %10597
  %10599 = vrot.lane.b32.xlu0 %v5019, 1
  %v10600 = vpop.permute.xlu0 %10599
  %10601 = vrot.lane.b32.xlu0 %v5022, 1
  %v10602 = vpop.permute.xlu0 %10601
  %10603 = vrot.lane.b32.xlu0 %v5025, 1
  %v10604 = vpop.permute.xlu0 %10603
  %10605 = vrot.lane.b32.xlu0 %v5028, 1
  %v10606 = vpop.permute.xlu0 %10605
  %10607 = vrot.lane.b32.xlu0 %v5031, 1
  %v10608 = vpop.permute.xlu0 %10607
  %10609 = vrot.lane.b32.xlu0 %v5034, 1
  %v10610 = vpop.permute.xlu0 %10609
  %10611 = vrot.lane.b32.xlu0 %v5037, 1
  %v10612 = vpop.permute.xlu0 %10611
  %10613 = vrot.lane.b32.xlu0 %v5040, 1
  %v10614 = vpop.permute.xlu0 %10613
  %10615 = vrot.lane.b32.xlu0 %v5043, 1
  %v10616 = vpop.permute.xlu0 %10615
  %10617 = vrot.lane.b32.xlu0 %v5046, 1
  %v10618 = vpop.permute.xlu0 %10617
  %10619 = vrot.lane.b32.xlu0 %v5049, 1
  %v10620 = vpop.permute.xlu0 %10619
  %10621 = vrot.lane.b32.xlu0 %v5052, 1
  %v10622 = vpop.permute.xlu0 %10621
  %10623 = vrot.lane.b32.xlu0 %v5055, 1
  %v10624 = vpop.permute.xlu0 %10623
  %10625 = vrot.lane.b32.xlu0 %v5058, 1
  %v10626 = vpop.permute.xlu0 %10625
  %10627 = vrot.lane.b32.xlu0 %v5061, 1
  %v10628 = vpop.permute.xlu0 %10627
  %10629 = vrot.lane.b32.xlu0 %v5064, 1
  %v10630 = vpop.permute.xlu0 %10629
  %10631 = vrot.lane.b32.xlu0 %v5067, 1
  %v10632 = vpop.permute.xlu0 %10631
  %10633 = vrot.lane.b32.xlu0 %v5070, 1
  %v10634 = vpop.permute.xlu0 %10633
  %10635 = vrot.lane.b32.xlu0 %v5073, 1
  %v10636 = vpop.permute.xlu0 %10635
  %10637 = vrot.lane.b32.xlu0 %v5076, 1
  %v10638 = vpop.permute.xlu0 %10637
  %10639 = vrot.lane.b32.xlu0 %v5079, 1
  %v10640 = vpop.permute.xlu0 %10639
  %10641 = vrot.lane.b32.xlu0 %v5082, 1
  %v10642 = vpop.permute.xlu0 %10641
  %10643 = vrot.lane.b32.xlu0 %v5085, 1
  %v10644 = vpop.permute.xlu0 %10643
  %10645 = vrot.lane.b32.xlu0 %v5088, 1
  %v10646 = vpop.permute.xlu0 %10645
  %10647 = vrot.lane.b32.xlu0 %v5091, 1
  %v10648 = vpop.permute.xlu0 %10647
  %10649 = vrot.lane.b32.xlu0 %v5094, 1
  %v10650 = vpop.permute.xlu0 %10649
  %10651 = vrot.lane.b32.xlu0 %v5097, 1
  %v10652 = vpop.permute.xlu0 %10651
  %10653 = vrot.lane.b32.xlu0 %v5100, 1
  %v10654 = vpop.permute.xlu0 %10653
  %10655 = vrot.lane.b32.xlu0 %v5103, 1
  %v10656 = vpop.permute.xlu0 %10655
  %10657 = vrot.lane.b32.xlu0 %v5106, 1
  %v10658 = vpop.permute.xlu0 %10657
  %10659 = vrot.lane.b32.xlu0 %v5109, 1
  %v10660 = vpop.permute.xlu0 %10659
  %10661 = vrot.lane.b32.xlu0 %v5112, 1
  %v10662 = vpop.permute.xlu0 %10661
  %10663 = vrot.lane.b32.xlu0 %v5115, 1
  %v10664 = vpop.permute.xlu0 %10663
  %10665 = vrot.lane.b32.xlu0 %v5118, 1
  %v10666 = vpop.permute.xlu0 %10665
  %10667 = vrot.lane.b32.xlu0 %v5121, 1
  %v10668 = vpop.permute.xlu0 %10667
  %10669 = vrot.lane.b32.xlu0 %v5124, 1
  %v10670 = vpop.permute.xlu0 %10669
  %10671 = vrot.lane.b32.xlu0 %v5127, 1
  %v10672 = vpop.permute.xlu0 %10671
  %10673 = vrot.lane.b32.xlu0 %v5130, 1
  %v10674 = vpop.permute.xlu0 %10673
  %10675 = vrot.lane.b32.xlu0 %v5133, 1
  %v10676 = vpop.permute.xlu0 %10675
  %10677 = vrot.lane.b32.xlu0 %v5136, 1
  %v10678 = vpop.permute.xlu0 %10677
  %10679 = vrot.lane.b32.xlu0 %v5139, 1
  %v10680 = vpop.permute.xlu0 %10679
  %10681 = vrot.lane.b32.xlu0 %v5142, 1
  %v10682 = vpop.permute.xlu0 %10681
  %10683 = vrot.lane.b32.xlu0 %v5145, 1
  %v10684 = vpop.permute.xlu0 %10683
  %10685 = vrot.lane.b32.xlu0 %v5148, 1
  %v10686 = vpop.permute.xlu0 %10685
  %10687 = vrot.lane.b32.xlu0 %v5151, 1
  %v10688 = vpop.permute.xlu0 %10687
  %10689 = vrot.lane.b32.xlu0 %v5154, 1
  %v10690 = vpop.permute.xlu0 %10689
  %10691 = vrot.lane.b32.xlu0 %v5157, 1
  %v10692 = vpop.permute.xlu0 %10691
  %10693 = vrot.lane.b32.xlu0 %v5160, 1
  %v10694 = vpop.permute.xlu0 %10693
  %10695 = vrot.lane.b32.xlu0 %v5163, 1
  %v10696 = vpop.permute.xlu0 %10695
  %10697 = vrot.lane.b32.xlu0 %v5166, 1
  %v10698 = vpop.permute.xlu0 %10697
  %10699 = vrot.lane.b32.xlu0 %v5169, 1
  %v10700 = vpop.permute.xlu0 %10699
  %10701 = vrot.lane.b32.xlu0 %v5172, 1
  %v10702 = vpop.permute.xlu0 %10701
  %10703 = vrot.lane.b32.xlu0 %v5175, 1
  %v10704 = vpop.permute.xlu0 %10703
  %10705 = vrot.lane.b32.xlu0 %v5178, 1
  %v10706 = vpop.permute.xlu0 %10705
  %10707 = vrot.lane.b32.xlu0 %v5181, 1
  %v10708 = vpop.permute.xlu0 %10707
  %10709 = vrot.lane.b32.xlu0 %v5184, 1
  %v10710 = vpop.permute.xlu0 %10709
  %10711 = vrot.lane.b32.xlu0 %v5187, 1
  %v10712 = vpop.permute.xlu0 %10711
  %10713 = vrot.lane.b32.xlu0 %v5190, 1
  %v10714 = vpop.permute.xlu0 %10713
  %10715 = vrot.lane.b32.xlu0 %v5193, 1
  %v10716 = vpop.permute.xlu0 %10715
  %10717 = vrot.lane.b32.xlu0 %v5196, 1
  %v10718 = vpop.permute.xlu0 %10717
  %10719 = vrot.lane.b32.xlu0 %v5199, 1
  %v10720 = vpop.permute.xlu0 %10719
  %10721 = vrot.lane.b32.xlu0 %v5202, 1
  %v10722 = vpop.permute.xlu0 %10721
  %10723 = vrot.lane.b32.xlu0 %v5205, 1
  %v10724 = vpop.permute.xlu0 %10723
  %10725 = vrot.lane.b32.xlu0 %v5208, 1
  %v10726 = vpop.permute.xlu0 %10725
  %10727 = vrot.lane.b32.xlu0 %v5211, 1
  %v10728 = vpop.permute.xlu0 %10727
  %10729 = vrot.lane.b32.xlu0 %v5214, 1
  %v10730 = vpop.permute.xlu0 %10729
  %10731 = vrot.lane.b32.xlu0 %v5217, 1
  %v10732 = vpop.permute.xlu0 %10731
  %10733 = vrot.lane.b32.xlu0 %v5220, 1
  %v10734 = vpop.permute.xlu0 %10733
  %10735 = vrot.lane.b32.xlu0 %v5223, 1
  %v10736 = vpop.permute.xlu0 %10735
  %10737 = vrot.lane.b32.xlu0 %v5226, 1
  %v10738 = vpop.permute.xlu0 %10737
  %10739 = vrot.lane.b32.xlu0 %v5229, 1
  %v10740 = vpop.permute.xlu0 %10739
  %10741 = vrot.lane.b32.xlu0 %v5232, 1
  %v10742 = vpop.permute.xlu0 %10741
  %10743 = vrot.lane.b32.xlu0 %v5235, 1
  %v10744 = vpop.permute.xlu0 %10743
  %10745 = vrot.lane.b32.xlu0 %v5238, 1
  %v10746 = vpop.permute.xlu0 %10745
  %10747 = vrot.lane.b32.xlu0 %v5241, 1
  %v10748 = vpop.permute.xlu0 %10747
  %10749 = vrot.lane.b32.xlu0 %v5244, 1
  %v10750 = vpop.permute.xlu0 %10749
  %10751 = vrot.lane.b32.xlu0 %v5247, 1
  %v10752 = vpop.permute.xlu0 %10751
  %10753 = vrot.lane.b32.xlu0 %v5250, 1
  %v10754 = vpop.permute.xlu0 %10753
  %10755 = vrot.lane.b32.xlu0 %v5253, 1
  %v10756 = vpop.permute.xlu0 %10755
  %10757 = vrot.lane.b32.xlu0 %v5256, 1
  %v10758 = vpop.permute.xlu0 %10757
  %10759 = vrot.lane.b32.xlu0 %v5259, 1
  %v10760 = vpop.permute.xlu0 %10759
  %10761 = vrot.lane.b32.xlu0 %v5262, 1
  %v10762 = vpop.permute.xlu0 %10761
  %10763 = vrot.lane.b32.xlu0 %v5265, 1
  %v10764 = vpop.permute.xlu0 %10763
  %10765 = vrot.lane.b32.xlu0 %v5268, 1
  %v10766 = vpop.permute.xlu0 %10765
  %10767 = vrot.lane.b32.xlu0 %v5271, 1
  %v10768 = vpop.permute.xlu0 %10767
  %vm10865 = vcmask 31752
  %10866 = vst.msk [vmem:[%s18] sm:$0xff] %vm10865, %v10578
  %10867 = vst.msk [vmem:[%s18 + $0x8] sm:$0xff] %vm10865, %v10580
  %10868 = vst.msk [vmem:[%s18 + $0x10] sm:$0xff] %vm10865, %v10582
  %10869 = vst.msk [vmem:[%s18 + $0x18] sm:$0xff] %vm10865, %v10584
  %10870 = vst.msk [vmem:[%s18 + $0x20] sm:$0xff] %vm10865, %v10586
  %10871 = vst.msk [vmem:[%s18 + $0x28] sm:$0xff] %vm10865, %v10588
  %10872 = vst.msk [vmem:[%s18 + $0x30] sm:$0xff] %vm10865, %v10590
  %10873 = vst.msk [vmem:[%s18 + $0x38] sm:$0xff] %vm10865, %v10592
  %10874 = vst.msk [vmem:[%s18 + $0x40] sm:$0xff] %vm10865, %v10594
  %10875 = vst.msk [vmem:[%s18 + $0x48] sm:$0xff] %vm10865, %v10596
  %10876 = vst.msk [vmem:[%s18 + $0x50] sm:$0xff] %vm10865, %v10598
  %10877 = vst.msk [vmem:[%s18 + $0x58] sm:$0xff] %vm10865, %v10600
  %10878 = vst.msk [vmem:[%s18 + $0x60] sm:$0xff] %vm10865, %v10602
  %10879 = vst.msk [vmem:[%s18 + $0x68] sm:$0xff] %vm10865, %v10604
  %10880 = vst.msk [vmem:[%s18 + $0x70] sm:$0xff] %vm10865, %v10606
  %10881 = vst.msk [vmem:[%s18 + $0x78] sm:$0xff] %vm10865, %v10608
  %10882 = vst.msk [vmem:[%s18 + $0x80] sm:$0xff] %vm10865, %v10610
  %10883 = vst.msk [vmem:[%s18 + $0x88] sm:$0xff] %vm10865, %v10612
  %10884 = vst.msk [vmem:[%s18 + $0x90] sm:$0xff] %vm10865, %v10614
  %10885 = vst.msk [vmem:[%s18 + $0x98] sm:$0xff] %vm10865, %v10616
  %10886 = vst.msk [vmem:[%s18 + $0xa0] sm:$0xff] %vm10865, %v10618
  %10887 = vst.msk [vmem:[%s18 + $0xa8] sm:$0xff] %vm10865, %v10620
  %10888 = vst.msk [vmem:[%s18 + $0xb0] sm:$0xff] %vm10865, %v10622
  %10889 = vst.msk [vmem:[%s18 + $0xb8] sm:$0xff] %vm10865, %v10624
  %10890 = vst.msk [vmem:[%s18 + $0xc0] sm:$0xff] %vm10865, %v10626
  %10891 = vst.msk [vmem:[%s18 + $0xc8] sm:$0xff] %vm10865, %v10628
  %10892 = vst.msk [vmem:[%s18 + $0xd0] sm:$0xff] %vm10865, %v10630
  %10893 = vst.msk [vmem:[%s18 + $0xd8] sm:$0xff] %vm10865, %v10632
  %10894 = vst.msk [vmem:[%s18 + $0xe0] sm:$0xff] %vm10865, %v10634
  %10895 = vst.msk [vmem:[%s18 + $0xe8] sm:$0xff] %vm10865, %v10636
  %10896 = vst.msk [vmem:[%s18 + $0xf0] sm:$0xff] %vm10865, %v10638
  %10897 = vst.msk [vmem:[%s18 + $0xf8] sm:$0xff] %vm10865, %v10640
  %10898 = vst.msk [vmem:[%s18 + $0x100] sm:$0xff] %vm10865, %v10642
  %10899 = vst.msk [vmem:[%s18 + $0x108] sm:$0xff] %vm10865, %v10644
  %10900 = vst.msk [vmem:[%s18 + $0x110] sm:$0xff] %vm10865, %v10646
  %10901 = vst.msk [vmem:[%s18 + $0x118] sm:$0xff] %vm10865, %v10648
  %10902 = vst.msk [vmem:[%s18 + $0x120] sm:$0xff] %vm10865, %v10650
  %10903 = vst.msk [vmem:[%s18 + $0x128] sm:$0xff] %vm10865, %v10652
  %10904 = vst.msk [vmem:[%s18 + $0x130] sm:$0xff] %vm10865, %v10654
  %10905 = vst.msk [vmem:[%s18 + $0x138] sm:$0xff] %vm10865, %v10656
  %10906 = vst.msk [vmem:[%s18 + $0x140] sm:$0xff] %vm10865, %v10658
  %10907 = vst.msk [vmem:[%s18 + $0x148] sm:$0xff] %vm10865, %v10660
  %10908 = vst.msk [vmem:[%s18 + $0x150] sm:$0xff] %vm10865, %v10662
  %10909 = vst.msk [vmem:[%s18 + $0x158] sm:$0xff] %vm10865, %v10664
  %10910 = vst.msk [vmem:[%s18 + $0x160] sm:$0xff] %vm10865, %v10666
  %10911 = vst.msk [vmem:[%s18 + $0x168] sm:$0xff] %vm10865, %v10668
  %10912 = vst.msk [vmem:[%s18 + $0x170] sm:$0xff] %vm10865, %v10670
  %10913 = vst.msk [vmem:[%s18 + $0x178] sm:$0xff] %vm10865, %v10672
  %10914 = vst.msk [vmem:[%s18 + $0x180] sm:$0xff] %vm10865, %v10674
  %10915 = vst.msk [vmem:[%s18 + $0x188] sm:$0xff] %vm10865, %v10676
  %10916 = vst.msk [vmem:[%s18 + $0x190] sm:$0xff] %vm10865, %v10678
  %10917 = vst.msk [vmem:[%s18 + $0x198] sm:$0xff] %vm10865, %v10680
  %10918 = vst.msk [vmem:[%s18 + $0x1a0] sm:$0xff] %vm10865, %v10682
  %10919 = vst.msk [vmem:[%s18 + $0x1a8] sm:$0xff] %vm10865, %v10684
  %10920 = vst.msk [vmem:[%s18 + $0x1b0] sm:$0xff] %vm10865, %v10686
  %10921 = vst.msk [vmem:[%s18 + $0x1b8] sm:$0xff] %vm10865, %v10688
  %10922 = vst.msk [vmem:[%s18 + $0x1c0] sm:$0xff] %vm10865, %v10690
  %10923 = vst.msk [vmem:[%s18 + $0x1c8] sm:$0xff] %vm10865, %v10692
  %10924 = vst.msk [vmem:[%s18 + $0x1d0] sm:$0xff] %vm10865, %v10694
  %10925 = vst.msk [vmem:[%s18 + $0x1d8] sm:$0xff] %vm10865, %v10696
  %10926 = vst.msk [vmem:[%s18 + $0x1e0] sm:$0xff] %vm10865, %v10698
  %10927 = vst.msk [vmem:[%s18 + $0x1e8] sm:$0xff] %vm10865, %v10700
  %10928 = vst.msk [vmem:[%s18 + $0x1f0] sm:$0xff] %vm10865, %v10702
  %10929 = vst.msk [vmem:[%s18 + $0x1f8] sm:$0xff] %vm10865, %v10704
  %10930 = vst.msk [vmem:[%s18 + $0x200] sm:$0xff] %vm10865, %v10706
  %10931 = vst.msk [vmem:[%s18 + $0x208] sm:$0xff] %vm10865, %v10708
  %10932 = vst.msk [vmem:[%s18 + $0x210] sm:$0xff] %vm10865, %v10710
  %10933 = vst.msk [vmem:[%s18 + $0x218] sm:$0xff] %vm10865, %v10712
  %10934 = vst.msk [vmem:[%s18 + $0x220] sm:$0xff] %vm10865, %v10714
  %10935 = vst.msk [vmem:[%s18 + $0x228] sm:$0xff] %vm10865, %v10716
  %10936 = vst.msk [vmem:[%s18 + $0x230] sm:$0xff] %vm10865, %v10718
  %10937 = vst.msk [vmem:[%s18 + $0x238] sm:$0xff] %vm10865, %v10720
  %10938 = vst.msk [vmem:[%s18 + $0x240] sm:$0xff] %vm10865, %v10722
  %10939 = vst.msk [vmem:[%s18 + $0x248] sm:$0xff] %vm10865, %v10724
  %10940 = vst.msk [vmem:[%s18 + $0x250] sm:$0xff] %vm10865, %v10726
  %10941 = vst.msk [vmem:[%s18 + $0x258] sm:$0xff] %vm10865, %v10728
  %10942 = vst.msk [vmem:[%s18 + $0x260] sm:$0xff] %vm10865, %v10730
  %10943 = vst.msk [vmem:[%s18 + $0x268] sm:$0xff] %vm10865, %v10732
  %10944 = vst.msk [vmem:[%s18 + $0x270] sm:$0xff] %vm10865, %v10734
  %10945 = vst.msk [vmem:[%s18 + $0x278] sm:$0xff] %vm10865, %v10736
  %10946 = vst.msk [vmem:[%s18 + $0x280] sm:$0xff] %vm10865, %v10738
  %10947 = vst.msk [vmem:[%s18 + $0x288] sm:$0xff] %vm10865, %v10740
  %10948 = vst.msk [vmem:[%s18 + $0x290] sm:$0xff] %vm10865, %v10742
  %10949 = vst.msk [vmem:[%s18 + $0x298] sm:$0xff] %vm10865, %v10744
  %10950 = vst.msk [vmem:[%s18 + $0x2a0] sm:$0xff] %vm10865, %v10746
  %10951 = vst.msk [vmem:[%s18 + $0x2a8] sm:$0xff] %vm10865, %v10748
  %10952 = vst.msk [vmem:[%s18 + $0x2b0] sm:$0xff] %vm10865, %v10750
  %10953 = vst.msk [vmem:[%s18 + $0x2b8] sm:$0xff] %vm10865, %v10752
  %10954 = vst.msk [vmem:[%s18 + $0x2c0] sm:$0xff] %vm10865, %v10754
  %10955 = vst.msk [vmem:[%s18 + $0x2c8] sm:$0xff] %vm10865, %v10756
  %10956 = vst.msk [vmem:[%s18 + $0x2d0] sm:$0xff] %vm10865, %v10758
  %10957 = vst.msk [vmem:[%s18 + $0x2d8] sm:$0xff] %vm10865, %v10760
  %10958 = vst.msk [vmem:[%s18 + $0x2e0] sm:$0xff] %vm10865, %v10762
  %10959 = vst.msk [vmem:[%s18 + $0x2e8] sm:$0xff] %vm10865, %v10764
  %10960 = vst.msk [vmem:[%s18 + $0x2f0] sm:$0xff] %vm10865, %v10766
  %10961 = vst.msk [vmem:[%s18 + $0x2f8] sm:$0xff] %vm10865, %v10768
  %11058 = vrot.lane.b32.xlu0 %v10288, 4
  %v11059 = vpop.permute.xlu0 %11058
  %11060 = vrot.lane.b32.xlu0 %v10289, 4
  %v11061 = vpop.permute.xlu0 %11060
  %11062 = vrot.lane.b32.xlu0 %v10290, 4
  %v11063 = vpop.permute.xlu0 %11062
  %11064 = vrot.lane.b32.xlu0 %v10291, 4
  %v11065 = vpop.permute.xlu0 %11064
  %11066 = vrot.lane.b32.xlu0 %v10292, 4
  %v11067 = vpop.permute.xlu0 %11066
  %11068 = vrot.lane.b32.xlu0 %v10293, 4
  %v11069 = vpop.permute.xlu0 %11068
  %11070 = vrot.lane.b32.xlu0 %v10294, 4
  %v11071 = vpop.permute.xlu0 %11070
  %11072 = vrot.lane.b32.xlu0 %v10295, 4
  %v11073 = vpop.permute.xlu0 %11072
  %11074 = vrot.lane.b32.xlu0 %v10296, 4
  %v11075 = vpop.permute.xlu0 %11074
  %11076 = vrot.lane.b32.xlu0 %v10297, 4
  %v11077 = vpop.permute.xlu0 %11076
  %11078 = vrot.lane.b32.xlu0 %v10298, 4
  %v11079 = vpop.permute.xlu0 %11078
  %11080 = vrot.lane.b32.xlu0 %v10299, 4
  %v11081 = vpop.permute.xlu0 %11080
  %11082 = vrot.lane.b32.xlu0 %v10300, 4
  %v11083 = vpop.permute.xlu0 %11082
  %11084 = vrot.lane.b32.xlu0 %v10301, 4
  %v11085 = vpop.permute.xlu0 %11084
  %11086 = vrot.lane.b32.xlu0 %v10302, 4
  %v11087 = vpop.permute.xlu0 %11086
  %11088 = vrot.lane.b32.xlu0 %v10303, 4
  %v11089 = vpop.permute.xlu0 %11088
  %11090 = vrot.lane.b32.xlu0 %v10304, 4
  %v11091 = vpop.permute.xlu0 %11090
  %11092 = vrot.lane.b32.xlu0 %v10305, 4
  %v11093 = vpop.permute.xlu0 %11092
  %11094 = vrot.lane.b32.xlu0 %v10306, 4
  %v11095 = vpop.permute.xlu0 %11094
  %11096 = vrot.lane.b32.xlu0 %v10307, 4
  %v11097 = vpop.permute.xlu0 %11096
  %11098 = vrot.lane.b32.xlu0 %v10308, 4
  %v11099 = vpop.permute.xlu0 %11098
  %11100 = vrot.lane.b32.xlu0 %v10309, 4
  %v11101 = vpop.permute.xlu0 %11100
  %11102 = vrot.lane.b32.xlu0 %v10310, 4
  %v11103 = vpop.permute.xlu0 %11102
  %11104 = vrot.lane.b32.xlu0 %v10311, 4
  %v11105 = vpop.permute.xlu0 %11104
  %11106 = vrot.lane.b32.xlu0 %v10312, 4
  %v11107 = vpop.permute.xlu0 %11106
  %11108 = vrot.lane.b32.xlu0 %v10313, 4
  %v11109 = vpop.permute.xlu0 %11108
  %11110 = vrot.lane.b32.xlu0 %v10314, 4
  %v11111 = vpop.permute.xlu0 %11110
  %11112 = vrot.lane.b32.xlu0 %v10315, 4
  %v11113 = vpop.permute.xlu0 %11112
  %11114 = vrot.lane.b32.xlu0 %v10316, 4
  %v11115 = vpop.permute.xlu0 %11114
  %11116 = vrot.lane.b32.xlu0 %v10317, 4
  %v11117 = vpop.permute.xlu0 %11116
  %11118 = vrot.lane.b32.xlu0 %v10318, 4
  %v11119 = vpop.permute.xlu0 %11118
  %11120 = vrot.lane.b32.xlu0 %v10319, 4
  %v11121 = vpop.permute.xlu0 %11120
  %11122 = vrot.lane.b32.xlu0 %v10320, 4
  %v11123 = vpop.permute.xlu0 %11122
  %11124 = vrot.lane.b32.xlu0 %v10321, 4
  %v11125 = vpop.permute.xlu0 %11124
  %11126 = vrot.lane.b32.xlu0 %v10322, 4
  %v11127 = vpop.permute.xlu0 %11126
  %11128 = vrot.lane.b32.xlu0 %v10323, 4
  %v11129 = vpop.permute.xlu0 %11128
  %11130 = vrot.lane.b32.xlu0 %v10324, 4
  %v11131 = vpop.permute.xlu0 %11130
  %11132 = vrot.lane.b32.xlu0 %v10325, 4
  %v11133 = vpop.permute.xlu0 %11132
  %11134 = vrot.lane.b32.xlu0 %v10326, 4
  %v11135 = vpop.permute.xlu0 %11134
  %11136 = vrot.lane.b32.xlu0 %v10327, 4
  %v11137 = vpop.permute.xlu0 %11136
  %11138 = vrot.lane.b32.xlu0 %v10328, 4
  %v11139 = vpop.permute.xlu0 %11138
  %11140 = vrot.lane.b32.xlu0 %v10329, 4
  %v11141 = vpop.permute.xlu0 %11140
  %11142 = vrot.lane.b32.xlu0 %v10330, 4
  %v11143 = vpop.permute.xlu0 %11142
  %11144 = vrot.lane.b32.xlu0 %v10331, 4
  %v11145 = vpop.permute.xlu0 %11144
  %11146 = vrot.lane.b32.xlu0 %v10332, 4
  %v11147 = vpop.permute.xlu0 %11146
  %11148 = vrot.lane.b32.xlu0 %v10333, 4
  %v11149 = vpop.permute.xlu0 %11148
  %11150 = vrot.lane.b32.xlu0 %v10334, 4
  %v11151 = vpop.permute.xlu0 %11150
  %11152 = vrot.lane.b32.xlu0 %v10335, 4
  %v11153 = vpop.permute.xlu0 %11152
  %11154 = vrot.lane.b32.xlu0 %v10336, 4
  %v11155 = vpop.permute.xlu0 %11154
  %11156 = vrot.lane.b32.xlu0 %v10337, 4
  %v11157 = vpop.permute.xlu0 %11156
  %11158 = vrot.lane.b32.xlu0 %v10338, 4
  %v11159 = vpop.permute.xlu0 %11158
  %11160 = vrot.lane.b32.xlu0 %v10339, 4
  %v11161 = vpop.permute.xlu0 %11160
  %11162 = vrot.lane.b32.xlu0 %v10340, 4
  %v11163 = vpop.permute.xlu0 %11162
  %11164 = vrot.lane.b32.xlu0 %v10341, 4
  %v11165 = vpop.permute.xlu0 %11164
  %11166 = vrot.lane.b32.xlu0 %v10342, 4
  %v11167 = vpop.permute.xlu0 %11166
  %11168 = vrot.lane.b32.xlu0 %v10343, 4
  %v11169 = vpop.permute.xlu0 %11168
  %11170 = vrot.lane.b32.xlu0 %v10344, 4
  %v11171 = vpop.permute.xlu0 %11170
  %11172 = vrot.lane.b32.xlu0 %v10345, 4
  %v11173 = vpop.permute.xlu0 %11172
  %11174 = vrot.lane.b32.xlu0 %v10346, 4
  %v11175 = vpop.permute.xlu0 %11174
  %11176 = vrot.lane.b32.xlu0 %v10347, 4
  %v11177 = vpop.permute.xlu0 %11176
  %11178 = vrot.lane.b32.xlu0 %v10348, 4
  %v11179 = vpop.permute.xlu0 %11178
  %11180 = vrot.lane.b32.xlu0 %v10349, 4
  %v11181 = vpop.permute.xlu0 %11180
  %11182 = vrot.lane.b32.xlu0 %v10350, 4
  %v11183 = vpop.permute.xlu0 %11182
  %11184 = vrot.lane.b32.xlu0 %v10351, 4
  %v11185 = vpop.permute.xlu0 %11184
  %11186 = vrot.lane.b32.xlu0 %v10352, 4
  %v11187 = vpop.permute.xlu0 %11186
  %11188 = vrot.lane.b32.xlu0 %v10353, 4
  %v11189 = vpop.permute.xlu0 %11188
  %11190 = vrot.lane.b32.xlu0 %v10354, 4
  %v11191 = vpop.permute.xlu0 %11190
  %11192 = vrot.lane.b32.xlu0 %v10355, 4
  %v11193 = vpop.permute.xlu0 %11192
  %11194 = vrot.lane.b32.xlu0 %v10356, 4
  %v11195 = vpop.permute.xlu0 %11194
  %11196 = vrot.lane.b32.xlu0 %v10357, 4
  %v11197 = vpop.permute.xlu0 %11196
  %11198 = vrot.lane.b32.xlu0 %v10358, 4
  %v11199 = vpop.permute.xlu0 %11198
  %11200 = vrot.lane.b32.xlu0 %v10359, 4
  %v11201 = vpop.permute.xlu0 %11200
  %11202 = vrot.lane.b32.xlu0 %v10360, 4
  %v11203 = vpop.permute.xlu0 %11202
  %11204 = vrot.lane.b32.xlu0 %v10361, 4
  %v11205 = vpop.permute.xlu0 %11204
  %11206 = vrot.lane.b32.xlu0 %v10362, 4
  %v11207 = vpop.permute.xlu0 %11206
  %11208 = vrot.lane.b32.xlu0 %v10363, 4
  %v11209 = vpop.permute.xlu0 %11208
  %11210 = vrot.lane.b32.xlu0 %v10364, 4
  %v11211 = vpop.permute.xlu0 %11210
  %11212 = vrot.lane.b32.xlu0 %v10365, 4
  %v11213 = vpop.permute.xlu0 %11212
  %11214 = vrot.lane.b32.xlu0 %v10366, 4
  %v11215 = vpop.permute.xlu0 %11214
  %11216 = vrot.lane.b32.xlu0 %v10367, 4
  %v11217 = vpop.permute.xlu0 %11216
  %11218 = vrot.lane.b32.xlu0 %v10368, 4
  %v11219 = vpop.permute.xlu0 %11218
  %11220 = vrot.lane.b32.xlu0 %v10369, 4
  %v11221 = vpop.permute.xlu0 %11220
  %11222 = vrot.lane.b32.xlu0 %v10370, 4
  %v11223 = vpop.permute.xlu0 %11222
  %11224 = vrot.lane.b32.xlu0 %v10371, 4
  %v11225 = vpop.permute.xlu0 %11224
  %11226 = vrot.lane.b32.xlu0 %v10372, 4
  %v11227 = vpop.permute.xlu0 %11226
  %11228 = vrot.lane.b32.xlu0 %v10373, 4
  %v11229 = vpop.permute.xlu0 %11228
  %11230 = vrot.lane.b32.xlu0 %v10374, 4
  %v11231 = vpop.permute.xlu0 %11230
  %11232 = vrot.lane.b32.xlu0 %v10375, 4
  %v11233 = vpop.permute.xlu0 %11232
  %11234 = vrot.lane.b32.xlu0 %v10376, 4
  %v11235 = vpop.permute.xlu0 %11234
  %11236 = vrot.lane.b32.xlu0 %v10377, 4
  %v11237 = vpop.permute.xlu0 %11236
  %11238 = vrot.lane.b32.xlu0 %v10378, 4
  %v11239 = vpop.permute.xlu0 %11238
  %11240 = vrot.lane.b32.xlu0 %v10379, 4
  %v11241 = vpop.permute.xlu0 %11240
  %11242 = vrot.lane.b32.xlu0 %v10380, 4
  %v11243 = vpop.permute.xlu0 %11242
  %11244 = vrot.lane.b32.xlu0 %v10381, 4
  %v11245 = vpop.permute.xlu0 %11244
  %11246 = vrot.lane.b32.xlu0 %v10382, 4
  %v11247 = vpop.permute.xlu0 %11246
  %11248 = vrot.lane.b32.xlu0 %v10383, 4
  %v11249 = vpop.permute.xlu0 %11248
  %vm11346 = vcmask 56352
  %11347 = vst.msk [vmem:[%s18] sm:$0xff] %vm11346, %v11059
  %11348 = vst.msk [vmem:[%s18 + $0x8] sm:$0xff] %vm11346, %v11061
  %11349 = vst.msk [vmem:[%s18 + $0x10] sm:$0xff] %vm11346, %v11063
  %11350 = vst.msk [vmem:[%s18 + $0x18] sm:$0xff] %vm11346, %v11065
  %11351 = vst.msk [vmem:[%s18 + $0x20] sm:$0xff] %vm11346, %v11067
  %11352 = vst.msk [vmem:[%s18 + $0x28] sm:$0xff] %vm11346, %v11069
  %11353 = vst.msk [vmem:[%s18 + $0x30] sm:$0xff] %vm11346, %v11071
  %11354 = vst.msk [vmem:[%s18 + $0x38] sm:$0xff] %vm11346, %v11073
  %11355 = vst.msk [vmem:[%s18 + $0x40] sm:$0xff] %vm11346, %v11075
  %11356 = vst.msk [vmem:[%s18 + $0x48] sm:$0xff] %vm11346, %v11077
  %11357 = vst.msk [vmem:[%s18 + $0x50] sm:$0xff] %vm11346, %v11079
  %11358 = vst.msk [vmem:[%s18 + $0x58] sm:$0xff] %vm11346, %v11081
  %11359 = vst.msk [vmem:[%s18 + $0x60] sm:$0xff] %vm11346, %v11083
  %11360 = vst.msk [vmem:[%s18 + $0x68] sm:$0xff] %vm11346, %v11085
  %11361 = vst.msk [vmem:[%s18 + $0x70] sm:$0xff] %vm11346, %v11087
  %11362 = vst.msk [vmem:[%s18 + $0x78] sm:$0xff] %vm11346, %v11089
  %11363 = vst.msk [vmem:[%s18 + $0x80] sm:$0xff] %vm11346, %v11091
  %11364 = vst.msk [vmem:[%s18 + $0x88] sm:$0xff] %vm11346, %v11093
  %11365 = vst.msk [vmem:[%s18 + $0x90] sm:$0xff] %vm11346, %v11095
  %11366 = vst.msk [vmem:[%s18 + $0x98] sm:$0xff] %vm11346, %v11097
  %11367 = vst.msk [vmem:[%s18 + $0xa0] sm:$0xff] %vm11346, %v11099
  %11368 = vst.msk [vmem:[%s18 + $0xa8] sm:$0xff] %vm11346, %v11101
  %11369 = vst.msk [vmem:[%s18 + $0xb0] sm:$0xff] %vm11346, %v11103
  %11370 = vst.msk [vmem:[%s18 + $0xb8] sm:$0xff] %vm11346, %v11105
  %11371 = vst.msk [vmem:[%s18 + $0xc0] sm:$0xff] %vm11346, %v11107
  %11372 = vst.msk [vmem:[%s18 + $0xc8] sm:$0xff] %vm11346, %v11109
  %11373 = vst.msk [vmem:[%s18 + $0xd0] sm:$0xff] %vm11346, %v11111
  %11374 = vst.msk [vmem:[%s18 + $0xd8] sm:$0xff] %vm11346, %v11113
  %11375 = vst.msk [vmem:[%s18 + $0xe0] sm:$0xff] %vm11346, %v11115
  %11376 = vst.msk [vmem:[%s18 + $0xe8] sm:$0xff] %vm11346, %v11117
  %11377 = vst.msk [vmem:[%s18 + $0xf0] sm:$0xff] %vm11346, %v11119
  %11378 = vst.msk [vmem:[%s18 + $0xf8] sm:$0xff] %vm11346, %v11121
  %11379 = vst.msk [vmem:[%s18 + $0x100] sm:$0xff] %vm11346, %v11123
  %11380 = vst.msk [vmem:[%s18 + $0x108] sm:$0xff] %vm11346, %v11125
  %11381 = vst.msk [vmem:[%s18 + $0x110] sm:$0xff] %vm11346, %v11127
  %11382 = vst.msk [vmem:[%s18 + $0x118] sm:$0xff] %vm11346, %v11129
  %11383 = vst.msk [vmem:[%s18 + $0x120] sm:$0xff] %vm11346, %v11131
  %11384 = vst.msk [vmem:[%s18 + $0x128] sm:$0xff] %vm11346, %v11133
  %11385 = vst.msk [vmem:[%s18 + $0x130] sm:$0xff] %vm11346, %v11135
  %11386 = vst.msk [vmem:[%s18 + $0x138] sm:$0xff] %vm11346, %v11137
  %11387 = vst.msk [vmem:[%s18 + $0x140] sm:$0xff] %vm11346, %v11139
  %11388 = vst.msk [vmem:[%s18 + $0x148] sm:$0xff] %vm11346, %v11141
  %11389 = vst.msk [vmem:[%s18 + $0x150] sm:$0xff] %vm11346, %v11143
  %11390 = vst.msk [vmem:[%s18 + $0x158] sm:$0xff] %vm11346, %v11145
  %11391 = vst.msk [vmem:[%s18 + $0x160] sm:$0xff] %vm11346, %v11147
  %11392 = vst.msk [vmem:[%s18 + $0x168] sm:$0xff] %vm11346, %v11149
  %11393 = vst.msk [vmem:[%s18 + $0x170] sm:$0xff] %vm11346, %v11151
  %11394 = vst.msk [vmem:[%s18 + $0x178] sm:$0xff] %vm11346, %v11153
  %11395 = vst.msk [vmem:[%s18 + $0x180] sm:$0xff] %vm11346, %v11155
  %11396 = vst.msk [vmem:[%s18 + $0x188] sm:$0xff] %vm11346, %v11157
  %11397 = vst.msk [vmem:[%s18 + $0x190] sm:$0xff] %vm11346, %v11159
  %11398 = vst.msk [vmem:[%s18 + $0x198] sm:$0xff] %vm11346, %v11161
  %11399 = vst.msk [vmem:[%s18 + $0x1a0] sm:$0xff] %vm11346, %v11163
  %11400 = vst.msk [vmem:[%s18 + $0x1a8] sm:$0xff] %vm11346, %v11165
  %11401 = vst.msk [vmem:[%s18 + $0x1b0] sm:$0xff] %vm11346, %v11167
  %11402 = vst.msk [vmem:[%s18 + $0x1b8] sm:$0xff] %vm11346, %v11169
  %11403 = vst.msk [vmem:[%s18 + $0x1c0] sm:$0xff] %vm11346, %v11171
  %11404 = vst.msk [vmem:[%s18 + $0x1c8] sm:$0xff] %vm11346, %v11173
  %11405 = vst.msk [vmem:[%s18 + $0x1d0] sm:$0xff] %vm11346, %v11175
  %11406 = vst.msk [vmem:[%s18 + $0x1d8] sm:$0xff] %vm11346, %v11177
  %11407 = vst.msk [vmem:[%s18 + $0x1e0] sm:$0xff] %vm11346, %v11179
  %11408 = vst.msk [vmem:[%s18 + $0x1e8] sm:$0xff] %vm11346, %v11181
  %11409 = vst.msk [vmem:[%s18 + $0x1f0] sm:$0xff] %vm11346, %v11183
  %11410 = vst.msk [vmem:[%s18 + $0x1f8] sm:$0xff] %vm11346, %v11185
  %11411 = vst.msk [vmem:[%s18 + $0x200] sm:$0xff] %vm11346, %v11187
  %11412 = vst.msk [vmem:[%s18 + $0x208] sm:$0xff] %vm11346, %v11189
  %11413 = vst.msk [vmem:[%s18 + $0x210] sm:$0xff] %vm11346, %v11191
  %11414 = vst.msk [vmem:[%s18 + $0x218] sm:$0xff] %vm11346, %v11193
  %11415 = vst.msk [vmem:[%s18 + $0x220] sm:$0xff] %vm11346, %v11195
  %11416 = vst.msk [vmem:[%s18 + $0x228] sm:$0xff] %vm11346, %v11197
  %11417 = vst.msk [vmem:[%s18 + $0x230] sm:$0xff] %vm11346, %v11199
  %11418 = vst.msk [vmem:[%s18 + $0x238] sm:$0xff] %vm11346, %v11201
  %11419 = vst.msk [vmem:[%s18 + $0x240] sm:$0xff] %vm11346, %v11203
  %11420 = vst.msk [vmem:[%s18 + $0x248] sm:$0xff] %vm11346, %v11205
  %11421 = vst.msk [vmem:[%s18 + $0x250] sm:$0xff] %vm11346, %v11207
  %11422 = vst.msk [vmem:[%s18 + $0x258] sm:$0xff] %vm11346, %v11209
  %11423 = vst.msk [vmem:[%s18 + $0x260] sm:$0xff] %vm11346, %v11211
  %11424 = vst.msk [vmem:[%s18 + $0x268] sm:$0xff] %vm11346, %v11213
  %11425 = vst.msk [vmem:[%s18 + $0x270] sm:$0xff] %vm11346, %v11215
  %11426 = vst.msk [vmem:[%s18 + $0x278] sm:$0xff] %vm11346, %v11217
  %11427 = vst.msk [vmem:[%s18 + $0x280] sm:$0xff] %vm11346, %v11219
  %11428 = vst.msk [vmem:[%s18 + $0x288] sm:$0xff] %vm11346, %v11221
  %11429 = vst.msk [vmem:[%s18 + $0x290] sm:$0xff] %vm11346, %v11223
  %11430 = vst.msk [vmem:[%s18 + $0x298] sm:$0xff] %vm11346, %v11225
  %11431 = vst.msk [vmem:[%s18 + $0x2a0] sm:$0xff] %vm11346, %v11227
  %11432 = vst.msk [vmem:[%s18 + $0x2a8] sm:$0xff] %vm11346, %v11229
  %11433 = vst.msk [vmem:[%s18 + $0x2b0] sm:$0xff] %vm11346, %v11231
  %11434 = vst.msk [vmem:[%s18 + $0x2b8] sm:$0xff] %vm11346, %v11233
  %11435 = vst.msk [vmem:[%s18 + $0x2c0] sm:$0xff] %vm11346, %v11235
  %11436 = vst.msk [vmem:[%s18 + $0x2c8] sm:$0xff] %vm11346, %v11237
  %11437 = vst.msk [vmem:[%s18 + $0x2d0] sm:$0xff] %vm11346, %v11239
  %11438 = vst.msk [vmem:[%s18 + $0x2d8] sm:$0xff] %vm11346, %v11241
  %11439 = vst.msk [vmem:[%s18 + $0x2e0] sm:$0xff] %vm11346, %v11243
  %11440 = vst.msk [vmem:[%s18 + $0x2e8] sm:$0xff] %vm11346, %v11245
  %11441 = vst.msk [vmem:[%s18 + $0x2f0] sm:$0xff] %vm11346, %v11247
  %11442 = vst.msk [vmem:[%s18 + $0x2f8] sm:$0xff] %vm11346, %v11249
  // Predicated region
  $region74: #{_forward_core.2} parent=0 // pred_check
    _
  $region75: #{_forward_core.2} parent=0 // pred_check_branch
    %11444 = sbr.rel (0) target = $region77
  $region76: #{_forward_core.2} parent=0 // pred_region
    _
  $region77: #{_forward_core.2} parent=0 // pred_fallthru
    _
  // Predicated region
  $region78: #{_forward_core.2} parent=0 // pred_check
    _
  $region79: #{_forward_core.2} parent=0 // pred_check_branch
    %11446 = sbr.rel (0) target = $region81
  $region80: #{_forward_core.2} parent=0 // pred_region
    _
  $region81: #{_forward_core.2} parent=0 // pred_fallthru
    _

</llo_original>
